<compile_context>
chip_gen: v7x
topology: tpu7x:2x2x1
jax: 0.10.0
libtpu: 0.0.40
codegen_flags: <defaults>
</compile_context>

<pallas_src>
from functools import partial

import jax
import jax.numpy as jnp
from jax.experimental import pallas as pl
from jax.experimental.pallas import tpu as pltpu

EPS = 1e-5       # nn.BatchNorm2d default eps
LANE = 128       # TPU lane width
F32 = jnp.float32
BF16 = jnp.bfloat16


def _round_up(x, m):
    return ((x + m - 1) // m) * m


def _is_v5e():
    """Best-effort detection of a 128-wide-MXU chip (v5e)."""
    try:
        kind = jax.devices()[0].device_kind.lower()
    except Exception:
        return False
    return ("v5 lite" in kind) or ("v5e" in kind) or ("v5lite" in kind)


def _im2col_3x3(patch_ref, img, H, W, C):
    """Scatter the 9 shifted taps of `img` (H, W, C) into patch_ref (H, W, 9*C).

    patch[h, w, k*C:(k+1)*C] = img[h+dh, w+dw, :]  (zero outside the image),
    k = (dh+1)*3 + (dw+1), matching HWIO weights reshaped to (9*C, Cout).

    Only the 1-pixel halo is zeroed: two full-width row strips (cover every
    dh!=0 halo row for all taps) plus one single-column strip per dw!=0 tap.
    Every other element of the slab is overwritten by the valid-rectangle tap
    writes below, so zero traffic scales with H+W instead of H*W.
    """
    dt = patch_ref.dtype
    zrow = jnp.zeros((1, W, 9 * C), dt)
    patch_ref[0:1, :, :] = zrow            # dh = -1 halo row (all taps)
    patch_ref[H - 1:H, :, :] = zrow        # dh = +1 halo row (all taps)
    zcol = jnp.zeros((H, 1, C), dt)
    for k, dw in ((0, -1), (3, -1), (6, -1), (2, 1), (5, 1), (8, 1)):
        col = 0 if dw == -1 else W - 1     # the one column this tap never writes
        patch_ref[:, col:col + 1, k * C:(k + 1) * C] = zcol

    k = 0
    for dh in (-1, 0, 1):
        for dw in (-1, 0, 1):
            sh0, sw0 = max(0, dh), max(0, dw)        # source start
            th0, tw0 = max(0, -dh), max(0, -dw)      # dest start
            hs, ws = H - abs(dh), W - abs(dw)        # valid extent
            patch_ref[th0:th0 + hs, tw0:tw0 + ws, k * C:(k + 1) * C] = (
                img[sh0:sh0 + hs, sw0:sw0 + ws, :])
            k += 1


def _stage1_stats_and_store(y1, s, y1_ref, s_ref, st_ref):
    # single-pass BN partial statistics, taken from the f32 accumulators
    st_ref[0, 0:1, :] = jnp.sum(y1, axis=0, keepdims=True)
    st_ref[0, 1:2, :] = jnp.sum(y1 * y1, axis=0, keepdims=True)
    st_ref[0, 2:3, :] = jnp.sum(s, axis=0, keepdims=True)
    st_ref[0, 3:4, :] = jnp.sum(s * s, axis=0, keepdims=True)
    # inter-stage intermediates stored in bf16 -> halves HBM round-trip traffic
    y1_ref[0] = y1.astype(y1_ref.dtype)
    s_ref[0] = s.astype(s_ref.dtype)


def _stage1_fused_kernel(x_ref, w1f_ref, y1_ref, s_ref, st_ref, patch_ref,
                         *, H, W, Ci, Co):
    """conv1 (3x3) with the 1x1 shortcut fused into the same matmul (v6e/v7x)."""
    img = x_ref[0]                                           # (H, W, Ci) f32
    _im2col_3x3(patch_ref, img, H, W, Ci)
    # MXU operands in bf16 (single-pass MXU mode), accumulation in f32.
    pat = patch_ref[...].reshape(H * W, 9 * Ci).astype(BF16)
    # Fused weight: columns [Co, 2Co) are zero except rows [4Ci, 5Ci) (the
    # centre tap == unshifted image), which hold the 1x1 shortcut weights.
    yfull = jnp.dot(pat, w1f_ref[...], preferred_element_type=F32)  # (HW, 2Co)
    _stage1_stats_and_store(yfull[:, :Co], yfull[:, Co:], y1_ref, s_ref, st_ref)


def _stage1_split_kernel(x_ref, w1_ref, w3_ref, y1_ref, s_ref, st_ref, patch_ref,
                         *, H, W, Ci, Co):
    """conv1 (3x3) + separate 1x1 shortcut matmul (v5e: 128-wide MXU)."""
    del Co
    img = x_ref[0]                                           # (H, W, Ci) f32
    _im2col_3x3(patch_ref, img, H, W, Ci)
    pat = patch_ref[...].reshape(H * W, 9 * Ci).astype(BF16)
    y1 = jnp.dot(pat, w1_ref[...], preferred_element_type=F32)
    s = jnp.dot(img.reshape(H * W, Ci).astype(BF16), w3_ref[...],
                preferred_element_type=F32)
    _stage1_stats_and_store(y1, s, y1_ref, s_ref, st_ref)


def _stage2_kernel(y1_ref, a_ref, b_ref, w2_ref, y2_ref, st_ref, patch_ref,
                   *, H, W, C):
    # BN(conv1) folded into one f32 FMA (y*a + b), then ReLU.
    y1 = y1_ref[0].astype(F32)                               # (HW, C)
    y1n = jnp.maximum(y1 * a_ref[...] + b_ref[...], 0.0)
    _im2col_3x3(patch_ref, y1n.reshape(H, W, C), H, W, C)
    pat = patch_ref[...].reshape(H * W, 9 * C).astype(BF16)
    y2 = jnp.dot(pat, w2_ref[...], preferred_element_type=F32)      # (HW, C)
    st_ref[0, 0:1, :] = jnp.sum(y2, axis=0, keepdims=True)
    st_ref[0, 1:2, :] = jnp.sum(y2 * y2, axis=0, keepdims=True)
    y2_ref[0] = y2.astype(y2_ref.dtype)


def _stage3_kernel(y2_ref, s_ref, a2_ref, b2_ref, as_ref, bs_ref, out_ref):
    # out = bn(conv2) + bn(shortcut)   (no final ReLU); y2 is aliased to out.
    y2 = y2_ref[0].astype(F32)
    s = s_ref[0].astype(F32)
    out = (y2 * a2_ref[...] + b2_ref[...]) + (s * as_ref[...] + bs_ref[...])
    out_ref[0] = out.astype(out_ref.dtype)


def residual_block_pallas(x_nchw, w1, b1, w2, b2, w3, b3, gamma, beta):
    """x_nchw: (N, Cin, H, W); w1: (3,3,Cin,Cout) HWIO; w2: (3,3,Cout,Cout) HWIO;
    w3: (Cin, Cout). Conv biases b1/b2/b3 are accepted for API fidelity but are
    exact no-ops under training-mode BN (the batch mean is subtracted right
    after each conv) and therefore dropped. Returns (N, Cout, H, W) float32."""
    del b1, b2, b3
    N, Cin, H, W = x_nchw.shape
    Cout = w1.shape[-1]
    Ci = _round_up(max(Cin, LANE), LANE)     # lane-dense padded channel counts
    Co = _round_up(max(Cout, LANE), LANE)
    HW = H * W
    # NOTE: H, W multiples of 8 keep the in-kernel (H,W,C)<->(HW,C) reshapes
    # free of sublane relayouts (true for the ResNet-style shapes used here).
    fuse = not _is_v5e()   # fuse the 1x1 shortcut into conv1's N dim on the
                           # 256-wide MXU chips (v6e/v7x); keep split on v5e.

    # ---- NHWC channel-padded input / bf16-packed weights ----
    # TODO(synk): also move x to bf16 once packed (16-bit) sub-sublane slices
    #             are verified on the target Mosaic; the big repeated traffic
    #             (the inter-stage activations) is already bf16 below.
    x = jnp.transpose(x_nchw, (0, 2, 3, 1)).astype(F32)
    x = jnp.pad(x, ((0, 0), (0, 0), (0, 0), (0, Ci - Cin)))

    def pack3x3(w, cin, cin_p, cout_p):
        w = w.astype(F32).reshape(9, cin, -1)            # k = (dh+1)*3 + (dw+1)
        w = jnp.pad(w, ((0, 0), (0, cin_p - cin), (0, cout_p - w.shape[-1])))
        return w.reshape(9 * cin_p, cout_p)

    w1p = pack3x3(w1, Cin, Ci, Co)                                   # (9Ci, Co)
    w2p = pack3x3(w2, Cout, Co, Co).astype(BF16)                     # (9Co, Co)
    w3p = jnp.pad(w3.astype(F32), ((0, Ci - Cin), (0, Co - Cout)))   # (Ci, Co)
    if fuse:
        right = jnp.zeros((9 * Ci, Co), F32).at[4 * Ci:5 * Ci].set(w3p)
        w1f = jnp.concatenate([w1p, right], axis=1).astype(BF16)     # (9Ci, 2Co)
    else:
        w1p = w1p.astype(BF16)
        w3p_b = w3p.astype(BF16)
    # gamma/beta zero-padded -> padded channels stay exactly 0 through BN.
    g = jnp.pad(gamma.astype(F32), (0, Co - Cout)).reshape(1, Co)
    bt = jnp.pad(beta.astype(F32), (0, Co - Cout)).reshape(1, Co)

    x_in = pl.BlockSpec((1, H, W, Ci), lambda i: (i, 0, 0, 0))
    act = pl.BlockSpec((1, HW, Co), lambda i: (i, 0, 0))     # lane-dense acts
    vec = pl.BlockSpec((1, Co), lambda i: (0, 0))

    def full2d(shape):
        return pl.BlockSpec(shape, lambda i: (0, 0))

    # 48 MiB scoped VMEM: above the 16/32 MiB defaults, below v7x's 64 MiB phys.
    params = pltpu.CompilerParams(dimension_semantics=("parallel",),
                                  vmem_limit_bytes=48 * 1024 * 1024)

    # ---- stage 1: conv1 (3x3) [+ fused 1x1 shortcut] + partial BN stats ----
    if fuse:
        kernel1 = partial(_stage1_fused_kernel, H=H, W=W, Ci=Ci, Co=Co)
        s1_in_specs = [x_in, full2d((9 * Ci, 2 * Co))]
        s1_args = (x, w1f)
    else:
        kernel1 = partial(_stage1_split_kernel, H=H, W=W, Ci=Ci, Co=Co)
        s1_in_specs = [x_in, full2d((9 * Ci, Co)), full2d((Ci, Co))]
        s1_args = (x, w1p, w3p_b)

    y1_raw, s_raw, st1 = pl.pallas_call(
        kernel1,
        grid=(N,),
        in_specs=s1_in_specs,
        out_specs=[act, act, pl.BlockSpec((1, 4, Co), lambda i: (i, 0, 0))],
        out_shape=[jax.ShapeDtypeStruct((N, HW, Co), BF16),
                   jax.ShapeDtypeStruct((N, HW, Co), BF16),
                   jax.ShapeDtypeStruct((N, 4, Co), F32)],
        scratch_shapes=[pltpu.VMEM((H, W, 9 * Ci), F32)],
        compiler_params=params,
    )(*s1_args)

    # ---- finalize BN affine coefficients (tiny (Co,)-sized math, exact) ----
    # TODO(synk): single-pass var (E[x^2]-mean^2) can lose precision at very
    #             large N*H*W; switch to compensated/centered sums if needed.
    cnt = float(N * HW)

    def bn_affine(s_, ss_):
        mean = s_ / cnt
        var = jnp.maximum(ss_ / cnt - mean * mean, 0.0)  # biased training var
        a = g * jax.lax.rsqrt(var + EPS)
        return a, bt - mean * a

    st1 = jnp.sum(st1, axis=0)                            # reduce over images
    a1, b1n = bn_affine(st1[0:1], st1[1:2])               # BN(conv1)
    a_s, b_sn = bn_affine(st1[2:3], st1[3:4])             # BN(shortcut)

    # ---- stage 2: relu(bn(y1)) -> conv2 (3x3) + partial BN stats ----
    y2_raw, st2 = pl.pallas_call(
        partial(_stage2_kernel, H=H, W=W, C=Co),
        grid=(N,),
        in_specs=[act, vec, vec, full2d((9 * Co, Co))],
        out_specs=[act, pl.BlockSpec((1, 2, Co), lambda i: (i, 0, 0))],
        out_shape=[jax.ShapeDtypeStruct((N, HW, Co), BF16),
                   jax.ShapeDtypeStruct((N, 2, Co), F32)],
        scratch_shapes=[pltpu.VMEM((H, W, 9 * Co), F32)],
        compiler_params=params,
    )(y1_raw, a1, b1n, w2p)

    st2 = jnp.sum(st2, axis=0)
    a2, b2n = bn_affine(st2[0:1], st2[1:2])               # BN(conv2)

    # ---- stage 3: out = bn(y2) + bn(shortcut); y2_raw buffer reused as out ----
    out = pl.pallas_call(
        _stage3_kernel,
        grid=(N,),
        in_specs=[act, act, vec, vec, vec, vec],
        out_specs=act,
        out_shape=jax.ShapeDtypeStruct((N, HW, Co), BF16),
        input_output_aliases={0: 0},
        compiler_params=params,
    )(y2_raw, s_raw, a2, b2n, a_s, b_sn)

    out = out.astype(F32).reshape(N, H, W, Co)[..., :Cout]  # drop channel pad
    return jnp.transpose(out, (0, 3, 1, 2))


def ref_forward(x_nchw, w1, b1, w2, b2, w3, b3, gamma, beta):
    """Pure-JAX reference with the PyTorch module's semantics (incl. biases)."""
    Cin, Cout = w3.shape
    x = jnp.transpose(x_nchw, (0, 2, 3, 1))

    def conv(x, w, b, pad):
        y = jax.lax.conv_general_dilated(
            x, w, (1, 1), [(pad, pad), (pad, pad)],
            dimension_numbers=("NHWC", "HWIO", "NHWC"))
        return y + b

    def bn(y):
        mean = jnp.mean(y, axis=(0, 1, 2), keepdims=True)
        var = jnp.mean((y - mean) ** 2, axis=(0, 1, 2), keepdims=True)
        return (y - mean) * jax.lax.rsqrt(var + EPS) * gamma + beta

    y = conv(x, w1, b1, 1)
    y = jnp.maximum(bn(y), 0.0)
    y = conv(y, w2, b2, 1)
    y = bn(y)
    s = conv(x, w3.reshape(1, 1, Cin, Cout), b3, 0)
    s = bn(s)
    return jnp.transpose(y + s, (0, 3, 1, 2))


if __name__ == "__main__":
    N, Cin, Cout, H, W = 2, 4, 8, 16, 16

    key = jax.random.PRNGKey(0)
    ks = jax.random.split(key, 7)
    x = jax.random.normal(ks[0], (N, Cin, H, W), jnp.float32)
    w1 = jax.random.normal(ks[1], (3, 3, Cin, Cout), jnp.float32) * 0.1
    b1 = jax.random.normal(ks[2], (Cout,), jnp.float32) * 0.01
    w2 = jax.random.normal(ks[3], (3, 3, Cout, Cout), jnp.float32) * 0.1
    b2 = jax.random.normal(ks[4], (Cout,), jnp.float32) * 0.01
    w3 = jax.random.normal(ks[5], (Cin, Cout), jnp.float32) * 0.1
    b3 = jax.random.normal(ks[6], (Cout,), jnp.float32) * 0.01
    gamma = jnp.ones((Cout,), jnp.float32)   # nn.BatchNorm2d default init
    beta = jnp.zeros((Cout,), jnp.float32)

    fwd = jax.jit(residual_block_pallas)
    out = jax.block_until_ready(fwd(x, w1, b1, w2, b2, w3, b3, gamma, beta))
    assert out.shape == (N, Cout, H, W)

    ref = ref_forward(x, w1, b1, w2, b2, w3, b3, gamma, beta)
    max_err = float(jnp.max(jnp.abs(out - ref)))
    # bf16 MXU operands + bf16 inter-stage activations vs an all-f32 reference
    assert jnp.allclose(out, ref, atol=5e-2, rtol=5e-2), f"max_err={max_err}"

    print("KERNEL_OK")
</pallas_src>

<mosaic_0001>
module attributes {stable_mosaic.version = 11 : i64} {
  func.func @_stage1_fused_kernel(%arg0: i32, %arg1: memref<1x16x16x128xf32, #tpu.memory_space<vmem>>, %arg2: memref<1152x256xbf16, #tpu.memory_space<vmem>>, %arg3: memref<1x256x128xbf16, #tpu.memory_space<vmem>>, %arg4: memref<1x256x128xbf16, #tpu.memory_space<vmem>>, %arg5: memref<1x4x128xf32, #tpu.memory_space<vmem>>, %arg6: memref<16x16x1152xf32, #tpu.memory_space<vmem>>) attributes {dimension_semantics = [#tpu.dimension_semantics<parallel>], iteration_bounds = array<i64: 2>, scalar_prefetch = 0 : i64, scratch_operands = 1 : i64, tpu.core_type = #tpu.core_type<tc>, window_params = [{transform_indices = @transform_0, window_bounds = array<i64: 1, 16, 16, 128>}, {pipeline_mode = #tpu.pipeline_mode<synchronous>, transform_indices = @transform_1, window_bounds = array<i64: 1152, 256>}, {transform_indices = @transform_2, window_bounds = array<i64: 1, 256, 128>}, {transform_indices = @transform_3, window_bounds = array<i64: 1, 256, 128>}, {transform_indices = @transform_4, window_bounds = array<i64: 1, 4, 128>}]} {
    %c0 = arith.constant 0 : index
    %c0_0 = arith.constant 0 : index
    %c0_1 = arith.constant 0 : index
    %c0_2 = arith.constant 0 : index
    %0 = vector.load %arg1[%c0, %c0_0, %c0_1, %c0_2] : memref<1x16x16x128xf32, #tpu.memory_space<vmem>>, vector<1x16x16x128xf32>
    %1 = vector.shape_cast %0 : vector<1x16x16x128xf32> to vector<16x16x128xf32>
    %cst = arith.constant 0.000000e+00 : f32
    %2 = vector.broadcast %cst : f32 to vector<1x16x1152xf32>
    %c0_3 = arith.constant 0 : index
    %c0_4 = arith.constant 0 : index
    %c0_5 = arith.constant 0 : index
    %3 = vector.load %arg6[%c0_3, %c0_4, %c0_5] : memref<16x16x1152xf32, #tpu.memory_space<vmem>>, vector<1x16x1152xf32>
    tpu.vector_store %arg6[%c0_3, %c0_4, %c0_5], %2 {strides = array<i32>} : memref<16x16x1152xf32, #tpu.memory_space<vmem>>, vector<1x16x1152xf32>,
    %c15 = arith.constant 15 : index
    %c0_6 = arith.constant 0 : index
    %c0_7 = arith.constant 0 : index
    %4 = vector.load %arg6[%c15, %c0_6, %c0_7] : memref<16x16x1152xf32, #tpu.memory_space<vmem>>, vector<1x16x1152xf32>
    tpu.vector_store %arg6[%c15, %c0_6, %c0_7], %2 {strides = array<i32>} : memref<16x16x1152xf32, #tpu.memory_space<vmem>>, vector<1x16x1152xf32>,
    %cst_8 = arith.constant 0.000000e+00 : f32
    %5 = vector.broadcast %cst_8 : f32 to vector<16x1x128xf32>
    %c0_9 = arith.constant 0 : index
    %c0_10 = arith.constant 0 : index
    %c0_11 = arith.constant 0 : index
    %6 = vector.load %arg6[%c0_9, %c0_10, %c0_11] : memref<16x16x1152xf32, #tpu.memory_space<vmem>>, vector<16x1x128xf32>
    tpu.vector_store %arg6[%c0_9, %c0_10, %c0_11], %5 {strides = array<i32>} : memref<16x16x1152xf32, #tpu.memory_space<vmem>>, vector<16x1x128xf32>,
    %c0_12 = arith.constant 0 : index
    %c0_13 = arith.constant 0 : index
    %c384 = arith.constant 384 : index
    %7 = vector.load %arg6[%c0_12, %c0_13, %c384] : memref<16x16x1152xf32, #tpu.memory_space<vmem>>, vector<16x1x128xf32>
    tpu.vector_store %arg6[%c0_12, %c0_13, %c384], %5 {strides = array<i32>} : memref<16x16x1152xf32, #tpu.memory_space<vmem>>, vector<16x1x128xf32>,
    %c0_14 = arith.constant 0 : index
    %c0_15 = arith.constant 0 : index
    %c768 = arith.constant 768 : index
    %8 = vector.load %arg6[%c0_14, %c0_15, %c768] : memref<16x16x1152xf32, #tpu.memory_space<vmem>>, vector<16x1x128xf32>
    tpu.vector_store %arg6[%c0_14, %c0_15, %c768], %5 {strides = array<i32>} : memref<16x16x1152xf32, #tpu.memory_space<vmem>>, vector<16x1x128xf32>,
    %c0_16 = arith.constant 0 : index
    %c15_17 = arith.constant 15 : index
    %c256 = arith.constant 256 : index
    %9 = vector.load %arg6[%c0_16, %c15_17, %c256] : memref<16x16x1152xf32, #tpu.memory_space<vmem>>, vector<16x1x128xf32>
    tpu.vector_store %arg6[%c0_16, %c15_17, %c256], %5 {strides = array<i32>} : memref<16x16x1152xf32, #tpu.memory_space<vmem>>, vector<16x1x128xf32>,
    %c0_18 = arith.constant 0 : index
    %c15_19 = arith.constant 15 : index
    %c640 = arith.constant 640 : index
    %10 = vector.load %arg6[%c0_18, %c15_19, %c640] : memref<16x16x1152xf32, #tpu.memory_space<vmem>>, vector<16x1x128xf32>
    tpu.vector_store %arg6[%c0_18, %c15_19, %c640], %5 {strides = array<i32>} : memref<16x16x1152xf32, #tpu.memory_space<vmem>>, vector<16x1x128xf32>,
    %c0_20 = arith.constant 0 : index
    %c15_21 = arith.constant 15 : index
    %c1024 = arith.constant 1024 : index
    %11 = vector.load %arg6[%c0_20, %c15_21, %c1024] : memref<16x16x1152xf32, #tpu.memory_space<vmem>>, vector<16x1x128xf32>
    tpu.vector_store %arg6[%c0_20, %c15_21, %c1024], %5 {strides = array<i32>} : memref<16x16x1152xf32, #tpu.memory_space<vmem>>, vector<16x1x128xf32>,
    %12 = vector.extract_strided_slice %1 {offsets = [0, 0, 0], sizes = [15, 15, 128], strides = [1, 1, 1]} : vector<16x16x128xf32> to vector<15x15x128xf32>
    %c1 = arith.constant 1 : index
    %c1_22 = arith.constant 1 : index
    %c0_23 = arith.constant 0 : index
    %13 = vector.load %arg6[%c1, %c1_22, %c0_23] : memref<16x16x1152xf32, #tpu.memory_space<vmem>>, vector<15x15x128xf32>
    tpu.vector_store %arg6[%c1, %c1_22, %c0_23], %12 {strides = array<i32>} : memref<16x16x1152xf32, #tpu.memory_space<vmem>>, vector<15x15x128xf32>,
    %14 = vector.extract_strided_slice %1 {offsets = [0, 0, 0], sizes = [15, 16, 128], strides = [1, 1, 1]} : vector<16x16x128xf32> to vector<15x16x128xf32>
    %c1_24 = arith.constant 1 : index
    %c0_25 = arith.constant 0 : index
    %c128 = arith.constant 128 : index
    %15 = vector.load %arg6[%c1_24, %c0_25, %c128] : memref<16x16x1152xf32, #tpu.memory_space<vmem>>, vector<15x16x128xf32>
    tpu.vector_store %arg6[%c1_24, %c0_25, %c128], %14 {strides = array<i32>} : memref<16x16x1152xf32, #tpu.memory_space<vmem>>, vector<15x16x128xf32>,
    %16 = vector.extract_strided_slice %1 {offsets = [0, 1, 0], sizes = [15, 15, 128], strides = [1, 1, 1]} : vector<16x16x128xf32> to vector<15x15x128xf32>
    %c1_26 = arith.constant 1 : index
    %c0_27 = arith.constant 0 : index
    %c256_28 = arith.constant 256 : index
    %17 = vector.load %arg6[%c1_26, %c0_27, %c256_28] : memref<16x16x1152xf32, #tpu.memory_space<vmem>>, vector<15x15x128xf32>
    tpu.vector_store %arg6[%c1_26, %c0_27, %c256_28], %16 {strides = array<i32>} : memref<16x16x1152xf32, #tpu.memory_space<vmem>>, vector<15x15x128xf32>,
    %18 = vector.extract_strided_slice %1 {offsets = [0, 0, 0], sizes = [16, 15, 128], strides = [1, 1, 1]} : vector<16x16x128xf32> to vector<16x15x128xf32>
    %c0_29 = arith.constant 0 : index
    %c1_30 = arith.constant 1 : index
    %c384_31 = arith.constant 384 : index
    %19 = vector.load %arg6[%c0_29, %c1_30, %c384_31] : memref<16x16x1152xf32, #tpu.memory_space<vmem>>, vector<16x15x128xf32>
    tpu.vector_store %arg6[%c0_29, %c1_30, %c384_31], %18 {strides = array<i32>} : memref<16x16x1152xf32, #tpu.memory_space<vmem>>, vector<16x15x128xf32>,
    %c0_32 = arith.constant 0 : index
    %c0_33 = arith.constant 0 : index
    %c512 = arith.constant 512 : index
    %20 = vector.load %arg6[%c0_32, %c0_33, %c512] : memref<16x16x1152xf32, #tpu.memory_space<vmem>>, vector<16x16x128xf32>
    tpu.vector_store %arg6[%c0_32, %c0_33, %c512], %1 {strides = array<i32>} : memref<16x16x1152xf32, #tpu.memory_space<vmem>>, vector<16x16x128xf32>,
    %21 = vector.extract_strided_slice %1 {offsets = [0, 1, 0], sizes = [16, 15, 128], strides = [1, 1, 1]} : vector<16x16x128xf32> to vector<16x15x128xf32>
    %c0_34 = arith.constant 0 : index
    %c0_35 = arith.constant 0 : index
    %c640_36 = arith.constant 640 : index
    %22 = vector.load %arg6[%c0_34, %c0_35, %c640_36] : memref<16x16x1152xf32, #tpu.memory_space<vmem>>, vector<16x15x128xf32>
    tpu.vector_store %arg6[%c0_34, %c0_35, %c640_36], %21 {strides = array<i32>} : memref<16x16x1152xf32, #tpu.memory_space<vmem>>, vector<16x15x128xf32>,
    %23 = vector.extract_strided_slice %1 {offsets = [1, 0, 0], sizes = [15, 15, 128], strides = [1, 1, 1]} : vector<16x16x128xf32> to vector<15x15x128xf32>
    %c0_37 = arith.constant 0 : index
    %c1_38 = arith.constant 1 : index
    %c768_39 = arith.constant 768 : index
    %24 = vector.load %arg6[%c0_37, %c1_38, %c768_39] : memref<16x16x1152xf32, #tpu.memory_space<vmem>>, vector<15x15x128xf32>
    tpu.vector_store %arg6[%c0_37, %c1_38, %c768_39], %23 {strides = array<i32>} : memref<16x16x1152xf32, #tpu.memory_space<vmem>>, vector<15x15x128xf32>,
    %25 = vector.extract_strided_slice %1 {offsets = [1, 0, 0], sizes = [15, 16, 128], strides = [1, 1, 1]} : vector<16x16x128xf32> to vector<15x16x128xf32>
    %c0_40 = arith.constant 0 : index
    %c0_41 = arith.constant 0 : index
    %c896 = arith.constant 896 : index
    %26 = vector.load %arg6[%c0_40, %c0_41, %c896] : memref<16x16x1152xf32, #tpu.memory_space<vmem>>, vector<15x16x128xf32>
    tpu.vector_store %arg6[%c0_40, %c0_41, %c896], %25 {strides = array<i32>} : memref<16x16x1152xf32, #tpu.memory_space<vmem>>, vector<15x16x128xf32>,
    %27 = vector.extract_strided_slice %1 {offsets = [1, 1, 0], sizes = [15, 15, 128], strides = [1, 1, 1]} : vector<16x16x128xf32> to vector<15x15x128xf32>
    %c0_42 = arith.constant 0 : index
    %c0_43 = arith.constant 0 : index
    %c1024_44 = arith.constant 1024 : index
    %28 = vector.load %arg6[%c0_42, %c0_43, %c1024_44] : memref<16x16x1152xf32, #tpu.memory_space<vmem>>, vector<15x15x128xf32>
    tpu.vector_store %arg6[%c0_42, %c0_43, %c1024_44], %27 {strides = array<i32>} : memref<16x16x1152xf32, #tpu.memory_space<vmem>>, vector<15x15x128xf32>,
    %c0_45 = arith.constant 0 : index
    %c0_46 = arith.constant 0 : index
    %c0_47 = arith.constant 0 : index
    %29 = vector.load %arg6[%c0_45, %c0_46, %c0_47] : memref<16x16x1152xf32, #tpu.memory_space<vmem>>, vector<16x16x1152xf32>
    %30 = vector.shape_cast %29 : vector<16x16x1152xf32> to vector<256x1152xf32>
    %31 = arith.truncf %30 : vector<256x1152xf32> to vector<256x1152xbf16>
    %c0_48 = arith.constant 0 : index
    %c0_49 = arith.constant 0 : index
    %32 = vector.load %arg2[%c0_48, %c0_49] : memref<1152x256xbf16, #tpu.memory_space<vmem>>, vector<1152x256xbf16>
    %cst_50 = arith.constant dense<0.000000e+00> : vector<256x256xf32>
    %33 = tpu.matmul %31, %32, %cst_50 {dimension_numbers = #tpu.dot_dimension_numbers<[1], [0], [0], [1], [0, 0, 1, 1], [], []>} : vector<256x1152xbf16>, vector<1152x256xbf16>, vector<256x256xf32> -> vector<256x256xf32>
    %34 = vector.extract_strided_slice %33 {offsets = [0, 0], sizes = [256, 128], strides = [1, 1]} : vector<256x256xf32> to vector<256x128xf32>
    %35 = vector.extract_strided_slice %33 {offsets = [0, 128], sizes = [256, 128], strides = [1, 1]} : vector<256x256xf32> to vector<256x128xf32>
    %cst_51 = arith.constant dense<0.000000e+00> : vector<128xf32>
    %36 = vector.multi_reduction <add>, %34, %cst_51 [0] : vector<256x128xf32> to vector<128xf32>
    %37 = vector.shape_cast %36 : vector<128xf32> to vector<1x128xf32>
    %c0_52 = arith.constant 0 : index
    %c0_53 = arith.constant 0 : index
    %c0_54 = arith.constant 0 : index
    %38 = vector.load %arg5[%c0_52, %c0_53, %c0_54] : memref<1x4x128xf32, #tpu.memory_space<vmem>>, vector<1x1x128xf32>
    %39 = vector.shape_cast %38 : vector<1x1x128xf32> to vector<1x128xf32>
    %40 = vector.shape_cast %37 : vector<1x128xf32> to vector<1x1x128xf32>
    tpu.vector_store %arg5[%c0_52, %c0_53, %c0_54], %40 {strides = array<i32>} : memref<1x4x128xf32, #tpu.memory_space<vmem>>, vector<1x1x128xf32>,
    %41 = arith.mulf %34, %34 : vector<256x128xf32>
    %cst_55 = arith.constant dense<0.000000e+00> : vector<128xf32>
    %42 = vector.multi_reduction <add>, %41, %cst_55 [0] : vector<256x128xf32> to vector<128xf32>
    %43 = vector.shape_cast %42 : vector<128xf32> to vector<1x128xf32>
    %c0_56 = arith.constant 0 : index
    %c1_57 = arith.constant 1 : index
    %c0_58 = arith.constant 0 : index
    %44 = vector.load %arg5[%c0_56, %c1_57, %c0_58] : memref<1x4x128xf32, #tpu.memory_space<vmem>>, vector<1x1x128xf32>
    %45 = vector.shape_cast %44 : vector<1x1x128xf32> to vector<1x128xf32>
    %46 = vector.shape_cast %43 : vector<1x128xf32> to vector<1x1x128xf32>
    tpu.vector_store %arg5[%c0_56, %c1_57, %c0_58], %46 {strides = array<i32>} : memref<1x4x128xf32, #tpu.memory_space<vmem>>, vector<1x1x128xf32>,
    %cst_59 = arith.constant dense<0.000000e+00> : vector<128xf32>
    %47 = vector.multi_reduction <add>, %35, %cst_59 [0] : vector<256x128xf32> to vector<128xf32>
    %48 = vector.shape_cast %47 : vector<128xf32> to vector<1x128xf32>
    %c0_60 = arith.constant 0 : index
    %c2 = arith.constant 2 : index
    %c0_61 = arith.constant 0 : index
    %49 = vector.load %arg5[%c0_60, %c2, %c0_61] : memref<1x4x128xf32, #tpu.memory_space<vmem>>, vector<1x1x128xf32>
    %50 = vector.shape_cast %49 : vector<1x1x128xf32> to vector<1x128xf32>
    %51 = vector.shape_cast %48 : vector<1x128xf32> to vector<1x1x128xf32>
    tpu.vector_store %arg5[%c0_60, %c2, %c0_61], %51 {strides = array<i32>} : memref<1x4x128xf32, #tpu.memory_space<vmem>>, vector<1x1x128xf32>,
    %52 = arith.mulf %35, %35 : vector<256x128xf32>
    %cst_62 = arith.constant dense<0.000000e+00> : vector<128xf32>
    %53 = vector.multi_reduction <add>, %52, %cst_62 [0] : vector<256x128xf32> to vector<128xf32>
    %54 = vector.shape_cast %53 : vector<128xf32> to vector<1x128xf32>
    %c0_63 = arith.constant 0 : index
    %c3 = arith.constant 3 : index
    %c0_64 = arith.constant 0 : index
    %55 = vector.load %arg5[%c0_63, %c3, %c0_64] : memref<1x4x128xf32, #tpu.memory_space<vmem>>, vector<1x1x128xf32>
    %56 = vector.shape_cast %55 : vector<1x1x128xf32> to vector<1x128xf32>
    %57 = vector.shape_cast %54 : vector<1x128xf32> to vector<1x1x128xf32>
    tpu.vector_store %arg5[%c0_63, %c3, %c0_64], %57 {strides = array<i32>} : memref<1x4x128xf32, #tpu.memory_space<vmem>>, vector<1x1x128xf32>,
    %58 = arith.truncf %34 : vector<256x128xf32> to vector<256x128xbf16>
    %c0_65 = arith.constant 0 : index
    %c0_66 = arith.constant 0 : index
    %c0_67 = arith.constant 0 : index
    %59 = vector.load %arg3[%c0_65, %c0_66, %c0_67] : memref<1x256x128xbf16, #tpu.memory_space<vmem>>, vector<1x256x128xbf16>
    %60 = vector.shape_cast %59 : vector<1x256x128xbf16> to vector<256x128xbf16>
    %61 = vector.shape_cast %58 : vector<256x128xbf16> to vector<1x256x128xbf16>
    tpu.vector_store %arg3[%c0_65, %c0_66, %c0_67], %61 {strides = array<i32>} : memref<1x256x128xbf16, #tpu.memory_space<vmem>>, vector<1x256x128xbf16>,
    %62 = arith.truncf %35 : vector<256x128xf32> to vector<256x128xbf16>
    %c0_68 = arith.constant 0 : index
    %c0_69 = arith.constant 0 : index
    %c0_70 = arith.constant 0 : index
    %63 = vector.load %arg4[%c0_68, %c0_69, %c0_70] : memref<1x256x128xbf16, #tpu.memory_space<vmem>>, vector<1x256x128xbf16>
    %64 = vector.shape_cast %63 : vector<1x256x128xbf16> to vector<256x128xbf16>
    %65 = vector.shape_cast %62 : vector<256x128xbf16> to vector<1x256x128xbf16>
    tpu.vector_store %arg4[%c0_68, %c0_69, %c0_70], %65 {strides = array<i32>} : memref<1x256x128xbf16, #tpu.memory_space<vmem>>, vector<1x256x128xbf16>,
    return
  }
  func.func @transform_0(%arg0: i32) -> (i32, i32, i32, i32) {
    %c0_i32 = arith.constant 0 : i32
    %c0_i32_0 = arith.constant 0 : i32
    %c0_i32_1 = arith.constant 0 : i32
    %c0_i32_2 = arith.constant 0 : i32
    return %arg0, %c0_i32, %c0_i32_0, %c0_i32_1 : i32, i32, i32, i32
  }
  func.func @transform_1(%arg0: i32) -> (i32, i32) {
    %c0_i32 = arith.constant 0 : i32
    %c0_i32_0 = arith.constant 0 : i32
    %c0_i32_1 = arith.constant 0 : i32
    return %c0_i32, %c0_i32_0 : i32, i32
  }
  func.func @transform_2(%arg0: i32) -> (i32, i32, i32) {
    %c0_i32 = arith.constant 0 : i32
    %c0_i32_0 = arith.constant 0 : i32
    %c0_i32_1 = arith.constant 0 : i32
    return %arg0, %c0_i32, %c0_i32_0 : i32, i32, i32
  }
  func.func @transform_3(%arg0: i32) -> (i32, i32, i32) {
    %c0_i32 = arith.constant 0 : i32
    %c0_i32_0 = arith.constant 0 : i32
    %c0_i32_1 = arith.constant 0 : i32
    return %arg0, %c0_i32, %c0_i32_0 : i32, i32, i32
  }
  func.func @transform_4(%arg0: i32) -> (i32, i32, i32) {
    %c0_i32 = arith.constant 0 : i32
    %c0_i32_0 = arith.constant 0 : i32
    %c0_i32_1 = arith.constant 0 : i32
    return %arg0, %c0_i32, %c0_i32_0 : i32, i32, i32
  }
}

module attributes {stable_mosaic.version = 11 : i64} {
  func.func @_stage2_kernel(%arg0: i32, %arg1: memref<1x256x128xbf16, #tpu.memory_space<vmem>>, %arg2: memref<1x128xf32, #tpu.memory_space<vmem>>, %arg3: memref<1x128xf32, #tpu.memory_space<vmem>>, %arg4: memref<1152x128xbf16, #tpu.memory_space<vmem>>, %arg5: memref<1x256x128xbf16, #tpu.memory_space<vmem>>, %arg6: memref<1x2x128xf32, #tpu.memory_space<vmem>>, %arg7: memref<16x16x1152xf32, #tpu.memory_space<vmem>>) attributes {dimension_semantics = [#tpu.dimension_semantics<parallel>], iteration_bounds = array<i64: 2>, scalar_prefetch = 0 : i64, scratch_operands = 1 : i64, tpu.core_type = #tpu.core_type<tc>, window_params = [{transform_indices = @transform_0, window_bounds = array<i64: 1, 256, 128>}, {pipeline_mode = #tpu.pipeline_mode<synchronous>, transform_indices = @transform_1, window_bounds = array<i64: 1, 128>}, {pipeline_mode = #tpu.pipeline_mode<synchronous>, transform_indices = @transform_2, window_bounds = array<i64: 1, 128>}, {pipeline_mode = #tpu.pipeline_mode<synchronous>, transform_indices = @transform_3, window_bounds = array<i64: 1152, 128>}, {transform_indices = @transform_4, window_bounds = array<i64: 1, 256, 128>}, {transform_indices = @transform_5, window_bounds = array<i64: 1, 2, 128>}]} {
    %c0 = arith.constant 0 : index
    %c0_0 = arith.constant 0 : index
    %c0_1 = arith.constant 0 : index
    %0 = vector.load %arg1[%c0, %c0_0, %c0_1] : memref<1x256x128xbf16, #tpu.memory_space<vmem>>, vector<1x256x128xbf16>
    %1 = vector.shape_cast %0 : vector<1x256x128xbf16> to vector<256x128xbf16>
    %2 = arith.extf %1 : vector<256x128xbf16> to vector<256x128xf32>
    %c0_2 = arith.constant 0 : index
    %c0_3 = arith.constant 0 : index
    %3 = vector.load %arg2[%c0_2, %c0_3] : memref<1x128xf32, #tpu.memory_space<vmem>>, vector<1x128xf32>
    %4 = vector.broadcast %3 : vector<1x128xf32> to vector<256x128xf32>
    %5 = arith.mulf %2, %4 : vector<256x128xf32>
    %c0_4 = arith.constant 0 : index
    %c0_5 = arith.constant 0 : index
    %6 = vector.load %arg3[%c0_4, %c0_5] : memref<1x128xf32, #tpu.memory_space<vmem>>, vector<1x128xf32>
    %7 = vector.broadcast %6 : vector<1x128xf32> to vector<256x128xf32>
    %8 = arith.addf %5, %7 : vector<256x128xf32>
    %cst = arith.constant 0.000000e+00 : f32
    %9 = vector.broadcast %cst : f32 to vector<256x128xf32>
    %10 = arith.maximumf %8, %9 : vector<256x128xf32>
    %11 = vector.shape_cast %10 : vector<256x128xf32> to vector<16x16x128xf32>
    %cst_6 = arith.constant 0.000000e+00 : f32
    %12 = vector.broadcast %cst_6 : f32 to vector<1x16x1152xf32>
    %c0_7 = arith.constant 0 : index
    %c0_8 = arith.constant 0 : index
    %c0_9 = arith.constant 0 : index
    %13 = vector.load %arg7[%c0_7, %c0_8, %c0_9] : memref<16x16x1152xf32, #tpu.memory_space<vmem>>, vector<1x16x1152xf32>
    tpu.vector_store %arg7[%c0_7, %c0_8, %c0_9], %12 {strides = array<i32>} : memref<16x16x1152xf32, #tpu.memory_space<vmem>>, vector<1x16x1152xf32>,
    %c15 = arith.constant 15 : index
    %c0_10 = arith.constant 0 : index
    %c0_11 = arith.constant 0 : index
    %14 = vector.load %arg7[%c15, %c0_10, %c0_11] : memref<16x16x1152xf32, #tpu.memory_space<vmem>>, vector<1x16x1152xf32>
    tpu.vector_store %arg7[%c15, %c0_10, %c0_11], %12 {strides = array<i32>} : memref<16x16x1152xf32, #tpu.memory_space<vmem>>, vector<1x16x1152xf32>,
    %cst_12 = arith.constant 0.000000e+00 : f32
    %15 = vector.broadcast %cst_12 : f32 to vector<16x1x128xf32>
    %c0_13 = arith.constant 0 : index
    %c0_14 = arith.constant 0 : index
    %c0_15 = arith.constant 0 : index
    %16 = vector.load %arg7[%c0_13, %c0_14, %c0_15] : memref<16x16x1152xf32, #tpu.memory_space<vmem>>, vector<16x1x128xf32>
    tpu.vector_store %arg7[%c0_13, %c0_14, %c0_15], %15 {strides = array<i32>} : memref<16x16x1152xf32, #tpu.memory_space<vmem>>, vector<16x1x128xf32>,
    %c0_16 = arith.constant 0 : index
    %c0_17 = arith.constant 0 : index
    %c384 = arith.constant 384 : index
    %17 = vector.load %arg7[%c0_16, %c0_17, %c384] : memref<16x16x1152xf32, #tpu.memory_space<vmem>>, vector<16x1x128xf32>
    tpu.vector_store %arg7[%c0_16, %c0_17, %c384], %15 {strides = array<i32>} : memref<16x16x1152xf32, #tpu.memory_space<vmem>>, vector<16x1x128xf32>,
    %c0_18 = arith.constant 0 : index
    %c0_19 = arith.constant 0 : index
    %c768 = arith.constant 768 : index
    %18 = vector.load %arg7[%c0_18, %c0_19, %c768] : memref<16x16x1152xf32, #tpu.memory_space<vmem>>, vector<16x1x128xf32>
    tpu.vector_store %arg7[%c0_18, %c0_19, %c768], %15 {strides = array<i32>} : memref<16x16x1152xf32, #tpu.memory_space<vmem>>, vector<16x1x128xf32>,
    %c0_20 = arith.constant 0 : index
    %c15_21 = arith.constant 15 : index
    %c256 = arith.constant 256 : index
    %19 = vector.load %arg7[%c0_20, %c15_21, %c256] : memref<16x16x1152xf32, #tpu.memory_space<vmem>>, vector<16x1x128xf32>
    tpu.vector_store %arg7[%c0_20, %c15_21, %c256], %15 {strides = array<i32>} : memref<16x16x1152xf32, #tpu.memory_space<vmem>>, vector<16x1x128xf32>,
    %c0_22 = arith.constant 0 : index
    %c15_23 = arith.constant 15 : index
    %c640 = arith.constant 640 : index
    %20 = vector.load %arg7[%c0_22, %c15_23, %c640] : memref<16x16x1152xf32, #tpu.memory_space<vmem>>, vector<16x1x128xf32>
    tpu.vector_store %arg7[%c0_22, %c15_23, %c640], %15 {strides = array<i32>} : memref<16x16x1152xf32, #tpu.memory_space<vmem>>, vector<16x1x128xf32>,
    %c0_24 = arith.constant 0 : index
    %c15_25 = arith.constant 15 : index
    %c1024 = arith.constant 1024 : index
    %21 = vector.load %arg7[%c0_24, %c15_25, %c1024] : memref<16x16x1152xf32, #tpu.memory_space<vmem>>, vector<16x1x128xf32>
    tpu.vector_store %arg7[%c0_24, %c15_25, %c1024], %15 {strides = array<i32>} : memref<16x16x1152xf32, #tpu.memory_space<vmem>>, vector<16x1x128xf32>,
    %22 = vector.extract_strided_slice %11 {offsets = [0, 0, 0], sizes = [15, 15, 128], strides = [1, 1, 1]} : vector<16x16x128xf32> to vector<15x15x128xf32>
    %c1 = arith.constant 1 : index
    %c1_26 = arith.constant 1 : index
    %c0_27 = arith.constant 0 : index
    %23 = vector.load %arg7[%c1, %c1_26, %c0_27] : memref<16x16x1152xf32, #tpu.memory_space<vmem>>, vector<15x15x128xf32>
    tpu.vector_store %arg7[%c1, %c1_26, %c0_27], %22 {strides = array<i32>} : memref<16x16x1152xf32, #tpu.memory_space<vmem>>, vector<15x15x128xf32>,
    %24 = vector.extract_strided_slice %11 {offsets = [0, 0, 0], sizes = [15, 16, 128], strides = [1, 1, 1]} : vector<16x16x128xf32> to vector<15x16x128xf32>
    %c1_28 = arith.constant 1 : index
    %c0_29 = arith.constant 0 : index
    %c128 = arith.constant 128 : index
    %25 = vector.load %arg7[%c1_28, %c0_29, %c128] : memref<16x16x1152xf32, #tpu.memory_space<vmem>>, vector<15x16x128xf32>
    tpu.vector_store %arg7[%c1_28, %c0_29, %c128], %24 {strides = array<i32>} : memref<16x16x1152xf32, #tpu.memory_space<vmem>>, vector<15x16x128xf32>,
    %26 = vector.extract_strided_slice %11 {offsets = [0, 1, 0], sizes = [15, 15, 128], strides = [1, 1, 1]} : vector<16x16x128xf32> to vector<15x15x128xf32>
    %c1_30 = arith.constant 1 : index
    %c0_31 = arith.constant 0 : index
    %c256_32 = arith.constant 256 : index
    %27 = vector.load %arg7[%c1_30, %c0_31, %c256_32] : memref<16x16x1152xf32, #tpu.memory_space<vmem>>, vector<15x15x128xf32>
    tpu.vector_store %arg7[%c1_30, %c0_31, %c256_32], %26 {strides = array<i32>} : memref<16x16x1152xf32, #tpu.memory_space<vmem>>, vector<15x15x128xf32>,
    %28 = vector.extract_strided_slice %11 {offsets = [0, 0, 0], sizes = [16, 15, 128], strides = [1, 1, 1]} : vector<16x16x128xf32> to vector<16x15x128xf32>
    %c0_33 = arith.constant 0 : index
    %c1_34 = arith.constant 1 : index
    %c384_35 = arith.constant 384 : index
    %29 = vector.load %arg7[%c0_33, %c1_34, %c384_35] : memref<16x16x1152xf32, #tpu.memory_space<vmem>>, vector<16x15x128xf32>
    tpu.vector_store %arg7[%c0_33, %c1_34, %c384_35], %28 {strides = array<i32>} : memref<16x16x1152xf32, #tpu.memory_space<vmem>>, vector<16x15x128xf32>,
    %c0_36 = arith.constant 0 : index
    %c0_37 = arith.constant 0 : index
    %c512 = arith.constant 512 : index
    %30 = vector.load %arg7[%c0_36, %c0_37, %c512] : memref<16x16x1152xf32, #tpu.memory_space<vmem>>, vector<16x16x128xf32>
    tpu.vector_store %arg7[%c0_36, %c0_37, %c512], %11 {strides = array<i32>} : memref<16x16x1152xf32, #tpu.memory_space<vmem>>, vector<16x16x128xf32>,
    %31 = vector.extract_strided_slice %11 {offsets = [0, 1, 0], sizes = [16, 15, 128], strides = [1, 1, 1]} : vector<16x16x128xf32> to vector<16x15x128xf32>
    %c0_38 = arith.constant 0 : index
    %c0_39 = arith.constant 0 : index
    %c640_40 = arith.constant 640 : index
    %32 = vector.load %arg7[%c0_38, %c0_39, %c640_40] : memref<16x16x1152xf32, #tpu.memory_space<vmem>>, vector<16x15x128xf32>
    tpu.vector_store %arg7[%c0_38, %c0_39, %c640_40], %31 {strides = array<i32>} : memref<16x16x1152xf32, #tpu.memory_space<vmem>>, vector<16x15x128xf32>,
    %33 = vector.extract_strided_slice %11 {offsets = [1, 0, 0], sizes = [15, 15, 128], strides = [1, 1, 1]} : vector<16x16x128xf32> to vector<15x15x128xf32>
    %c0_41 = arith.constant 0 : index
    %c1_42 = arith.constant 1 : index
    %c768_43 = arith.constant 768 : index
    %34 = vector.load %arg7[%c0_41, %c1_42, %c768_43] : memref<16x16x1152xf32, #tpu.memory_space<vmem>>, vector<15x15x128xf32>
    tpu.vector_store %arg7[%c0_41, %c1_42, %c768_43], %33 {strides = array<i32>} : memref<16x16x1152xf32, #tpu.memory_space<vmem>>, vector<15x15x128xf32>,
    %35 = vector.extract_strided_slice %11 {offsets = [1, 0, 0], sizes = [15, 16, 128], strides = [1, 1, 1]} : vector<16x16x128xf32> to vector<15x16x128xf32>
    %c0_44 = arith.constant 0 : index
    %c0_45 = arith.constant 0 : index
    %c896 = arith.constant 896 : index
    %36 = vector.load %arg7[%c0_44, %c0_45, %c896] : memref<16x16x1152xf32, #tpu.memory_space<vmem>>, vector<15x16x128xf32>
    tpu.vector_store %arg7[%c0_44, %c0_45, %c896], %35 {strides = array<i32>} : memref<16x16x1152xf32, #tpu.memory_space<vmem>>, vector<15x16x128xf32>,
    %37 = vector.extract_strided_slice %11 {offsets = [1, 1, 0], sizes = [15, 15, 128], strides = [1, 1, 1]} : vector<16x16x128xf32> to vector<15x15x128xf32>
    %c0_46 = arith.constant 0 : index
    %c0_47 = arith.constant 0 : index
    %c1024_48 = arith.constant 1024 : index
    %38 = vector.load %arg7[%c0_46, %c0_47, %c1024_48] : memref<16x16x1152xf32, #tpu.memory_space<vmem>>, vector<15x15x128xf32>
    tpu.vector_store %arg7[%c0_46, %c0_47, %c1024_48], %37 {strides = array<i32>} : memref<16x16x1152xf32, #tpu.memory_space<vmem>>, vector<15x15x128xf32>,
    %c0_49 = arith.constant 0 : index
    %c0_50 = arith.constant 0 : index
    %c0_51 = arith.constant 0 : index
    %39 = vector.load %arg7[%c0_49, %c0_50, %c0_51] : memref<16x16x1152xf32, #tpu.memory_space<vmem>>, vector<16x16x1152xf32>
    %40 = vector.shape_cast %39 : vector<16x16x1152xf32> to vector<256x1152xf32>
    %41 = arith.truncf %40 : vector<256x1152xf32> to vector<256x1152xbf16>
    %c0_52 = arith.constant 0 : index
    %c0_53 = arith.constant 0 : index
    %42 = vector.load %arg4[%c0_52, %c0_53] : memref<1152x128xbf16, #tpu.memory_space<vmem>>, vector<1152x128xbf16>
    %cst_54 = arith.constant dense<0.000000e+00> : vector<256x128xf32>
    %43 = tpu.matmul %41, %42, %cst_54 {dimension_numbers = #tpu.dot_dimension_numbers<[1], [0], [0], [1], [0, 0, 1, 1], [], []>} : vector<256x1152xbf16>, vector<1152x128xbf16>, vector<256x128xf32> -> vector<256x128xf32>
    %cst_55 = arith.constant dense<0.000000e+00> : vector<128xf32>
    %44 = vector.multi_reduction <add>, %43, %cst_55 [0] : vector<256x128xf32> to vector<128xf32>
    %45 = vector.shape_cast %44 : vector<128xf32> to vector<1x128xf32>
    %c0_56 = arith.constant 0 : index
    %c0_57 = arith.constant 0 : index
    %c0_58 = arith.constant 0 : index
    %46 = vector.load %arg6[%c0_56, %c0_57, %c0_58] : memref<1x2x128xf32, #tpu.memory_space<vmem>>, vector<1x1x128xf32>
    %47 = vector.shape_cast %46 : vector<1x1x128xf32> to vector<1x128xf32>
    %48 = vector.shape_cast %45 : vector<1x128xf32> to vector<1x1x128xf32>
    tpu.vector_store %arg6[%c0_56, %c0_57, %c0_58], %48 {strides = array<i32>} : memref<1x2x128xf32, #tpu.memory_space<vmem>>, vector<1x1x128xf32>,
    %49 = arith.mulf %43, %43 : vector<256x128xf32>
    %cst_59 = arith.constant dense<0.000000e+00> : vector<128xf32>
    %50 = vector.multi_reduction <add>, %49, %cst_59 [0] : vector<256x128xf32> to vector<128xf32>
    %51 = vector.shape_cast %50 : vector<128xf32> to vector<1x128xf32>
    %c0_60 = arith.constant 0 : index
    %c1_61 = arith.constant 1 : index
    %c0_62 = arith.constant 0 : index
    %52 = vector.load %arg6[%c0_60, %c1_61, %c0_62] : memref<1x2x128xf32, #tpu.memory_space<vmem>>, vector<1x1x128xf32>
    %53 = vector.shape_cast %52 : vector<1x1x128xf32> to vector<1x128xf32>
    %54 = vector.shape_cast %51 : vector<1x128xf32> to vector<1x1x128xf32>
    tpu.vector_store %arg6[%c0_60, %c1_61, %c0_62], %54 {strides = array<i32>} : memref<1x2x128xf32, #tpu.memory_space<vmem>>, vector<1x1x128xf32>,
    %55 = arith.truncf %43 : vector<256x128xf32> to vector<256x128xbf16>
    %c0_63 = arith.constant 0 : index
    %c0_64 = arith.constant 0 : index
    %c0_65 = arith.constant 0 : index
    %56 = vector.load %arg5[%c0_63, %c0_64, %c0_65] : memref<1x256x128xbf16, #tpu.memory_space<vmem>>, vector<1x256x128xbf16>
    %57 = vector.shape_cast %56 : vector<1x256x128xbf16> to vector<256x128xbf16>
    %58 = vector.shape_cast %55 : vector<256x128xbf16> to vector<1x256x128xbf16>
    tpu.vector_store %arg5[%c0_63, %c0_64, %c0_65], %58 {strides = array<i32>} : memref<1x256x128xbf16, #tpu.memory_space<vmem>>, vector<1x256x128xbf16>,
    return
  }
  func.func @transform_0(%arg0: i32) -> (i32, i32, i32) {
    %c0_i32 = arith.constant 0 : i32
    %c0_i32_0 = arith.constant 0 : i32
    %c0_i32_1 = arith.constant 0 : i32
    return %arg0, %c0_i32, %c0_i32_0 : i32, i32, i32
  }
  func.func @transform_1(%arg0: i32) -> (i32, i32) {
    %c0_i32 = arith.constant 0 : i32
    %c0_i32_0 = arith.constant 0 : i32
    %c0_i32_1 = arith.constant 0 : i32
    return %c0_i32, %c0_i32_0 : i32, i32
  }
  func.func @transform_2(%arg0: i32) -> (i32, i32) {
    %c0_i32 = arith.constant 0 : i32
    %c0_i32_0 = arith.constant 0 : i32
    %c0_i32_1 = arith.constant 0 : i32
    return %c0_i32, %c0_i32_0 : i32, i32
  }
  func.func @transform_3(%arg0: i32) -> (i32, i32) {
    %c0_i32 = arith.constant 0 : i32
    %c0_i32_0 = arith.constant 0 : i32
    %c0_i32_1 = arith.constant 0 : i32
    return %c0_i32, %c0_i32_0 : i32, i32
  }
  func.func @transform_4(%arg0: i32) -> (i32, i32, i32) {
    %c0_i32 = arith.constant 0 : i32
    %c0_i32_0 = arith.constant 0 : i32
    %c0_i32_1 = arith.constant 0 : i32
    return %arg0, %c0_i32, %c0_i32_0 : i32, i32, i32
  }
  func.func @transform_5(%arg0: i32) -> (i32, i32, i32) {
    %c0_i32 = arith.constant 0 : i32
    %c0_i32_0 = arith.constant 0 : i32
    %c0_i32_1 = arith.constant 0 : i32
    return %arg0, %c0_i32, %c0_i32_0 : i32, i32, i32
  }
}

module attributes {stable_mosaic.version = 11 : i64} {
  func.func @_stage3_kernel(%arg0: i32, %arg1: memref<1x256x128xbf16, #tpu.memory_space<vmem>>, %arg2: memref<1x256x128xbf16, #tpu.memory_space<vmem>>, %arg3: memref<1x128xf32, #tpu.memory_space<vmem>>, %arg4: memref<1x128xf32, #tpu.memory_space<vmem>>, %arg5: memref<1x128xf32, #tpu.memory_space<vmem>>, %arg6: memref<1x128xf32, #tpu.memory_space<vmem>>, %arg7: memref<1x256x128xbf16, #tpu.memory_space<vmem>>) attributes {dimension_semantics = [#tpu.dimension_semantics<parallel>], iteration_bounds = array<i64: 2>, scalar_prefetch = 0 : i64, scratch_operands = 0 : i64, tpu.core_type = #tpu.core_type<tc>, window_params = [{transform_indices = @transform_0, window_bounds = array<i64: 1, 256, 128>}, {transform_indices = @transform_1, window_bounds = array<i64: 1, 256, 128>}, {pipeline_mode = #tpu.pipeline_mode<synchronous>, transform_indices = @transform_2, window_bounds = array<i64: 1, 128>}, {pipeline_mode = #tpu.pipeline_mode<synchronous>, transform_indices = @transform_3, window_bounds = array<i64: 1, 128>}, {pipeline_mode = #tpu.pipeline_mode<synchronous>, transform_indices = @transform_4, window_bounds = array<i64: 1, 128>}, {pipeline_mode = #tpu.pipeline_mode<synchronous>, transform_indices = @transform_5, window_bounds = array<i64: 1, 128>}, {transform_indices = @transform_6, window_bounds = array<i64: 1, 256, 128>}]} {
    %c0 = arith.constant 0 : index
    %c0_0 = arith.constant 0 : index
    %c0_1 = arith.constant 0 : index
    %0 = vector.load %arg1[%c0, %c0_0, %c0_1] : memref<1x256x128xbf16, #tpu.memory_space<vmem>>, vector<1x256x128xbf16>
    %1 = vector.shape_cast %0 : vector<1x256x128xbf16> to vector<256x128xbf16>
    %2 = arith.extf %1 : vector<256x128xbf16> to vector<256x128xf32>
    %c0_2 = arith.constant 0 : index
    %c0_3 = arith.constant 0 : index
    %c0_4 = arith.constant 0 : index
    %3 = vector.load %arg2[%c0_2, %c0_3, %c0_4] : memref<1x256x128xbf16, #tpu.memory_space<vmem>>, vector<1x256x128xbf16>
    %4 = vector.shape_cast %3 : vector<1x256x128xbf16> to vector<256x128xbf16>
    %5 = arith.extf %4 : vector<256x128xbf16> to vector<256x128xf32>
    %c0_5 = arith.constant 0 : index
    %c0_6 = arith.constant 0 : index
    %6 = vector.load %arg3[%c0_5, %c0_6] : memref<1x128xf32, #tpu.memory_space<vmem>>, vector<1x128xf32>
    %7 = vector.broadcast %6 : vector<1x128xf32> to vector<256x128xf32>
    %8 = arith.mulf %2, %7 : vector<256x128xf32>
    %c0_7 = arith.constant 0 : index
    %c0_8 = arith.constant 0 : index
    %9 = vector.load %arg4[%c0_7, %c0_8] : memref<1x128xf32, #tpu.memory_space<vmem>>, vector<1x128xf32>
    %10 = vector.broadcast %9 : vector<1x128xf32> to vector<256x128xf32>
    %11 = arith.addf %8, %10 : vector<256x128xf32>
    %c0_9 = arith.constant 0 : index
    %c0_10 = arith.constant 0 : index
    %12 = vector.load %arg5[%c0_9, %c0_10] : memref<1x128xf32, #tpu.memory_space<vmem>>, vector<1x128xf32>
    %13 = vector.broadcast %12 : vector<1x128xf32> to vector<256x128xf32>
    %14 = arith.mulf %5, %13 : vector<256x128xf32>
    %c0_11 = arith.constant 0 : index
    %c0_12 = arith.constant 0 : index
    %15 = vector.load %arg6[%c0_11, %c0_12] : memref<1x128xf32, #tpu.memory_space<vmem>>, vector<1x128xf32>
    %16 = vector.broadcast %15 : vector<1x128xf32> to vector<256x128xf32>
    %17 = arith.addf %14, %16 : vector<256x128xf32>
    %18 = arith.addf %11, %17 : vector<256x128xf32>
    %19 = arith.truncf %18 : vector<256x128xf32> to vector<256x128xbf16>
    %c0_13 = arith.constant 0 : index
    %c0_14 = arith.constant 0 : index
    %c0_15 = arith.constant 0 : index
    %20 = vector.load %arg7[%c0_13, %c0_14, %c0_15] : memref<1x256x128xbf16, #tpu.memory_space<vmem>>, vector<1x256x128xbf16>
    %21 = vector.shape_cast %20 : vector<1x256x128xbf16> to vector<256x128xbf16>
    %22 = vector.shape_cast %19 : vector<256x128xbf16> to vector<1x256x128xbf16>
    tpu.vector_store %arg7[%c0_13, %c0_14, %c0_15], %22 {strides = array<i32>} : memref<1x256x128xbf16, #tpu.memory_space<vmem>>, vector<1x256x128xbf16>,
    return
  }
  func.func @transform_0(%arg0: i32) -> (i32, i32, i32) {
    %c0_i32 = arith.constant 0 : i32
    %c0_i32_0 = arith.constant 0 : i32
    %c0_i32_1 = arith.constant 0 : i32
    return %arg0, %c0_i32, %c0_i32_0 : i32, i32, i32
  }
  func.func @transform_1(%arg0: i32) -> (i32, i32, i32) {
    %c0_i32 = arith.constant 0 : i32
    %c0_i32_0 = arith.constant 0 : i32
    %c0_i32_1 = arith.constant 0 : i32
    return %arg0, %c0_i32, %c0_i32_0 : i32, i32, i32
  }
  func.func @transform_2(%arg0: i32) -> (i32, i32) {
    %c0_i32 = arith.constant 0 : i32
    %c0_i32_0 = arith.constant 0 : i32
    %c0_i32_1 = arith.constant 0 : i32
    return %c0_i32, %c0_i32_0 : i32, i32
  }
  func.func @transform_3(%arg0: i32) -> (i32, i32) {
    %c0_i32 = arith.constant 0 : i32
    %c0_i32_0 = arith.constant 0 : i32
    %c0_i32_1 = arith.constant 0 : i32
    return %c0_i32, %c0_i32_0 : i32, i32
  }
  func.func @transform_4(%arg0: i32) -> (i32, i32) {
    %c0_i32 = arith.constant 0 : i32
    %c0_i32_0 = arith.constant 0 : i32
    %c0_i32_1 = arith.constant 0 : i32
    return %c0_i32, %c0_i32_0 : i32, i32
  }
  func.func @transform_5(%arg0: i32) -> (i32, i32) {
    %c0_i32 = arith.constant 0 : i32
    %c0_i32_0 = arith.constant 0 : i32
    %c0_i32_1 = arith.constant 0 : i32
    return %c0_i32, %c0_i32_0 : i32, i32
  }
  func.func @transform_6(%arg0: i32) -> (i32, i32, i32) {
    %c0_i32 = arith.constant 0 : i32
    %c0_i32_0 = arith.constant 0 : i32
    %c0_i32_1 = arith.constant 0 : i32
    return %arg0, %c0_i32, %c0_i32_0 : i32, i32, i32
  }
}

</mosaic_0001>

<llo_original>
// kernel: residual_block_pallas.5
$region0: #{residual_block_pallas.5}
  #allocation0 [shape = 'u32[]', space=smem, size = 0x4, offset = 0x4, fixed_abs, tag = 'smem constant byte address 0x4 - core index']
  #allocation1 [shape = 'u32[144,128]{1,0:T(1,128)}', space=vmem, size = 0x12000, scoped, tag = 'internal scratch']
  %s0 = inlined_call_operand.vmem [shape: bf16[2,256,128], index: 0, kind: input, shape index: {}, may-alias: {0,6}]
  %s1 = inlined_call_operand.vmem [shape: bf16[2,256,128], index: 1, kind: input, shape index: {}]
  %s2 = inlined_call_operand.vmem [shape: f32[1,128], index: 2, kind: input, shape index: {}]
  %s3 = inlined_call_operand.vmem [shape: f32[1,128], index: 3, kind: input, shape index: {}]
  %s4 = inlined_call_operand.vmem [shape: f32[1,128], index: 4, kind: input, shape index: {}]
  %s5 = inlined_call_operand.vmem [shape: f32[1,128], index: 5, kind: input, shape index: {}]
  %s6 = inlined_call_operand.vmem [shape: bf16[2,256,128], index: 6, kind: output, shape index: {}, may-alias: {0,6}]
  %s7 = sld [smem:[#allocation0]]
  $region57: #{residual_block_pallas.5} parent=0
    _
  %s9 = ssub.s32 1, %s7
  %s10 = scalar_select 0, %s9, %s7
  loop: start=0, step=1, limit=4
  $region2: #{residual_block_pallas.5} parent=0 // loop_pre_header
    _
  $region3: #{residual_block_pallas.5} parent=0 // loop_header
    %s12 = sphi 0, %s16
    %p13 = scmp.ge.s32.totalorder %s12, 4
    %s22 = sphi 0, %s24
    %s25 = sphi 0, %s22
    %s26 = sphi 0, %s25
    %s42 = sphi 0, %s26
    %s48 = sphi 0, %s50
    %s51 = sphi 0, %s48
    %s52 = sphi 0, %s51
    %s68 = sphi 0, %s52
    %s72 = sphi 0, %s72
    %s74 = sphi 0, %s72
    %s75 = sphi 0, %s74
    %s89 = sphi 0, %s75
    %s93 = sphi 0, %s93
    %s95 = sphi 0, %s93
    %s96 = sphi 0, %s95
    %s110 = sphi 0, %s96
    %s114 = sphi 0, %s114
    %s116 = sphi 0, %s114
    %s117 = sphi 0, %s116
    %s131 = sphi 0, %s117
    %s135 = sphi 0, %s135
    %s137 = sphi 0, %s135
    %s138 = sphi 0, %s137
    %s152 = sphi 0, %s138
    %s158 = sphi 0, %s160
    %s161 = sphi 0, %s158
    %s162 = sphi 0, %s161
    %s178 = sphi 0, %s162
  $region4: #{residual_block_pallas.5} parent=0 // loop_header_branch
    %15 = sbr.rel (%p13) target = $region8
  $region5: #{residual_block_pallas.5} parent=0 // loop_body
    %s17 = ssub.s32 %s12, 1
    %s18 = ssub.s32 %s12, 2
    %s19 = sadd.s32 %s12, 1
    %s20 = ssub.s32 %s12, %s19
    %p21 = scmp.eq.s32.totalorder %s20, 0
    %s23 = sadd.s32 %s22, 1
    %s24 = scalar_select %p21, %s22, %s23
    %p27 = pneg %p21
    %p28 = scmp.eq.s32.totalorder %s12, 1
    %p29 = por %p27, %p28
    %p30 = scmp.ne.s32.totalorder %s22, %s25
    %p31 = scmp.eq.s32.totalorder %s12, 0
    %p32 = por %p30, %p31
    %p33 = scmp.ne.s32.totalorder %s22, %s25
    %p34 = scmp.eq.s32.totalorder %s17, 1
    %p35 = por %p33, %p34
    %p36 = scmp.ne.s32.totalorder %s25, %s26
    %p37 = scmp.eq.s32.totalorder %s17, 0
    %p38 = por %p36, %p37
    %p39 = scmp.ne.s32.totalorder %s25, %s26
    %p40 = scmp.eq.s32.totalorder %s18, 1
    %p41 = por %p39, %p40
    %p43 = scmp.ne.s32.totalorder %s26, %s42
    %p44 = scmp.eq.s32.totalorder %s18, 0
    %p45 = por %p43, %p44
    %s46 = ssub.s32 %s12, %s19
    %p47 = scmp.eq.s32.totalorder %s46, 0
    %s49 = sadd.s32 %s48, 1
    %s50 = scalar_select %p47, %s48, %s49
    %p53 = pneg %p47
    %p54 = scmp.eq.s32.totalorder %s12, 1
    %p55 = por %p53, %p54
    %p56 = scmp.ne.s32.totalorder %s48, %s51
    %p57 = scmp.eq.s32.totalorder %s12, 0
    %p58 = por %p56, %p57
    %p59 = scmp.ne.s32.totalorder %s48, %s51
    %p60 = scmp.eq.s32.totalorder %s17, 1
    %p61 = por %p59, %p60
    %p62 = scmp.ne.s32.totalorder %s51, %s52
    %p63 = scmp.eq.s32.totalorder %s17, 0
    %p64 = por %p62, %p63
    %p65 = scmp.ne.s32.totalorder %s51, %s52
    %p66 = scmp.eq.s32.totalorder %s18, 1
    %p67 = por %p65, %p66
    %p69 = scmp.ne.s32.totalorder %s52, %s68
    %p70 = scmp.eq.s32.totalorder %s18, 0
    %p71 = por %p69, %p70
    %s73 = sadd.s32 %s72, 1
    %p76 = scmp.eq.s32.totalorder %s12, 1
    %p77 = scmp.ne.s32.totalorder %s72, %s74
    %p78 = scmp.eq.s32.totalorder %s12, 0
    %p79 = por %p77, %p78
    %p80 = scmp.ne.s32.totalorder %s72, %s74
    %p81 = scmp.eq.s32.totalorder %s17, 1
    %p82 = por %p80, %p81
    %p83 = scmp.ne.s32.totalorder %s74, %s75
    %p84 = scmp.eq.s32.totalorder %s17, 0
    %p85 = por %p83, %p84
    %p86 = scmp.ne.s32.totalorder %s74, %s75
    %p87 = scmp.eq.s32.totalorder %s18, 1
    %p88 = por %p86, %p87
    %p90 = scmp.ne.s32.totalorder %s75, %s89
    %p91 = scmp.eq.s32.totalorder %s18, 0
    %p92 = por %p90, %p91
    %s94 = sadd.s32 %s93, 1
    %p97 = scmp.eq.s32.totalorder %s12, 1
    %p98 = scmp.ne.s32.totalorder %s93, %s95
    %p99 = scmp.eq.s32.totalorder %s12, 0
    %p100 = por %p98, %p99
    %p101 = scmp.ne.s32.totalorder %s93, %s95
    %p102 = scmp.eq.s32.totalorder %s17, 1
    %p103 = por %p101, %p102
    %p104 = scmp.ne.s32.totalorder %s95, %s96
    %p105 = scmp.eq.s32.totalorder %s17, 0
    %p106 = por %p104, %p105
    %p107 = scmp.ne.s32.totalorder %s95, %s96
    %p108 = scmp.eq.s32.totalorder %s18, 1
    %p109 = por %p107, %p108
    %p111 = scmp.ne.s32.totalorder %s96, %s110
    %p112 = scmp.eq.s32.totalorder %s18, 0
    %p113 = por %p111, %p112
    %s115 = sadd.s32 %s114, 1
    %p118 = scmp.eq.s32.totalorder %s12, 1
    %p119 = scmp.ne.s32.totalorder %s114, %s116
    %p120 = scmp.eq.s32.totalorder %s12, 0
    %p121 = por %p119, %p120
    %p122 = scmp.ne.s32.totalorder %s114, %s116
    %p123 = scmp.eq.s32.totalorder %s17, 1
    %p124 = por %p122, %p123
    %p125 = scmp.ne.s32.totalorder %s116, %s117
    %p126 = scmp.eq.s32.totalorder %s17, 0
    %p127 = por %p125, %p126
    %p128 = scmp.ne.s32.totalorder %s116, %s117
    %p129 = scmp.eq.s32.totalorder %s18, 1
    %p130 = por %p128, %p129
    %p132 = scmp.ne.s32.totalorder %s117, %s131
    %p133 = scmp.eq.s32.totalorder %s18, 0
    %p134 = por %p132, %p133
    %s136 = sadd.s32 %s135, 1
    %p139 = scmp.eq.s32.totalorder %s12, 1
    %p140 = scmp.ne.s32.totalorder %s135, %s137
    %p141 = scmp.eq.s32.totalorder %s12, 0
    %p142 = por %p140, %p141
    %p143 = scmp.ne.s32.totalorder %s135, %s137
    %p144 = scmp.eq.s32.totalorder %s17, 1
    %p145 = por %p143, %p144
    %p146 = scmp.ne.s32.totalorder %s137, %s138
    %p147 = scmp.eq.s32.totalorder %s17, 0
    %p148 = por %p146, %p147
    %p149 = scmp.ne.s32.totalorder %s137, %s138
    %p150 = scmp.eq.s32.totalorder %s18, 1
    %p151 = por %p149, %p150
    %p153 = scmp.ne.s32.totalorder %s138, %s152
    %p154 = scmp.eq.s32.totalorder %s18, 0
    %p155 = por %p153, %p154
    %s156 = ssub.s32 %s12, %s19
    %p157 = scmp.eq.s32.totalorder %s156, 0
    %s159 = sadd.s32 %s158, 1
    %s160 = scalar_select %p157, %s158, %s159
    %p163 = pneg %p157
    %p164 = scmp.eq.s32.totalorder %s12, 1
    %p165 = por %p163, %p164
    %p166 = scmp.ne.s32.totalorder %s158, %s161
    %p167 = scmp.eq.s32.totalorder %s12, 0
    %p168 = por %p166, %p167
    %p169 = scmp.ne.s32.totalorder %s158, %s161
    %p170 = scmp.eq.s32.totalorder %s17, 1
    %p171 = por %p169, %p170
    %p172 = scmp.ne.s32.totalorder %s161, %s162
    %p173 = scmp.eq.s32.totalorder %s17, 0
    %p174 = por %p172, %p173
    %p175 = scmp.ne.s32.totalorder %s161, %s162
    %p176 = scmp.eq.s32.totalorder %s18, 1
    %p177 = por %p175, %p176
    %p179 = scmp.ne.s32.totalorder %s162, %s178
    %p180 = scmp.eq.s32.totalorder %s18, 0
    %p181 = por %p179, %p180
    %p182 = scmp.le.s32.totalorder 1, %s12
    %p183 = scmp.lt.s32.totalorder %s12, 3
    %p184 = pnand %p182, %p183
    %p185 = pneg %p184
    // Predicated region
    $region9: #{residual_block_pallas.5} parent=5 // pred_check
      _
    $region10: #{residual_block_pallas.5} parent=5 // pred_check_branch
      %187 = sbr.rel (%p184) target = $region12
    $region11: #{residual_block_pallas.5} parent=5 // pred_region
      %s188 = ssub.s32 %s12, 1
      // Predicated region
      $region13: #{residual_block_pallas.5} parent=11 // pred_check
        %p189 = pneg %p85
      $region14: #{residual_block_pallas.5} parent=11 // pred_check_branch
        %191 = sbr.rel (%p189) target = $region16
      $region15: #{residual_block_pallas.5} parent=11 // pred_region
        _
      $region16: #{residual_block_pallas.5} parent=11 // pred_fallthru
        _
      // Predicated region
      $region17: #{residual_block_pallas.5} parent=11 // pred_check
        %p192 = pneg %p106
      $region18: #{residual_block_pallas.5} parent=11 // pred_check_branch
        %194 = sbr.rel (%p192) target = $region20
      $region19: #{residual_block_pallas.5} parent=11 // pred_region
        _
      $region20: #{residual_block_pallas.5} parent=11 // pred_fallthru
        _
      // Predicated region
      $region21: #{residual_block_pallas.5} parent=11 // pred_check
        %p195 = pneg %p127
      $region22: #{residual_block_pallas.5} parent=11 // pred_check_branch
        %197 = sbr.rel (%p195) target = $region24
      $region23: #{residual_block_pallas.5} parent=11 // pred_region
        _
      $region24: #{residual_block_pallas.5} parent=11 // pred_fallthru
        _
      // Predicated region
      $region25: #{residual_block_pallas.5} parent=11 // pred_check
        %p198 = pneg %p148
      $region26: #{residual_block_pallas.5} parent=11 // pred_check_branch
        %200 = sbr.rel (%p198) target = $region28
      $region27: #{residual_block_pallas.5} parent=11 // pred_region
        _
      $region28: #{residual_block_pallas.5} parent=11 // pred_fallthru
        _
    $region12: #{residual_block_pallas.5} parent=5 // pred_fallthru
      _
    %p201 = scmp.lt.s32.totalorder %s12, 2
    // Predicated region
    $region29: #{residual_block_pallas.5} parent=5 // pred_check
      %p202 = pneg %p201
    $region30: #{residual_block_pallas.5} parent=5 // pred_check_branch
      %204 = sbr.rel (%p202) target = $region32
    $region31: #{residual_block_pallas.5} parent=5 // pred_region
      // Predicated region
      $region33: #{residual_block_pallas.5} parent=31 // pred_check
        %p205 = pneg %p32
      $region34: #{residual_block_pallas.5} parent=31 // pred_check_branch
        %207 = sbr.rel (%p205) target = $region36
      $region35: #{residual_block_pallas.5} parent=31 // pred_region
        %p208 = scmp.lt.s32.totalorder %s12, 1
        %s209 = scalar_select %p208, %s12, 1
        %s210 = smul.addr %s209, 32
        %s211 = smul.addr %s210, 4
        %s212 = scalar_lea.vmem %s0, %s211
      $region36: #{residual_block_pallas.5} parent=31 // pred_fallthru
        _
      // Predicated region
      $region37: #{residual_block_pallas.5} parent=31 // pred_check
        %p213 = pneg %p58
      $region38: #{residual_block_pallas.5} parent=31 // pred_check_branch
        %215 = sbr.rel (%p213) target = $region40
      $region39: #{residual_block_pallas.5} parent=31 // pred_region
        %p216 = scmp.lt.s32.totalorder %s12, 1
        %s217 = scalar_select %p216, %s12, 1
        %s218 = smul.addr %s217, 32
        %s219 = smul.addr %s218, 4
        %s220 = scalar_lea.vmem %s1, %s219
      $region40: #{residual_block_pallas.5} parent=31 // pred_fallthru
        _
    $region32: #{residual_block_pallas.5} parent=5 // pred_fallthru
      _
    %p221 = scmp.le.s32.totalorder 1, %s12
    %p222 = scmp.lt.s32.totalorder %s12, 3
    %p223 = pnand %p221, %p222
    %p224 = pneg %p223
    // Predicated region
    $region41: #{residual_block_pallas.5} parent=5 // pred_check
      _
    $region42: #{residual_block_pallas.5} parent=5 // pred_check_branch
      %226 = sbr.rel (%p223) target = $region44
    $region43: #{residual_block_pallas.5} parent=5 // pred_region
      %s227 = ssub.s32 %s12, 1
      %p228 = scmp.lt.s32.totalorder %s17, 1
      %s229 = scalar_select %p228, %s17, 1
      %s230 = smul.addr %s229, 32
      %s231 = smul.addr %s230, 4
      %s232 = scalar_lea.vmem %s0, %s231
      %p233 = pneg %p38
      %p234 = pneg %p35
      %p235 = scmp.lt.s32.totalorder %s17, 1
      %s236 = scalar_select %p235, %s17, 1
      %s237 = smul.addr %s236, 32
      %s238 = smul.addr %s237, 4
      %s239 = scalar_lea.vmem %s1, %s238
      %p240 = pneg %p64
      %p241 = pneg %p61
      %p242 = pneg %p85
      %p243 = pneg %p82
      %p244 = pneg %p106
      %p245 = pneg %p103
      %p246 = pneg %p127
      %p247 = pneg %p124
      %p248 = pneg %p148
      %p249 = pneg %p145
      %p250 = pneg %p174
      %p251 = pneg %p171
      %p252 = scmp.lt.s32.totalorder %s17, 1
      %s253 = scalar_select %p252, %s17, 1
      %s254 = smul.addr %s253, 32
      %s255 = smul.addr %s254, 4
      %s256 = scalar_lea.vmem %s6, %s255
      %p257 = scmp.lt.s32.totalorder %s17, 1
      %s258 = scalar_select %p257, %s17, 1
      %s259 = smul.addr %s258, 32
      %s260 = smul.addr %s259, 4
      %s261 = scalar_lea.vmem %s0, %s260
      %p262 = scmp.lt.s32.totalorder %s17, 1
      %s263 = scalar_select %p262, %s17, 1
      %s264 = smul.addr %s263, 32
      %s265 = smul.addr %s264, 4
      %s266 = scalar_lea.vmem %s1, %s265
      %p267 = scmp.lt.s32.totalorder %s17, 1
      %s268 = scalar_select %p267, %s17, 1
      %s269 = smul.addr %s268, 32
      %s270 = smul.addr %s269, 4
      %s271 = scalar_lea.vmem %s6, %s270
      %v272 = vld [vmem:[%s261] sm:$0xf]
      %v273 = vld [vmem:[%s261 + $0x4] sm:$0xf]
      %v274 = vld [vmem:[%s261 + $0x8] sm:$0xf]
      %v275 = vld [vmem:[%s261 + $0xc] sm:$0xf]
      %v276 = vld [vmem:[%s261 + $0x10] sm:$0xf]
      %v277 = vld [vmem:[%s261 + $0x14] sm:$0xf]
      %v278 = vld [vmem:[%s261 + $0x18] sm:$0xf]
      %v279 = vld [vmem:[%s261 + $0x1c] sm:$0xf]
      %v280 = vld [vmem:[%s261 + $0x20] sm:$0xf]
      %v281 = vld [vmem:[%s261 + $0x24] sm:$0xf]
      %v282 = vld [vmem:[%s261 + $0x28] sm:$0xf]
      %v283 = vld [vmem:[%s261 + $0x2c] sm:$0xf]
      %v284 = vld [vmem:[%s261 + $0x30] sm:$0xf]
      %v285 = vld [vmem:[%s261 + $0x34] sm:$0xf]
      %v286 = vld [vmem:[%s261 + $0x38] sm:$0xf]
      %v287 = vld [vmem:[%s261 + $0x3c] sm:$0xf]
      %v288 = vld [vmem:[%s261 + $0x40] sm:$0xf]
      %v289 = vld [vmem:[%s261 + $0x44] sm:$0xf]
      %v290 = vld [vmem:[%s261 + $0x48] sm:$0xf]
      %v291 = vld [vmem:[%s261 + $0x4c] sm:$0xf]
      %v292 = vld [vmem:[%s261 + $0x50] sm:$0xf]
      %v293 = vld [vmem:[%s261 + $0x54] sm:$0xf]
      %v294 = vld [vmem:[%s261 + $0x58] sm:$0xf]
      %v295 = vld [vmem:[%s261 + $0x5c] sm:$0xf]
      %v296 = vld [vmem:[%s261 + $0x60] sm:$0xf]
      %v297 = vld [vmem:[%s261 + $0x64] sm:$0xf]
      %v298 = vld [vmem:[%s261 + $0x68] sm:$0xf]
      %v299 = vld [vmem:[%s261 + $0x6c] sm:$0xf]
      %v300 = vld [vmem:[%s261 + $0x70] sm:$0xf]
      %v301 = vld [vmem:[%s261 + $0x74] sm:$0xf]
      %v302 = vld [vmem:[%s261 + $0x78] sm:$0xf]
      %v303 = vld [vmem:[%s261 + $0x7c] sm:$0xf]
      %v304 = vunpack.c.l.bf16 %v272
      %v305 = vunpack.c.l.bf16 %v273
      %v306 = vunpack.c.l.bf16 %v274
      %v307 = vunpack.c.l.bf16 %v275
      %v308 = vunpack.c.l.bf16 %v276
      %v309 = vunpack.c.l.bf16 %v277
      %v310 = vunpack.c.l.bf16 %v278
      %v311 = vunpack.c.l.bf16 %v279
      %v312 = vunpack.c.l.bf16 %v280
      %v313 = vunpack.c.l.bf16 %v281
      %v314 = vunpack.c.l.bf16 %v282
      %v315 = vunpack.c.l.bf16 %v283
      %v316 = vunpack.c.l.bf16 %v284
      %v317 = vunpack.c.l.bf16 %v285
      %v318 = vunpack.c.l.bf16 %v286
      %v319 = vunpack.c.l.bf16 %v287
      %v320 = vunpack.c.l.bf16 %v288
      %v321 = vunpack.c.l.bf16 %v289
      %v322 = vunpack.c.l.bf16 %v290
      %v323 = vunpack.c.l.bf16 %v291
      %v324 = vunpack.c.l.bf16 %v292
      %v325 = vunpack.c.l.bf16 %v293
      %v326 = vunpack.c.l.bf16 %v294
      %v327 = vunpack.c.l.bf16 %v295
      %v328 = vunpack.c.l.bf16 %v296
      %v329 = vunpack.c.l.bf16 %v297
      %v330 = vunpack.c.l.bf16 %v298
      %v331 = vunpack.c.l.bf16 %v299
      %v332 = vunpack.c.l.bf16 %v300
      %v333 = vunpack.c.l.bf16 %v301
      %v334 = vunpack.c.l.bf16 %v302
      %v335 = vunpack.c.l.bf16 %v303
      %v336 = vld [vmem:[%s266] sm:$0xf]
      %v337 = vld [vmem:[%s266 + $0x4] sm:$0xf]
      %v338 = vld [vmem:[%s266 + $0x8] sm:$0xf]
      %v339 = vld [vmem:[%s266 + $0xc] sm:$0xf]
      %v340 = vld [vmem:[%s266 + $0x10] sm:$0xf]
      %v341 = vld [vmem:[%s266 + $0x14] sm:$0xf]
      %v342 = vld [vmem:[%s266 + $0x18] sm:$0xf]
      %v343 = vld [vmem:[%s266 + $0x1c] sm:$0xf]
      %v344 = vld [vmem:[%s266 + $0x20] sm:$0xf]
      %v345 = vld [vmem:[%s266 + $0x24] sm:$0xf]
      %v346 = vld [vmem:[%s266 + $0x28] sm:$0xf]
      %v347 = vld [vmem:[%s266 + $0x2c] sm:$0xf]
      %v348 = vld [vmem:[%s266 + $0x30] sm:$0xf]
      %v349 = vld [vmem:[%s266 + $0x34] sm:$0xf]
      %v350 = vld [vmem:[%s266 + $0x38] sm:$0xf]
      %v351 = vld [vmem:[%s266 + $0x3c] sm:$0xf]
      %v352 = vld [vmem:[%s266 + $0x40] sm:$0xf]
      %v353 = vld [vmem:[%s266 + $0x44] sm:$0xf]
      %v354 = vld [vmem:[%s266 + $0x48] sm:$0xf]
      %v355 = vld [vmem:[%s266 + $0x4c] sm:$0xf]
      %v356 = vld [vmem:[%s266 + $0x50] sm:$0xf]
      %v357 = vld [vmem:[%s266 + $0x54] sm:$0xf]
      %v358 = vld [vmem:[%s266 + $0x58] sm:$0xf]
      %v359 = vld [vmem:[%s266 + $0x5c] sm:$0xf]
      %v360 = vld [vmem:[%s266 + $0x60] sm:$0xf]
      %v361 = vld [vmem:[%s266 + $0x64] sm:$0xf]
      %v362 = vld [vmem:[%s266 + $0x68] sm:$0xf]
      %v363 = vld [vmem:[%s266 + $0x6c] sm:$0xf]
      %v364 = vld [vmem:[%s266 + $0x70] sm:$0xf]
      %v365 = vld [vmem:[%s266 + $0x74] sm:$0xf]
      %v366 = vld [vmem:[%s266 + $0x78] sm:$0xf]
      %v367 = vld [vmem:[%s266 + $0x7c] sm:$0xf]
      %v368 = vunpack.c.l.bf16 %v336
      %v369 = vunpack.c.l.bf16 %v337
      %v370 = vunpack.c.l.bf16 %v338
      %v371 = vunpack.c.l.bf16 %v339
      %v372 = vunpack.c.l.bf16 %v340
      %v373 = vunpack.c.l.bf16 %v341
      %v374 = vunpack.c.l.bf16 %v342
      %v375 = vunpack.c.l.bf16 %v343
      %v376 = vunpack.c.l.bf16 %v344
      %v377 = vunpack.c.l.bf16 %v345
      %v378 = vunpack.c.l.bf16 %v346
      %v379 = vunpack.c.l.bf16 %v347
      %v380 = vunpack.c.l.bf16 %v348
      %v381 = vunpack.c.l.bf16 %v349
      %v382 = vunpack.c.l.bf16 %v350
      %v383 = vunpack.c.l.bf16 %v351
      %v384 = vunpack.c.l.bf16 %v352
      %v385 = vunpack.c.l.bf16 %v353
      %v386 = vunpack.c.l.bf16 %v354
      %v387 = vunpack.c.l.bf16 %v355
      %v388 = vunpack.c.l.bf16 %v356
      %v389 = vunpack.c.l.bf16 %v357
      %v390 = vunpack.c.l.bf16 %v358
      %v391 = vunpack.c.l.bf16 %v359
      %v392 = vunpack.c.l.bf16 %v360
      %v393 = vunpack.c.l.bf16 %v361
      %v394 = vunpack.c.l.bf16 %v362
      %v395 = vunpack.c.l.bf16 %v363
      %v396 = vunpack.c.l.bf16 %v364
      %v397 = vunpack.c.l.bf16 %v365
      %v398 = vunpack.c.l.bf16 %v366
      %v399 = vunpack.c.l.bf16 %v367
      %v400 = vld [vmem:[%s2] sm:$0x1]
      %v402 = vlaneseq
      %v403 = vshrl.u32 %v402, 7
      %v404 = vsub.s32 0, %v403
      %v405 = vrot.slane %v400, %v404
      %v407 = vmul.f32 %v304, %v405
      %v408 = vmul.f32 %v305, %v405
      %v409 = vmul.f32 %v306, %v405
      %v410 = vmul.f32 %v307, %v405
      %v411 = vmul.f32 %v308, %v405
      %v412 = vmul.f32 %v309, %v405
      %v413 = vmul.f32 %v310, %v405
      %v414 = vmul.f32 %v311, %v405
      %v415 = vmul.f32 %v312, %v405
      %v416 = vmul.f32 %v313, %v405
      %v417 = vmul.f32 %v314, %v405
      %v418 = vmul.f32 %v315, %v405
      %v419 = vmul.f32 %v316, %v405
      %v420 = vmul.f32 %v317, %v405
      %v421 = vmul.f32 %v318, %v405
      %v422 = vmul.f32 %v319, %v405
      %v423 = vmul.f32 %v320, %v405
      %v424 = vmul.f32 %v321, %v405
      %v425 = vmul.f32 %v322, %v405
      %v426 = vmul.f32 %v323, %v405
      %v427 = vmul.f32 %v324, %v405
      %v428 = vmul.f32 %v325, %v405
      %v429 = vmul.f32 %v326, %v405
      %v430 = vmul.f32 %v327, %v405
      %v431 = vmul.f32 %v328, %v405
      %v432 = vmul.f32 %v329, %v405
      %v433 = vmul.f32 %v330, %v405
      %v434 = vmul.f32 %v331, %v405
      %v435 = vmul.f32 %v332, %v405
      %v436 = vmul.f32 %v333, %v405
      %v437 = vmul.f32 %v334, %v405
      %v438 = vmul.f32 %v335, %v405
      %v439 = vld [vmem:[%s3] sm:$0x1]
      %v441 = vlaneseq
      %v442 = vshrl.u32 %v441, 7
      %v443 = vsub.s32 0, %v442
      %v444 = vrot.slane %v439, %v443
      %v446 = vadd.f32 %v407, %v444
      %v447 = vadd.f32 %v408, %v444
      %v448 = vadd.f32 %v409, %v444
      %v449 = vadd.f32 %v410, %v444
      %v450 = vadd.f32 %v411, %v444
      %v451 = vadd.f32 %v412, %v444
      %v452 = vadd.f32 %v413, %v444
      %v453 = vadd.f32 %v414, %v444
      %v454 = vadd.f32 %v415, %v444
      %v455 = vadd.f32 %v416, %v444
      %v456 = vadd.f32 %v417, %v444
      %v457 = vadd.f32 %v418, %v444
      %v458 = vadd.f32 %v419, %v444
      %v459 = vadd.f32 %v420, %v444
      %v460 = vadd.f32 %v421, %v444
      %v461 = vadd.f32 %v422, %v444
      %v462 = vadd.f32 %v423, %v444
      %v463 = vadd.f32 %v424, %v444
      %v464 = vadd.f32 %v425, %v444
      %v465 = vadd.f32 %v426, %v444
      %v466 = vadd.f32 %v427, %v444
      %v467 = vadd.f32 %v428, %v444
      %v468 = vadd.f32 %v429, %v444
      %v469 = vadd.f32 %v430, %v444
      %v470 = vadd.f32 %v431, %v444
      %v471 = vadd.f32 %v432, %v444
      %v472 = vadd.f32 %v433, %v444
      %v473 = vadd.f32 %v434, %v444
      %v474 = vadd.f32 %v435, %v444
      %v475 = vadd.f32 %v436, %v444
      %v476 = vadd.f32 %v437, %v444
      %v477 = vadd.f32 %v438, %v444
      %v478 = vld [vmem:[%s4] sm:$0x1]
      %v480 = vlaneseq
      %v481 = vshrl.u32 %v480, 7
      %v482 = vsub.s32 0, %v481
      %v483 = vrot.slane %v478, %v482
      %v485 = vmul.f32 %v368, %v483
      %v486 = vmul.f32 %v369, %v483
      %v487 = vmul.f32 %v370, %v483
      %v488 = vmul.f32 %v371, %v483
      %v489 = vmul.f32 %v372, %v483
      %v490 = vmul.f32 %v373, %v483
      %v491 = vmul.f32 %v374, %v483
      %v492 = vmul.f32 %v375, %v483
      %v493 = vmul.f32 %v376, %v483
      %v494 = vmul.f32 %v377, %v483
      %v495 = vmul.f32 %v378, %v483
      %v496 = vmul.f32 %v379, %v483
      %v497 = vmul.f32 %v380, %v483
      %v498 = vmul.f32 %v381, %v483
      %v499 = vmul.f32 %v382, %v483
      %v500 = vmul.f32 %v383, %v483
      %v501 = vmul.f32 %v384, %v483
      %v502 = vmul.f32 %v385, %v483
      %v503 = vmul.f32 %v386, %v483
      %v504 = vmul.f32 %v387, %v483
      %v505 = vmul.f32 %v388, %v483
      %v506 = vmul.f32 %v389, %v483
      %v507 = vmul.f32 %v390, %v483
      %v508 = vmul.f32 %v391, %v483
      %v509 = vmul.f32 %v392, %v483
      %v510 = vmul.f32 %v393, %v483
      %v511 = vmul.f32 %v394, %v483
      %v512 = vmul.f32 %v395, %v483
      %v513 = vmul.f32 %v396, %v483
      %v514 = vmul.f32 %v397, %v483
      %v515 = vmul.f32 %v398, %v483
      %v516 = vmul.f32 %v399, %v483
      %v517 = vld [vmem:[%s5] sm:$0x1]
      %v519 = vlaneseq
      %v520 = vshrl.u32 %v519, 7
      %v521 = vsub.s32 0, %v520
      %v522 = vrot.slane %v517, %v521
      %v524 = vadd.f32 %v485, %v522
      %v525 = vadd.f32 %v486, %v522
      %v526 = vadd.f32 %v487, %v522
      %v527 = vadd.f32 %v488, %v522
      %v528 = vadd.f32 %v489, %v522
      %v529 = vadd.f32 %v490, %v522
      %v530 = vadd.f32 %v491, %v522
      %v531 = vadd.f32 %v492, %v522
      %v532 = vadd.f32 %v493, %v522
      %v533 = vadd.f32 %v494, %v522
      %v534 = vadd.f32 %v495, %v522
      %v535 = vadd.f32 %v496, %v522
      %v536 = vadd.f32 %v497, %v522
      %v537 = vadd.f32 %v498, %v522
      %v538 = vadd.f32 %v499, %v522
      %v539 = vadd.f32 %v500, %v522
      %v540 = vadd.f32 %v501, %v522
      %v541 = vadd.f32 %v502, %v522
      %v542 = vadd.f32 %v503, %v522
      %v543 = vadd.f32 %v504, %v522
      %v544 = vadd.f32 %v505, %v522
      %v545 = vadd.f32 %v506, %v522
      %v546 = vadd.f32 %v507, %v522
      %v547 = vadd.f32 %v508, %v522
      %v548 = vadd.f32 %v509, %v522
      %v549 = vadd.f32 %v510, %v522
      %v550 = vadd.f32 %v511, %v522
      %v551 = vadd.f32 %v512, %v522
      %v552 = vadd.f32 %v513, %v522
      %v553 = vadd.f32 %v514, %v522
      %v554 = vadd.f32 %v515, %v522
      %v555 = vadd.f32 %v516, %v522
      %v556 = vadd.f32 %v446, %v524
      %v557 = vadd.f32 %v447, %v525
      %v558 = vadd.f32 %v448, %v526
      %v559 = vadd.f32 %v449, %v527
      %v560 = vadd.f32 %v450, %v528
      %v561 = vadd.f32 %v451, %v529
      %v562 = vadd.f32 %v452, %v530
      %v563 = vadd.f32 %v453, %v531
      %v564 = vadd.f32 %v454, %v532
      %v565 = vadd.f32 %v455, %v533
      %v566 = vadd.f32 %v456, %v534
      %v567 = vadd.f32 %v457, %v535
      %v568 = vadd.f32 %v458, %v536
      %v569 = vadd.f32 %v459, %v537
      %v570 = vadd.f32 %v460, %v538
      %v571 = vadd.f32 %v461, %v539
      %v572 = vadd.f32 %v462, %v540
      %v573 = vadd.f32 %v463, %v541
      %v574 = vadd.f32 %v464, %v542
      %v575 = vadd.f32 %v465, %v543
      %v576 = vadd.f32 %v466, %v544
      %v577 = vadd.f32 %v467, %v545
      %v578 = vadd.f32 %v468, %v546
      %v579 = vadd.f32 %v469, %v547
      %v580 = vadd.f32 %v470, %v548
      %v581 = vadd.f32 %v471, %v549
      %v582 = vadd.f32 %v472, %v550
      %v583 = vadd.f32 %v473, %v551
      %v584 = vadd.f32 %v474, %v552
      %v585 = vadd.f32 %v475, %v553
      %v586 = vadd.f32 %v476, %v554
      %v587 = vadd.f32 %v477, %v555
      %v588 = vpack.c.bf16 %v557, %v556
      %v589 = vpack.c.bf16 %v559, %v558
      %v590 = vpack.c.bf16 %v561, %v560
      %v591 = vpack.c.bf16 %v563, %v562
      %v592 = vpack.c.bf16 %v565, %v564
      %v593 = vpack.c.bf16 %v567, %v566
      %v594 = vpack.c.bf16 %v569, %v568
      %v595 = vpack.c.bf16 %v571, %v570
      %v596 = vpack.c.bf16 %v573, %v572
      %v597 = vpack.c.bf16 %v575, %v574
      %v598 = vpack.c.bf16 %v577, %v576
      %v599 = vpack.c.bf16 %v579, %v578
      %v600 = vpack.c.bf16 %v581, %v580
      %v601 = vpack.c.bf16 %v583, %v582
      %v602 = vpack.c.bf16 %v585, %v584
      %v603 = vpack.c.bf16 %v587, %v586
      %v620 = vunpack.c.l.b16 %v588
      %v621 = vunpack.c.h.b16 %v588
      %v622 = vunpack.c.l.b16 %v589
      %v623 = vunpack.c.h.b16 %v589
      %v624 = vunpack.c.l.b16 %v590
      %v625 = vunpack.c.h.b16 %v590
      %v626 = vunpack.c.l.b16 %v591
      %v627 = vunpack.c.h.b16 %v591
      %v628 = vunpack.c.l.b16 %v592
      %v629 = vunpack.c.h.b16 %v592
      %v630 = vunpack.c.l.b16 %v593
      %v631 = vunpack.c.h.b16 %v593
      %v632 = vunpack.c.l.b16 %v594
      %v633 = vunpack.c.h.b16 %v594
      %v634 = vunpack.c.l.b16 %v595
      %v635 = vunpack.c.h.b16 %v595
      %v636 = vunpack.c.l.b16 %v596
      %v637 = vunpack.c.h.b16 %v596
      %v638 = vunpack.c.l.b16 %v597
      %v639 = vunpack.c.h.b16 %v597
      %v640 = vunpack.c.l.b16 %v598
      %v641 = vunpack.c.h.b16 %v598
      %v642 = vunpack.c.l.b16 %v599
      %v643 = vunpack.c.h.b16 %v599
      %v644 = vunpack.c.l.b16 %v600
      %v645 = vunpack.c.h.b16 %v600
      %v646 = vunpack.c.l.b16 %v601
      %v647 = vunpack.c.h.b16 %v601
      %v648 = vunpack.c.l.b16 %v602
      %v649 = vunpack.c.h.b16 %v602
      %v650 = vunpack.c.l.b16 %v603
      %v651 = vunpack.c.h.b16 %v603
      %v652 = vpack.c.b16 %v620, %v620
      %v653 = vpack.c.b16 %v621, %v621
      %v654 = vpack.c.b16 %v622, %v622
      %v655 = vpack.c.b16 %v623, %v623
      %v656 = vpack.c.b16 %v624, %v624
      %v657 = vpack.c.b16 %v625, %v625
      %v658 = vpack.c.b16 %v626, %v626
      %v659 = vpack.c.b16 %v627, %v627
      %v660 = vpack.c.b16 %v628, %v628
      %v661 = vpack.c.b16 %v629, %v629
      %v662 = vpack.c.b16 %v630, %v630
      %v663 = vpack.c.b16 %v631, %v631
      %v664 = vpack.c.b16 %v632, %v632
      %v665 = vpack.c.b16 %v633, %v633
      %v666 = vpack.c.b16 %v634, %v634
      %v667 = vpack.c.b16 %v635, %v635
      %v668 = vpack.c.b16 %v636, %v636
      %v669 = vpack.c.b16 %v637, %v637
      %v670 = vpack.c.b16 %v638, %v638
      %v671 = vpack.c.b16 %v639, %v639
      %v672 = vpack.c.b16 %v640, %v640
      %v673 = vpack.c.b16 %v641, %v641
      %v674 = vpack.c.b16 %v642, %v642
      %v675 = vpack.c.b16 %v643, %v643
      %v676 = vpack.c.b16 %v644, %v644
      %v677 = vpack.c.b16 %v645, %v645
      %v678 = vpack.c.b16 %v646, %v646
      %v679 = vpack.c.b16 %v647, %v647
      %v680 = vpack.c.b16 %v648, %v648
      %v681 = vpack.c.b16 %v649, %v649
      %v682 = vpack.c.b16 %v650, %v650
      %v683 = vpack.c.b16 %v651, %v651
      %716 = vst [vmem:[%s271] sm:$0xf] %v652
      %717 = vst [vmem:[%s271 + $0x4] sm:$0xf] %v653
      %718 = vst [vmem:[%s271 + $0x8] sm:$0xf] %v654
      %719 = vst [vmem:[%s271 + $0xc] sm:$0xf] %v655
      %720 = vst [vmem:[%s271 + $0x10] sm:$0xf] %v656
      %721 = vst [vmem:[%s271 + $0x14] sm:$0xf] %v657
      %722 = vst [vmem:[%s271 + $0x18] sm:$0xf] %v658
      %723 = vst [vmem:[%s271 + $0x1c] sm:$0xf] %v659
      %724 = vst [vmem:[%s271 + $0x20] sm:$0xf] %v660
      %725 = vst [vmem:[%s271 + $0x24] sm:$0xf] %v661
      %726 = vst [vmem:[%s271 + $0x28] sm:$0xf] %v662
      %727 = vst [vmem:[%s271 + $0x2c] sm:$0xf] %v663
      %728 = vst [vmem:[%s271 + $0x30] sm:$0xf] %v664
      %729 = vst [vmem:[%s271 + $0x34] sm:$0xf] %v665
      %730 = vst [vmem:[%s271 + $0x38] sm:$0xf] %v666
      %731 = vst [vmem:[%s271 + $0x3c] sm:$0xf] %v667
      %732 = vst [vmem:[%s271 + $0x40] sm:$0xf] %v668
      %733 = vst [vmem:[%s271 + $0x44] sm:$0xf] %v669
      %734 = vst [vmem:[%s271 + $0x48] sm:$0xf] %v670
      %735 = vst [vmem:[%s271 + $0x4c] sm:$0xf] %v671
      %736 = vst [vmem:[%s271 + $0x50] sm:$0xf] %v672
      %737 = vst [vmem:[%s271 + $0x54] sm:$0xf] %v673
      %738 = vst [vmem:[%s271 + $0x58] sm:$0xf] %v674
      %739 = vst [vmem:[%s271 + $0x5c] sm:$0xf] %v675
      %740 = vst [vmem:[%s271 + $0x60] sm:$0xf] %v676
      %741 = vst [vmem:[%s271 + $0x64] sm:$0xf] %v677
      %742 = vst [vmem:[%s271 + $0x68] sm:$0xf] %v678
      %743 = vst [vmem:[%s271 + $0x6c] sm:$0xf] %v679
      %744 = vst [vmem:[%s271 + $0x70] sm:$0xf] %v680
      %745 = vst [vmem:[%s271 + $0x74] sm:$0xf] %v681
      %746 = vst [vmem:[%s271 + $0x78] sm:$0xf] %v682
      %747 = vst [vmem:[%s271 + $0x7c] sm:$0xf] %v683
      %p748 = scmp.lt.s32.totalorder %s17, 1
      %s749 = scalar_select %p748, %s17, 1
      %s750 = smul.addr %s749, 32
      %s751 = smul.addr %s750, 4
      %s752 = scalar_lea.vmem %s6, %s751
      // Predicated region
      $region45: #{residual_block_pallas.5} parent=43 // pred_check
        %p753 = pneg %p171
      $region46: #{residual_block_pallas.5} parent=43 // pred_check_branch
        %755 = sbr.rel (%p753) target = $region48
      $region47: #{residual_block_pallas.5} parent=43 // pred_region
        _
      $region48: #{residual_block_pallas.5} parent=43 // pred_fallthru
        _
    $region44: #{residual_block_pallas.5} parent=5 // pred_fallthru
      _
    %p756 = scmp.le.s32.totalorder 2, %s12
    // Predicated region
    $region49: #{residual_block_pallas.5} parent=5 // pred_check
      %p757 = pneg %p756
    $region50: #{residual_block_pallas.5} parent=5 // pred_check_branch
      %759 = sbr.rel (%p757) target = $region52
    $region51: #{residual_block_pallas.5} parent=5 // pred_region
      %s760 = ssub.s32 %s12, 2
      // Predicated region
      $region53: #{residual_block_pallas.5} parent=51 // pred_check
        %p761 = pneg %p177
      $region54: #{residual_block_pallas.5} parent=51 // pred_check_branch
        %763 = sbr.rel (%p761) target = $region56
      $region55: #{residual_block_pallas.5} parent=51 // pred_region
        %p764 = scmp.lt.s32.totalorder %s18, 1
        %s765 = scalar_select %p764, %s18, 1
        %s766 = smul.addr %s765, 32
        %s767 = smul.addr %s766, 4
        %s768 = scalar_lea.vmem %s6, %s767
      $region56: #{residual_block_pallas.5} parent=51 // pred_fallthru
        _
    $region52: #{residual_block_pallas.5} parent=5 // pred_fallthru
      _
  $region6: #{residual_block_pallas.5} parent=0 // loop_footer
    %s16 = sadd.s32 1, %s12
  $region7: #{residual_block_pallas.5} parent=0 // loop_footer_branch
    %11 = sbr.rel target = $region3
  $region8: #{residual_block_pallas.5} parent=0 // loop_exit
    _

// kernel: residual_block_pallas.3
$region0: #{residual_block_pallas.3}
  #allocation0 [shape = 'u32[]', space=smem, size = 0x4, offset = 0x4, fixed_abs, tag = 'smem constant byte address 0x4 - core index']
  #allocation1 [shape = 'u32[144,128]{1,0:T(1,128)}', space=vmem, size = 0x12000, scoped, tag = 'internal scratch']
  #allocation2 [shape = 'f32[16,16,1152]{2,1,0:T(8,128)}', space=vmem, size = 0x120000, scoped, tag = 'scratch operand']
  %s0 = inlined_call_operand.vmem [shape: f32[2,16,16,128], index: 0, kind: input, shape index: {}]
  %s1 = inlined_call_operand.vmem [shape: bf16[1152,256], index: 1, kind: input, shape index: {}]
  %s2 = inlined_call_operand.vmem [shape: bf16[2,256,128], index: 2, kind: output, shape index: {0}]
  %s3 = inlined_call_operand.vmem [shape: bf16[2,256,128], index: 3, kind: output, shape index: {1}]
  %s4 = inlined_call_operand.vmem [shape: f32[2,4,128], index: 4, kind: output, shape index: {2}]
  %5 = xla_tuple %s2, %s3, %s4
  %s6 = sld [smem:[#allocation0]]
  $region57: #{residual_block_pallas.3} parent=0
    _
  %s8 = ssub.s32 1, %s6
  %s9 = scalar_select 0, %s8, %s6
  loop: start=0, step=1, limit=4
  $region2: #{residual_block_pallas.3} parent=0 // loop_pre_header
    _
  $region3: #{residual_block_pallas.3} parent=0 // loop_header
    %s11 = sphi 0, %s15
    %p12 = scmp.ge.s32.totalorder %s11, 4
    %s21 = sphi 0, %s23
    %s24 = sphi 0, %s21
    %s25 = sphi 0, %s24
    %s41 = sphi 0, %s25
    %s45 = sphi 0, %s45
    %s47 = sphi 0, %s45
    %s48 = sphi 0, %s47
    %s62 = sphi 0, %s48
    %s68 = sphi 0, %s70
    %s71 = sphi 0, %s68
    %s72 = sphi 0, %s71
    %s88 = sphi 0, %s72
    %s94 = sphi 0, %s96
    %s97 = sphi 0, %s94
    %s98 = sphi 0, %s97
    %s114 = sphi 0, %s98
    %s120 = sphi 0, %s122
    %s123 = sphi 0, %s120
    %s124 = sphi 0, %s123
    %s140 = sphi 0, %s124
  $region4: #{residual_block_pallas.3} parent=0 // loop_header_branch
    %14 = sbr.rel (%p12) target = $region8
  $region5: #{residual_block_pallas.3} parent=0 // loop_body
    %s16 = ssub.s32 %s11, 1
    %s17 = ssub.s32 %s11, 2
    %s18 = sadd.s32 %s11, 1
    %s19 = ssub.s32 %s11, %s18
    %p20 = scmp.eq.s32.totalorder %s19, 0
    %s22 = sadd.s32 %s21, 1
    %s23 = scalar_select %p20, %s21, %s22
    %p26 = pneg %p20
    %p27 = scmp.eq.s32.totalorder %s11, 1
    %p28 = por %p26, %p27
    %p29 = scmp.ne.s32.totalorder %s21, %s24
    %p30 = scmp.eq.s32.totalorder %s11, 0
    %p31 = por %p29, %p30
    %p32 = scmp.ne.s32.totalorder %s21, %s24
    %p33 = scmp.eq.s32.totalorder %s16, 1
    %p34 = por %p32, %p33
    %p35 = scmp.ne.s32.totalorder %s24, %s25
    %p36 = scmp.eq.s32.totalorder %s16, 0
    %p37 = por %p35, %p36
    %p38 = scmp.ne.s32.totalorder %s24, %s25
    %p39 = scmp.eq.s32.totalorder %s17, 1
    %p40 = por %p38, %p39
    %p42 = scmp.ne.s32.totalorder %s25, %s41
    %p43 = scmp.eq.s32.totalorder %s17, 0
    %p44 = por %p42, %p43
    %s46 = sadd.s32 %s45, 1
    %p49 = scmp.eq.s32.totalorder %s11, 1
    %p50 = scmp.ne.s32.totalorder %s45, %s47
    %p51 = scmp.eq.s32.totalorder %s11, 0
    %p52 = por %p50, %p51
    %p53 = scmp.ne.s32.totalorder %s45, %s47
    %p54 = scmp.eq.s32.totalorder %s16, 1
    %p55 = por %p53, %p54
    %p56 = scmp.ne.s32.totalorder %s47, %s48
    %p57 = scmp.eq.s32.totalorder %s16, 0
    %p58 = por %p56, %p57
    %p59 = scmp.ne.s32.totalorder %s47, %s48
    %p60 = scmp.eq.s32.totalorder %s17, 1
    %p61 = por %p59, %p60
    %p63 = scmp.ne.s32.totalorder %s48, %s62
    %p64 = scmp.eq.s32.totalorder %s17, 0
    %p65 = por %p63, %p64
    %s66 = ssub.s32 %s11, %s18
    %p67 = scmp.eq.s32.totalorder %s66, 0
    %s69 = sadd.s32 %s68, 1
    %s70 = scalar_select %p67, %s68, %s69
    %p73 = pneg %p67
    %p74 = scmp.eq.s32.totalorder %s11, 1
    %p75 = por %p73, %p74
    %p76 = scmp.ne.s32.totalorder %s68, %s71
    %p77 = scmp.eq.s32.totalorder %s11, 0
    %p78 = por %p76, %p77
    %p79 = scmp.ne.s32.totalorder %s68, %s71
    %p80 = scmp.eq.s32.totalorder %s16, 1
    %p81 = por %p79, %p80
    %p82 = scmp.ne.s32.totalorder %s71, %s72
    %p83 = scmp.eq.s32.totalorder %s16, 0
    %p84 = por %p82, %p83
    %p85 = scmp.ne.s32.totalorder %s71, %s72
    %p86 = scmp.eq.s32.totalorder %s17, 1
    %p87 = por %p85, %p86
    %p89 = scmp.ne.s32.totalorder %s72, %s88
    %p90 = scmp.eq.s32.totalorder %s17, 0
    %p91 = por %p89, %p90
    %s92 = ssub.s32 %s11, %s18
    %p93 = scmp.eq.s32.totalorder %s92, 0
    %s95 = sadd.s32 %s94, 1
    %s96 = scalar_select %p93, %s94, %s95
    %p99 = pneg %p93
    %p100 = scmp.eq.s32.totalorder %s11, 1
    %p101 = por %p99, %p100
    %p102 = scmp.ne.s32.totalorder %s94, %s97
    %p103 = scmp.eq.s32.totalorder %s11, 0
    %p104 = por %p102, %p103
    %p105 = scmp.ne.s32.totalorder %s94, %s97
    %p106 = scmp.eq.s32.totalorder %s16, 1
    %p107 = por %p105, %p106
    %p108 = scmp.ne.s32.totalorder %s97, %s98
    %p109 = scmp.eq.s32.totalorder %s16, 0
    %p110 = por %p108, %p109
    %p111 = scmp.ne.s32.totalorder %s97, %s98
    %p112 = scmp.eq.s32.totalorder %s17, 1
    %p113 = por %p111, %p112
    %p115 = scmp.ne.s32.totalorder %s98, %s114
    %p116 = scmp.eq.s32.totalorder %s17, 0
    %p117 = por %p115, %p116
    %s118 = ssub.s32 %s11, %s18
    %p119 = scmp.eq.s32.totalorder %s118, 0
    %s121 = sadd.s32 %s120, 1
    %s122 = scalar_select %p119, %s120, %s121
    %p125 = pneg %p119
    %p126 = scmp.eq.s32.totalorder %s11, 1
    %p127 = por %p125, %p126
    %p128 = scmp.ne.s32.totalorder %s120, %s123
    %p129 = scmp.eq.s32.totalorder %s11, 0
    %p130 = por %p128, %p129
    %p131 = scmp.ne.s32.totalorder %s120, %s123
    %p132 = scmp.eq.s32.totalorder %s16, 1
    %p133 = por %p131, %p132
    %p134 = scmp.ne.s32.totalorder %s123, %s124
    %p135 = scmp.eq.s32.totalorder %s16, 0
    %p136 = por %p134, %p135
    %p137 = scmp.ne.s32.totalorder %s123, %s124
    %p138 = scmp.eq.s32.totalorder %s17, 1
    %p139 = por %p137, %p138
    %p141 = scmp.ne.s32.totalorder %s124, %s140
    %p142 = scmp.eq.s32.totalorder %s17, 0
    %p143 = por %p141, %p142
    %p144 = scmp.le.s32.totalorder 1, %s11
    %p145 = scmp.lt.s32.totalorder %s11, 3
    %p146 = pnand %p144, %p145
    %p147 = pneg %p146
    // Predicated region
    $region9: #{residual_block_pallas.3} parent=5 // pred_check
      _
    $region10: #{residual_block_pallas.3} parent=5 // pred_check_branch
      %149 = sbr.rel (%p146) target = $region12
    $region11: #{residual_block_pallas.3} parent=5 // pred_region
      %s150 = ssub.s32 %s11, 1
      // Predicated region
      $region13: #{residual_block_pallas.3} parent=11 // pred_check
        %p151 = pneg %p58
      $region14: #{residual_block_pallas.3} parent=11 // pred_check_branch
        %153 = sbr.rel (%p151) target = $region16
      $region15: #{residual_block_pallas.3} parent=11 // pred_region
        _
      $region16: #{residual_block_pallas.3} parent=11 // pred_fallthru
        _
    $region12: #{residual_block_pallas.3} parent=5 // pred_fallthru
      _
    %p154 = scmp.lt.s32.totalorder %s11, 2
    // Predicated region
    $region17: #{residual_block_pallas.3} parent=5 // pred_check
      %p155 = pneg %p154
    $region18: #{residual_block_pallas.3} parent=5 // pred_check_branch
      %157 = sbr.rel (%p155) target = $region20
    $region19: #{residual_block_pallas.3} parent=5 // pred_region
      // Predicated region
      $region21: #{residual_block_pallas.3} parent=19 // pred_check
        %p158 = pneg %p31
      $region22: #{residual_block_pallas.3} parent=19 // pred_check_branch
        %160 = sbr.rel (%p158) target = $region24
      $region23: #{residual_block_pallas.3} parent=19 // pred_region
        %p161 = scmp.lt.s32.totalorder %s11, 1
        %s162 = scalar_select %p161, %s11, 1
        %s163 = smul.addr %s162, 32
        %s164 = smul.addr %s163, 8
        %s165 = scalar_lea.vmem %s0, %s164
      $region24: #{residual_block_pallas.3} parent=19 // pred_fallthru
        _
    $region20: #{residual_block_pallas.3} parent=5 // pred_fallthru
      _
    %p166 = scmp.le.s32.totalorder 1, %s11
    %p167 = scmp.lt.s32.totalorder %s11, 3
    %p168 = pnand %p166, %p167
    %p169 = pneg %p168
    // Predicated region
    $region25: #{residual_block_pallas.3} parent=5 // pred_check
      _
    $region26: #{residual_block_pallas.3} parent=5 // pred_check_branch
      %171 = sbr.rel (%p168) target = $region28
    $region27: #{residual_block_pallas.3} parent=5 // pred_region
      %s172 = ssub.s32 %s11, 1
      %p173 = scmp.lt.s32.totalorder %s16, 1
      %s174 = scalar_select %p173, %s16, 1
      %s175 = smul.addr %s174, 32
      %s176 = smul.addr %s175, 8
      %s177 = scalar_lea.vmem %s0, %s176
      %p178 = pneg %p37
      %p179 = pneg %p34
      %p180 = pneg %p58
      %p181 = pneg %p55
      %p182 = pneg %p84
      %p183 = pneg %p81
      %p184 = scmp.lt.s32.totalorder %s16, 1
      %s185 = scalar_select %p184, %s16, 1
      %s186 = smul.addr %s185, 32
      %s187 = smul.addr %s186, 4
      %s188 = scalar_lea.vmem %s2, %s187
      %p189 = pneg %p110
      %p190 = pneg %p107
      %p191 = scmp.lt.s32.totalorder %s16, 1
      %s192 = scalar_select %p191, %s16, 1
      %s193 = smul.addr %s192, 32
      %s194 = smul.addr %s193, 4
      %s195 = scalar_lea.vmem %s3, %s194
      %p196 = pneg %p136
      %p197 = pneg %p133
      %p198 = scmp.lt.s32.totalorder %s16, 1
      %s199 = scalar_select %p198, %s16, 1
      %s200 = smul.addr %s199, 4
      %s201 = scalar_lea.vmem %s4, %s200
      %p202 = scmp.lt.s32.totalorder %s16, 1
      %s203 = scalar_select %p202, %s16, 1
      %s204 = smul.addr %s203, 32
      %s205 = smul.addr %s204, 8
      %s206 = scalar_lea.vmem %s0, %s205
      %p207 = scmp.lt.s32.totalorder %s16, 1
      %s208 = scalar_select %p207, %s16, 1
      %s209 = smul.addr %s208, 32
      %s210 = smul.addr %s209, 4
      %s211 = scalar_lea.vmem %s2, %s210
      %p212 = scmp.lt.s32.totalorder %s16, 1
      %s213 = scalar_select %p212, %s16, 1
      %s214 = smul.addr %s213, 32
      %s215 = smul.addr %s214, 4
      %s216 = scalar_lea.vmem %s3, %s215
      %p217 = scmp.lt.s32.totalorder %s16, 1
      %s218 = scalar_select %p217, %s16, 1
      %s219 = smul.addr %s218, 4
      %s220 = scalar_lea.vmem %s4, %s219
      %v222 = vld [vmem:[%s206] sm:$0xff]
      %v223 = vld [vmem:[%s206 + $0x8] sm:$0xff]
      %v224 = vld [vmem:[%s206 + $0x10] sm:$0xff]
      %v225 = vld [vmem:[%s206 + $0x18] sm:$0xff]
      %v226 = vld [vmem:[%s206 + $0x20] sm:$0xff]
      %v227 = vld [vmem:[%s206 + $0x28] sm:$0xff]
      %v228 = vld [vmem:[%s206 + $0x30] sm:$0xff]
      %v229 = vld [vmem:[%s206 + $0x38] sm:$0xff]
      %v230 = vld [vmem:[%s206 + $0x40] sm:$0xff]
      %v231 = vld [vmem:[%s206 + $0x48] sm:$0xff]
      %v232 = vld [vmem:[%s206 + $0x50] sm:$0xff]
      %v233 = vld [vmem:[%s206 + $0x58] sm:$0xff]
      %v234 = vld [vmem:[%s206 + $0x60] sm:$0xff]
      %v235 = vld [vmem:[%s206 + $0x68] sm:$0xff]
      %v236 = vld [vmem:[%s206 + $0x70] sm:$0xff]
      %v237 = vld [vmem:[%s206 + $0x78] sm:$0xff]
      %v238 = vld [vmem:[%s206 + $0x80] sm:$0xff]
      %v239 = vld [vmem:[%s206 + $0x88] sm:$0xff]
      %v240 = vld [vmem:[%s206 + $0x90] sm:$0xff]
      %v241 = vld [vmem:[%s206 + $0x98] sm:$0xff]
      %v242 = vld [vmem:[%s206 + $0xa0] sm:$0xff]
      %v243 = vld [vmem:[%s206 + $0xa8] sm:$0xff]
      %v244 = vld [vmem:[%s206 + $0xb0] sm:$0xff]
      %v245 = vld [vmem:[%s206 + $0xb8] sm:$0xff]
      %v246 = vld [vmem:[%s206 + $0xc0] sm:$0xff]
      %v247 = vld [vmem:[%s206 + $0xc8] sm:$0xff]
      %v248 = vld [vmem:[%s206 + $0xd0] sm:$0xff]
      %v249 = vld [vmem:[%s206 + $0xd8] sm:$0xff]
      %v250 = vld [vmem:[%s206 + $0xe0] sm:$0xff]
      %v251 = vld [vmem:[%s206 + $0xe8] sm:$0xff]
      %v252 = vld [vmem:[%s206 + $0xf0] sm:$0xff]
      %v253 = vld [vmem:[%s206 + $0xf8] sm:$0xff]
      %254 = vst [vmem:[#allocation2] sm:$0xff] 0.0
      %255 = vst [vmem:[#allocation2 + $0x8] sm:$0xff] 0.0
      %256 = vst [vmem:[#allocation2 + $0x10] sm:$0xff] 0.0
      %257 = vst [vmem:[#allocation2 + $0x18] sm:$0xff] 0.0
      %258 = vst [vmem:[#allocation2 + $0x20] sm:$0xff] 0.0
      %259 = vst [vmem:[#allocation2 + $0x28] sm:$0xff] 0.0
      %260 = vst [vmem:[#allocation2 + $0x30] sm:$0xff] 0.0
      %261 = vst [vmem:[#allocation2 + $0x38] sm:$0xff] 0.0
      %262 = vst [vmem:[#allocation2 + $0x40] sm:$0xff] 0.0
      %263 = vst [vmem:[#allocation2 + $0x48] sm:$0xff] 0.0
      %264 = vst [vmem:[#allocation2 + $0x50] sm:$0xff] 0.0
      %265 = vst [vmem:[#allocation2 + $0x58] sm:$0xff] 0.0
      %266 = vst [vmem:[#allocation2 + $0x60] sm:$0xff] 0.0
      %267 = vst [vmem:[#allocation2 + $0x68] sm:$0xff] 0.0
      %268 = vst [vmem:[#allocation2 + $0x70] sm:$0xff] 0.0
      %269 = vst [vmem:[#allocation2 + $0x78] sm:$0xff] 0.0
      %270 = vst [vmem:[#allocation2 + $0x80] sm:$0xff] 0.0
      %271 = vst [vmem:[#allocation2 + $0x88] sm:$0xff] 0.0
      %s272 = scalar_lea.vmem [#allocation2], 2160
      %273 = vst [vmem:[%s272] sm:$0xff] 0.0
      %274 = vst [vmem:[%s272 + $0x8] sm:$0xff] 0.0
      %275 = vst [vmem:[%s272 + $0x10] sm:$0xff] 0.0
      %276 = vst [vmem:[%s272 + $0x18] sm:$0xff] 0.0
      %277 = vst [vmem:[%s272 + $0x20] sm:$0xff] 0.0
      %278 = vst [vmem:[%s272 + $0x28] sm:$0xff] 0.0
      %279 = vst [vmem:[%s272 + $0x30] sm:$0xff] 0.0
      %280 = vst [vmem:[%s272 + $0x38] sm:$0xff] 0.0
      %281 = vst [vmem:[%s272 + $0x40] sm:$0xff] 0.0
      %282 = vst [vmem:[%s272 + $0x48] sm:$0xff] 0.0
      %283 = vst [vmem:[%s272 + $0x50] sm:$0xff] 0.0
      %284 = vst [vmem:[%s272 + $0x58] sm:$0xff] 0.0
      %285 = vst [vmem:[%s272 + $0x60] sm:$0xff] 0.0
      %286 = vst [vmem:[%s272 + $0x68] sm:$0xff] 0.0
      %287 = vst [vmem:[%s272 + $0x70] sm:$0xff] 0.0
      %288 = vst [vmem:[%s272 + $0x78] sm:$0xff] 0.0
      %289 = vst [vmem:[%s272 + $0x80] sm:$0xff] 0.0
      %290 = vst [vmem:[%s272 + $0x88] sm:$0xff] 0.0
      %291 = vst [vmem:[#allocation2] sm:$0x1] 0.0
      %292 = vst [vmem:[#allocation2 + $0x90] sm:$0x1] 0.0
      %293 = vst [vmem:[#allocation2 + $0x120] sm:$0x1] 0.0
      %294 = vst [vmem:[#allocation2 + $0x1b0] sm:$0x1] 0.0
      %295 = vst [vmem:[#allocation2 + $0x240] sm:$0x1] 0.0
      %296 = vst [vmem:[#allocation2 + $0x2d0] sm:$0x1] 0.0
      %297 = vst [vmem:[#allocation2 + $0x360] sm:$0x1] 0.0
      %298 = vst [vmem:[#allocation2 + $0x3f0] sm:$0x1] 0.0
      %299 = vst [vmem:[#allocation2 + $0x480] sm:$0x1] 0.0
      %300 = vst [vmem:[#allocation2 + $0x510] sm:$0x1] 0.0
      %301 = vst [vmem:[#allocation2 + $0x5a0] sm:$0x1] 0.0
      %302 = vst [vmem:[#allocation2 + $0x630] sm:$0x1] 0.0
      %303 = vst [vmem:[#allocation2 + $0x6c0] sm:$0x1] 0.0
      %304 = vst [vmem:[#allocation2 + $0x750] sm:$0x1] 0.0
      %305 = vst [vmem:[#allocation2 + $0x7e0] sm:$0x1] 0.0
      %306 = vst [vmem:[#allocation2 + $0x870] sm:$0x1] 0.0
      %307 = vst [vmem:[#allocation2 + $0x18] sm:$0x1] 0.0
      %308 = vst [vmem:[#allocation2 + $0xa8] sm:$0x1] 0.0
      %309 = vst [vmem:[#allocation2 + $0x138] sm:$0x1] 0.0
      %310 = vst [vmem:[#allocation2 + $0x1c8] sm:$0x1] 0.0
      %311 = vst [vmem:[#allocation2 + $0x258] sm:$0x1] 0.0
      %312 = vst [vmem:[#allocation2 + $0x2e8] sm:$0x1] 0.0
      %313 = vst [vmem:[#allocation2 + $0x378] sm:$0x1] 0.0
      %314 = vst [vmem:[#allocation2 + $0x408] sm:$0x1] 0.0
      %315 = vst [vmem:[#allocation2 + $0x498] sm:$0x1] 0.0
      %316 = vst [vmem:[#allocation2 + $0x528] sm:$0x1] 0.0
      %317 = vst [vmem:[#allocation2 + $0x5b8] sm:$0x1] 0.0
      %318 = vst [vmem:[#allocation2 + $0x648] sm:$0x1] 0.0
      %319 = vst [vmem:[#allocation2 + $0x6d8] sm:$0x1] 0.0
      %320 = vst [vmem:[#allocation2 + $0x768] sm:$0x1] 0.0
      %321 = vst [vmem:[#allocation2 + $0x7f8] sm:$0x1] 0.0
      %322 = vst [vmem:[#allocation2 + $0x888] sm:$0x1] 0.0
      %323 = vst [vmem:[#allocation2 + $0x30] sm:$0x1] 0.0
      %324 = vst [vmem:[#allocation2 + $0xc0] sm:$0x1] 0.0
      %325 = vst [vmem:[#allocation2 + $0x150] sm:$0x1] 0.0
      %326 = vst [vmem:[#allocation2 + $0x1e0] sm:$0x1] 0.0
      %327 = vst [vmem:[#allocation2 + $0x270] sm:$0x1] 0.0
      %328 = vst [vmem:[#allocation2 + $0x300] sm:$0x1] 0.0
      %329 = vst [vmem:[#allocation2 + $0x390] sm:$0x1] 0.0
      %330 = vst [vmem:[#allocation2 + $0x420] sm:$0x1] 0.0
      %331 = vst [vmem:[#allocation2 + $0x4b0] sm:$0x1] 0.0
      %332 = vst [vmem:[#allocation2 + $0x540] sm:$0x1] 0.0
      %333 = vst [vmem:[#allocation2 + $0x5d0] sm:$0x1] 0.0
      %334 = vst [vmem:[#allocation2 + $0x660] sm:$0x1] 0.0
      %335 = vst [vmem:[#allocation2 + $0x6f0] sm:$0x1] 0.0
      %336 = vst [vmem:[#allocation2 + $0x780] sm:$0x1] 0.0
      %337 = vst [vmem:[#allocation2 + $0x810] sm:$0x1] 0.0
      %338 = vst [vmem:[#allocation2 + $0x8a0] sm:$0x1] 0.0
      %339 = vst [vmem:[#allocation2 + $0x5f] sm:$0x1] 0.0
      %340 = vst [vmem:[#allocation2 + $0xef] sm:$0x1] 0.0
      %341 = vst [vmem:[#allocation2 + $0x17f] sm:$0x1] 0.0
      %342 = vst [vmem:[#allocation2 + $0x20f] sm:$0x1] 0.0
      %343 = vst [vmem:[#allocation2 + $0x29f] sm:$0x1] 0.0
      %344 = vst [vmem:[#allocation2 + $0x32f] sm:$0x1] 0.0
      %345 = vst [vmem:[#allocation2 + $0x3bf] sm:$0x1] 0.0
      %346 = vst [vmem:[#allocation2 + $0x44f] sm:$0x1] 0.0
      %347 = vst [vmem:[#allocation2 + $0x4df] sm:$0x1] 0.0
      %348 = vst [vmem:[#allocation2 + $0x56f] sm:$0x1] 0.0
      %349 = vst [vmem:[#allocation2 + $0x5ff] sm:$0x1] 0.0
      %350 = vst [vmem:[#allocation2 + $0x68f] sm:$0x1] 0.0
      %351 = vst [vmem:[#allocation2 + $0x71f] sm:$0x1] 0.0
      %352 = vst [vmem:[#allocation2 + $0x7af] sm:$0x1] 0.0
      %353 = vst [vmem:[#allocation2 + $0x83f] sm:$0x1] 0.0
      %354 = vst [vmem:[#allocation2 + $0x8cf] sm:$0x1] 0.0
      %355 = vst [vmem:[#allocation2 + $0x77] sm:$0x1] 0.0
      %356 = vst [vmem:[#allocation2 + $0x107] sm:$0x1] 0.0
      %357 = vst [vmem:[#allocation2 + $0x197] sm:$0x1] 0.0
      %358 = vst [vmem:[#allocation2 + $0x227] sm:$0x1] 0.0
      %359 = vst [vmem:[#allocation2 + $0x2b7] sm:$0x1] 0.0
      %360 = vst [vmem:[#allocation2 + $0x347] sm:$0x1] 0.0
      %361 = vst [vmem:[#allocation2 + $0x3d7] sm:$0x1] 0.0
      %362 = vst [vmem:[#allocation2 + $0x467] sm:$0x1] 0.0
      %363 = vst [vmem:[#allocation2 + $0x4f7] sm:$0x1] 0.0
      %364 = vst [vmem:[#allocation2 + $0x587] sm:$0x1] 0.0
      %365 = vst [vmem:[#allocation2 + $0x617] sm:$0x1] 0.0
      %366 = vst [vmem:[#allocation2 + $0x6a7] sm:$0x1] 0.0
      %367 = vst [vmem:[#allocation2 + $0x737] sm:$0x1] 0.0
      %368 = vst [vmem:[#allocation2 + $0x7c7] sm:$0x1] 0.0
      %369 = vst [vmem:[#allocation2 + $0x857] sm:$0x1] 0.0
      %370 = vst [vmem:[#allocation2 + $0x8e7] sm:$0x1] 0.0
      %371 = vst [vmem:[#allocation2 + $0x8f] sm:$0x1] 0.0
      %372 = vst [vmem:[#allocation2 + $0x11f] sm:$0x1] 0.0
      %373 = vst [vmem:[#allocation2 + $0x1af] sm:$0x1] 0.0
      %374 = vst [vmem:[#allocation2 + $0x23f] sm:$0x1] 0.0
      %375 = vst [vmem:[#allocation2 + $0x2cf] sm:$0x1] 0.0
      %376 = vst [vmem:[#allocation2 + $0x35f] sm:$0x1] 0.0
      %377 = vst [vmem:[#allocation2 + $0x3ef] sm:$0x1] 0.0
      %378 = vst [vmem:[#allocation2 + $0x47f] sm:$0x1] 0.0
      %379 = vst [vmem:[#allocation2 + $0x50f] sm:$0x1] 0.0
      %380 = vst [vmem:[#allocation2 + $0x59f] sm:$0x1] 0.0
      %381 = vst [vmem:[#allocation2 + $0x62f] sm:$0x1] 0.0
      %382 = vst [vmem:[#allocation2 + $0x6bf] sm:$0x1] 0.0
      %383 = vst [vmem:[#allocation2 + $0x74f] sm:$0x1] 0.0
      %384 = vst [vmem:[#allocation2 + $0x7df] sm:$0x1] 0.0
      %385 = vst [vmem:[#allocation2 + $0x86f] sm:$0x1] 0.0
      %386 = vst [vmem:[#allocation2 + $0x8ff] sm:$0x1] 0.0
      %vm417 = vcmask 1040384
      %v418 = vrot.slane %v222, 7
      %v419 = vrot.slane %v223, 7
      %v420 = vsel %vm417, %v418, %v419
      %v421 = vrot.slane %v224, 7
      %v422 = vrot.slane %v225, 7
      %v423 = vsel %vm417, %v421, %v422
      %v424 = vrot.slane %v226, 7
      %v425 = vrot.slane %v227, 7
      %v426 = vsel %vm417, %v424, %v425
      %v427 = vrot.slane %v228, 7
      %v428 = vrot.slane %v229, 7
      %v429 = vsel %vm417, %v427, %v428
      %v430 = vrot.slane %v230, 7
      %v431 = vrot.slane %v231, 7
      %v432 = vsel %vm417, %v430, %v431
      %v433 = vrot.slane %v232, 7
      %v434 = vrot.slane %v233, 7
      %v435 = vsel %vm417, %v433, %v434
      %v436 = vrot.slane %v234, 7
      %v437 = vrot.slane %v235, 7
      %v438 = vsel %vm417, %v436, %v437
      %v439 = vrot.slane %v236, 7
      %v440 = vrot.slane %v237, 7
      %v441 = vsel %vm417, %v439, %v440
      %v442 = vrot.slane %v238, 7
      %v443 = vrot.slane %v239, 7
      %v444 = vsel %vm417, %v442, %v443
      %v445 = vrot.slane %v240, 7
      %v446 = vrot.slane %v241, 7
      %v447 = vsel %vm417, %v445, %v446
      %v448 = vrot.slane %v242, 7
      %v449 = vrot.slane %v243, 7
      %v450 = vsel %vm417, %v448, %v449
      %v451 = vrot.slane %v244, 7
      %v452 = vrot.slane %v245, 7
      %v453 = vsel %vm417, %v451, %v452
      %v454 = vrot.slane %v246, 7
      %v455 = vrot.slane %v247, 7
      %v456 = vsel %vm417, %v454, %v455
      %v457 = vrot.slane %v248, 7
      %v458 = vrot.slane %v249, 7
      %v459 = vsel %vm417, %v457, %v458
      %v460 = vrot.slane %v250, 7
      %v461 = vrot.slane %v251, 7
      %v462 = vsel %vm417, %v460, %v461
      %s493 = scalar_lea.vmem [#allocation2], 144
      %494 = vst [vmem:[%s493] sm:$0xfe] %v418
      %495 = vst [vmem:[%s493 + $0x48] sm:$0xff] %v420
      %496 = vst [vmem:[%s493 + $0x90] sm:$0xfe] %v421
      %497 = vst [vmem:[%s493 + $0xd8] sm:$0xff] %v423
      %498 = vst [vmem:[%s493 + $0x120] sm:$0xfe] %v424
      %499 = vst [vmem:[%s493 + $0x168] sm:$0xff] %v426
      %500 = vst [vmem:[%s493 + $0x1b0] sm:$0xfe] %v427
      %501 = vst [vmem:[%s493 + $0x1f8] sm:$0xff] %v429
      %502 = vst [vmem:[%s493 + $0x240] sm:$0xfe] %v430
      %503 = vst [vmem:[%s493 + $0x288] sm:$0xff] %v432
      %504 = vst [vmem:[%s493 + $0x2d0] sm:$0xfe] %v433
      %505 = vst [vmem:[%s493 + $0x318] sm:$0xff] %v435
      %506 = vst [vmem:[%s493 + $0x360] sm:$0xfe] %v436
      %507 = vst [vmem:[%s493 + $0x3a8] sm:$0xff] %v438
      %508 = vst [vmem:[%s493 + $0x3f0] sm:$0xfe] %v439
      %509 = vst [vmem:[%s493 + $0x438] sm:$0xff] %v441
      %510 = vst [vmem:[%s493 + $0x480] sm:$0xfe] %v442
      %511 = vst [vmem:[%s493 + $0x4c8] sm:$0xff] %v444
      %512 = vst [vmem:[%s493 + $0x510] sm:$0xfe] %v445
      %513 = vst [vmem:[%s493 + $0x558] sm:$0xff] %v447
      %514 = vst [vmem:[%s493 + $0x5a0] sm:$0xfe] %v448
      %515 = vst [vmem:[%s493 + $0x5e8] sm:$0xff] %v450
      %516 = vst [vmem:[%s493 + $0x630] sm:$0xfe] %v451
      %517 = vst [vmem:[%s493 + $0x678] sm:$0xff] %v453
      %518 = vst [vmem:[%s493 + $0x6c0] sm:$0xfe] %v454
      %519 = vst [vmem:[%s493 + $0x708] sm:$0xff] %v456
      %520 = vst [vmem:[%s493 + $0x750] sm:$0xfe] %v457
      %521 = vst [vmem:[%s493 + $0x798] sm:$0xff] %v459
      %522 = vst [vmem:[%s493 + $0x7e0] sm:$0xfe] %v460
      %523 = vst [vmem:[%s493 + $0x828] sm:$0xff] %v462
      %524 = vst [vmem:[%s493 + $0x8] sm:$0xff] %v222
      %525 = vst [vmem:[%s493 + $0x50] sm:$0xff] %v223
      %526 = vst [vmem:[%s493 + $0x98] sm:$0xff] %v224
      %527 = vst [vmem:[%s493 + $0xe0] sm:$0xff] %v225
      %528 = vst [vmem:[%s493 + $0x128] sm:$0xff] %v226
      %529 = vst [vmem:[%s493 + $0x170] sm:$0xff] %v227
      %530 = vst [vmem:[%s493 + $0x1b8] sm:$0xff] %v228
      %531 = vst [vmem:[%s493 + $0x200] sm:$0xff] %v229
      %532 = vst [vmem:[%s493 + $0x248] sm:$0xff] %v230
      %533 = vst [vmem:[%s493 + $0x290] sm:$0xff] %v231
      %534 = vst [vmem:[%s493 + $0x2d8] sm:$0xff] %v232
      %535 = vst [vmem:[%s493 + $0x320] sm:$0xff] %v233
      %536 = vst [vmem:[%s493 + $0x368] sm:$0xff] %v234
      %537 = vst [vmem:[%s493 + $0x3b0] sm:$0xff] %v235
      %538 = vst [vmem:[%s493 + $0x3f8] sm:$0xff] %v236
      %539 = vst [vmem:[%s493 + $0x440] sm:$0xff] %v237
      %540 = vst [vmem:[%s493 + $0x488] sm:$0xff] %v238
      %541 = vst [vmem:[%s493 + $0x4d0] sm:$0xff] %v239
      %542 = vst [vmem:[%s493 + $0x518] sm:$0xff] %v240
      %543 = vst [vmem:[%s493 + $0x560] sm:$0xff] %v241
      %544 = vst [vmem:[%s493 + $0x5a8] sm:$0xff] %v242
      %545 = vst [vmem:[%s493 + $0x5f0] sm:$0xff] %v243
      %546 = vst [vmem:[%s493 + $0x638] sm:$0xff] %v244
      %547 = vst [vmem:[%s493 + $0x680] sm:$0xff] %v245
      %548 = vst [vmem:[%s493 + $0x6c8] sm:$0xff] %v246
      %549 = vst [vmem:[%s493 + $0x710] sm:$0xff] %v247
      %550 = vst [vmem:[%s493 + $0x758] sm:$0xff] %v248
      %551 = vst [vmem:[%s493 + $0x7a0] sm:$0xff] %v249
      %552 = vst [vmem:[%s493 + $0x7e8] sm:$0xff] %v250
      %553 = vst [vmem:[%s493 + $0x830] sm:$0xff] %v251
      %vm554 = vcmask 1046528
      %v555 = vrot.slane %v222, 1
      %v556 = vrot.slane %v223, 1
      %v557 = vsel %vm554, %v555, %v556
      %v558 = vrot.slane %v224, 1
      %v559 = vrot.slane %v225, 1
      %v560 = vsel %vm554, %v558, %v559
      %v561 = vrot.slane %v226, 1
      %v562 = vrot.slane %v227, 1
      %v563 = vsel %vm554, %v561, %v562
      %v564 = vrot.slane %v228, 1
      %v565 = vrot.slane %v229, 1
      %v566 = vsel %vm554, %v564, %v565
      %v567 = vrot.slane %v230, 1
      %v568 = vrot.slane %v231, 1
      %v569 = vsel %vm554, %v567, %v568
      %v570 = vrot.slane %v232, 1
      %v571 = vrot.slane %v233, 1
      %v572 = vsel %vm554, %v570, %v571
      %v573 = vrot.slane %v234, 1
      %v574 = vrot.slane %v235, 1
      %v575 = vsel %vm554, %v573, %v574
      %v576 = vrot.slane %v236, 1
      %v577 = vrot.slane %v237, 1
      %v578 = vsel %vm554, %v576, %v577
      %v579 = vrot.slane %v238, 1
      %v580 = vrot.slane %v239, 1
      %v581 = vsel %vm554, %v579, %v580
      %v582 = vrot.slane %v240, 1
      %v583 = vrot.slane %v241, 1
      %v584 = vsel %vm554, %v582, %v583
      %v585 = vrot.slane %v242, 1
      %v586 = vrot.slane %v243, 1
      %v587 = vsel %vm554, %v585, %v586
      %v588 = vrot.slane %v244, 1
      %v589 = vrot.slane %v245, 1
      %v590 = vsel %vm554, %v588, %v589
      %v591 = vrot.slane %v246, 1
      %v592 = vrot.slane %v247, 1
      %v593 = vsel %vm554, %v591, %v592
      %v594 = vrot.slane %v248, 1
      %v595 = vrot.slane %v249, 1
      %v596 = vsel %vm554, %v594, %v595
      %v597 = vrot.slane %v250, 1
      %v598 = vrot.slane %v251, 1
      %v599 = vsel %vm554, %v597, %v598
      %630 = vst [vmem:[%s493 + $0x10] sm:$0xff] %v557
      %631 = vst [vmem:[%s493 + $0x58] sm:$0x7f] %v556
      %632 = vst [vmem:[%s493 + $0xa0] sm:$0xff] %v560
      %633 = vst [vmem:[%s493 + $0xe8] sm:$0x7f] %v559
      %634 = vst [vmem:[%s493 + $0x130] sm:$0xff] %v563
      %635 = vst [vmem:[%s493 + $0x178] sm:$0x7f] %v562
      %636 = vst [vmem:[%s493 + $0x1c0] sm:$0xff] %v566
      %637 = vst [vmem:[%s493 + $0x208] sm:$0x7f] %v565
      %638 = vst [vmem:[%s493 + $0x250] sm:$0xff] %v569
      %639 = vst [vmem:[%s493 + $0x298] sm:$0x7f] %v568
      %640 = vst [vmem:[%s493 + $0x2e0] sm:$0xff] %v572
      %641 = vst [vmem:[%s493 + $0x328] sm:$0x7f] %v571
      %642 = vst [vmem:[%s493 + $0x370] sm:$0xff] %v575
      %643 = vst [vmem:[%s493 + $0x3b8] sm:$0x7f] %v574
      %644 = vst [vmem:[%s493 + $0x400] sm:$0xff] %v578
      %645 = vst [vmem:[%s493 + $0x448] sm:$0x7f] %v577
      %646 = vst [vmem:[%s493 + $0x490] sm:$0xff] %v581
      %647 = vst [vmem:[%s493 + $0x4d8] sm:$0x7f] %v580
      %648 = vst [vmem:[%s493 + $0x520] sm:$0xff] %v584
      %649 = vst [vmem:[%s493 + $0x568] sm:$0x7f] %v583
      %650 = vst [vmem:[%s493 + $0x5b0] sm:$0xff] %v587
      %651 = vst [vmem:[%s493 + $0x5f8] sm:$0x7f] %v586
      %652 = vst [vmem:[%s493 + $0x640] sm:$0xff] %v590
      %653 = vst [vmem:[%s493 + $0x688] sm:$0x7f] %v589
      %654 = vst [vmem:[%s493 + $0x6d0] sm:$0xff] %v593
      %655 = vst [vmem:[%s493 + $0x718] sm:$0x7f] %v592
      %656 = vst [vmem:[%s493 + $0x760] sm:$0xff] %v596
      %657 = vst [vmem:[%s493 + $0x7a8] sm:$0x7f] %v595
      %658 = vst [vmem:[%s493 + $0x7f0] sm:$0xff] %v599
      %659 = vst [vmem:[%s493 + $0x838] sm:$0x7f] %v598
      %v662 = vrot.slane %v252, 7
      %v663 = vrot.slane %v253, 7
      %v664 = vsel %vm417, %v662, %v663
      %667 = vst [vmem:[#allocation2 + $0x18] sm:$0xfe] %v418
      %668 = vst [vmem:[#allocation2 + $0x60] sm:$0xff] %v420
      %669 = vst [vmem:[#allocation2 + $0xa8] sm:$0xfe] %v421
      %670 = vst [vmem:[#allocation2 + $0xf0] sm:$0xff] %v423
      %671 = vst [vmem:[#allocation2 + $0x138] sm:$0xfe] %v424
      %672 = vst [vmem:[#allocation2 + $0x180] sm:$0xff] %v426
      %673 = vst [vmem:[#allocation2 + $0x1c8] sm:$0xfe] %v427
      %674 = vst [vmem:[#allocation2 + $0x210] sm:$0xff] %v429
      %675 = vst [vmem:[#allocation2 + $0x258] sm:$0xfe] %v430
      %676 = vst [vmem:[#allocation2 + $0x2a0] sm:$0xff] %v432
      %677 = vst [vmem:[#allocation2 + $0x2e8] sm:$0xfe] %v433
      %678 = vst [vmem:[#allocation2 + $0x330] sm:$0xff] %v435
      %679 = vst [vmem:[#allocation2 + $0x378] sm:$0xfe] %v436
      %680 = vst [vmem:[#allocation2 + $0x3c0] sm:$0xff] %v438
      %681 = vst [vmem:[#allocation2 + $0x408] sm:$0xfe] %v439
      %682 = vst [vmem:[#allocation2 + $0x450] sm:$0xff] %v441
      %683 = vst [vmem:[#allocation2 + $0x498] sm:$0xfe] %v442
      %684 = vst [vmem:[#allocation2 + $0x4e0] sm:$0xff] %v444
      %685 = vst [vmem:[#allocation2 + $0x528] sm:$0xfe] %v445
      %686 = vst [vmem:[#allocation2 + $0x570] sm:$0xff] %v447
      %687 = vst [vmem:[#allocation2 + $0x5b8] sm:$0xfe] %v448
      %688 = vst [vmem:[#allocation2 + $0x600] sm:$0xff] %v450
      %689 = vst [vmem:[#allocation2 + $0x648] sm:$0xfe] %v451
      %690 = vst [vmem:[#allocation2 + $0x690] sm:$0xff] %v453
      %691 = vst [vmem:[#allocation2 + $0x6d8] sm:$0xfe] %v454
      %692 = vst [vmem:[#allocation2 + $0x720] sm:$0xff] %v456
      %693 = vst [vmem:[#allocation2 + $0x768] sm:$0xfe] %v457
      %694 = vst [vmem:[#allocation2 + $0x7b0] sm:$0xff] %v459
      %695 = vst [vmem:[#allocation2 + $0x7f8] sm:$0xfe] %v460
      %696 = vst [vmem:[#allocation2 + $0x840] sm:$0xff] %v462
      %697 = vst [vmem:[#allocation2 + $0x888] sm:$0xfe] %v662
      %698 = vst [vmem:[#allocation2 + $0x8d0] sm:$0xff] %v664
      %699 = vst [vmem:[#allocation2 + $0x20] sm:$0xff] %v222
      %700 = vst [vmem:[#allocation2 + $0x68] sm:$0xff] %v223
      %701 = vst [vmem:[#allocation2 + $0xb0] sm:$0xff] %v224
      %702 = vst [vmem:[#allocation2 + $0xf8] sm:$0xff] %v225
      %703 = vst [vmem:[#allocation2 + $0x140] sm:$0xff] %v226
      %704 = vst [vmem:[#allocation2 + $0x188] sm:$0xff] %v227
      %705 = vst [vmem:[#allocation2 + $0x1d0] sm:$0xff] %v228
      %706 = vst [vmem:[#allocation2 + $0x218] sm:$0xff] %v229
      %707 = vst [vmem:[#allocation2 + $0x260] sm:$0xff] %v230
      %708 = vst [vmem:[#allocation2 + $0x2a8] sm:$0xff] %v231
      %709 = vst [vmem:[#allocation2 + $0x2f0] sm:$0xff] %v232
      %710 = vst [vmem:[#allocation2 + $0x338] sm:$0xff] %v233
      %711 = vst [vmem:[#allocation2 + $0x380] sm:$0xff] %v234
      %712 = vst [vmem:[#allocation2 + $0x3c8] sm:$0xff] %v235
      %713 = vst [vmem:[#allocation2 + $0x410] sm:$0xff] %v236
      %714 = vst [vmem:[#allocation2 + $0x458] sm:$0xff] %v237
      %715 = vst [vmem:[#allocation2 + $0x4a0] sm:$0xff] %v238
      %716 = vst [vmem:[#allocation2 + $0x4e8] sm:$0xff] %v239
      %717 = vst [vmem:[#allocation2 + $0x530] sm:$0xff] %v240
      %718 = vst [vmem:[#allocation2 + $0x578] sm:$0xff] %v241
      %719 = vst [vmem:[#allocation2 + $0x5c0] sm:$0xff] %v242
      %720 = vst [vmem:[#allocation2 + $0x608] sm:$0xff] %v243
      %721 = vst [vmem:[#allocation2 + $0x650] sm:$0xff] %v244
      %722 = vst [vmem:[#allocation2 + $0x698] sm:$0xff] %v245
      %723 = vst [vmem:[#allocation2 + $0x6e0] sm:$0xff] %v246
      %724 = vst [vmem:[#allocation2 + $0x728] sm:$0xff] %v247
      %725 = vst [vmem:[#allocation2 + $0x770] sm:$0xff] %v248
      %726 = vst [vmem:[#allocation2 + $0x7b8] sm:$0xff] %v249
      %727 = vst [vmem:[#allocation2 + $0x800] sm:$0xff] %v250
      %728 = vst [vmem:[#allocation2 + $0x848] sm:$0xff] %v251
      %729 = vst [vmem:[#allocation2 + $0x890] sm:$0xff] %v252
      %730 = vst [vmem:[#allocation2 + $0x8d8] sm:$0xff] %v253
      %v731 = vrot.slane %v252, 1
      %v732 = vrot.slane %v253, 1
      %v733 = vsel %vm554, %v731, %v732
      %736 = vst [vmem:[#allocation2 + $0x28] sm:$0xff] %v557
      %737 = vst [vmem:[#allocation2 + $0x70] sm:$0x7f] %v556
      %738 = vst [vmem:[#allocation2 + $0xb8] sm:$0xff] %v560
      %739 = vst [vmem:[#allocation2 + $0x100] sm:$0x7f] %v559
      %740 = vst [vmem:[#allocation2 + $0x148] sm:$0xff] %v563
      %741 = vst [vmem:[#allocation2 + $0x190] sm:$0x7f] %v562
      %742 = vst [vmem:[#allocation2 + $0x1d8] sm:$0xff] %v566
      %743 = vst [vmem:[#allocation2 + $0x220] sm:$0x7f] %v565
      %744 = vst [vmem:[#allocation2 + $0x268] sm:$0xff] %v569
      %745 = vst [vmem:[#allocation2 + $0x2b0] sm:$0x7f] %v568
      %746 = vst [vmem:[#allocation2 + $0x2f8] sm:$0xff] %v572
      %747 = vst [vmem:[#allocation2 + $0x340] sm:$0x7f] %v571
      %748 = vst [vmem:[#allocation2 + $0x388] sm:$0xff] %v575
      %749 = vst [vmem:[#allocation2 + $0x3d0] sm:$0x7f] %v574
      %750 = vst [vmem:[#allocation2 + $0x418] sm:$0xff] %v578
      %751 = vst [vmem:[#allocation2 + $0x460] sm:$0x7f] %v577
      %752 = vst [vmem:[#allocation2 + $0x4a8] sm:$0xff] %v581
      %753 = vst [vmem:[#allocation2 + $0x4f0] sm:$0x7f] %v580
      %754 = vst [vmem:[#allocation2 + $0x538] sm:$0xff] %v584
      %755 = vst [vmem:[#allocation2 + $0x580] sm:$0x7f] %v583
      %756 = vst [vmem:[#allocation2 + $0x5c8] sm:$0xff] %v587
      %757 = vst [vmem:[#allocation2 + $0x610] sm:$0x7f] %v586
      %758 = vst [vmem:[#allocation2 + $0x658] sm:$0xff] %v590
      %759 = vst [vmem:[#allocation2 + $0x6a0] sm:$0x7f] %v589
      %760 = vst [vmem:[#allocation2 + $0x6e8] sm:$0xff] %v593
      %761 = vst [vmem:[#allocation2 + $0x730] sm:$0x7f] %v592
      %762 = vst [vmem:[#allocation2 + $0x778] sm:$0xff] %v596
      %763 = vst [vmem:[#allocation2 + $0x7c0] sm:$0x7f] %v595
      %764 = vst [vmem:[#allocation2 + $0x808] sm:$0xff] %v599
      %765 = vst [vmem:[#allocation2 + $0x850] sm:$0x7f] %v598
      %766 = vst [vmem:[#allocation2 + $0x898] sm:$0xff] %v733
      %767 = vst [vmem:[#allocation2 + $0x8e0] sm:$0x7f] %v732
      %768 = vst [vmem:[#allocation2 + $0x30] sm:$0xfe] %v421
      %769 = vst [vmem:[#allocation2 + $0x78] sm:$0xff] %v423
      %770 = vst [vmem:[#allocation2 + $0xc0] sm:$0xfe] %v424
      %771 = vst [vmem:[#allocation2 + $0x108] sm:$0xff] %v426
      %772 = vst [vmem:[#allocation2 + $0x150] sm:$0xfe] %v427
      %773 = vst [vmem:[#allocation2 + $0x198] sm:$0xff] %v429
      %774 = vst [vmem:[#allocation2 + $0x1e0] sm:$0xfe] %v430
      %775 = vst [vmem:[#allocation2 + $0x228] sm:$0xff] %v432
      %776 = vst [vmem:[#allocation2 + $0x270] sm:$0xfe] %v433
      %777 = vst [vmem:[#allocation2 + $0x2b8] sm:$0xff] %v435
      %778 = vst [vmem:[#allocation2 + $0x300] sm:$0xfe] %v436
      %779 = vst [vmem:[#allocation2 + $0x348] sm:$0xff] %v438
      %780 = vst [vmem:[#allocation2 + $0x390] sm:$0xfe] %v439
      %781 = vst [vmem:[#allocation2 + $0x3d8] sm:$0xff] %v441
      %782 = vst [vmem:[#allocation2 + $0x420] sm:$0xfe] %v442
      %783 = vst [vmem:[#allocation2 + $0x468] sm:$0xff] %v444
      %784 = vst [vmem:[#allocation2 + $0x4b0] sm:$0xfe] %v445
      %785 = vst [vmem:[#allocation2 + $0x4f8] sm:$0xff] %v447
      %786 = vst [vmem:[#allocation2 + $0x540] sm:$0xfe] %v448
      %787 = vst [vmem:[#allocation2 + $0x588] sm:$0xff] %v450
      %788 = vst [vmem:[#allocation2 + $0x5d0] sm:$0xfe] %v451
      %789 = vst [vmem:[#allocation2 + $0x618] sm:$0xff] %v453
      %790 = vst [vmem:[#allocation2 + $0x660] sm:$0xfe] %v454
      %791 = vst [vmem:[#allocation2 + $0x6a8] sm:$0xff] %v456
      %792 = vst [vmem:[#allocation2 + $0x6f0] sm:$0xfe] %v457
      %793 = vst [vmem:[#allocation2 + $0x738] sm:$0xff] %v459
      %794 = vst [vmem:[#allocation2 + $0x780] sm:$0xfe] %v460
      %795 = vst [vmem:[#allocation2 + $0x7c8] sm:$0xff] %v462
      %796 = vst [vmem:[#allocation2 + $0x810] sm:$0xfe] %v662
      %797 = vst [vmem:[#allocation2 + $0x858] sm:$0xff] %v664
      %798 = vst [vmem:[#allocation2 + $0x38] sm:$0xff] %v224
      %799 = vst [vmem:[#allocation2 + $0x80] sm:$0xff] %v225
      %800 = vst [vmem:[#allocation2 + $0xc8] sm:$0xff] %v226
      %801 = vst [vmem:[#allocation2 + $0x110] sm:$0xff] %v227
      %802 = vst [vmem:[#allocation2 + $0x158] sm:$0xff] %v228
      %803 = vst [vmem:[#allocation2 + $0x1a0] sm:$0xff] %v229
      %804 = vst [vmem:[#allocation2 + $0x1e8] sm:$0xff] %v230
      %805 = vst [vmem:[#allocation2 + $0x230] sm:$0xff] %v231
      %806 = vst [vmem:[#allocation2 + $0x278] sm:$0xff] %v232
      %807 = vst [vmem:[#allocation2 + $0x2c0] sm:$0xff] %v233
      %808 = vst [vmem:[#allocation2 + $0x308] sm:$0xff] %v234
      %809 = vst [vmem:[#allocation2 + $0x350] sm:$0xff] %v235
      %810 = vst [vmem:[#allocation2 + $0x398] sm:$0xff] %v236
      %811 = vst [vmem:[#allocation2 + $0x3e0] sm:$0xff] %v237
      %812 = vst [vmem:[#allocation2 + $0x428] sm:$0xff] %v238
      %813 = vst [vmem:[#allocation2 + $0x470] sm:$0xff] %v239
      %814 = vst [vmem:[#allocation2 + $0x4b8] sm:$0xff] %v240
      %815 = vst [vmem:[#allocation2 + $0x500] sm:$0xff] %v241
      %816 = vst [vmem:[#allocation2 + $0x548] sm:$0xff] %v242
      %817 = vst [vmem:[#allocation2 + $0x590] sm:$0xff] %v243
      %818 = vst [vmem:[#allocation2 + $0x5d8] sm:$0xff] %v244
      %819 = vst [vmem:[#allocation2 + $0x620] sm:$0xff] %v245
      %820 = vst [vmem:[#allocation2 + $0x668] sm:$0xff] %v246
      %821 = vst [vmem:[#allocation2 + $0x6b0] sm:$0xff] %v247
      %822 = vst [vmem:[#allocation2 + $0x6f8] sm:$0xff] %v248
      %823 = vst [vmem:[#allocation2 + $0x740] sm:$0xff] %v249
      %824 = vst [vmem:[#allocation2 + $0x788] sm:$0xff] %v250
      %825 = vst [vmem:[#allocation2 + $0x7d0] sm:$0xff] %v251
      %826 = vst [vmem:[#allocation2 + $0x818] sm:$0xff] %v252
      %827 = vst [vmem:[#allocation2 + $0x860] sm:$0xff] %v253
      %828 = vst [vmem:[#allocation2 + $0x40] sm:$0xff] %v560
      %829 = vst [vmem:[#allocation2 + $0x88] sm:$0x7f] %v559
      %830 = vst [vmem:[#allocation2 + $0xd0] sm:$0xff] %v563
      %831 = vst [vmem:[#allocation2 + $0x118] sm:$0x7f] %v562
      %832 = vst [vmem:[#allocation2 + $0x160] sm:$0xff] %v566
      %833 = vst [vmem:[#allocation2 + $0x1a8] sm:$0x7f] %v565
      %834 = vst [vmem:[#allocation2 + $0x1f0] sm:$0xff] %v569
      %835 = vst [vmem:[#allocation2 + $0x238] sm:$0x7f] %v568
      %836 = vst [vmem:[#allocation2 + $0x280] sm:$0xff] %v572
      %837 = vst [vmem:[#allocation2 + $0x2c8] sm:$0x7f] %v571
      %838 = vst [vmem:[#allocation2 + $0x310] sm:$0xff] %v575
      %839 = vst [vmem:[#allocation2 + $0x358] sm:$0x7f] %v574
      %840 = vst [vmem:[#allocation2 + $0x3a0] sm:$0xff] %v578
      %841 = vst [vmem:[#allocation2 + $0x3e8] sm:$0x7f] %v577
      %842 = vst [vmem:[#allocation2 + $0x430] sm:$0xff] %v581
      %843 = vst [vmem:[#allocation2 + $0x478] sm:$0x7f] %v580
      %844 = vst [vmem:[#allocation2 + $0x4c0] sm:$0xff] %v584
      %845 = vst [vmem:[#allocation2 + $0x508] sm:$0x7f] %v583
      %846 = vst [vmem:[#allocation2 + $0x550] sm:$0xff] %v587
      %847 = vst [vmem:[#allocation2 + $0x598] sm:$0x7f] %v586
      %848 = vst [vmem:[#allocation2 + $0x5e0] sm:$0xff] %v590
      %849 = vst [vmem:[#allocation2 + $0x628] sm:$0x7f] %v589
      %850 = vst [vmem:[#allocation2 + $0x670] sm:$0xff] %v593
      %851 = vst [vmem:[#allocation2 + $0x6b8] sm:$0x7f] %v592
      %852 = vst [vmem:[#allocation2 + $0x700] sm:$0xff] %v596
      %853 = vst [vmem:[#allocation2 + $0x748] sm:$0x7f] %v595
      %854 = vst [vmem:[#allocation2 + $0x790] sm:$0xff] %v599
      %855 = vst [vmem:[#allocation2 + $0x7d8] sm:$0x7f] %v598
      %856 = vst [vmem:[#allocation2 + $0x820] sm:$0xff] %v733
      %857 = vst [vmem:[#allocation2 + $0x868] sm:$0x7f] %v732
      %v858 = vld [vmem:[#allocation2] sm:$0xff]
      %v859 = vld [vmem:[#allocation2 + $0x8] sm:$0xff]
      %v860 = vld [vmem:[#allocation2 + $0x10] sm:$0xff]
      %v861 = vld [vmem:[#allocation2 + $0x18] sm:$0xff]
      %v862 = vld [vmem:[#allocation2 + $0x20] sm:$0xff]
      %v863 = vld [vmem:[#allocation2 + $0x28] sm:$0xff]
      %v864 = vld [vmem:[#allocation2 + $0x30] sm:$0xff]
      %v865 = vld [vmem:[#allocation2 + $0x38] sm:$0xff]
      %v866 = vld [vmem:[#allocation2 + $0x40] sm:$0xff]
      %v867 = vld [vmem:[#allocation2 + $0x48] sm:$0xff]
      %v868 = vld [vmem:[#allocation2 + $0x50] sm:$0xff]
      %v869 = vld [vmem:[#allocation2 + $0x58] sm:$0xff]
      %v870 = vld [vmem:[#allocation2 + $0x60] sm:$0xff]
      %v871 = vld [vmem:[#allocation2 + $0x68] sm:$0xff]
      %v872 = vld [vmem:[#allocation2 + $0x70] sm:$0xff]
      %v873 = vld [vmem:[#allocation2 + $0x78] sm:$0xff]
      %v874 = vld [vmem:[#allocation2 + $0x80] sm:$0xff]
      %v875 = vld [vmem:[#allocation2 + $0x88] sm:$0xff]
      %v876 = vld [vmem:[#allocation2 + $0x90] sm:$0xff]
      %v877 = vld [vmem:[#allocation2 + $0x98] sm:$0xff]
      %v878 = vld [vmem:[#allocation2 + $0xa0] sm:$0xff]
      %v879 = vld [vmem:[#allocation2 + $0xa8] sm:$0xff]
      %v880 = vld [vmem:[#allocation2 + $0xb0] sm:$0xff]
      %v881 = vld [vmem:[#allocation2 + $0xb8] sm:$0xff]
      %v882 = vld [vmem:[#allocation2 + $0xc0] sm:$0xff]
      %v883 = vld [vmem:[#allocation2 + $0xc8] sm:$0xff]
      %v884 = vld [vmem:[#allocation2 + $0xd0] sm:$0xff]
      %v885 = vld [vmem:[#allocation2 + $0xd8] sm:$0xff]
      %v886 = vld [vmem:[#allocation2 + $0xe0] sm:$0xff]
      %v887 = vld [vmem:[#allocation2 + $0xe8] sm:$0xff]
      %v888 = vld [vmem:[#allocation2 + $0xf0] sm:$0xff]
      %v889 = vld [vmem:[#allocation2 + $0xf8] sm:$0xff]
      %v890 = vld [vmem:[#allocation2 + $0x100] sm:$0xff]
      %v891 = vld [vmem:[#allocation2 + $0x108] sm:$0xff]
      %v892 = vld [vmem:[#allocation2 + $0x110] sm:$0xff]
      %v893 = vld [vmem:[#allocation2 + $0x118] sm:$0xff]
      %v894 = vld [vmem:[#allocation2 + $0x120] sm:$0xff]
      %v895 = vld [vmem:[#allocation2 + $0x128] sm:$0xff]
      %v896 = vld [vmem:[#allocation2 + $0x130] sm:$0xff]
      %v897 = vld [vmem:[#allocation2 + $0x138] sm:$0xff]
      %v898 = vld [vmem:[#allocation2 + $0x140] sm:$0xff]
      %v899 = vld [vmem:[#allocation2 + $0x148] sm:$0xff]
      %v900 = vld [vmem:[#allocation2 + $0x150] sm:$0xff]
      %v901 = vld [vmem:[#allocation2 + $0x158] sm:$0xff]
      %v902 = vld [vmem:[#allocation2 + $0x160] sm:$0xff]
      %v903 = vld [vmem:[#allocation2 + $0x168] sm:$0xff]
      %v904 = vld [vmem:[#allocation2 + $0x170] sm:$0xff]
      %v905 = vld [vmem:[#allocation2 + $0x178] sm:$0xff]
      %v906 = vld [vmem:[#allocation2 + $0x180] sm:$0xff]
      %v907 = vld [vmem:[#allocation2 + $0x188] sm:$0xff]
      %v908 = vld [vmem:[#allocation2 + $0x190] sm:$0xff]
      %v909 = vld [vmem:[#allocation2 + $0x198] sm:$0xff]
      %v910 = vld [vmem:[#allocation2 + $0x1a0] sm:$0xff]
      %v911 = vld [vmem:[#allocation2 + $0x1a8] sm:$0xff]
      %v912 = vld [vmem:[#allocation2 + $0x1b0] sm:$0xff]
      %v913 = vld [vmem:[#allocation2 + $0x1b8] sm:$0xff]
      %v914 = vld [vmem:[#allocation2 + $0x1c0] sm:$0xff]
      %v915 = vld [vmem:[#allocation2 + $0x1c8] sm:$0xff]
      %v916 = vld [vmem:[#allocation2 + $0x1d0] sm:$0xff]
      %v917 = vld [vmem:[#allocation2 + $0x1d8] sm:$0xff]
      %v918 = vld [vmem:[#allocation2 + $0x1e0] sm:$0xff]
      %v919 = vld [vmem:[#allocation2 + $0x1e8] sm:$0xff]
      %v920 = vld [vmem:[#allocation2 + $0x1f0] sm:$0xff]
      %v921 = vld [vmem:[#allocation2 + $0x1f8] sm:$0xff]
      %v922 = vld [vmem:[#allocation2 + $0x200] sm:$0xff]
      %v923 = vld [vmem:[#allocation2 + $0x208] sm:$0xff]
      %v924 = vld [vmem:[#allocation2 + $0x210] sm:$0xff]
      %v925 = vld [vmem:[#allocation2 + $0x218] sm:$0xff]
      %v926 = vld [vmem:[#allocation2 + $0x220] sm:$0xff]
      %v927 = vld [vmem:[#allocation2 + $0x228] sm:$0xff]
      %v928 = vld [vmem:[#allocation2 + $0x230] sm:$0xff]
      %v929 = vld [vmem:[#allocation2 + $0x238] sm:$0xff]
      %v930 = vld [vmem:[#allocation2 + $0x240] sm:$0xff]
      %v931 = vld [vmem:[#allocation2 + $0x248] sm:$0xff]
      %v932 = vld [vmem:[#allocation2 + $0x250] sm:$0xff]
      %v933 = vld [vmem:[#allocation2 + $0x258] sm:$0xff]
      %v934 = vld [vmem:[#allocation2 + $0x260] sm:$0xff]
      %v935 = vld [vmem:[#allocation2 + $0x268] sm:$0xff]
      %v936 = vld [vmem:[#allocation2 + $0x270] sm:$0xff]
      %v937 = vld [vmem:[#allocation2 + $0x278] sm:$0xff]
      %v938 = vld [vmem:[#allocation2 + $0x280] sm:$0xff]
      %v939 = vld [vmem:[#allocation2 + $0x288] sm:$0xff]
      %v940 = vld [vmem:[#allocation2 + $0x290] sm:$0xff]
      %v941 = vld [vmem:[#allocation2 + $0x298] sm:$0xff]
      %v942 = vld [vmem:[#allocation2 + $0x2a0] sm:$0xff]
      %v943 = vld [vmem:[#allocation2 + $0x2a8] sm:$0xff]
      %v944 = vld [vmem:[#allocation2 + $0x2b0] sm:$0xff]
      %v945 = vld [vmem:[#allocation2 + $0x2b8] sm:$0xff]
      %v946 = vld [vmem:[#allocation2 + $0x2c0] sm:$0xff]
      %v947 = vld [vmem:[#allocation2 + $0x2c8] sm:$0xff]
      %v948 = vld [vmem:[#allocation2 + $0x2d0] sm:$0xff]
      %v949 = vld [vmem:[#allocation2 + $0x2d8] sm:$0xff]
      %v950 = vld [vmem:[#allocation2 + $0x2e0] sm:$0xff]
      %v951 = vld [vmem:[#allocation2 + $0x2e8] sm:$0xff]
      %v952 = vld [vmem:[#allocation2 + $0x2f0] sm:$0xff]
      %v953 = vld [vmem:[#allocation2 + $0x2f8] sm:$0xff]
      %v954 = vld [vmem:[#allocation2 + $0x300] sm:$0xff]
      %v955 = vld [vmem:[#allocation2 + $0x308] sm:$0xff]
      %v956 = vld [vmem:[#allocation2 + $0x310] sm:$0xff]
      %v957 = vld [vmem:[#allocation2 + $0x318] sm:$0xff]
      %v958 = vld [vmem:[#allocation2 + $0x320] sm:$0xff]
      %v959 = vld [vmem:[#allocation2 + $0x328] sm:$0xff]
      %v960 = vld [vmem:[#allocation2 + $0x330] sm:$0xff]
      %v961 = vld [vmem:[#allocation2 + $0x338] sm:$0xff]
      %v962 = vld [vmem:[#allocation2 + $0x340] sm:$0xff]
      %v963 = vld [vmem:[#allocation2 + $0x348] sm:$0xff]
      %v964 = vld [vmem:[#allocation2 + $0x350] sm:$0xff]
      %v965 = vld [vmem:[#allocation2 + $0x358] sm:$0xff]
      %v966 = vld [vmem:[#allocation2 + $0x360] sm:$0xff]
      %v967 = vld [vmem:[#allocation2 + $0x368] sm:$0xff]
      %v968 = vld [vmem:[#allocation2 + $0x370] sm:$0xff]
      %v969 = vld [vmem:[#allocation2 + $0x378] sm:$0xff]
      %v970 = vld [vmem:[#allocation2 + $0x380] sm:$0xff]
      %v971 = vld [vmem:[#allocation2 + $0x388] sm:$0xff]
      %v972 = vld [vmem:[#allocation2 + $0x390] sm:$0xff]
      %v973 = vld [vmem:[#allocation2 + $0x398] sm:$0xff]
      %v974 = vld [vmem:[#allocation2 + $0x3a0] sm:$0xff]
      %v975 = vld [vmem:[#allocation2 + $0x3a8] sm:$0xff]
      %v976 = vld [vmem:[#allocation2 + $0x3b0] sm:$0xff]
      %v977 = vld [vmem:[#allocation2 + $0x3b8] sm:$0xff]
      %v978 = vld [vmem:[#allocation2 + $0x3c0] sm:$0xff]
      %v979 = vld [vmem:[#allocation2 + $0x3c8] sm:$0xff]
      %v980 = vld [vmem:[#allocation2 + $0x3d0] sm:$0xff]
      %v981 = vld [vmem:[#allocation2 + $0x3d8] sm:$0xff]
      %v982 = vld [vmem:[#allocation2 + $0x3e0] sm:$0xff]
      %v983 = vld [vmem:[#allocation2 + $0x3e8] sm:$0xff]
      %v984 = vld [vmem:[#allocation2 + $0x3f0] sm:$0xff]
      %v985 = vld [vmem:[#allocation2 + $0x3f8] sm:$0xff]
      %v986 = vld [vmem:[#allocation2 + $0x400] sm:$0xff]
      %v987 = vld [vmem:[#allocation2 + $0x408] sm:$0xff]
      %v988 = vld [vmem:[#allocation2 + $0x410] sm:$0xff]
      %v989 = vld [vmem:[#allocation2 + $0x418] sm:$0xff]
      %v990 = vld [vmem:[#allocation2 + $0x420] sm:$0xff]
      %v991 = vld [vmem:[#allocation2 + $0x428] sm:$0xff]
      %v992 = vld [vmem:[#allocation2 + $0x430] sm:$0xff]
      %v993 = vld [vmem:[#allocation2 + $0x438] sm:$0xff]
      %v994 = vld [vmem:[#allocation2 + $0x440] sm:$0xff]
      %v995 = vld [vmem:[#allocation2 + $0x448] sm:$0xff]
      %v996 = vld [vmem:[#allocation2 + $0x450] sm:$0xff]
      %v997 = vld [vmem:[#allocation2 + $0x458] sm:$0xff]
      %v998 = vld [vmem:[#allocation2 + $0x460] sm:$0xff]
      %v999 = vld [vmem:[#allocation2 + $0x468] sm:$0xff]
      %v1000 = vld [vmem:[#allocation2 + $0x470] sm:$0xff]
      %v1001 = vld [vmem:[#allocation2 + $0x478] sm:$0xff]
      %v1002 = vld [vmem:[#allocation2 + $0x480] sm:$0xff]
      %v1003 = vld [vmem:[#allocation2 + $0x488] sm:$0xff]
      %v1004 = vld [vmem:[#allocation2 + $0x490] sm:$0xff]
      %v1005 = vld [vmem:[#allocation2 + $0x498] sm:$0xff]
      %v1006 = vld [vmem:[#allocation2 + $0x4a0] sm:$0xff]
      %v1007 = vld [vmem:[#allocation2 + $0x4a8] sm:$0xff]
      %v1008 = vld [vmem:[#allocation2 + $0x4b0] sm:$0xff]
      %v1009 = vld [vmem:[#allocation2 + $0x4b8] sm:$0xff]
      %v1010 = vld [vmem:[#allocation2 + $0x4c0] sm:$0xff]
      %v1011 = vld [vmem:[#allocation2 + $0x4c8] sm:$0xff]
      %v1012 = vld [vmem:[#allocation2 + $0x4d0] sm:$0xff]
      %v1013 = vld [vmem:[#allocation2 + $0x4d8] sm:$0xff]
      %v1014 = vld [vmem:[#allocation2 + $0x4e0] sm:$0xff]
      %v1015 = vld [vmem:[#allocation2 + $0x4e8] sm:$0xff]
      %v1016 = vld [vmem:[#allocation2 + $0x4f0] sm:$0xff]
      %v1017 = vld [vmem:[#allocation2 + $0x4f8] sm:$0xff]
      %v1018 = vld [vmem:[#allocation2 + $0x500] sm:$0xff]
      %v1019 = vld [vmem:[#allocation2 + $0x508] sm:$0xff]
      %v1020 = vld [vmem:[#allocation2 + $0x510] sm:$0xff]
      %v1021 = vld [vmem:[#allocation2 + $0x518] sm:$0xff]
      %v1022 = vld [vmem:[#allocation2 + $0x520] sm:$0xff]
      %v1023 = vld [vmem:[#allocation2 + $0x528] sm:$0xff]
      %v1024 = vld [vmem:[#allocation2 + $0x530] sm:$0xff]
      %v1025 = vld [vmem:[#allocation2 + $0x538] sm:$0xff]
      %v1026 = vld [vmem:[#allocation2 + $0x540] sm:$0xff]
      %v1027 = vld [vmem:[#allocation2 + $0x548] sm:$0xff]
      %v1028 = vld [vmem:[#allocation2 + $0x550] sm:$0xff]
      %v1029 = vld [vmem:[#allocation2 + $0x558] sm:$0xff]
      %v1030 = vld [vmem:[#allocation2 + $0x560] sm:$0xff]
      %v1031 = vld [vmem:[#allocation2 + $0x568] sm:$0xff]
      %v1032 = vld [vmem:[#allocation2 + $0x570] sm:$0xff]
      %v1033 = vld [vmem:[#allocation2 + $0x578] sm:$0xff]
      %v1034 = vld [vmem:[#allocation2 + $0x580] sm:$0xff]
      %v1035 = vld [vmem:[#allocation2 + $0x588] sm:$0xff]
      %v1036 = vld [vmem:[#allocation2 + $0x590] sm:$0xff]
      %v1037 = vld [vmem:[#allocation2 + $0x598] sm:$0xff]
      %v1038 = vld [vmem:[#allocation2 + $0x5a0] sm:$0xff]
      %v1039 = vld [vmem:[#allocation2 + $0x5a8] sm:$0xff]
      %v1040 = vld [vmem:[#allocation2 + $0x5b0] sm:$0xff]
      %v1041 = vld [vmem:[#allocation2 + $0x5b8] sm:$0xff]
      %v1042 = vld [vmem:[#allocation2 + $0x5c0] sm:$0xff]
      %v1043 = vld [vmem:[#allocation2 + $0x5c8] sm:$0xff]
      %v1044 = vld [vmem:[#allocation2 + $0x5d0] sm:$0xff]
      %v1045 = vld [vmem:[#allocation2 + $0x5d8] sm:$0xff]
      %v1046 = vld [vmem:[#allocation2 + $0x5e0] sm:$0xff]
      %v1047 = vld [vmem:[#allocation2 + $0x5e8] sm:$0xff]
      %v1048 = vld [vmem:[#allocation2 + $0x5f0] sm:$0xff]
      %v1049 = vld [vmem:[#allocation2 + $0x5f8] sm:$0xff]
      %v1050 = vld [vmem:[#allocation2 + $0x600] sm:$0xff]
      %v1051 = vld [vmem:[#allocation2 + $0x608] sm:$0xff]
      %v1052 = vld [vmem:[#allocation2 + $0x610] sm:$0xff]
      %v1053 = vld [vmem:[#allocation2 + $0x618] sm:$0xff]
      %v1054 = vld [vmem:[#allocation2 + $0x620] sm:$0xff]
      %v1055 = vld [vmem:[#allocation2 + $0x628] sm:$0xff]
      %v1056 = vld [vmem:[#allocation2 + $0x630] sm:$0xff]
      %v1057 = vld [vmem:[#allocation2 + $0x638] sm:$0xff]
      %v1058 = vld [vmem:[#allocation2 + $0x640] sm:$0xff]
      %v1059 = vld [vmem:[#allocation2 + $0x648] sm:$0xff]
      %v1060 = vld [vmem:[#allocation2 + $0x650] sm:$0xff]
      %v1061 = vld [vmem:[#allocation2 + $0x658] sm:$0xff]
      %v1062 = vld [vmem:[#allocation2 + $0x660] sm:$0xff]
      %v1063 = vld [vmem:[#allocation2 + $0x668] sm:$0xff]
      %v1064 = vld [vmem:[#allocation2 + $0x670] sm:$0xff]
      %v1065 = vld [vmem:[#allocation2 + $0x678] sm:$0xff]
      %v1066 = vld [vmem:[#allocation2 + $0x680] sm:$0xff]
      %v1067 = vld [vmem:[#allocation2 + $0x688] sm:$0xff]
      %v1068 = vld [vmem:[#allocation2 + $0x690] sm:$0xff]
      %v1069 = vld [vmem:[#allocation2 + $0x698] sm:$0xff]
      %v1070 = vld [vmem:[#allocation2 + $0x6a0] sm:$0xff]
      %v1071 = vld [vmem:[#allocation2 + $0x6a8] sm:$0xff]
      %v1072 = vld [vmem:[#allocation2 + $0x6b0] sm:$0xff]
      %v1073 = vld [vmem:[#allocation2 + $0x6b8] sm:$0xff]
      %v1074 = vld [vmem:[#allocation2 + $0x6c0] sm:$0xff]
      %v1075 = vld [vmem:[#allocation2 + $0x6c8] sm:$0xff]
      %v1076 = vld [vmem:[#allocation2 + $0x6d0] sm:$0xff]
      %v1077 = vld [vmem:[#allocation2 + $0x6d8] sm:$0xff]
      %v1078 = vld [vmem:[#allocation2 + $0x6e0] sm:$0xff]
      %v1079 = vld [vmem:[#allocation2 + $0x6e8] sm:$0xff]
      %v1080 = vld [vmem:[#allocation2 + $0x6f0] sm:$0xff]
      %v1081 = vld [vmem:[#allocation2 + $0x6f8] sm:$0xff]
      %v1082 = vld [vmem:[#allocation2 + $0x700] sm:$0xff]
      %v1083 = vld [vmem:[#allocation2 + $0x708] sm:$0xff]
      %v1084 = vld [vmem:[#allocation2 + $0x710] sm:$0xff]
      %v1085 = vld [vmem:[#allocation2 + $0x718] sm:$0xff]
      %v1086 = vld [vmem:[#allocation2 + $0x720] sm:$0xff]
      %v1087 = vld [vmem:[#allocation2 + $0x728] sm:$0xff]
      %v1088 = vld [vmem:[#allocation2 + $0x730] sm:$0xff]
      %v1089 = vld [vmem:[#allocation2 + $0x738] sm:$0xff]
      %v1090 = vld [vmem:[#allocation2 + $0x740] sm:$0xff]
      %v1091 = vld [vmem:[#allocation2 + $0x748] sm:$0xff]
      %v1092 = vld [vmem:[#allocation2 + $0x750] sm:$0xff]
      %v1093 = vld [vmem:[#allocation2 + $0x758] sm:$0xff]
      %v1094 = vld [vmem:[#allocation2 + $0x760] sm:$0xff]
      %v1095 = vld [vmem:[#allocation2 + $0x768] sm:$0xff]
      %v1096 = vld [vmem:[#allocation2 + $0x770] sm:$0xff]
      %v1097 = vld [vmem:[#allocation2 + $0x778] sm:$0xff]
      %v1098 = vld [vmem:[#allocation2 + $0x780] sm:$0xff]
      %v1099 = vld [vmem:[#allocation2 + $0x788] sm:$0xff]
      %v1100 = vld [vmem:[#allocation2 + $0x790] sm:$0xff]
      %v1101 = vld [vmem:[#allocation2 + $0x798] sm:$0xff]
      %v1102 = vld [vmem:[#allocation2 + $0x7a0] sm:$0xff]
      %v1103 = vld [vmem:[#allocation2 + $0x7a8] sm:$0xff]
      %v1104 = vld [vmem:[#allocation2 + $0x7b0] sm:$0xff]
      %v1105 = vld [vmem:[#allocation2 + $0x7b8] sm:$0xff]
      %v1106 = vld [vmem:[#allocation2 + $0x7c0] sm:$0xff]
      %v1107 = vld [vmem:[#allocation2 + $0x7c8] sm:$0xff]
      %v1108 = vld [vmem:[#allocation2 + $0x7d0] sm:$0xff]
      %v1109 = vld [vmem:[#allocation2 + $0x7d8] sm:$0xff]
      %v1110 = vld [vmem:[#allocation2 + $0x7e0] sm:$0xff]
      %v1111 = vld [vmem:[#allocation2 + $0x7e8] sm:$0xff]
      %v1112 = vld [vmem:[#allocation2 + $0x7f0] sm:$0xff]
      %v1113 = vld [vmem:[#allocation2 + $0x7f8] sm:$0xff]
      %v1114 = vld [vmem:[#allocation2 + $0x800] sm:$0xff]
      %v1115 = vld [vmem:[#allocation2 + $0x808] sm:$0xff]
      %v1116 = vld [vmem:[#allocation2 + $0x810] sm:$0xff]
      %v1117 = vld [vmem:[#allocation2 + $0x818] sm:$0xff]
      %v1118 = vld [vmem:[#allocation2 + $0x820] sm:$0xff]
      %v1119 = vld [vmem:[#allocation2 + $0x828] sm:$0xff]
      %v1120 = vld [vmem:[#allocation2 + $0x830] sm:$0xff]
      %v1121 = vld [vmem:[#allocation2 + $0x838] sm:$0xff]
      %v1122 = vld [vmem:[#allocation2 + $0x840] sm:$0xff]
      %v1123 = vld [vmem:[#allocation2 + $0x848] sm:$0xff]
      %v1124 = vld [vmem:[#allocation2 + $0x850] sm:$0xff]
      %v1125 = vld [vmem:[#allocation2 + $0x858] sm:$0xff]
      %v1126 = vld [vmem:[#allocation2 + $0x860] sm:$0xff]
      %v1127 = vld [vmem:[#allocation2 + $0x868] sm:$0xff]
      %v1128 = vld [vmem:[#allocation2 + $0x870] sm:$0xff]
      %v1129 = vld [vmem:[#allocation2 + $0x878] sm:$0xff]
      %v1130 = vld [vmem:[#allocation2 + $0x880] sm:$0xff]
      %v1131 = vld [vmem:[#allocation2 + $0x888] sm:$0xff]
      %v1132 = vld [vmem:[#allocation2 + $0x890] sm:$0xff]
      %v1133 = vld [vmem:[#allocation2 + $0x898] sm:$0xff]
      %v1134 = vld [vmem:[#allocation2 + $0x8a0] sm:$0xff]
      %v1135 = vld [vmem:[#allocation2 + $0x8a8] sm:$0xff]
      %v1136 = vld [vmem:[#allocation2 + $0x8b0] sm:$0xff]
      %v1137 = vld [vmem:[#allocation2 + $0x8b8] sm:$0xff]
      %v1138 = vld [vmem:[#allocation2 + $0x8c0] sm:$0xff]
      %v1139 = vld [vmem:[#allocation2 + $0x8c8] sm:$0xff]
      %v1140 = vld [vmem:[#allocation2 + $0x8d0] sm:$0xff]
      %v1141 = vld [vmem:[#allocation2 + $0x8d8] sm:$0xff]
      %v1142 = vld [vmem:[#allocation2 + $0x8e0] sm:$0xff]
      %v1143 = vld [vmem:[#allocation2 + $0x8e8] sm:$0xff]
      %v1144 = vld [vmem:[#allocation2 + $0x8f0] sm:$0xff]
      %v1145 = vld [vmem:[#allocation2 + $0x8f8] sm:$0xff]
      %v1146 = vpack.c.bf16 %v867, %v858
      %v1147 = vpack.c.bf16 %v868, %v859
      %v1148 = vpack.c.bf16 %v869, %v860
      %v1149 = vpack.c.bf16 %v870, %v861
      %v1150 = vpack.c.bf16 %v871, %v862
      %v1151 = vpack.c.bf16 %v872, %v863
      %v1152 = vpack.c.bf16 %v873, %v864
      %v1153 = vpack.c.bf16 %v874, %v865
      %v1154 = vpack.c.bf16 %v875, %v866
      %v1155 = vpack.c.bf16 %v885, %v876
      %v1156 = vpack.c.bf16 %v886, %v877
      %v1157 = vpack.c.bf16 %v887, %v878
      %v1158 = vpack.c.bf16 %v888, %v879
      %v1159 = vpack.c.bf16 %v889, %v880
      %v1160 = vpack.c.bf16 %v890, %v881
      %v1161 = vpack.c.bf16 %v891, %v882
      %v1162 = vpack.c.bf16 %v892, %v883
      %v1163 = vpack.c.bf16 %v893, %v884
      %v1164 = vpack.c.bf16 %v903, %v894
      %v1165 = vpack.c.bf16 %v904, %v895
      %v1166 = vpack.c.bf16 %v905, %v896
      %v1167 = vpack.c.bf16 %v906, %v897
      %v1168 = vpack.c.bf16 %v907, %v898
      %v1169 = vpack.c.bf16 %v908, %v899
      %v1170 = vpack.c.bf16 %v909, %v900
      %v1171 = vpack.c.bf16 %v910, %v901
      %v1172 = vpack.c.bf16 %v911, %v902
      %v1173 = vpack.c.bf16 %v921, %v912
      %v1174 = vpack.c.bf16 %v922, %v913
      %v1175 = vpack.c.bf16 %v923, %v914
      %v1176 = vpack.c.bf16 %v924, %v915
      %v1177 = vpack.c.bf16 %v925, %v916
      %v1178 = vpack.c.bf16 %v926, %v917
      %v1179 = vpack.c.bf16 %v927, %v918
      %v1180 = vpack.c.bf16 %v928, %v919
      %v1181 = vpack.c.bf16 %v929, %v920
      %v1182 = vpack.c.bf16 %v939, %v930
      %v1183 = vpack.c.bf16 %v940, %v931
      %v1184 = vpack.c.bf16 %v941, %v932
      %v1185 = vpack.c.bf16 %v942, %v933
      %v1186 = vpack.c.bf16 %v943, %v934
      %v1187 = vpack.c.bf16 %v944, %v935
      %v1188 = vpack.c.bf16 %v945, %v936
      %v1189 = vpack.c.bf16 %v946, %v937
      %v1190 = vpack.c.bf16 %v947, %v938
      %v1191 = vpack.c.bf16 %v957, %v948
      %v1192 = vpack.c.bf16 %v958, %v949
      %v1193 = vpack.c.bf16 %v959, %v950
      %v1194 = vpack.c.bf16 %v960, %v951
      %v1195 = vpack.c.bf16 %v961, %v952
      %v1196 = vpack.c.bf16 %v962, %v953
      %v1197 = vpack.c.bf16 %v963, %v954
      %v1198 = vpack.c.bf16 %v964, %v955
      %v1199 = vpack.c.bf16 %v965, %v956
      %v1200 = vpack.c.bf16 %v975, %v966
      %v1201 = vpack.c.bf16 %v976, %v967
      %v1202 = vpack.c.bf16 %v977, %v968
      %v1203 = vpack.c.bf16 %v978, %v969
      %v1204 = vpack.c.bf16 %v979, %v970
      %v1205 = vpack.c.bf16 %v980, %v971
      %v1206 = vpack.c.bf16 %v981, %v972
      %v1207 = vpack.c.bf16 %v982, %v973
      %v1208 = vpack.c.bf16 %v983, %v974
      %v1209 = vpack.c.bf16 %v993, %v984
      %v1210 = vpack.c.bf16 %v994, %v985
      %v1211 = vpack.c.bf16 %v995, %v986
      %v1212 = vpack.c.bf16 %v996, %v987
      %v1213 = vpack.c.bf16 %v997, %v988
      %v1214 = vpack.c.bf16 %v998, %v989
      %v1215 = vpack.c.bf16 %v999, %v990
      %v1216 = vpack.c.bf16 %v1000, %v991
      %v1217 = vpack.c.bf16 %v1001, %v992
      %v1218 = vpack.c.bf16 %v1011, %v1002
      %v1219 = vpack.c.bf16 %v1012, %v1003
      %v1220 = vpack.c.bf16 %v1013, %v1004
      %v1221 = vpack.c.bf16 %v1014, %v1005
      %v1222 = vpack.c.bf16 %v1015, %v1006
      %v1223 = vpack.c.bf16 %v1016, %v1007
      %v1224 = vpack.c.bf16 %v1017, %v1008
      %v1225 = vpack.c.bf16 %v1018, %v1009
      %v1226 = vpack.c.bf16 %v1019, %v1010
      %v1227 = vpack.c.bf16 %v1029, %v1020
      %v1228 = vpack.c.bf16 %v1030, %v1021
      %v1229 = vpack.c.bf16 %v1031, %v1022
      %v1230 = vpack.c.bf16 %v1032, %v1023
      %v1231 = vpack.c.bf16 %v1033, %v1024
      %v1232 = vpack.c.bf16 %v1034, %v1025
      %v1233 = vpack.c.bf16 %v1035, %v1026
      %v1234 = vpack.c.bf16 %v1036, %v1027
      %v1235 = vpack.c.bf16 %v1037, %v1028
      %v1236 = vpack.c.bf16 %v1047, %v1038
      %v1237 = vpack.c.bf16 %v1048, %v1039
      %v1238 = vpack.c.bf16 %v1049, %v1040
      %v1239 = vpack.c.bf16 %v1050, %v1041
      %v1240 = vpack.c.bf16 %v1051, %v1042
      %v1241 = vpack.c.bf16 %v1052, %v1043
      %v1242 = vpack.c.bf16 %v1053, %v1044
      %v1243 = vpack.c.bf16 %v1054, %v1045
      %v1244 = vpack.c.bf16 %v1055, %v1046
      %v1245 = vpack.c.bf16 %v1065, %v1056
      %v1246 = vpack.c.bf16 %v1066, %v1057
      %v1247 = vpack.c.bf16 %v1067, %v1058
      %v1248 = vpack.c.bf16 %v1068, %v1059
      %v1249 = vpack.c.bf16 %v1069, %v1060
      %v1250 = vpack.c.bf16 %v1070, %v1061
      %v1251 = vpack.c.bf16 %v1071, %v1062
      %v1252 = vpack.c.bf16 %v1072, %v1063
      %v1253 = vpack.c.bf16 %v1073, %v1064
      %v1254 = vpack.c.bf16 %v1083, %v1074
      %v1255 = vpack.c.bf16 %v1084, %v1075
      %v1256 = vpack.c.bf16 %v1085, %v1076
      %v1257 = vpack.c.bf16 %v1086, %v1077
      %v1258 = vpack.c.bf16 %v1087, %v1078
      %v1259 = vpack.c.bf16 %v1088, %v1079
      %v1260 = vpack.c.bf16 %v1089, %v1080
      %v1261 = vpack.c.bf16 %v1090, %v1081
      %v1262 = vpack.c.bf16 %v1091, %v1082
      %v1263 = vpack.c.bf16 %v1101, %v1092
      %v1264 = vpack.c.bf16 %v1102, %v1093
      %v1265 = vpack.c.bf16 %v1103, %v1094
      %v1266 = vpack.c.bf16 %v1104, %v1095
      %v1267 = vpack.c.bf16 %v1105, %v1096
      %v1268 = vpack.c.bf16 %v1106, %v1097
      %v1269 = vpack.c.bf16 %v1107, %v1098
      %v1270 = vpack.c.bf16 %v1108, %v1099
      %v1271 = vpack.c.bf16 %v1109, %v1100
      %v1272 = vpack.c.bf16 %v1119, %v1110
      %v1273 = vpack.c.bf16 %v1120, %v1111
      %v1274 = vpack.c.bf16 %v1121, %v1112
      %v1275 = vpack.c.bf16 %v1122, %v1113
      %v1276 = vpack.c.bf16 %v1123, %v1114
      %v1277 = vpack.c.bf16 %v1124, %v1115
      %v1278 = vpack.c.bf16 %v1125, %v1116
      %v1279 = vpack.c.bf16 %v1126, %v1117
      %v1280 = vpack.c.bf16 %v1127, %v1118
      %v1281 = vpack.c.bf16 %v1137, %v1128
      %v1282 = vpack.c.bf16 %v1138, %v1129
      %v1283 = vpack.c.bf16 %v1139, %v1130
      %v1284 = vpack.c.bf16 %v1140, %v1131
      %v1285 = vpack.c.bf16 %v1141, %v1132
      %v1286 = vpack.c.bf16 %v1142, %v1133
      %v1287 = vpack.c.bf16 %v1143, %v1134
      %v1288 = vpack.c.bf16 %v1144, %v1135
      %v1289 = vpack.c.bf16 %v1145, %v1136
      %v1290 = vld [vmem:[%s1] sm:$0xff]
      %v1291 = vld [vmem:[%s1 + $0x8] sm:$0xff]
      %v1292 = vld [vmem:[%s1 + $0x10] sm:$0xff]
      %v1293 = vld [vmem:[%s1 + $0x18] sm:$0xff]
      %v1294 = vld [vmem:[%s1 + $0x20] sm:$0xff]
      %v1295 = vld [vmem:[%s1 + $0x28] sm:$0xff]
      %v1296 = vld [vmem:[%s1 + $0x30] sm:$0xff]
      %v1297 = vld [vmem:[%s1 + $0x38] sm:$0xff]
      %v1298 = vld [vmem:[%s1 + $0x40] sm:$0xff]
      %v1299 = vld [vmem:[%s1 + $0x48] sm:$0xff]
      %v1300 = vld [vmem:[%s1 + $0x50] sm:$0xff]
      %v1301 = vld [vmem:[%s1 + $0x58] sm:$0xff]
      %v1302 = vld [vmem:[%s1 + $0x60] sm:$0xff]
      %v1303 = vld [vmem:[%s1 + $0x68] sm:$0xff]
      %v1304 = vld [vmem:[%s1 + $0x70] sm:$0xff]
      %v1305 = vld [vmem:[%s1 + $0x78] sm:$0xff]
      %v1306 = vld [vmem:[%s1 + $0x80] sm:$0xff]
      %v1307 = vld [vmem:[%s1 + $0x88] sm:$0xff]
      %v1308 = vld [vmem:[%s1 + $0x90] sm:$0xff]
      %v1309 = vld [vmem:[%s1 + $0x98] sm:$0xff]
      %v1310 = vld [vmem:[%s1 + $0xa0] sm:$0xff]
      %v1311 = vld [vmem:[%s1 + $0xa8] sm:$0xff]
      %v1312 = vld [vmem:[%s1 + $0xb0] sm:$0xff]
      %v1313 = vld [vmem:[%s1 + $0xb8] sm:$0xff]
      %v1314 = vld [vmem:[%s1 + $0xc0] sm:$0xff]
      %v1315 = vld [vmem:[%s1 + $0xc8] sm:$0xff]
      %v1316 = vld [vmem:[%s1 + $0xd0] sm:$0xff]
      %v1317 = vld [vmem:[%s1 + $0xd8] sm:$0xff]
      %v1318 = vld [vmem:[%s1 + $0xe0] sm:$0xff]
      %v1319 = vld [vmem:[%s1 + $0xe8] sm:$0xff]
      %v1320 = vld [vmem:[%s1 + $0xf0] sm:$0xff]
      %v1321 = vld [vmem:[%s1 + $0xf8] sm:$0xff]
      %v1322 = vld [vmem:[%s1 + $0x100] sm:$0xff]
      %v1323 = vld [vmem:[%s1 + $0x108] sm:$0xff]
      %v1324 = vld [vmem:[%s1 + $0x110] sm:$0xff]
      %v1325 = vld [vmem:[%s1 + $0x118] sm:$0xff]
      %v1326 = vld [vmem:[%s1 + $0x120] sm:$0xff]
      %v1327 = vld [vmem:[%s1 + $0x128] sm:$0xff]
      %v1328 = vld [vmem:[%s1 + $0x130] sm:$0xff]
      %v1329 = vld [vmem:[%s1 + $0x138] sm:$0xff]
      %v1330 = vld [vmem:[%s1 + $0x140] sm:$0xff]
      %v1331 = vld [vmem:[%s1 + $0x148] sm:$0xff]
      %v1332 = vld [vmem:[%s1 + $0x150] sm:$0xff]
      %v1333 = vld [vmem:[%s1 + $0x158] sm:$0xff]
      %v1334 = vld [vmem:[%s1 + $0x160] sm:$0xff]
      %v1335 = vld [vmem:[%s1 + $0x168] sm:$0xff]
      %v1336 = vld [vmem:[%s1 + $0x170] sm:$0xff]
      %v1337 = vld [vmem:[%s1 + $0x178] sm:$0xff]
      %v1338 = vld [vmem:[%s1 + $0x180] sm:$0xff]
      %v1339 = vld [vmem:[%s1 + $0x188] sm:$0xff]
      %v1340 = vld [vmem:[%s1 + $0x190] sm:$0xff]
      %v1341 = vld [vmem:[%s1 + $0x198] sm:$0xff]
      %v1342 = vld [vmem:[%s1 + $0x1a0] sm:$0xff]
      %v1343 = vld [vmem:[%s1 + $0x1a8] sm:$0xff]
      %v1344 = vld [vmem:[%s1 + $0x1b0] sm:$0xff]
      %v1345 = vld [vmem:[%s1 + $0x1b8] sm:$0xff]
      %v1346 = vld [vmem:[%s1 + $0x1c0] sm:$0xff]
      %v1347 = vld [vmem:[%s1 + $0x1c8] sm:$0xff]
      %v1348 = vld [vmem:[%s1 + $0x1d0] sm:$0xff]
      %v1349 = vld [vmem:[%s1 + $0x1d8] sm:$0xff]
      %v1350 = vld [vmem:[%s1 + $0x1e0] sm:$0xff]
      %v1351 = vld [vmem:[%s1 + $0x1e8] sm:$0xff]
      %v1352 = vld [vmem:[%s1 + $0x1f0] sm:$0xff]
      %v1353 = vld [vmem:[%s1 + $0x1f8] sm:$0xff]
      %v1354 = vld [vmem:[%s1 + $0x200] sm:$0xff]
      %v1355 = vld [vmem:[%s1 + $0x208] sm:$0xff]
      %v1356 = vld [vmem:[%s1 + $0x210] sm:$0xff]
      %v1357 = vld [vmem:[%s1 + $0x218] sm:$0xff]
      %v1358 = vld [vmem:[%s1 + $0x220] sm:$0xff]
      %v1359 = vld [vmem:[%s1 + $0x228] sm:$0xff]
      %v1360 = vld [vmem:[%s1 + $0x230] sm:$0xff]
      %v1361 = vld [vmem:[%s1 + $0x238] sm:$0xff]
      %v1362 = vld [vmem:[%s1 + $0x240] sm:$0xff]
      %v1363 = vld [vmem:[%s1 + $0x248] sm:$0xff]
      %v1364 = vld [vmem:[%s1 + $0x250] sm:$0xff]
      %v1365 = vld [vmem:[%s1 + $0x258] sm:$0xff]
      %v1366 = vld [vmem:[%s1 + $0x260] sm:$0xff]
      %v1367 = vld [vmem:[%s1 + $0x268] sm:$0xff]
      %v1368 = vld [vmem:[%s1 + $0x270] sm:$0xff]
      %v1369 = vld [vmem:[%s1 + $0x278] sm:$0xff]
      %v1370 = vld [vmem:[%s1 + $0x280] sm:$0xff]
      %v1371 = vld [vmem:[%s1 + $0x288] sm:$0xff]
      %v1372 = vld [vmem:[%s1 + $0x290] sm:$0xff]
      %v1373 = vld [vmem:[%s1 + $0x298] sm:$0xff]
      %v1374 = vld [vmem:[%s1 + $0x2a0] sm:$0xff]
      %v1375 = vld [vmem:[%s1 + $0x2a8] sm:$0xff]
      %v1376 = vld [vmem:[%s1 + $0x2b0] sm:$0xff]
      %v1377 = vld [vmem:[%s1 + $0x2b8] sm:$0xff]
      %v1378 = vld [vmem:[%s1 + $0x2c0] sm:$0xff]
      %v1379 = vld [vmem:[%s1 + $0x2c8] sm:$0xff]
      %v1380 = vld [vmem:[%s1 + $0x2d0] sm:$0xff]
      %v1381 = vld [vmem:[%s1 + $0x2d8] sm:$0xff]
      %v1382 = vld [vmem:[%s1 + $0x2e0] sm:$0xff]
      %v1383 = vld [vmem:[%s1 + $0x2e8] sm:$0xff]
      %v1384 = vld [vmem:[%s1 + $0x2f0] sm:$0xff]
      %v1385 = vld [vmem:[%s1 + $0x2f8] sm:$0xff]
      %v1386 = vld [vmem:[%s1 + $0x300] sm:$0xff]
      %v1387 = vld [vmem:[%s1 + $0x308] sm:$0xff]
      %v1388 = vld [vmem:[%s1 + $0x310] sm:$0xff]
      %v1389 = vld [vmem:[%s1 + $0x318] sm:$0xff]
      %v1390 = vld [vmem:[%s1 + $0x320] sm:$0xff]
      %v1391 = vld [vmem:[%s1 + $0x328] sm:$0xff]
      %v1392 = vld [vmem:[%s1 + $0x330] sm:$0xff]
      %v1393 = vld [vmem:[%s1 + $0x338] sm:$0xff]
      %v1394 = vld [vmem:[%s1 + $0x340] sm:$0xff]
      %v1395 = vld [vmem:[%s1 + $0x348] sm:$0xff]
      %v1396 = vld [vmem:[%s1 + $0x350] sm:$0xff]
      %v1397 = vld [vmem:[%s1 + $0x358] sm:$0xff]
      %v1398 = vld [vmem:[%s1 + $0x360] sm:$0xff]
      %v1399 = vld [vmem:[%s1 + $0x368] sm:$0xff]
      %v1400 = vld [vmem:[%s1 + $0x370] sm:$0xff]
      %v1401 = vld [vmem:[%s1 + $0x378] sm:$0xff]
      %v1402 = vld [vmem:[%s1 + $0x380] sm:$0xff]
      %v1403 = vld [vmem:[%s1 + $0x388] sm:$0xff]
      %v1404 = vld [vmem:[%s1 + $0x390] sm:$0xff]
      %v1405 = vld [vmem:[%s1 + $0x398] sm:$0xff]
      %v1406 = vld [vmem:[%s1 + $0x3a0] sm:$0xff]
      %v1407 = vld [vmem:[%s1 + $0x3a8] sm:$0xff]
      %v1408 = vld [vmem:[%s1 + $0x3b0] sm:$0xff]
      %v1409 = vld [vmem:[%s1 + $0x3b8] sm:$0xff]
      %v1410 = vld [vmem:[%s1 + $0x3c0] sm:$0xff]
      %v1411 = vld [vmem:[%s1 + $0x3c8] sm:$0xff]
      %v1412 = vld [vmem:[%s1 + $0x3d0] sm:$0xff]
      %v1413 = vld [vmem:[%s1 + $0x3d8] sm:$0xff]
      %v1414 = vld [vmem:[%s1 + $0x3e0] sm:$0xff]
      %v1415 = vld [vmem:[%s1 + $0x3e8] sm:$0xff]
      %v1416 = vld [vmem:[%s1 + $0x3f0] sm:$0xff]
      %v1417 = vld [vmem:[%s1 + $0x3f8] sm:$0xff]
      %v1418 = vld [vmem:[%s1 + $0x400] sm:$0xff]
      %v1419 = vld [vmem:[%s1 + $0x408] sm:$0xff]
      %v1420 = vld [vmem:[%s1 + $0x410] sm:$0xff]
      %v1421 = vld [vmem:[%s1 + $0x418] sm:$0xff]
      %v1422 = vld [vmem:[%s1 + $0x420] sm:$0xff]
      %v1423 = vld [vmem:[%s1 + $0x428] sm:$0xff]
      %v1424 = vld [vmem:[%s1 + $0x430] sm:$0xff]
      %v1425 = vld [vmem:[%s1 + $0x438] sm:$0xff]
      %v1426 = vld [vmem:[%s1 + $0x440] sm:$0xff]
      %v1427 = vld [vmem:[%s1 + $0x448] sm:$0xff]
      %v1428 = vld [vmem:[%s1 + $0x450] sm:$0xff]
      %v1429 = vld [vmem:[%s1 + $0x458] sm:$0xff]
      %v1430 = vld [vmem:[%s1 + $0x460] sm:$0xff]
      %v1431 = vld [vmem:[%s1 + $0x468] sm:$0xff]
      %v1432 = vld [vmem:[%s1 + $0x470] sm:$0xff]
      %v1433 = vld [vmem:[%s1 + $0x478] sm:$0xff]
      %v1578 = vunpack.c.l.b16 %v1290
      %v1579 = vunpack.c.h.b16 %v1290
      %v1580 = vunpack.c.l.b16 %v1291
      %v1581 = vunpack.c.h.b16 %v1291
      %v1582 = vunpack.c.l.b16 %v1292
      %v1583 = vunpack.c.h.b16 %v1292
      %v1584 = vunpack.c.l.b16 %v1293
      %v1585 = vunpack.c.h.b16 %v1293
      %v1586 = vunpack.c.l.b16 %v1294
      %v1587 = vunpack.c.h.b16 %v1294
      %v1588 = vunpack.c.l.b16 %v1295
      %v1589 = vunpack.c.h.b16 %v1295
      %v1590 = vunpack.c.l.b16 %v1296
      %v1591 = vunpack.c.h.b16 %v1296
      %v1592 = vunpack.c.l.b16 %v1297
      %v1593 = vunpack.c.h.b16 %v1297
      %v1594 = vunpack.c.l.b16 %v1298
      %v1595 = vunpack.c.h.b16 %v1298
      %v1596 = vunpack.c.l.b16 %v1299
      %v1597 = vunpack.c.h.b16 %v1299
      %v1598 = vunpack.c.l.b16 %v1300
      %v1599 = vunpack.c.h.b16 %v1300
      %v1600 = vunpack.c.l.b16 %v1301
      %v1601 = vunpack.c.h.b16 %v1301
      %v1602 = vunpack.c.l.b16 %v1302
      %v1603 = vunpack.c.h.b16 %v1302
      %v1604 = vunpack.c.l.b16 %v1303
      %v1605 = vunpack.c.h.b16 %v1303
      %v1606 = vunpack.c.l.b16 %v1304
      %v1607 = vunpack.c.h.b16 %v1304
      %v1608 = vunpack.c.l.b16 %v1305
      %v1609 = vunpack.c.h.b16 %v1305
      %v1610 = vunpack.c.l.b16 %v1306
      %v1611 = vunpack.c.h.b16 %v1306
      %v1612 = vunpack.c.l.b16 %v1307
      %v1613 = vunpack.c.h.b16 %v1307
      %v1614 = vunpack.c.l.b16 %v1308
      %v1615 = vunpack.c.h.b16 %v1308
      %v1616 = vunpack.c.l.b16 %v1309
      %v1617 = vunpack.c.h.b16 %v1309
      %v1618 = vunpack.c.l.b16 %v1310
      %v1619 = vunpack.c.h.b16 %v1310
      %v1620 = vunpack.c.l.b16 %v1311
      %v1621 = vunpack.c.h.b16 %v1311
      %v1622 = vunpack.c.l.b16 %v1312
      %v1623 = vunpack.c.h.b16 %v1312
      %v1624 = vunpack.c.l.b16 %v1313
      %v1625 = vunpack.c.h.b16 %v1313
      %v1626 = vunpack.c.l.b16 %v1314
      %v1627 = vunpack.c.h.b16 %v1314
      %v1628 = vunpack.c.l.b16 %v1315
      %v1629 = vunpack.c.h.b16 %v1315
      %v1630 = vunpack.c.l.b16 %v1316
      %v1631 = vunpack.c.h.b16 %v1316
      %v1632 = vunpack.c.l.b16 %v1317
      %v1633 = vunpack.c.h.b16 %v1317
      %v1634 = vunpack.c.l.b16 %v1318
      %v1635 = vunpack.c.h.b16 %v1318
      %v1636 = vunpack.c.l.b16 %v1319
      %v1637 = vunpack.c.h.b16 %v1319
      %v1638 = vunpack.c.l.b16 %v1320
      %v1639 = vunpack.c.h.b16 %v1320
      %v1640 = vunpack.c.l.b16 %v1321
      %v1641 = vunpack.c.h.b16 %v1321
      %v1642 = vunpack.c.l.b16 %v1322
      %v1643 = vunpack.c.h.b16 %v1322
      %v1644 = vunpack.c.l.b16 %v1323
      %v1645 = vunpack.c.h.b16 %v1323
      %v1646 = vunpack.c.l.b16 %v1324
      %v1647 = vunpack.c.h.b16 %v1324
      %v1648 = vunpack.c.l.b16 %v1325
      %v1649 = vunpack.c.h.b16 %v1325
      %v1650 = vunpack.c.l.b16 %v1326
      %v1651 = vunpack.c.h.b16 %v1326
      %v1652 = vunpack.c.l.b16 %v1327
      %v1653 = vunpack.c.h.b16 %v1327
      %v1654 = vunpack.c.l.b16 %v1328
      %v1655 = vunpack.c.h.b16 %v1328
      %v1656 = vunpack.c.l.b16 %v1329
      %v1657 = vunpack.c.h.b16 %v1329
      %v1658 = vunpack.c.l.b16 %v1330
      %v1659 = vunpack.c.h.b16 %v1330
      %v1660 = vunpack.c.l.b16 %v1331
      %v1661 = vunpack.c.h.b16 %v1331
      %v1662 = vunpack.c.l.b16 %v1332
      %v1663 = vunpack.c.h.b16 %v1332
      %v1664 = vunpack.c.l.b16 %v1333
      %v1665 = vunpack.c.h.b16 %v1333
      %v1666 = vunpack.c.l.b16 %v1334
      %v1667 = vunpack.c.h.b16 %v1334
      %v1668 = vunpack.c.l.b16 %v1335
      %v1669 = vunpack.c.h.b16 %v1335
      %v1670 = vunpack.c.l.b16 %v1336
      %v1671 = vunpack.c.h.b16 %v1336
      %v1672 = vunpack.c.l.b16 %v1337
      %v1673 = vunpack.c.h.b16 %v1337
      %v1674 = vunpack.c.l.b16 %v1338
      %v1675 = vunpack.c.h.b16 %v1338
      %v1676 = vunpack.c.l.b16 %v1339
      %v1677 = vunpack.c.h.b16 %v1339
      %v1678 = vunpack.c.l.b16 %v1340
      %v1679 = vunpack.c.h.b16 %v1340
      %v1680 = vunpack.c.l.b16 %v1341
      %v1681 = vunpack.c.h.b16 %v1341
      %v1682 = vunpack.c.l.b16 %v1342
      %v1683 = vunpack.c.h.b16 %v1342
      %v1684 = vunpack.c.l.b16 %v1343
      %v1685 = vunpack.c.h.b16 %v1343
      %v1686 = vunpack.c.l.b16 %v1344
      %v1687 = vunpack.c.h.b16 %v1344
      %v1688 = vunpack.c.l.b16 %v1345
      %v1689 = vunpack.c.h.b16 %v1345
      %v1690 = vunpack.c.l.b16 %v1346
      %v1691 = vunpack.c.h.b16 %v1346
      %v1692 = vunpack.c.l.b16 %v1347
      %v1693 = vunpack.c.h.b16 %v1347
      %v1694 = vunpack.c.l.b16 %v1348
      %v1695 = vunpack.c.h.b16 %v1348
      %v1696 = vunpack.c.l.b16 %v1349
      %v1697 = vunpack.c.h.b16 %v1349
      %v1698 = vunpack.c.l.b16 %v1350
      %v1699 = vunpack.c.h.b16 %v1350
      %v1700 = vunpack.c.l.b16 %v1351
      %v1701 = vunpack.c.h.b16 %v1351
      %v1702 = vunpack.c.l.b16 %v1352
      %v1703 = vunpack.c.h.b16 %v1352
      %v1704 = vunpack.c.l.b16 %v1353
      %v1705 = vunpack.c.h.b16 %v1353
      %v1706 = vunpack.c.l.b16 %v1354
      %v1707 = vunpack.c.h.b16 %v1354
      %v1708 = vunpack.c.l.b16 %v1355
      %v1709 = vunpack.c.h.b16 %v1355
      %v1710 = vunpack.c.l.b16 %v1356
      %v1711 = vunpack.c.h.b16 %v1356
      %v1712 = vunpack.c.l.b16 %v1357
      %v1713 = vunpack.c.h.b16 %v1357
      %v1714 = vunpack.c.l.b16 %v1358
      %v1715 = vunpack.c.h.b16 %v1358
      %v1716 = vunpack.c.l.b16 %v1359
      %v1717 = vunpack.c.h.b16 %v1359
      %v1718 = vunpack.c.l.b16 %v1360
      %v1719 = vunpack.c.h.b16 %v1360
      %v1720 = vunpack.c.l.b16 %v1361
      %v1721 = vunpack.c.h.b16 %v1361
      %v1722 = vunpack.c.l.b16 %v1362
      %v1723 = vunpack.c.h.b16 %v1362
      %v1724 = vunpack.c.l.b16 %v1363
      %v1725 = vunpack.c.h.b16 %v1363
      %v1726 = vunpack.c.l.b16 %v1364
      %v1727 = vunpack.c.h.b16 %v1364
      %v1728 = vunpack.c.l.b16 %v1365
      %v1729 = vunpack.c.h.b16 %v1365
      %v1730 = vunpack.c.l.b16 %v1366
      %v1731 = vunpack.c.h.b16 %v1366
      %v1732 = vunpack.c.l.b16 %v1367
      %v1733 = vunpack.c.h.b16 %v1367
      %v1734 = vunpack.c.l.b16 %v1368
      %v1735 = vunpack.c.h.b16 %v1368
      %v1736 = vunpack.c.l.b16 %v1369
      %v1737 = vunpack.c.h.b16 %v1369
      %v1738 = vunpack.c.l.b16 %v1370
      %v1739 = vunpack.c.h.b16 %v1370
      %v1740 = vunpack.c.l.b16 %v1371
      %v1741 = vunpack.c.h.b16 %v1371
      %v1742 = vunpack.c.l.b16 %v1372
      %v1743 = vunpack.c.h.b16 %v1372
      %v1744 = vunpack.c.l.b16 %v1373
      %v1745 = vunpack.c.h.b16 %v1373
      %v1746 = vunpack.c.l.b16 %v1374
      %v1747 = vunpack.c.h.b16 %v1374
      %v1748 = vunpack.c.l.b16 %v1375
      %v1749 = vunpack.c.h.b16 %v1375
      %v1750 = vunpack.c.l.b16 %v1376
      %v1751 = vunpack.c.h.b16 %v1376
      %v1752 = vunpack.c.l.b16 %v1377
      %v1753 = vunpack.c.h.b16 %v1377
      %v1754 = vunpack.c.l.b16 %v1378
      %v1755 = vunpack.c.h.b16 %v1378
      %v1756 = vunpack.c.l.b16 %v1379
      %v1757 = vunpack.c.h.b16 %v1379
      %v1758 = vunpack.c.l.b16 %v1380
      %v1759 = vunpack.c.h.b16 %v1380
      %v1760 = vunpack.c.l.b16 %v1381
      %v1761 = vunpack.c.h.b16 %v1381
      %v1762 = vunpack.c.l.b16 %v1382
      %v1763 = vunpack.c.h.b16 %v1382
      %v1764 = vunpack.c.l.b16 %v1383
      %v1765 = vunpack.c.h.b16 %v1383
      %v1766 = vunpack.c.l.b16 %v1384
      %v1767 = vunpack.c.h.b16 %v1384
      %v1768 = vunpack.c.l.b16 %v1385
      %v1769 = vunpack.c.h.b16 %v1385
      %v1770 = vunpack.c.l.b16 %v1386
      %v1771 = vunpack.c.h.b16 %v1386
      %v1772 = vunpack.c.l.b16 %v1387
      %v1773 = vunpack.c.h.b16 %v1387
      %v1774 = vunpack.c.l.b16 %v1388
      %v1775 = vunpack.c.h.b16 %v1388
      %v1776 = vunpack.c.l.b16 %v1389
      %v1777 = vunpack.c.h.b16 %v1389
      %v1778 = vunpack.c.l.b16 %v1390
      %v1779 = vunpack.c.h.b16 %v1390
      %v1780 = vunpack.c.l.b16 %v1391
      %v1781 = vunpack.c.h.b16 %v1391
      %v1782 = vunpack.c.l.b16 %v1392
      %v1783 = vunpack.c.h.b16 %v1392
      %v1784 = vunpack.c.l.b16 %v1393
      %v1785 = vunpack.c.h.b16 %v1393
      %v1786 = vunpack.c.l.b16 %v1394
      %v1787 = vunpack.c.h.b16 %v1394
      %v1788 = vunpack.c.l.b16 %v1395
      %v1789 = vunpack.c.h.b16 %v1395
      %v1790 = vunpack.c.l.b16 %v1396
      %v1791 = vunpack.c.h.b16 %v1396
      %v1792 = vunpack.c.l.b16 %v1397
      %v1793 = vunpack.c.h.b16 %v1397
      %v1794 = vunpack.c.l.b16 %v1398
      %v1795 = vunpack.c.h.b16 %v1398
      %v1796 = vunpack.c.l.b16 %v1399
      %v1797 = vunpack.c.h.b16 %v1399
      %v1798 = vunpack.c.l.b16 %v1400
      %v1799 = vunpack.c.h.b16 %v1400
      %v1800 = vunpack.c.l.b16 %v1401
      %v1801 = vunpack.c.h.b16 %v1401
      %v1802 = vunpack.c.l.b16 %v1402
      %v1803 = vunpack.c.h.b16 %v1402
      %v1804 = vunpack.c.l.b16 %v1403
      %v1805 = vunpack.c.h.b16 %v1403
      %v1806 = vunpack.c.l.b16 %v1404
      %v1807 = vunpack.c.h.b16 %v1404
      %v1808 = vunpack.c.l.b16 %v1405
      %v1809 = vunpack.c.h.b16 %v1405
      %v1810 = vunpack.c.l.b16 %v1406
      %v1811 = vunpack.c.h.b16 %v1406
      %v1812 = vunpack.c.l.b16 %v1407
      %v1813 = vunpack.c.h.b16 %v1407
      %v1814 = vunpack.c.l.b16 %v1408
      %v1815 = vunpack.c.h.b16 %v1408
      %v1816 = vunpack.c.l.b16 %v1409
      %v1817 = vunpack.c.h.b16 %v1409
      %v1818 = vunpack.c.l.b16 %v1410
      %v1819 = vunpack.c.h.b16 %v1410
      %v1820 = vunpack.c.l.b16 %v1411
      %v1821 = vunpack.c.h.b16 %v1411
      %v1822 = vunpack.c.l.b16 %v1412
      %v1823 = vunpack.c.h.b16 %v1412
      %v1824 = vunpack.c.l.b16 %v1413
      %v1825 = vunpack.c.h.b16 %v1413
      %v1826 = vunpack.c.l.b16 %v1414
      %v1827 = vunpack.c.h.b16 %v1414
      %v1828 = vunpack.c.l.b16 %v1415
      %v1829 = vunpack.c.h.b16 %v1415
      %v1830 = vunpack.c.l.b16 %v1416
      %v1831 = vunpack.c.h.b16 %v1416
      %v1832 = vunpack.c.l.b16 %v1417
      %v1833 = vunpack.c.h.b16 %v1417
      %v1834 = vunpack.c.l.b16 %v1418
      %v1835 = vunpack.c.h.b16 %v1418
      %v1836 = vunpack.c.l.b16 %v1419
      %v1837 = vunpack.c.h.b16 %v1419
      %v1838 = vunpack.c.l.b16 %v1420
      %v1839 = vunpack.c.h.b16 %v1420
      %v1840 = vunpack.c.l.b16 %v1421
      %v1841 = vunpack.c.h.b16 %v1421
      %v1842 = vunpack.c.l.b16 %v1422
      %v1843 = vunpack.c.h.b16 %v1422
      %v1844 = vunpack.c.l.b16 %v1423
      %v1845 = vunpack.c.h.b16 %v1423
      %v1846 = vunpack.c.l.b16 %v1424
      %v1847 = vunpack.c.h.b16 %v1424
      %v1848 = vunpack.c.l.b16 %v1425
      %v1849 = vunpack.c.h.b16 %v1425
      %v1850 = vunpack.c.l.b16 %v1426
      %v1851 = vunpack.c.h.b16 %v1426
      %v1852 = vunpack.c.l.b16 %v1427
      %v1853 = vunpack.c.h.b16 %v1427
      %v1854 = vunpack.c.l.b16 %v1428
      %v1855 = vunpack.c.h.b16 %v1428
      %v1856 = vunpack.c.l.b16 %v1429
      %v1857 = vunpack.c.h.b16 %v1429
      %v1858 = vunpack.c.l.b16 %v1430
      %v1859 = vunpack.c.h.b16 %v1430
      %v1860 = vunpack.c.l.b16 %v1431
      %v1861 = vunpack.c.h.b16 %v1431
      %v1862 = vunpack.c.l.b16 %v1432
      %v1863 = vunpack.c.h.b16 %v1432
      %v1864 = vunpack.c.l.b16 %v1433
      %v1865 = vunpack.c.h.b16 %v1433
      %v1866 = vpack.c.b16 %v1580, %v1578
      %v1867 = vpack.c.b16 %v1581, %v1579
      %v1868 = vpack.c.b16 %v1584, %v1582
      %v1869 = vpack.c.b16 %v1585, %v1583
      %v1870 = vpack.c.b16 %v1588, %v1586
      %v1871 = vpack.c.b16 %v1589, %v1587
      %v1872 = vpack.c.b16 %v1592, %v1590
      %v1873 = vpack.c.b16 %v1593, %v1591
      %v1874 = vpack.c.b16 %v1596, %v1594
      %v1875 = vpack.c.b16 %v1597, %v1595
      %v1876 = vpack.c.b16 %v1600, %v1598
      %v1877 = vpack.c.b16 %v1601, %v1599
      %v1878 = vpack.c.b16 %v1604, %v1602
      %v1879 = vpack.c.b16 %v1605, %v1603
      %v1880 = vpack.c.b16 %v1608, %v1606
      %v1881 = vpack.c.b16 %v1609, %v1607
      %v1882 = vpack.c.b16 %v1612, %v1610
      %v1883 = vpack.c.b16 %v1613, %v1611
      %v1884 = vpack.c.b16 %v1616, %v1614
      %v1885 = vpack.c.b16 %v1617, %v1615
      %v1886 = vpack.c.b16 %v1620, %v1618
      %v1887 = vpack.c.b16 %v1621, %v1619
      %v1888 = vpack.c.b16 %v1624, %v1622
      %v1889 = vpack.c.b16 %v1625, %v1623
      %v1890 = vpack.c.b16 %v1628, %v1626
      %v1891 = vpack.c.b16 %v1629, %v1627
      %v1892 = vpack.c.b16 %v1632, %v1630
      %v1893 = vpack.c.b16 %v1633, %v1631
      %v1894 = vpack.c.b16 %v1636, %v1634
      %v1895 = vpack.c.b16 %v1637, %v1635
      %v1896 = vpack.c.b16 %v1640, %v1638
      %v1897 = vpack.c.b16 %v1641, %v1639
      %v1898 = vpack.c.b16 %v1644, %v1642
      %v1899 = vpack.c.b16 %v1645, %v1643
      %v1900 = vpack.c.b16 %v1648, %v1646
      %v1901 = vpack.c.b16 %v1649, %v1647
      %v1902 = vpack.c.b16 %v1652, %v1650
      %v1903 = vpack.c.b16 %v1653, %v1651
      %v1904 = vpack.c.b16 %v1656, %v1654
      %v1905 = vpack.c.b16 %v1657, %v1655
      %v1906 = vpack.c.b16 %v1660, %v1658
      %v1907 = vpack.c.b16 %v1661, %v1659
      %v1908 = vpack.c.b16 %v1664, %v1662
      %v1909 = vpack.c.b16 %v1665, %v1663
      %v1910 = vpack.c.b16 %v1668, %v1666
      %v1911 = vpack.c.b16 %v1669, %v1667
      %v1912 = vpack.c.b16 %v1672, %v1670
      %v1913 = vpack.c.b16 %v1673, %v1671
      %v1914 = vpack.c.b16 %v1676, %v1674
      %v1915 = vpack.c.b16 %v1677, %v1675
      %v1916 = vpack.c.b16 %v1680, %v1678
      %v1917 = vpack.c.b16 %v1681, %v1679
      %v1918 = vpack.c.b16 %v1684, %v1682
      %v1919 = vpack.c.b16 %v1685, %v1683
      %v1920 = vpack.c.b16 %v1688, %v1686
      %v1921 = vpack.c.b16 %v1689, %v1687
      %v1922 = vpack.c.b16 %v1692, %v1690
      %v1923 = vpack.c.b16 %v1693, %v1691
      %v1924 = vpack.c.b16 %v1696, %v1694
      %v1925 = vpack.c.b16 %v1697, %v1695
      %v1926 = vpack.c.b16 %v1700, %v1698
      %v1927 = vpack.c.b16 %v1701, %v1699
      %v1928 = vpack.c.b16 %v1704, %v1702
      %v1929 = vpack.c.b16 %v1705, %v1703
      %v1930 = vpack.c.b16 %v1708, %v1706
      %v1931 = vpack.c.b16 %v1709, %v1707
      %v1932 = vpack.c.b16 %v1712, %v1710
      %v1933 = vpack.c.b16 %v1713, %v1711
      %v1934 = vpack.c.b16 %v1716, %v1714
      %v1935 = vpack.c.b16 %v1717, %v1715
      %v1936 = vpack.c.b16 %v1720, %v1718
      %v1937 = vpack.c.b16 %v1721, %v1719
      %v1938 = vpack.c.b16 %v1724, %v1722
      %v1939 = vpack.c.b16 %v1725, %v1723
      %v1940 = vpack.c.b16 %v1728, %v1726
      %v1941 = vpack.c.b16 %v1729, %v1727
      %v1942 = vpack.c.b16 %v1732, %v1730
      %v1943 = vpack.c.b16 %v1733, %v1731
      %v1944 = vpack.c.b16 %v1736, %v1734
      %v1945 = vpack.c.b16 %v1737, %v1735
      %v1946 = vpack.c.b16 %v1740, %v1738
      %v1947 = vpack.c.b16 %v1741, %v1739
      %v1948 = vpack.c.b16 %v1744, %v1742
      %v1949 = vpack.c.b16 %v1745, %v1743
      %v1950 = vpack.c.b16 %v1748, %v1746
      %v1951 = vpack.c.b16 %v1749, %v1747
      %v1952 = vpack.c.b16 %v1752, %v1750
      %v1953 = vpack.c.b16 %v1753, %v1751
      %v1954 = vpack.c.b16 %v1756, %v1754
      %v1955 = vpack.c.b16 %v1757, %v1755
      %v1956 = vpack.c.b16 %v1760, %v1758
      %v1957 = vpack.c.b16 %v1761, %v1759
      %v1958 = vpack.c.b16 %v1764, %v1762
      %v1959 = vpack.c.b16 %v1765, %v1763
      %v1960 = vpack.c.b16 %v1768, %v1766
      %v1961 = vpack.c.b16 %v1769, %v1767
      %v1962 = vpack.c.b16 %v1772, %v1770
      %v1963 = vpack.c.b16 %v1773, %v1771
      %v1964 = vpack.c.b16 %v1776, %v1774
      %v1965 = vpack.c.b16 %v1777, %v1775
      %v1966 = vpack.c.b16 %v1780, %v1778
      %v1967 = vpack.c.b16 %v1781, %v1779
      %v1968 = vpack.c.b16 %v1784, %v1782
      %v1969 = vpack.c.b16 %v1785, %v1783
      %v1970 = vpack.c.b16 %v1788, %v1786
      %v1971 = vpack.c.b16 %v1789, %v1787
      %v1972 = vpack.c.b16 %v1792, %v1790
      %v1973 = vpack.c.b16 %v1793, %v1791
      %v1974 = vpack.c.b16 %v1796, %v1794
      %v1975 = vpack.c.b16 %v1797, %v1795
      %v1976 = vpack.c.b16 %v1800, %v1798
      %v1977 = vpack.c.b16 %v1801, %v1799
      %v1978 = vpack.c.b16 %v1804, %v1802
      %v1979 = vpack.c.b16 %v1805, %v1803
      %v1980 = vpack.c.b16 %v1808, %v1806
      %v1981 = vpack.c.b16 %v1809, %v1807
      %v1982 = vpack.c.b16 %v1812, %v1810
      %v1983 = vpack.c.b16 %v1813, %v1811
      %v1984 = vpack.c.b16 %v1816, %v1814
      %v1985 = vpack.c.b16 %v1817, %v1815
      %v1986 = vpack.c.b16 %v1820, %v1818
      %v1987 = vpack.c.b16 %v1821, %v1819
      %v1988 = vpack.c.b16 %v1824, %v1822
      %v1989 = vpack.c.b16 %v1825, %v1823
      %v1990 = vpack.c.b16 %v1828, %v1826
      %v1991 = vpack.c.b16 %v1829, %v1827
      %v1992 = vpack.c.b16 %v1832, %v1830
      %v1993 = vpack.c.b16 %v1833, %v1831
      %v1994 = vpack.c.b16 %v1836, %v1834
      %v1995 = vpack.c.b16 %v1837, %v1835
      %v1996 = vpack.c.b16 %v1840, %v1838
      %v1997 = vpack.c.b16 %v1841, %v1839
      %v1998 = vpack.c.b16 %v1844, %v1842
      %v1999 = vpack.c.b16 %v1845, %v1843
      %v2000 = vpack.c.b16 %v1848, %v1846
      %v2001 = vpack.c.b16 %v1849, %v1847
      %v2002 = vpack.c.b16 %v1852, %v1850
      %v2003 = vpack.c.b16 %v1853, %v1851
      %v2004 = vpack.c.b16 %v1856, %v1854
      %v2005 = vpack.c.b16 %v1857, %v1855
      %v2006 = vpack.c.b16 %v1860, %v1858
      %v2007 = vpack.c.b16 %v1861, %v1859
      %v2008 = vpack.c.b16 %v1864, %v1862
      %v2009 = vpack.c.b16 %v1865, %v1863
      %2154 = vmatprep.subr.bf16.mxu0 %v1867
      %2155 = vmatpush1.bf16.msra.mxu0 %v1866
      %2156 = vmatprep.subr.bf16.mxu0 %v1869
      %2157 = vmatpush1.bf16.msra.mxu0 %v1868
      %2158 = vmatprep.subr.bf16.mxu0 %v1871
      %2159 = vmatpush1.bf16.msra.mxu0 %v1870
      %2160 = vmatprep.subr.bf16.mxu0 %v1873
      %2161 = vmatpush1.bf16.msra.mxu0 %v1872
      %2162 = vmatprep.subr.bf16.mxu0 %v1875
      %2163 = vmatpush1.bf16.msra.mxu0 %v1874
      %2164 = vmatprep.subr.bf16.mxu0 %v1877
      %2165 = vmatpush1.bf16.msra.mxu0 %v1876
      %2166 = vmatprep.subr.bf16.mxu0 %v1879
      %2167 = vmatpush1.bf16.msra.mxu0 %v1878
      %2168 = vmatprep.subr.bf16.mxu0 %v1881
      %2169 = vmatpush1.bf16.msra.mxu0 %v1880
      %2170 = vmatprep.subr.bf16.mxu0 %v1883
      %2171 = vmatpush1.bf16.msra.mxu0 %v1882
      %2172 = vmatprep.subr.bf16.mxu0 %v1885
      %2173 = vmatpush1.bf16.msra.mxu0 %v1884
      %2174 = vmatprep.subr.bf16.mxu0 %v1887
      %2175 = vmatpush1.bf16.msra.mxu0 %v1886
      %2176 = vmatprep.subr.bf16.mxu0 %v1889
      %2177 = vmatpush1.bf16.msra.mxu0 %v1888
      %2178 = vmatprep.subr.bf16.mxu0 %v1891
      %2179 = vmatpush1.bf16.msra.mxu0 %v1890
      %2180 = vmatprep.subr.bf16.mxu0 %v1893
      %2181 = vmatpush1.bf16.msra.mxu0 %v1892
      %2182 = vmatprep.subr.bf16.mxu0 %v1895
      %2183 = vmatpush1.bf16.msra.mxu0 %v1894
      %2184 = vmatprep.subr.bf16.mxu0 %v1897
      %2185 = vmatpush1.bf16.msra.mxu0 %v1896
      %2186 = vmatprep.mubr.bf16.mxu0 %v1147
      %2187 = vmatmul.mubr.bf16.gmra.mrb[0].mxu0 %v1146
      %v2188 = vpop.f32.mrb[0].mxu0
      %v2189 = vadd.f32 0.0, %v2188
      %v2190 = vpop.f32.mrb[0].mxu0
      %v2191 = vadd.f32 0.0, %v2190
      %v2192 = vpop.f32.mrb[0].mxu0
      %v2193 = vadd.f32 0.0, %v2192
      %v2194 = vpop.f32.mrb[0].mxu0
      %v2195 = vadd.f32 0.0, %v2194
      %2196 = vmatprep.mubr.bf16.mxu0 %v1156
      %2197 = vmatmul.mubr.bf16.gmra.mrb[0].mxu0 %v1155
      %v2198 = vpop.f32.mrb[0].mxu0
      %v2199 = vadd.f32 0.0, %v2198
      %v2200 = vpop.f32.mrb[0].mxu0
      %v2201 = vadd.f32 0.0, %v2200
      %v2202 = vpop.f32.mrb[0].mxu0
      %v2203 = vadd.f32 0.0, %v2202
      %v2204 = vpop.f32.mrb[0].mxu0
      %v2205 = vadd.f32 0.0, %v2204
      %2206 = vmatprep.mubr.bf16.mxu0 %v1165
      %2207 = vmatmul.mubr.bf16.gmra.mrb[0].mxu0 %v1164
      %v2208 = vpop.f32.mrb[0].mxu0
      %v2209 = vadd.f32 0.0, %v2208
      %v2210 = vpop.f32.mrb[0].mxu0
      %v2211 = vadd.f32 0.0, %v2210
      %v2212 = vpop.f32.mrb[0].mxu0
      %v2213 = vadd.f32 0.0, %v2212
      %v2214 = vpop.f32.mrb[0].mxu0
      %v2215 = vadd.f32 0.0, %v2214
      %2216 = vmatprep.mubr.bf16.mxu0 %v1174
      %2217 = vmatmul.mubr.bf16.gmra.mrb[0].mxu0 %v1173
      %v2218 = vpop.f32.mrb[0].mxu0
      %v2219 = vadd.f32 0.0, %v2218
      %v2220 = vpop.f32.mrb[0].mxu0
      %v2221 = vadd.f32 0.0, %v2220
      %v2222 = vpop.f32.mrb[0].mxu0
      %v2223 = vadd.f32 0.0, %v2222
      %v2224 = vpop.f32.mrb[0].mxu0
      %v2225 = vadd.f32 0.0, %v2224
      %2226 = vmatprep.mubr.bf16.mxu0 %v1183
      %2227 = vmatmul.mubr.bf16.gmra.mrb[0].mxu0 %v1182
      %v2228 = vpop.f32.mrb[0].mxu0
      %v2229 = vadd.f32 0.0, %v2228
      %v2230 = vpop.f32.mrb[0].mxu0
      %v2231 = vadd.f32 0.0, %v2230
      %v2232 = vpop.f32.mrb[0].mxu0
      %v2233 = vadd.f32 0.0, %v2232
      %v2234 = vpop.f32.mrb[0].mxu0
      %v2235 = vadd.f32 0.0, %v2234
      %2236 = vmatprep.mubr.bf16.mxu0 %v1192
      %2237 = vmatmul.mubr.bf16.gmra.mrb[0].mxu0 %v1191
      %v2238 = vpop.f32.mrb[0].mxu0
      %v2239 = vadd.f32 0.0, %v2238
      %v2240 = vpop.f32.mrb[0].mxu0
      %v2241 = vadd.f32 0.0, %v2240
      %v2242 = vpop.f32.mrb[0].mxu0
      %v2243 = vadd.f32 0.0, %v2242
      %v2244 = vpop.f32.mrb[0].mxu0
      %v2245 = vadd.f32 0.0, %v2244
      %2246 = vmatprep.mubr.bf16.mxu0 %v1201
      %2247 = vmatmul.mubr.bf16.gmra.mrb[0].mxu0 %v1200
      %v2248 = vpop.f32.mrb[0].mxu0
      %v2249 = vadd.f32 0.0, %v2248
      %v2250 = vpop.f32.mrb[0].mxu0
      %v2251 = vadd.f32 0.0, %v2250
      %v2252 = vpop.f32.mrb[0].mxu0
      %v2253 = vadd.f32 0.0, %v2252
      %v2254 = vpop.f32.mrb[0].mxu0
      %v2255 = vadd.f32 0.0, %v2254
      %2256 = vmatprep.mubr.bf16.mxu0 %v1210
      %2257 = vmatmul.mubr.bf16.gmra.mrb[0].mxu0 %v1209
      %v2258 = vpop.f32.mrb[0].mxu0
      %v2259 = vadd.f32 0.0, %v2258
      %v2260 = vpop.f32.mrb[0].mxu0
      %v2261 = vadd.f32 0.0, %v2260
      %v2262 = vpop.f32.mrb[0].mxu0
      %v2263 = vadd.f32 0.0, %v2262
      %v2264 = vpop.f32.mrb[0].mxu0
      %v2265 = vadd.f32 0.0, %v2264
      %2266 = vmatprep.mubr.bf16.mxu0 %v1219
      %2267 = vmatmul.mubr.bf16.gmra.mrb[0].mxu0 %v1218
      %v2268 = vpop.f32.mrb[0].mxu0
      %v2269 = vadd.f32 0.0, %v2268
      %v2270 = vpop.f32.mrb[0].mxu0
      %v2271 = vadd.f32 0.0, %v2270
      %v2272 = vpop.f32.mrb[0].mxu0
      %v2273 = vadd.f32 0.0, %v2272
      %v2274 = vpop.f32.mrb[0].mxu0
      %v2275 = vadd.f32 0.0, %v2274
      %2276 = vmatprep.mubr.bf16.mxu0 %v1228
      %2277 = vmatmul.mubr.bf16.gmra.mrb[0].mxu0 %v1227
      %v2278 = vpop.f32.mrb[0].mxu0
      %v2279 = vadd.f32 0.0, %v2278
      %v2280 = vpop.f32.mrb[0].mxu0
      %v2281 = vadd.f32 0.0, %v2280
      %v2282 = vpop.f32.mrb[0].mxu0
      %v2283 = vadd.f32 0.0, %v2282
      %v2284 = vpop.f32.mrb[0].mxu0
      %v2285 = vadd.f32 0.0, %v2284
      %2286 = vmatprep.mubr.bf16.mxu0 %v1237
      %2287 = vmatmul.mubr.bf16.gmra.mrb[0].mxu0 %v1236
      %v2288 = vpop.f32.mrb[0].mxu0
      %v2289 = vadd.f32 0.0, %v2288
      %v2290 = vpop.f32.mrb[0].mxu0
      %v2291 = vadd.f32 0.0, %v2290
      %v2292 = vpop.f32.mrb[0].mxu0
      %v2293 = vadd.f32 0.0, %v2292
      %v2294 = vpop.f32.mrb[0].mxu0
      %v2295 = vadd.f32 0.0, %v2294
      %2296 = vmatprep.mubr.bf16.mxu0 %v1246
      %2297 = vmatmul.mubr.bf16.gmra.mrb[0].mxu0 %v1245
      %v2298 = vpop.f32.mrb[0].mxu0
      %v2299 = vadd.f32 0.0, %v2298
      %v2300 = vpop.f32.mrb[0].mxu0
      %v2301 = vadd.f32 0.0, %v2300
      %v2302 = vpop.f32.mrb[0].mxu0
      %v2303 = vadd.f32 0.0, %v2302
      %v2304 = vpop.f32.mrb[0].mxu0
      %v2305 = vadd.f32 0.0, %v2304
      %2306 = vmatprep.mubr.bf16.mxu0 %v1255
      %2307 = vmatmul.mubr.bf16.gmra.mrb[0].mxu0 %v1254
      %v2308 = vpop.f32.mrb[0].mxu0
      %v2309 = vadd.f32 0.0, %v2308
      %v2310 = vpop.f32.mrb[0].mxu0
      %v2311 = vadd.f32 0.0, %v2310
      %v2312 = vpop.f32.mrb[0].mxu0
      %v2313 = vadd.f32 0.0, %v2312
      %v2314 = vpop.f32.mrb[0].mxu0
      %v2315 = vadd.f32 0.0, %v2314
      %2316 = vmatprep.mubr.bf16.mxu0 %v1264
      %2317 = vmatmul.mubr.bf16.gmra.mrb[0].mxu0 %v1263
      %v2318 = vpop.f32.mrb[0].mxu0
      %v2319 = vadd.f32 0.0, %v2318
      %v2320 = vpop.f32.mrb[0].mxu0
      %v2321 = vadd.f32 0.0, %v2320
      %v2322 = vpop.f32.mrb[0].mxu0
      %v2323 = vadd.f32 0.0, %v2322
      %v2324 = vpop.f32.mrb[0].mxu0
      %v2325 = vadd.f32 0.0, %v2324
      %2326 = vmatprep.mubr.bf16.mxu0 %v1273
      %2327 = vmatmul.mubr.bf16.gmra.mrb[0].mxu0 %v1272
      %v2328 = vpop.f32.mrb[0].mxu0
      %v2329 = vadd.f32 0.0, %v2328
      %v2330 = vpop.f32.mrb[0].mxu0
      %v2331 = vadd.f32 0.0, %v2330
      %v2332 = vpop.f32.mrb[0].mxu0
      %v2333 = vadd.f32 0.0, %v2332
      %v2334 = vpop.f32.mrb[0].mxu0
      %v2335 = vadd.f32 0.0, %v2334
      %2336 = vmatprep.mubr.bf16.mxu0 %v1282
      %2337 = vmatmul.mubr.bf16.gmra.mrb[0].mxu0 %v1281
      %v2338 = vpop.f32.mrb[0].mxu0
      %v2339 = vadd.f32 0.0, %v2338
      %v2340 = vpop.f32.mrb[0].mxu0
      %v2341 = vadd.f32 0.0, %v2340
      %v2342 = vpop.f32.mrb[0].mxu0
      %v2343 = vadd.f32 0.0, %v2342
      %v2344 = vpop.f32.mrb[0].mxu0
      %v2345 = vadd.f32 0.0, %v2344
      %2346 = vdwg.mxu0
      %2347 = vmatprep.subr.bf16.mxu0 %v1899
      %2348 = vmatpush1.bf16.msra.mxu0 %v1898
      %2349 = vmatprep.subr.bf16.mxu0 %v1901
      %2350 = vmatpush1.bf16.msra.mxu0 %v1900
      %2351 = vmatprep.subr.bf16.mxu0 %v1903
      %2352 = vmatpush1.bf16.msra.mxu0 %v1902
      %2353 = vmatprep.subr.bf16.mxu0 %v1905
      %2354 = vmatpush1.bf16.msra.mxu0 %v1904
      %2355 = vmatprep.subr.bf16.mxu0 %v1907
      %2356 = vmatpush1.bf16.msra.mxu0 %v1906
      %2357 = vmatprep.subr.bf16.mxu0 %v1909
      %2358 = vmatpush1.bf16.msra.mxu0 %v1908
      %2359 = vmatprep.subr.bf16.mxu0 %v1911
      %2360 = vmatpush1.bf16.msra.mxu0 %v1910
      %2361 = vmatprep.subr.bf16.mxu0 %v1913
      %2362 = vmatpush1.bf16.msra.mxu0 %v1912
      %2363 = vmatprep.subr.bf16.mxu0 %v1915
      %2364 = vmatpush1.bf16.msra.mxu0 %v1914
      %2365 = vmatprep.subr.bf16.mxu0 %v1917
      %2366 = vmatpush1.bf16.msra.mxu0 %v1916
      %2367 = vmatprep.subr.bf16.mxu0 %v1919
      %2368 = vmatpush1.bf16.msra.mxu0 %v1918
      %2369 = vmatprep.subr.bf16.mxu0 %v1921
      %2370 = vmatpush1.bf16.msra.mxu0 %v1920
      %2371 = vmatprep.subr.bf16.mxu0 %v1923
      %2372 = vmatpush1.bf16.msra.mxu0 %v1922
      %2373 = vmatprep.subr.bf16.mxu0 %v1925
      %2374 = vmatpush1.bf16.msra.mxu0 %v1924
      %2375 = vmatprep.subr.bf16.mxu0 %v1927
      %2376 = vmatpush1.bf16.msra.mxu0 %v1926
      %2377 = vmatprep.subr.bf16.mxu0 %v1929
      %2378 = vmatpush1.bf16.msra.mxu0 %v1928
      %2379 = vmatprep.mubr.bf16.mxu0 %v1149
      %2380 = vmatmul.mubr.bf16.gmra.mrb[0].mxu0 %v1148
      %v2381 = vpop.f32.mrb[0].mxu0
      %v2382 = vadd.f32 %v2189, %v2381
      %v2383 = vpop.f32.mrb[0].mxu0
      %v2384 = vadd.f32 %v2191, %v2383
      %v2385 = vpop.f32.mrb[0].mxu0
      %v2386 = vadd.f32 %v2193, %v2385
      %v2387 = vpop.f32.mrb[0].mxu0
      %v2388 = vadd.f32 %v2195, %v2387
      %2389 = vmatprep.mubr.bf16.mxu0 %v1158
      %2390 = vmatmul.mubr.bf16.gmra.mrb[0].mxu0 %v1157
      %v2391 = vpop.f32.mrb[0].mxu0
      %v2392 = vadd.f32 %v2199, %v2391
      %v2393 = vpop.f32.mrb[0].mxu0
      %v2394 = vadd.f32 %v2201, %v2393
      %v2395 = vpop.f32.mrb[0].mxu0
      %v2396 = vadd.f32 %v2203, %v2395
      %v2397 = vpop.f32.mrb[0].mxu0
      %v2398 = vadd.f32 %v2205, %v2397
      %2399 = vmatprep.mubr.bf16.mxu0 %v1167
      %2400 = vmatmul.mubr.bf16.gmra.mrb[0].mxu0 %v1166
      %v2401 = vpop.f32.mrb[0].mxu0
      %v2402 = vadd.f32 %v2209, %v2401
      %v2403 = vpop.f32.mrb[0].mxu0
      %v2404 = vadd.f32 %v2211, %v2403
      %v2405 = vpop.f32.mrb[0].mxu0
      %v2406 = vadd.f32 %v2213, %v2405
      %v2407 = vpop.f32.mrb[0].mxu0
      %v2408 = vadd.f32 %v2215, %v2407
      %2409 = vmatprep.mubr.bf16.mxu0 %v1176
      %2410 = vmatmul.mubr.bf16.gmra.mrb[0].mxu0 %v1175
      %v2411 = vpop.f32.mrb[0].mxu0
      %v2412 = vadd.f32 %v2219, %v2411
      %v2413 = vpop.f32.mrb[0].mxu0
      %v2414 = vadd.f32 %v2221, %v2413
      %v2415 = vpop.f32.mrb[0].mxu0
      %v2416 = vadd.f32 %v2223, %v2415
      %v2417 = vpop.f32.mrb[0].mxu0
      %v2418 = vadd.f32 %v2225, %v2417
      %2419 = vmatprep.mubr.bf16.mxu0 %v1185
      %2420 = vmatmul.mubr.bf16.gmra.mrb[0].mxu0 %v1184
      %v2421 = vpop.f32.mrb[0].mxu0
      %v2422 = vadd.f32 %v2229, %v2421
      %v2423 = vpop.f32.mrb[0].mxu0
      %v2424 = vadd.f32 %v2231, %v2423
      %v2425 = vpop.f32.mrb[0].mxu0
      %v2426 = vadd.f32 %v2233, %v2425
      %v2427 = vpop.f32.mrb[0].mxu0
      %v2428 = vadd.f32 %v2235, %v2427
      %2429 = vmatprep.mubr.bf16.mxu0 %v1194
      %2430 = vmatmul.mubr.bf16.gmra.mrb[0].mxu0 %v1193
      %v2431 = vpop.f32.mrb[0].mxu0
      %v2432 = vadd.f32 %v2239, %v2431
      %v2433 = vpop.f32.mrb[0].mxu0
      %v2434 = vadd.f32 %v2241, %v2433
      %v2435 = vpop.f32.mrb[0].mxu0
      %v2436 = vadd.f32 %v2243, %v2435
      %v2437 = vpop.f32.mrb[0].mxu0
      %v2438 = vadd.f32 %v2245, %v2437
      %2439 = vmatprep.mubr.bf16.mxu0 %v1203
      %2440 = vmatmul.mubr.bf16.gmra.mrb[0].mxu0 %v1202
      %v2441 = vpop.f32.mrb[0].mxu0
      %v2442 = vadd.f32 %v2249, %v2441
      %v2443 = vpop.f32.mrb[0].mxu0
      %v2444 = vadd.f32 %v2251, %v2443
      %v2445 = vpop.f32.mrb[0].mxu0
      %v2446 = vadd.f32 %v2253, %v2445
      %v2447 = vpop.f32.mrb[0].mxu0
      %v2448 = vadd.f32 %v2255, %v2447
      %2449 = vmatprep.mubr.bf16.mxu0 %v1212
      %2450 = vmatmul.mubr.bf16.gmra.mrb[0].mxu0 %v1211
      %v2451 = vpop.f32.mrb[0].mxu0
      %v2452 = vadd.f32 %v2259, %v2451
      %v2453 = vpop.f32.mrb[0].mxu0
      %v2454 = vadd.f32 %v2261, %v2453
      %v2455 = vpop.f32.mrb[0].mxu0
      %v2456 = vadd.f32 %v2263, %v2455
      %v2457 = vpop.f32.mrb[0].mxu0
      %v2458 = vadd.f32 %v2265, %v2457
      %2459 = vmatprep.mubr.bf16.mxu0 %v1221
      %2460 = vmatmul.mubr.bf16.gmra.mrb[0].mxu0 %v1220
      %v2461 = vpop.f32.mrb[0].mxu0
      %v2462 = vadd.f32 %v2269, %v2461
      %v2463 = vpop.f32.mrb[0].mxu0
      %v2464 = vadd.f32 %v2271, %v2463
      %v2465 = vpop.f32.mrb[0].mxu0
      %v2466 = vadd.f32 %v2273, %v2465
      %v2467 = vpop.f32.mrb[0].mxu0
      %v2468 = vadd.f32 %v2275, %v2467
      %2469 = vmatprep.mubr.bf16.mxu0 %v1230
      %2470 = vmatmul.mubr.bf16.gmra.mrb[0].mxu0 %v1229
      %v2471 = vpop.f32.mrb[0].mxu0
      %v2472 = vadd.f32 %v2279, %v2471
      %v2473 = vpop.f32.mrb[0].mxu0
      %v2474 = vadd.f32 %v2281, %v2473
      %v2475 = vpop.f32.mrb[0].mxu0
      %v2476 = vadd.f32 %v2283, %v2475
      %v2477 = vpop.f32.mrb[0].mxu0
      %v2478 = vadd.f32 %v2285, %v2477
      %2479 = vmatprep.mubr.bf16.mxu0 %v1239
      %2480 = vmatmul.mubr.bf16.gmra.mrb[0].mxu0 %v1238
      %v2481 = vpop.f32.mrb[0].mxu0
      %v2482 = vadd.f32 %v2289, %v2481
      %v2483 = vpop.f32.mrb[0].mxu0
      %v2484 = vadd.f32 %v2291, %v2483
      %v2485 = vpop.f32.mrb[0].mxu0
      %v2486 = vadd.f32 %v2293, %v2485
      %v2487 = vpop.f32.mrb[0].mxu0
      %v2488 = vadd.f32 %v2295, %v2487
      %2489 = vmatprep.mubr.bf16.mxu0 %v1248
      %2490 = vmatmul.mubr.bf16.gmra.mrb[0].mxu0 %v1247
      %v2491 = vpop.f32.mrb[0].mxu0
      %v2492 = vadd.f32 %v2299, %v2491
      %v2493 = vpop.f32.mrb[0].mxu0
      %v2494 = vadd.f32 %v2301, %v2493
      %v2495 = vpop.f32.mrb[0].mxu0
      %v2496 = vadd.f32 %v2303, %v2495
      %v2497 = vpop.f32.mrb[0].mxu0
      %v2498 = vadd.f32 %v2305, %v2497
      %2499 = vmatprep.mubr.bf16.mxu0 %v1257
      %2500 = vmatmul.mubr.bf16.gmra.mrb[0].mxu0 %v1256
      %v2501 = vpop.f32.mrb[0].mxu0
      %v2502 = vadd.f32 %v2309, %v2501
      %v2503 = vpop.f32.mrb[0].mxu0
      %v2504 = vadd.f32 %v2311, %v2503
      %v2505 = vpop.f32.mrb[0].mxu0
      %v2506 = vadd.f32 %v2313, %v2505
      %v2507 = vpop.f32.mrb[0].mxu0
      %v2508 = vadd.f32 %v2315, %v2507
      %2509 = vmatprep.mubr.bf16.mxu0 %v1266
      %2510 = vmatmul.mubr.bf16.gmra.mrb[0].mxu0 %v1265
      %v2511 = vpop.f32.mrb[0].mxu0
      %v2512 = vadd.f32 %v2319, %v2511
      %v2513 = vpop.f32.mrb[0].mxu0
      %v2514 = vadd.f32 %v2321, %v2513
      %v2515 = vpop.f32.mrb[0].mxu0
      %v2516 = vadd.f32 %v2323, %v2515
      %v2517 = vpop.f32.mrb[0].mxu0
      %v2518 = vadd.f32 %v2325, %v2517
      %2519 = vmatprep.mubr.bf16.mxu0 %v1275
      %2520 = vmatmul.mubr.bf16.gmra.mrb[0].mxu0 %v1274
      %v2521 = vpop.f32.mrb[0].mxu0
      %v2522 = vadd.f32 %v2329, %v2521
      %v2523 = vpop.f32.mrb[0].mxu0
      %v2524 = vadd.f32 %v2331, %v2523
      %v2525 = vpop.f32.mrb[0].mxu0
      %v2526 = vadd.f32 %v2333, %v2525
      %v2527 = vpop.f32.mrb[0].mxu0
      %v2528 = vadd.f32 %v2335, %v2527
      %2529 = vmatprep.mubr.bf16.mxu0 %v1284
      %2530 = vmatmul.mubr.bf16.gmra.mrb[0].mxu0 %v1283
      %v2531 = vpop.f32.mrb[0].mxu0
      %v2532 = vadd.f32 %v2339, %v2531
      %v2533 = vpop.f32.mrb[0].mxu0
      %v2534 = vadd.f32 %v2341, %v2533
      %v2535 = vpop.f32.mrb[0].mxu0
      %v2536 = vadd.f32 %v2343, %v2535
      %v2537 = vpop.f32.mrb[0].mxu0
      %v2538 = vadd.f32 %v2345, %v2537
      %2539 = vdwg.mxu0
      %2540 = vmatprep.subr.bf16.mxu0 %v1931
      %2541 = vmatpush1.bf16.msra.mxu0 %v1930
      %2542 = vmatprep.subr.bf16.mxu0 %v1933
      %2543 = vmatpush1.bf16.msra.mxu0 %v1932
      %2544 = vmatprep.subr.bf16.mxu0 %v1935
      %2545 = vmatpush1.bf16.msra.mxu0 %v1934
      %2546 = vmatprep.subr.bf16.mxu0 %v1937
      %2547 = vmatpush1.bf16.msra.mxu0 %v1936
      %2548 = vmatprep.subr.bf16.mxu0 %v1939
      %2549 = vmatpush1.bf16.msra.mxu0 %v1938
      %2550 = vmatprep.subr.bf16.mxu0 %v1941
      %2551 = vmatpush1.bf16.msra.mxu0 %v1940
      %2552 = vmatprep.subr.bf16.mxu0 %v1943
      %2553 = vmatpush1.bf16.msra.mxu0 %v1942
      %2554 = vmatprep.subr.bf16.mxu0 %v1945
      %2555 = vmatpush1.bf16.msra.mxu0 %v1944
      %2556 = vmatprep.subr.bf16.mxu0 %v1947
      %2557 = vmatpush1.bf16.msra.mxu0 %v1946
      %2558 = vmatprep.subr.bf16.mxu0 %v1949
      %2559 = vmatpush1.bf16.msra.mxu0 %v1948
      %2560 = vmatprep.subr.bf16.mxu0 %v1951
      %2561 = vmatpush1.bf16.msra.mxu0 %v1950
      %2562 = vmatprep.subr.bf16.mxu0 %v1953
      %2563 = vmatpush1.bf16.msra.mxu0 %v1952
      %2564 = vmatprep.subr.bf16.mxu0 %v1955
      %2565 = vmatpush1.bf16.msra.mxu0 %v1954
      %2566 = vmatprep.subr.bf16.mxu0 %v1957
      %2567 = vmatpush1.bf16.msra.mxu0 %v1956
      %2568 = vmatprep.subr.bf16.mxu0 %v1959
      %2569 = vmatpush1.bf16.msra.mxu0 %v1958
      %2570 = vmatprep.subr.bf16.mxu0 %v1961
      %2571 = vmatpush1.bf16.msra.mxu0 %v1960
      %2572 = vmatprep.mubr.bf16.mxu0 %v1151
      %2573 = vmatmul.mubr.bf16.gmra.mrb[0].mxu0 %v1150
      %v2574 = vpop.f32.mrb[0].mxu0
      %v2575 = vadd.f32 %v2382, %v2574
      %v2576 = vpop.f32.mrb[0].mxu0
      %v2577 = vadd.f32 %v2384, %v2576
      %v2578 = vpop.f32.mrb[0].mxu0
      %v2579 = vadd.f32 %v2386, %v2578
      %v2580 = vpop.f32.mrb[0].mxu0
      %v2581 = vadd.f32 %v2388, %v2580
      %2582 = vmatprep.mubr.bf16.mxu0 %v1160
      %2583 = vmatmul.mubr.bf16.gmra.mrb[0].mxu0 %v1159
      %v2584 = vpop.f32.mrb[0].mxu0
      %v2585 = vadd.f32 %v2392, %v2584
      %v2586 = vpop.f32.mrb[0].mxu0
      %v2587 = vadd.f32 %v2394, %v2586
      %v2588 = vpop.f32.mrb[0].mxu0
      %v2589 = vadd.f32 %v2396, %v2588
      %v2590 = vpop.f32.mrb[0].mxu0
      %v2591 = vadd.f32 %v2398, %v2590
      %2592 = vmatprep.mubr.bf16.mxu0 %v1169
      %2593 = vmatmul.mubr.bf16.gmra.mrb[0].mxu0 %v1168
      %v2594 = vpop.f32.mrb[0].mxu0
      %v2595 = vadd.f32 %v2402, %v2594
      %v2596 = vpop.f32.mrb[0].mxu0
      %v2597 = vadd.f32 %v2404, %v2596
      %v2598 = vpop.f32.mrb[0].mxu0
      %v2599 = vadd.f32 %v2406, %v2598
      %v2600 = vpop.f32.mrb[0].mxu0
      %v2601 = vadd.f32 %v2408, %v2600
      %2602 = vmatprep.mubr.bf16.mxu0 %v1178
      %2603 = vmatmul.mubr.bf16.gmra.mrb[0].mxu0 %v1177
      %v2604 = vpop.f32.mrb[0].mxu0
      %v2605 = vadd.f32 %v2412, %v2604
      %v2606 = vpop.f32.mrb[0].mxu0
      %v2607 = vadd.f32 %v2414, %v2606
      %v2608 = vpop.f32.mrb[0].mxu0
      %v2609 = vadd.f32 %v2416, %v2608
      %v2610 = vpop.f32.mrb[0].mxu0
      %v2611 = vadd.f32 %v2418, %v2610
      %2612 = vmatprep.mubr.bf16.mxu0 %v1187
      %2613 = vmatmul.mubr.bf16.gmra.mrb[0].mxu0 %v1186
      %v2614 = vpop.f32.mrb[0].mxu0
      %v2615 = vadd.f32 %v2422, %v2614
      %v2616 = vpop.f32.mrb[0].mxu0
      %v2617 = vadd.f32 %v2424, %v2616
      %v2618 = vpop.f32.mrb[0].mxu0
      %v2619 = vadd.f32 %v2426, %v2618
      %v2620 = vpop.f32.mrb[0].mxu0
      %v2621 = vadd.f32 %v2428, %v2620
      %2622 = vmatprep.mubr.bf16.mxu0 %v1196
      %2623 = vmatmul.mubr.bf16.gmra.mrb[0].mxu0 %v1195
      %v2624 = vpop.f32.mrb[0].mxu0
      %v2625 = vadd.f32 %v2432, %v2624
      %v2626 = vpop.f32.mrb[0].mxu0
      %v2627 = vadd.f32 %v2434, %v2626
      %v2628 = vpop.f32.mrb[0].mxu0
      %v2629 = vadd.f32 %v2436, %v2628
      %v2630 = vpop.f32.mrb[0].mxu0
      %v2631 = vadd.f32 %v2438, %v2630
      %2632 = vmatprep.mubr.bf16.mxu0 %v1205
      %2633 = vmatmul.mubr.bf16.gmra.mrb[0].mxu0 %v1204
      %v2634 = vpop.f32.mrb[0].mxu0
      %v2635 = vadd.f32 %v2442, %v2634
      %v2636 = vpop.f32.mrb[0].mxu0
      %v2637 = vadd.f32 %v2444, %v2636
      %v2638 = vpop.f32.mrb[0].mxu0
      %v2639 = vadd.f32 %v2446, %v2638
      %v2640 = vpop.f32.mrb[0].mxu0
      %v2641 = vadd.f32 %v2448, %v2640
      %2642 = vmatprep.mubr.bf16.mxu0 %v1214
      %2643 = vmatmul.mubr.bf16.gmra.mrb[0].mxu0 %v1213
      %v2644 = vpop.f32.mrb[0].mxu0
      %v2645 = vadd.f32 %v2452, %v2644
      %v2646 = vpop.f32.mrb[0].mxu0
      %v2647 = vadd.f32 %v2454, %v2646
      %v2648 = vpop.f32.mrb[0].mxu0
      %v2649 = vadd.f32 %v2456, %v2648
      %v2650 = vpop.f32.mrb[0].mxu0
      %v2651 = vadd.f32 %v2458, %v2650
      %2652 = vmatprep.mubr.bf16.mxu0 %v1223
      %2653 = vmatmul.mubr.bf16.gmra.mrb[0].mxu0 %v1222
      %v2654 = vpop.f32.mrb[0].mxu0
      %v2655 = vadd.f32 %v2462, %v2654
      %v2656 = vpop.f32.mrb[0].mxu0
      %v2657 = vadd.f32 %v2464, %v2656
      %v2658 = vpop.f32.mrb[0].mxu0
      %v2659 = vadd.f32 %v2466, %v2658
      %v2660 = vpop.f32.mrb[0].mxu0
      %v2661 = vadd.f32 %v2468, %v2660
      %2662 = vmatprep.mubr.bf16.mxu0 %v1232
      %2663 = vmatmul.mubr.bf16.gmra.mrb[0].mxu0 %v1231
      %v2664 = vpop.f32.mrb[0].mxu0
      %v2665 = vadd.f32 %v2472, %v2664
      %v2666 = vpop.f32.mrb[0].mxu0
      %v2667 = vadd.f32 %v2474, %v2666
      %v2668 = vpop.f32.mrb[0].mxu0
      %v2669 = vadd.f32 %v2476, %v2668
      %v2670 = vpop.f32.mrb[0].mxu0
      %v2671 = vadd.f32 %v2478, %v2670
      %2672 = vmatprep.mubr.bf16.mxu0 %v1241
      %2673 = vmatmul.mubr.bf16.gmra.mrb[0].mxu0 %v1240
      %v2674 = vpop.f32.mrb[0].mxu0
      %v2675 = vadd.f32 %v2482, %v2674
      %v2676 = vpop.f32.mrb[0].mxu0
      %v2677 = vadd.f32 %v2484, %v2676
      %v2678 = vpop.f32.mrb[0].mxu0
      %v2679 = vadd.f32 %v2486, %v2678
      %v2680 = vpop.f32.mrb[0].mxu0
      %v2681 = vadd.f32 %v2488, %v2680
      %2682 = vmatprep.mubr.bf16.mxu0 %v1250
      %2683 = vmatmul.mubr.bf16.gmra.mrb[0].mxu0 %v1249
      %v2684 = vpop.f32.mrb[0].mxu0
      %v2685 = vadd.f32 %v2492, %v2684
      %v2686 = vpop.f32.mrb[0].mxu0
      %v2687 = vadd.f32 %v2494, %v2686
      %v2688 = vpop.f32.mrb[0].mxu0
      %v2689 = vadd.f32 %v2496, %v2688
      %v2690 = vpop.f32.mrb[0].mxu0
      %v2691 = vadd.f32 %v2498, %v2690
      %2692 = vmatprep.mubr.bf16.mxu0 %v1259
      %2693 = vmatmul.mubr.bf16.gmra.mrb[0].mxu0 %v1258
      %v2694 = vpop.f32.mrb[0].mxu0
      %v2695 = vadd.f32 %v2502, %v2694
      %v2696 = vpop.f32.mrb[0].mxu0
      %v2697 = vadd.f32 %v2504, %v2696
      %v2698 = vpop.f32.mrb[0].mxu0
      %v2699 = vadd.f32 %v2506, %v2698
      %v2700 = vpop.f32.mrb[0].mxu0
      %v2701 = vadd.f32 %v2508, %v2700
      %2702 = vmatprep.mubr.bf16.mxu0 %v1268
      %2703 = vmatmul.mubr.bf16.gmra.mrb[0].mxu0 %v1267
      %v2704 = vpop.f32.mrb[0].mxu0
      %v2705 = vadd.f32 %v2512, %v2704
      %v2706 = vpop.f32.mrb[0].mxu0
      %v2707 = vadd.f32 %v2514, %v2706
      %v2708 = vpop.f32.mrb[0].mxu0
      %v2709 = vadd.f32 %v2516, %v2708
      %v2710 = vpop.f32.mrb[0].mxu0
      %v2711 = vadd.f32 %v2518, %v2710
      %2712 = vmatprep.mubr.bf16.mxu0 %v1277
      %2713 = vmatmul.mubr.bf16.gmra.mrb[0].mxu0 %v1276
      %v2714 = vpop.f32.mrb[0].mxu0
      %v2715 = vadd.f32 %v2522, %v2714
      %v2716 = vpop.f32.mrb[0].mxu0
      %v2717 = vadd.f32 %v2524, %v2716
      %v2718 = vpop.f32.mrb[0].mxu0
      %v2719 = vadd.f32 %v2526, %v2718
      %v2720 = vpop.f32.mrb[0].mxu0
      %v2721 = vadd.f32 %v2528, %v2720
      %2722 = vmatprep.mubr.bf16.mxu0 %v1286
      %2723 = vmatmul.mubr.bf16.gmra.mrb[0].mxu0 %v1285
      %v2724 = vpop.f32.mrb[0].mxu0
      %v2725 = vadd.f32 %v2532, %v2724
      %v2726 = vpop.f32.mrb[0].mxu0
      %v2727 = vadd.f32 %v2534, %v2726
      %v2728 = vpop.f32.mrb[0].mxu0
      %v2729 = vadd.f32 %v2536, %v2728
      %v2730 = vpop.f32.mrb[0].mxu0
      %v2731 = vadd.f32 %v2538, %v2730
      %2732 = vdwg.mxu0
      %2733 = vmatprep.subr.bf16.mxu0 %v1963
      %2734 = vmatpush1.bf16.msra.mxu0 %v1962
      %2735 = vmatprep.subr.bf16.mxu0 %v1965
      %2736 = vmatpush1.bf16.msra.mxu0 %v1964
      %2737 = vmatprep.subr.bf16.mxu0 %v1967
      %2738 = vmatpush1.bf16.msra.mxu0 %v1966
      %2739 = vmatprep.subr.bf16.mxu0 %v1969
      %2740 = vmatpush1.bf16.msra.mxu0 %v1968
      %2741 = vmatprep.subr.bf16.mxu0 %v1971
      %2742 = vmatpush1.bf16.msra.mxu0 %v1970
      %2743 = vmatprep.subr.bf16.mxu0 %v1973
      %2744 = vmatpush1.bf16.msra.mxu0 %v1972
      %2745 = vmatprep.subr.bf16.mxu0 %v1975
      %2746 = vmatpush1.bf16.msra.mxu0 %v1974
      %2747 = vmatprep.subr.bf16.mxu0 %v1977
      %2748 = vmatpush1.bf16.msra.mxu0 %v1976
      %2749 = vmatprep.subr.bf16.mxu0 %v1979
      %2750 = vmatpush1.bf16.msra.mxu0 %v1978
      %2751 = vmatprep.subr.bf16.mxu0 %v1981
      %2752 = vmatpush1.bf16.msra.mxu0 %v1980
      %2753 = vmatprep.subr.bf16.mxu0 %v1983
      %2754 = vmatpush1.bf16.msra.mxu0 %v1982
      %2755 = vmatprep.subr.bf16.mxu0 %v1985
      %2756 = vmatpush1.bf16.msra.mxu0 %v1984
      %2757 = vmatprep.subr.bf16.mxu0 %v1987
      %2758 = vmatpush1.bf16.msra.mxu0 %v1986
      %2759 = vmatprep.subr.bf16.mxu0 %v1989
      %2760 = vmatpush1.bf16.msra.mxu0 %v1988
      %2761 = vmatprep.subr.bf16.mxu0 %v1991
      %2762 = vmatpush1.bf16.msra.mxu0 %v1990
      %2763 = vmatprep.subr.bf16.mxu0 %v1993
      %2764 = vmatpush1.bf16.msra.mxu0 %v1992
      %2765 = vmatprep.mubr.bf16.mxu0 %v1153
      %2766 = vmatmul.mubr.bf16.gmra.mrb[0].mxu0 %v1152
      %v2767 = vpop.f32.mrb[0].mxu0
      %v2768 = vadd.f32 %v2575, %v2767
      %v2769 = vpop.f32.mrb[0].mxu0
      %v2770 = vadd.f32 %v2577, %v2769
      %v2771 = vpop.f32.mrb[0].mxu0
      %v2772 = vadd.f32 %v2579, %v2771
      %v2773 = vpop.f32.mrb[0].mxu0
      %v2774 = vadd.f32 %v2581, %v2773
      %2775 = vmatprep.mubr.bf16.mxu0 %v1162
      %2776 = vmatmul.mubr.bf16.gmra.mrb[0].mxu0 %v1161
      %v2777 = vpop.f32.mrb[0].mxu0
      %v2778 = vadd.f32 %v2585, %v2777
      %v2779 = vpop.f32.mrb[0].mxu0
      %v2780 = vadd.f32 %v2587, %v2779
      %v2781 = vpop.f32.mrb[0].mxu0
      %v2782 = vadd.f32 %v2589, %v2781
      %v2783 = vpop.f32.mrb[0].mxu0
      %v2784 = vadd.f32 %v2591, %v2783
      %2785 = vmatprep.mubr.bf16.mxu0 %v1171
      %2786 = vmatmul.mubr.bf16.gmra.mrb[0].mxu0 %v1170
      %v2787 = vpop.f32.mrb[0].mxu0
      %v2788 = vadd.f32 %v2595, %v2787
      %v2789 = vpop.f32.mrb[0].mxu0
      %v2790 = vadd.f32 %v2597, %v2789
      %v2791 = vpop.f32.mrb[0].mxu0
      %v2792 = vadd.f32 %v2599, %v2791
      %v2793 = vpop.f32.mrb[0].mxu0
      %v2794 = vadd.f32 %v2601, %v2793
      %2795 = vmatprep.mubr.bf16.mxu0 %v1180
      %2796 = vmatmul.mubr.bf16.gmra.mrb[0].mxu0 %v1179
      %v2797 = vpop.f32.mrb[0].mxu0
      %v2798 = vadd.f32 %v2605, %v2797
      %v2799 = vpop.f32.mrb[0].mxu0
      %v2800 = vadd.f32 %v2607, %v2799
      %v2801 = vpop.f32.mrb[0].mxu0
      %v2802 = vadd.f32 %v2609, %v2801
      %v2803 = vpop.f32.mrb[0].mxu0
      %v2804 = vadd.f32 %v2611, %v2803
      %2805 = vmatprep.mubr.bf16.mxu0 %v1189
      %2806 = vmatmul.mubr.bf16.gmra.mrb[0].mxu0 %v1188
      %v2807 = vpop.f32.mrb[0].mxu0
      %v2808 = vadd.f32 %v2615, %v2807
      %v2809 = vpop.f32.mrb[0].mxu0
      %v2810 = vadd.f32 %v2617, %v2809
      %v2811 = vpop.f32.mrb[0].mxu0
      %v2812 = vadd.f32 %v2619, %v2811
      %v2813 = vpop.f32.mrb[0].mxu0
      %v2814 = vadd.f32 %v2621, %v2813
      %2815 = vmatprep.mubr.bf16.mxu0 %v1198
      %2816 = vmatmul.mubr.bf16.gmra.mrb[0].mxu0 %v1197
      %v2817 = vpop.f32.mrb[0].mxu0
      %v2818 = vadd.f32 %v2625, %v2817
      %v2819 = vpop.f32.mrb[0].mxu0
      %v2820 = vadd.f32 %v2627, %v2819
      %v2821 = vpop.f32.mrb[0].mxu0
      %v2822 = vadd.f32 %v2629, %v2821
      %v2823 = vpop.f32.mrb[0].mxu0
      %v2824 = vadd.f32 %v2631, %v2823
      %2825 = vmatprep.mubr.bf16.mxu0 %v1207
      %2826 = vmatmul.mubr.bf16.gmra.mrb[0].mxu0 %v1206
      %v2827 = vpop.f32.mrb[0].mxu0
      %v2828 = vadd.f32 %v2635, %v2827
      %v2829 = vpop.f32.mrb[0].mxu0
      %v2830 = vadd.f32 %v2637, %v2829
      %v2831 = vpop.f32.mrb[0].mxu0
      %v2832 = vadd.f32 %v2639, %v2831
      %v2833 = vpop.f32.mrb[0].mxu0
      %v2834 = vadd.f32 %v2641, %v2833
      %2835 = vmatprep.mubr.bf16.mxu0 %v1216
      %2836 = vmatmul.mubr.bf16.gmra.mrb[0].mxu0 %v1215
      %v2837 = vpop.f32.mrb[0].mxu0
      %v2838 = vadd.f32 %v2645, %v2837
      %v2839 = vpop.f32.mrb[0].mxu0
      %v2840 = vadd.f32 %v2647, %v2839
      %v2841 = vpop.f32.mrb[0].mxu0
      %v2842 = vadd.f32 %v2649, %v2841
      %v2843 = vpop.f32.mrb[0].mxu0
      %v2844 = vadd.f32 %v2651, %v2843
      %2845 = vmatprep.mubr.bf16.mxu0 %v1225
      %2846 = vmatmul.mubr.bf16.gmra.mrb[0].mxu0 %v1224
      %v2847 = vpop.f32.mrb[0].mxu0
      %v2848 = vadd.f32 %v2655, %v2847
      %v2849 = vpop.f32.mrb[0].mxu0
      %v2850 = vadd.f32 %v2657, %v2849
      %v2851 = vpop.f32.mrb[0].mxu0
      %v2852 = vadd.f32 %v2659, %v2851
      %v2853 = vpop.f32.mrb[0].mxu0
      %v2854 = vadd.f32 %v2661, %v2853
      %2855 = vmatprep.mubr.bf16.mxu0 %v1234
      %2856 = vmatmul.mubr.bf16.gmra.mrb[0].mxu0 %v1233
      %v2857 = vpop.f32.mrb[0].mxu0
      %v2858 = vadd.f32 %v2665, %v2857
      %v2859 = vpop.f32.mrb[0].mxu0
      %v2860 = vadd.f32 %v2667, %v2859
      %v2861 = vpop.f32.mrb[0].mxu0
      %v2862 = vadd.f32 %v2669, %v2861
      %v2863 = vpop.f32.mrb[0].mxu0
      %v2864 = vadd.f32 %v2671, %v2863
      %2865 = vmatprep.mubr.bf16.mxu0 %v1243
      %2866 = vmatmul.mubr.bf16.gmra.mrb[0].mxu0 %v1242
      %v2867 = vpop.f32.mrb[0].mxu0
      %v2868 = vadd.f32 %v2675, %v2867
      %v2869 = vpop.f32.mrb[0].mxu0
      %v2870 = vadd.f32 %v2677, %v2869
      %v2871 = vpop.f32.mrb[0].mxu0
      %v2872 = vadd.f32 %v2679, %v2871
      %v2873 = vpop.f32.mrb[0].mxu0
      %v2874 = vadd.f32 %v2681, %v2873
      %2875 = vmatprep.mubr.bf16.mxu0 %v1252
      %2876 = vmatmul.mubr.bf16.gmra.mrb[0].mxu0 %v1251
      %v2877 = vpop.f32.mrb[0].mxu0
      %v2878 = vadd.f32 %v2685, %v2877
      %v2879 = vpop.f32.mrb[0].mxu0
      %v2880 = vadd.f32 %v2687, %v2879
      %v2881 = vpop.f32.mrb[0].mxu0
      %v2882 = vadd.f32 %v2689, %v2881
      %v2883 = vpop.f32.mrb[0].mxu0
      %v2884 = vadd.f32 %v2691, %v2883
      %2885 = vmatprep.mubr.bf16.mxu0 %v1261
      %2886 = vmatmul.mubr.bf16.gmra.mrb[0].mxu0 %v1260
      %v2887 = vpop.f32.mrb[0].mxu0
      %v2888 = vadd.f32 %v2695, %v2887
      %v2889 = vpop.f32.mrb[0].mxu0
      %v2890 = vadd.f32 %v2697, %v2889
      %v2891 = vpop.f32.mrb[0].mxu0
      %v2892 = vadd.f32 %v2699, %v2891
      %v2893 = vpop.f32.mrb[0].mxu0
      %v2894 = vadd.f32 %v2701, %v2893
      %2895 = vmatprep.mubr.bf16.mxu0 %v1270
      %2896 = vmatmul.mubr.bf16.gmra.mrb[0].mxu0 %v1269
      %v2897 = vpop.f32.mrb[0].mxu0
      %v2898 = vadd.f32 %v2705, %v2897
      %v2899 = vpop.f32.mrb[0].mxu0
      %v2900 = vadd.f32 %v2707, %v2899
      %v2901 = vpop.f32.mrb[0].mxu0
      %v2902 = vadd.f32 %v2709, %v2901
      %v2903 = vpop.f32.mrb[0].mxu0
      %v2904 = vadd.f32 %v2711, %v2903
      %2905 = vmatprep.mubr.bf16.mxu0 %v1279
      %2906 = vmatmul.mubr.bf16.gmra.mrb[0].mxu0 %v1278
      %v2907 = vpop.f32.mrb[0].mxu0
      %v2908 = vadd.f32 %v2715, %v2907
      %v2909 = vpop.f32.mrb[0].mxu0
      %v2910 = vadd.f32 %v2717, %v2909
      %v2911 = vpop.f32.mrb[0].mxu0
      %v2912 = vadd.f32 %v2719, %v2911
      %v2913 = vpop.f32.mrb[0].mxu0
      %v2914 = vadd.f32 %v2721, %v2913
      %2915 = vmatprep.mubr.bf16.mxu0 %v1288
      %2916 = vmatmul.mubr.bf16.gmra.mrb[0].mxu0 %v1287
      %v2917 = vpop.f32.mrb[0].mxu0
      %v2918 = vadd.f32 %v2725, %v2917
      %v2919 = vpop.f32.mrb[0].mxu0
      %v2920 = vadd.f32 %v2727, %v2919
      %v2921 = vpop.f32.mrb[0].mxu0
      %v2922 = vadd.f32 %v2729, %v2921
      %v2923 = vpop.f32.mrb[0].mxu0
      %v2924 = vadd.f32 %v2731, %v2923
      %2925 = vdwg.mxu0
      %2926 = vmatprep.subr.bf16.mxu0 %v1995
      %2927 = vmatpush1.bf16.msra.mxu0 %v1994
      %2928 = vmatprep.subr.bf16.mxu0 %v1997
      %2929 = vmatpush1.bf16.msra.mxu0 %v1996
      %2930 = vmatprep.subr.bf16.mxu0 %v1999
      %2931 = vmatpush1.bf16.msra.mxu0 %v1998
      %2932 = vmatprep.subr.bf16.mxu0 %v2001
      %2933 = vmatpush1.bf16.msra.mxu0 %v2000
      %2934 = vmatprep.subr.bf16.mxu0 %v2003
      %2935 = vmatpush1.bf16.msra.mxu0 %v2002
      %2936 = vmatprep.subr.bf16.mxu0 %v2005
      %2937 = vmatpush1.bf16.msra.mxu0 %v2004
      %2938 = vmatprep.subr.bf16.mxu0 %v2007
      %2939 = vmatpush1.bf16.msra.mxu0 %v2006
      %2940 = vmatprep.subr.bf16.mxu0 %v2009
      %2941 = vmatpush1.bf16.msra.mxu0 %v2008
      %2942 = vmatprep.subr.bf16.mxu0 0
      %2943 = vmatpush1.bf16.msra.mxu0 0
      %2944 = vmatprep.subr.bf16.mxu0 0
      %2945 = vmatpush1.bf16.msra.mxu0 0
      %2946 = vmatprep.subr.bf16.mxu0 0
      %2947 = vmatpush1.bf16.msra.mxu0 0
      %2948 = vmatprep.subr.bf16.mxu0 0
      %2949 = vmatpush1.bf16.msra.mxu0 0
      %2950 = vmatprep.subr.bf16.mxu0 0
      %2951 = vmatpush1.bf16.msra.mxu0 0
      %2952 = vmatprep.subr.bf16.mxu0 0
      %2953 = vmatpush1.bf16.msra.mxu0 0
      %2954 = vmatprep.subr.bf16.mxu0 0
      %2955 = vmatpush1.bf16.msra.mxu0 0
      %2956 = vmatprep.subr.bf16.mxu0 0
      %2957 = vmatpush1.bf16.msra.mxu0 0
      %2958 = vmatprep.mubr.bf16.mxu0 0
      %2959 = vmatmul.mubr.bf16.gmra.mrb[0].mxu0 %v1154
      %v2960 = vpop.f32.mrb[0].mxu0
      %v2961 = vadd.f32 %v2768, %v2960
      %v2962 = vpop.f32.mrb[0].mxu0
      %v2963 = vadd.f32 %v2770, %v2962
      %v2964 = vpop.f32.mrb[0].mxu0
      %v2965 = vadd.f32 %v2772, %v2964
      %v2966 = vpop.f32.mrb[0].mxu0
      %v2967 = vadd.f32 %v2774, %v2966
      %2968 = vmatprep.mubr.bf16.mxu0 0
      %2969 = vmatmul.mubr.bf16.gmra.mrb[0].mxu0 %v1163
      %v2970 = vpop.f32.mrb[0].mxu0
      %v2971 = vadd.f32 %v2778, %v2970
      %v2972 = vpop.f32.mrb[0].mxu0
      %v2973 = vadd.f32 %v2780, %v2972
      %v2974 = vpop.f32.mrb[0].mxu0
      %v2975 = vadd.f32 %v2782, %v2974
      %v2976 = vpop.f32.mrb[0].mxu0
      %v2977 = vadd.f32 %v2784, %v2976
      %2978 = vmatprep.mubr.bf16.mxu0 0
      %2979 = vmatmul.mubr.bf16.gmra.mrb[0].mxu0 %v1172
      %v2980 = vpop.f32.mrb[0].mxu0
      %v2981 = vadd.f32 %v2788, %v2980
      %v2982 = vpop.f32.mrb[0].mxu0
      %v2983 = vadd.f32 %v2790, %v2982
      %v2984 = vpop.f32.mrb[0].mxu0
      %v2985 = vadd.f32 %v2792, %v2984
      %v2986 = vpop.f32.mrb[0].mxu0
      %v2987 = vadd.f32 %v2794, %v2986
      %2988 = vmatprep.mubr.bf16.mxu0 0
      %2989 = vmatmul.mubr.bf16.gmra.mrb[0].mxu0 %v1181
      %v2990 = vpop.f32.mrb[0].mxu0
      %v2991 = vadd.f32 %v2798, %v2990
      %v2992 = vpop.f32.mrb[0].mxu0
      %v2993 = vadd.f32 %v2800, %v2992
      %v2994 = vpop.f32.mrb[0].mxu0
      %v2995 = vadd.f32 %v2802, %v2994
      %v2996 = vpop.f32.mrb[0].mxu0
      %v2997 = vadd.f32 %v2804, %v2996
      %2998 = vmatprep.mubr.bf16.mxu0 0
      %2999 = vmatmul.mubr.bf16.gmra.mrb[0].mxu0 %v1190
      %v3000 = vpop.f32.mrb[0].mxu0
      %v3001 = vadd.f32 %v2808, %v3000
      %v3002 = vpop.f32.mrb[0].mxu0
      %v3003 = vadd.f32 %v2810, %v3002
      %v3004 = vpop.f32.mrb[0].mxu0
      %v3005 = vadd.f32 %v2812, %v3004
      %v3006 = vpop.f32.mrb[0].mxu0
      %v3007 = vadd.f32 %v2814, %v3006
      %3008 = vmatprep.mubr.bf16.mxu0 0
      %3009 = vmatmul.mubr.bf16.gmra.mrb[0].mxu0 %v1199
      %v3010 = vpop.f32.mrb[0].mxu0
      %v3011 = vadd.f32 %v2818, %v3010
      %v3012 = vpop.f32.mrb[0].mxu0
      %v3013 = vadd.f32 %v2820, %v3012
      %v3014 = vpop.f32.mrb[0].mxu0
      %v3015 = vadd.f32 %v2822, %v3014
      %v3016 = vpop.f32.mrb[0].mxu0
      %v3017 = vadd.f32 %v2824, %v3016
      %3018 = vmatprep.mubr.bf16.mxu0 0
      %3019 = vmatmul.mubr.bf16.gmra.mrb[0].mxu0 %v1208
      %v3020 = vpop.f32.mrb[0].mxu0
      %v3021 = vadd.f32 %v2828, %v3020
      %v3022 = vpop.f32.mrb[0].mxu0
      %v3023 = vadd.f32 %v2830, %v3022
      %v3024 = vpop.f32.mrb[0].mxu0
      %v3025 = vadd.f32 %v2832, %v3024
      %v3026 = vpop.f32.mrb[0].mxu0
      %v3027 = vadd.f32 %v2834, %v3026
      %3028 = vmatprep.mubr.bf16.mxu0 0
      %3029 = vmatmul.mubr.bf16.gmra.mrb[0].mxu0 %v1217
      %v3030 = vpop.f32.mrb[0].mxu0
      %v3031 = vadd.f32 %v2838, %v3030
      %v3032 = vpop.f32.mrb[0].mxu0
      %v3033 = vadd.f32 %v2840, %v3032
      %v3034 = vpop.f32.mrb[0].mxu0
      %v3035 = vadd.f32 %v2842, %v3034
      %v3036 = vpop.f32.mrb[0].mxu0
      %v3037 = vadd.f32 %v2844, %v3036
      %3038 = vmatprep.mubr.bf16.mxu0 0
      %3039 = vmatmul.mubr.bf16.gmra.mrb[0].mxu0 %v1226
      %v3040 = vpop.f32.mrb[0].mxu0
      %v3041 = vadd.f32 %v2848, %v3040
      %v3042 = vpop.f32.mrb[0].mxu0
      %v3043 = vadd.f32 %v2850, %v3042
      %v3044 = vpop.f32.mrb[0].mxu0
      %v3045 = vadd.f32 %v2852, %v3044
      %v3046 = vpop.f32.mrb[0].mxu0
      %v3047 = vadd.f32 %v2854, %v3046
      %3048 = vmatprep.mubr.bf16.mxu0 0
      %3049 = vmatmul.mubr.bf16.gmra.mrb[0].mxu0 %v1235
      %v3050 = vpop.f32.mrb[0].mxu0
      %v3051 = vadd.f32 %v2858, %v3050
      %v3052 = vpop.f32.mrb[0].mxu0
      %v3053 = vadd.f32 %v2860, %v3052
      %v3054 = vpop.f32.mrb[0].mxu0
      %v3055 = vadd.f32 %v2862, %v3054
      %v3056 = vpop.f32.mrb[0].mxu0
      %v3057 = vadd.f32 %v2864, %v3056
      %3058 = vmatprep.mubr.bf16.mxu0 0
      %3059 = vmatmul.mubr.bf16.gmra.mrb[0].mxu0 %v1244
      %v3060 = vpop.f32.mrb[0].mxu0
      %v3061 = vadd.f32 %v2868, %v3060
      %v3062 = vpop.f32.mrb[0].mxu0
      %v3063 = vadd.f32 %v2870, %v3062
      %v3064 = vpop.f32.mrb[0].mxu0
      %v3065 = vadd.f32 %v2872, %v3064
      %v3066 = vpop.f32.mrb[0].mxu0
      %v3067 = vadd.f32 %v2874, %v3066
      %3068 = vmatprep.mubr.bf16.mxu0 0
      %3069 = vmatmul.mubr.bf16.gmra.mrb[0].mxu0 %v1253
      %v3070 = vpop.f32.mrb[0].mxu0
      %v3071 = vadd.f32 %v2878, %v3070
      %v3072 = vpop.f32.mrb[0].mxu0
      %v3073 = vadd.f32 %v2880, %v3072
      %v3074 = vpop.f32.mrb[0].mxu0
      %v3075 = vadd.f32 %v2882, %v3074
      %v3076 = vpop.f32.mrb[0].mxu0
      %v3077 = vadd.f32 %v2884, %v3076
      %3078 = vmatprep.mubr.bf16.mxu0 0
      %3079 = vmatmul.mubr.bf16.gmra.mrb[0].mxu0 %v1262
      %v3080 = vpop.f32.mrb[0].mxu0
      %v3081 = vadd.f32 %v2888, %v3080
      %v3082 = vpop.f32.mrb[0].mxu0
      %v3083 = vadd.f32 %v2890, %v3082
      %v3084 = vpop.f32.mrb[0].mxu0
      %v3085 = vadd.f32 %v2892, %v3084
      %v3086 = vpop.f32.mrb[0].mxu0
      %v3087 = vadd.f32 %v2894, %v3086
      %3088 = vmatprep.mubr.bf16.mxu0 0
      %3089 = vmatmul.mubr.bf16.gmra.mrb[0].mxu0 %v1271
      %v3090 = vpop.f32.mrb[0].mxu0
      %v3091 = vadd.f32 %v2898, %v3090
      %v3092 = vpop.f32.mrb[0].mxu0
      %v3093 = vadd.f32 %v2900, %v3092
      %v3094 = vpop.f32.mrb[0].mxu0
      %v3095 = vadd.f32 %v2902, %v3094
      %v3096 = vpop.f32.mrb[0].mxu0
      %v3097 = vadd.f32 %v2904, %v3096
      %3098 = vmatprep.mubr.bf16.mxu0 0
      %3099 = vmatmul.mubr.bf16.gmra.mrb[0].mxu0 %v1280
      %v3100 = vpop.f32.mrb[0].mxu0
      %v3101 = vadd.f32 %v2908, %v3100
      %v3102 = vpop.f32.mrb[0].mxu0
      %v3103 = vadd.f32 %v2910, %v3102
      %v3104 = vpop.f32.mrb[0].mxu0
      %v3105 = vadd.f32 %v2912, %v3104
      %v3106 = vpop.f32.mrb[0].mxu0
      %v3107 = vadd.f32 %v2914, %v3106
      %3108 = vmatprep.mubr.bf16.mxu0 0
      %3109 = vmatmul.mubr.bf16.gmra.mrb[0].mxu0 %v1289
      %v3110 = vpop.f32.mrb[0].mxu0
      %v3111 = vadd.f32 %v2918, %v3110
      %v3112 = vpop.f32.mrb[0].mxu0
      %v3113 = vadd.f32 %v2920, %v3112
      %v3114 = vpop.f32.mrb[0].mxu0
      %v3115 = vadd.f32 %v2922, %v3114
      %v3116 = vpop.f32.mrb[0].mxu0
      %v3117 = vadd.f32 %v2924, %v3116
      %3118 = vdwg.mxu0
      %v3119 = vadd.f32 %v2961, %v2965
      %v3120 = vadd.f32 %v3119, %v2971
      %v3121 = vadd.f32 %v3120, %v2975
      %v3122 = vadd.f32 %v3121, %v2981
      %v3123 = vadd.f32 %v3122, %v2985
      %v3124 = vadd.f32 %v3123, %v2991
      %v3125 = vadd.f32 %v3124, %v2995
      %v3126 = vadd.f32 %v3125, %v3001
      %v3127 = vadd.f32 %v3126, %v3005
      %v3128 = vadd.f32 %v3127, %v3011
      %v3129 = vadd.f32 %v3128, %v3015
      %v3130 = vadd.f32 %v3129, %v3021
      %v3131 = vadd.f32 %v3130, %v3025
      %v3132 = vadd.f32 %v3131, %v3031
      %v3133 = vadd.f32 %v3132, %v3035
      %v3134 = vadd.f32 %v3133, %v3041
      %v3135 = vadd.f32 %v3134, %v3045
      %v3136 = vadd.f32 %v3135, %v3051
      %v3137 = vadd.f32 %v3136, %v3055
      %v3138 = vadd.f32 %v3137, %v3061
      %v3139 = vadd.f32 %v3138, %v3065
      %v3140 = vadd.f32 %v3139, %v3071
      %v3141 = vadd.f32 %v3140, %v3075
      %v3142 = vadd.f32 %v3141, %v3081
      %v3143 = vadd.f32 %v3142, %v3085
      %v3144 = vadd.f32 %v3143, %v3091
      %v3145 = vadd.f32 %v3144, %v3095
      %v3146 = vadd.f32 %v3145, %v3101
      %v3147 = vadd.f32 %v3146, %v3105
      %v3148 = vadd.f32 %v3147, %v3111
      %v3149 = vadd.f32 %v3148, %v3115
      %v3150 = vrot.slane %v3149, 4
      %v3151 = vadd.f32 %v3149, %v3150
      %v3152 = vrot.slane %v3151, 2
      %v3153 = vadd.f32 %v3151, %v3152
      %v3154 = vrot.slane %v3153, 1
      %v3155 = vadd.f32 %v3153, %v3154
      %3156 = vst [vmem:[%s220] sm:$0x1] %v3155
      %v3157 = vmul.f32 %v2961, %v2961
      %v3158 = vmul.f32 %v2965, %v2965
      %v3159 = vmul.f32 %v2971, %v2971
      %v3160 = vmul.f32 %v2975, %v2975
      %v3161 = vmul.f32 %v2981, %v2981
      %v3162 = vmul.f32 %v2985, %v2985
      %v3163 = vmul.f32 %v2991, %v2991
      %v3164 = vmul.f32 %v2995, %v2995
      %v3165 = vmul.f32 %v3001, %v3001
      %v3166 = vmul.f32 %v3005, %v3005
      %v3167 = vmul.f32 %v3011, %v3011
      %v3168 = vmul.f32 %v3015, %v3015
      %v3169 = vmul.f32 %v3021, %v3021
      %v3170 = vmul.f32 %v3025, %v3025
      %v3171 = vmul.f32 %v3031, %v3031
      %v3172 = vmul.f32 %v3035, %v3035
      %v3173 = vmul.f32 %v3041, %v3041
      %v3174 = vmul.f32 %v3045, %v3045
      %v3175 = vmul.f32 %v3051, %v3051
      %v3176 = vmul.f32 %v3055, %v3055
      %v3177 = vmul.f32 %v3061, %v3061
      %v3178 = vmul.f32 %v3065, %v3065
      %v3179 = vmul.f32 %v3071, %v3071
      %v3180 = vmul.f32 %v3075, %v3075
      %v3181 = vmul.f32 %v3081, %v3081
      %v3182 = vmul.f32 %v3085, %v3085
      %v3183 = vmul.f32 %v3091, %v3091
      %v3184 = vmul.f32 %v3095, %v3095
      %v3185 = vmul.f32 %v3101, %v3101
      %v3186 = vmul.f32 %v3105, %v3105
      %v3187 = vmul.f32 %v3111, %v3111
      %v3188 = vmul.f32 %v3115, %v3115
      %v3189 = vadd.f32 %v3157, %v3158
      %v3190 = vadd.f32 %v3189, %v3159
      %v3191 = vadd.f32 %v3190, %v3160
      %v3192 = vadd.f32 %v3191, %v3161
      %v3193 = vadd.f32 %v3192, %v3162
      %v3194 = vadd.f32 %v3193, %v3163
      %v3195 = vadd.f32 %v3194, %v3164
      %v3196 = vadd.f32 %v3195, %v3165
      %v3197 = vadd.f32 %v3196, %v3166
      %v3198 = vadd.f32 %v3197, %v3167
      %v3199 = vadd.f32 %v3198, %v3168
      %v3200 = vadd.f32 %v3199, %v3169
      %v3201 = vadd.f32 %v3200, %v3170
      %v3202 = vadd.f32 %v3201, %v3171
      %v3203 = vadd.f32 %v3202, %v3172
      %v3204 = vadd.f32 %v3203, %v3173
      %v3205 = vadd.f32 %v3204, %v3174
      %v3206 = vadd.f32 %v3205, %v3175
      %v3207 = vadd.f32 %v3206, %v3176
      %v3208 = vadd.f32 %v3207, %v3177
      %v3209 = vadd.f32 %v3208, %v3178
      %v3210 = vadd.f32 %v3209, %v3179
      %v3211 = vadd.f32 %v3210, %v3180
      %v3212 = vadd.f32 %v3211, %v3181
      %v3213 = vadd.f32 %v3212, %v3182
      %v3214 = vadd.f32 %v3213, %v3183
      %v3215 = vadd.f32 %v3214, %v3184
      %v3216 = vadd.f32 %v3215, %v3185
      %v3217 = vadd.f32 %v3216, %v3186
      %v3218 = vadd.f32 %v3217, %v3187
      %v3219 = vadd.f32 %v3218, %v3188
      %v3220 = vrot.slane %v3219, 4
      %v3221 = vadd.f32 %v3219, %v3220
      %v3222 = vrot.slane %v3221, 2
      %v3223 = vadd.f32 %v3221, %v3222
      %v3224 = vrot.slane %v3223, 1
      %v3225 = vadd.f32 %v3223, %v3224
      %3226 = vst [vmem:[%s220 + $0x1] sm:$0x1] %v3225
      %v3227 = vadd.f32 %v2963, %v2967
      %v3228 = vadd.f32 %v3227, %v2973
      %v3229 = vadd.f32 %v3228, %v2977
      %v3230 = vadd.f32 %v3229, %v2983
      %v3231 = vadd.f32 %v3230, %v2987
      %v3232 = vadd.f32 %v3231, %v2993
      %v3233 = vadd.f32 %v3232, %v2997
      %v3234 = vadd.f32 %v3233, %v3003
      %v3235 = vadd.f32 %v3234, %v3007
      %v3236 = vadd.f32 %v3235, %v3013
      %v3237 = vadd.f32 %v3236, %v3017
      %v3238 = vadd.f32 %v3237, %v3023
      %v3239 = vadd.f32 %v3238, %v3027
      %v3240 = vadd.f32 %v3239, %v3033
      %v3241 = vadd.f32 %v3240, %v3037
      %v3242 = vadd.f32 %v3241, %v3043
      %v3243 = vadd.f32 %v3242, %v3047
      %v3244 = vadd.f32 %v3243, %v3053
      %v3245 = vadd.f32 %v3244, %v3057
      %v3246 = vadd.f32 %v3245, %v3063
      %v3247 = vadd.f32 %v3246, %v3067
      %v3248 = vadd.f32 %v3247, %v3073
      %v3249 = vadd.f32 %v3248, %v3077
      %v3250 = vadd.f32 %v3249, %v3083
      %v3251 = vadd.f32 %v3250, %v3087
      %v3252 = vadd.f32 %v3251, %v3093
      %v3253 = vadd.f32 %v3252, %v3097
      %v3254 = vadd.f32 %v3253, %v3103
      %v3255 = vadd.f32 %v3254, %v3107
      %v3256 = vadd.f32 %v3255, %v3113
      %v3257 = vadd.f32 %v3256, %v3117
      %v3258 = vrot.slane %v3257, 4
      %v3259 = vadd.f32 %v3257, %v3258
      %v3260 = vrot.slane %v3259, 2
      %v3261 = vadd.f32 %v3259, %v3260
      %v3262 = vrot.slane %v3261, 1
      %v3263 = vadd.f32 %v3261, %v3262
      %3264 = vst [vmem:[%s220 + $0x2] sm:$0x1] %v3263
      %v3265 = vmul.f32 %v2963, %v2963
      %v3266 = vmul.f32 %v2967, %v2967
      %v3267 = vmul.f32 %v2973, %v2973
      %v3268 = vmul.f32 %v2977, %v2977
      %v3269 = vmul.f32 %v2983, %v2983
      %v3270 = vmul.f32 %v2987, %v2987
      %v3271 = vmul.f32 %v2993, %v2993
      %v3272 = vmul.f32 %v2997, %v2997
      %v3273 = vmul.f32 %v3003, %v3003
      %v3274 = vmul.f32 %v3007, %v3007
      %v3275 = vmul.f32 %v3013, %v3013
      %v3276 = vmul.f32 %v3017, %v3017
      %v3277 = vmul.f32 %v3023, %v3023
      %v3278 = vmul.f32 %v3027, %v3027
      %v3279 = vmul.f32 %v3033, %v3033
      %v3280 = vmul.f32 %v3037, %v3037
      %v3281 = vmul.f32 %v3043, %v3043
      %v3282 = vmul.f32 %v3047, %v3047
      %v3283 = vmul.f32 %v3053, %v3053
      %v3284 = vmul.f32 %v3057, %v3057
      %v3285 = vmul.f32 %v3063, %v3063
      %v3286 = vmul.f32 %v3067, %v3067
      %v3287 = vmul.f32 %v3073, %v3073
      %v3288 = vmul.f32 %v3077, %v3077
      %v3289 = vmul.f32 %v3083, %v3083
      %v3290 = vmul.f32 %v3087, %v3087
      %v3291 = vmul.f32 %v3093, %v3093
      %v3292 = vmul.f32 %v3097, %v3097
      %v3293 = vmul.f32 %v3103, %v3103
      %v3294 = vmul.f32 %v3107, %v3107
      %v3295 = vmul.f32 %v3113, %v3113
      %v3296 = vmul.f32 %v3117, %v3117
      %v3297 = vadd.f32 %v3265, %v3266
      %v3298 = vadd.f32 %v3297, %v3267
      %v3299 = vadd.f32 %v3298, %v3268
      %v3300 = vadd.f32 %v3299, %v3269
      %v3301 = vadd.f32 %v3300, %v3270
      %v3302 = vadd.f32 %v3301, %v3271
      %v3303 = vadd.f32 %v3302, %v3272
      %v3304 = vadd.f32 %v3303, %v3273
      %v3305 = vadd.f32 %v3304, %v3274
      %v3306 = vadd.f32 %v3305, %v3275
      %v3307 = vadd.f32 %v3306, %v3276
      %v3308 = vadd.f32 %v3307, %v3277
      %v3309 = vadd.f32 %v3308, %v3278
      %v3310 = vadd.f32 %v3309, %v3279
      %v3311 = vadd.f32 %v3310, %v3280
      %v3312 = vadd.f32 %v3311, %v3281
      %v3313 = vadd.f32 %v3312, %v3282
      %v3314 = vadd.f32 %v3313, %v3283
      %v3315 = vadd.f32 %v3314, %v3284
      %v3316 = vadd.f32 %v3315, %v3285
      %v3317 = vadd.f32 %v3316, %v3286
      %v3318 = vadd.f32 %v3317, %v3287
      %v3319 = vadd.f32 %v3318, %v3288
      %v3320 = vadd.f32 %v3319, %v3289
      %v3321 = vadd.f32 %v3320, %v3290
      %v3322 = vadd.f32 %v3321, %v3291
      %v3323 = vadd.f32 %v3322, %v3292
      %v3324 = vadd.f32 %v3323, %v3293
      %v3325 = vadd.f32 %v3324, %v3294
      %v3326 = vadd.f32 %v3325, %v3295
      %v3327 = vadd.f32 %v3326, %v3296
      %v3328 = vrot.slane %v3327, 4
      %v3329 = vadd.f32 %v3327, %v3328
      %v3330 = vrot.slane %v3329, 2
      %v3331 = vadd.f32 %v3329, %v3330
      %v3332 = vrot.slane %v3331, 1
      %v3333 = vadd.f32 %v3331, %v3332
      %3334 = vst [vmem:[%s220 + $0x3] sm:$0x1] %v3333
      %v3335 = vpack.c.bf16 %v2965, %v2961
      %v3336 = vpack.c.bf16 %v2975, %v2971
      %v3337 = vpack.c.bf16 %v2985, %v2981
      %v3338 = vpack.c.bf16 %v2995, %v2991
      %v3339 = vpack.c.bf16 %v3005, %v3001
      %v3340 = vpack.c.bf16 %v3015, %v3011
      %v3341 = vpack.c.bf16 %v3025, %v3021
      %v3342 = vpack.c.bf16 %v3035, %v3031
      %v3343 = vpack.c.bf16 %v3045, %v3041
      %v3344 = vpack.c.bf16 %v3055, %v3051
      %v3345 = vpack.c.bf16 %v3065, %v3061
      %v3346 = vpack.c.bf16 %v3075, %v3071
      %v3347 = vpack.c.bf16 %v3085, %v3081
      %v3348 = vpack.c.bf16 %v3095, %v3091
      %v3349 = vpack.c.bf16 %v3105, %v3101
      %v3350 = vpack.c.bf16 %v3115, %v3111
      %v3367 = vunpack.c.l.b16 %v3335
      %v3368 = vunpack.c.h.b16 %v3335
      %v3369 = vunpack.c.l.b16 %v3336
      %v3370 = vunpack.c.h.b16 %v3336
      %v3371 = vunpack.c.l.b16 %v3337
      %v3372 = vunpack.c.h.b16 %v3337
      %v3373 = vunpack.c.l.b16 %v3338
      %v3374 = vunpack.c.h.b16 %v3338
      %v3375 = vunpack.c.l.b16 %v3339
      %v3376 = vunpack.c.h.b16 %v3339
      %v3377 = vunpack.c.l.b16 %v3340
      %v3378 = vunpack.c.h.b16 %v3340
      %v3379 = vunpack.c.l.b16 %v3341
      %v3380 = vunpack.c.h.b16 %v3341
      %v3381 = vunpack.c.l.b16 %v3342
      %v3382 = vunpack.c.h.b16 %v3342
      %v3383 = vunpack.c.l.b16 %v3343
      %v3384 = vunpack.c.h.b16 %v3343
      %v3385 = vunpack.c.l.b16 %v3344
      %v3386 = vunpack.c.h.b16 %v3344
      %v3387 = vunpack.c.l.b16 %v3345
      %v3388 = vunpack.c.h.b16 %v3345
      %v3389 = vunpack.c.l.b16 %v3346
      %v3390 = vunpack.c.h.b16 %v3346
      %v3391 = vunpack.c.l.b16 %v3347
      %v3392 = vunpack.c.h.b16 %v3347
      %v3393 = vunpack.c.l.b16 %v3348
      %v3394 = vunpack.c.h.b16 %v3348
      %v3395 = vunpack.c.l.b16 %v3349
      %v3396 = vunpack.c.h.b16 %v3349
      %v3397 = vunpack.c.l.b16 %v3350
      %v3398 = vunpack.c.h.b16 %v3350
      %v3399 = vpack.c.b16 %v3367, %v3367
      %v3400 = vpack.c.b16 %v3368, %v3368
      %v3401 = vpack.c.b16 %v3369, %v3369
      %v3402 = vpack.c.b16 %v3370, %v3370
      %v3403 = vpack.c.b16 %v3371, %v3371
      %v3404 = vpack.c.b16 %v3372, %v3372
      %v3405 = vpack.c.b16 %v3373, %v3373
      %v3406 = vpack.c.b16 %v3374, %v3374
      %v3407 = vpack.c.b16 %v3375, %v3375
      %v3408 = vpack.c.b16 %v3376, %v3376
      %v3409 = vpack.c.b16 %v3377, %v3377
      %v3410 = vpack.c.b16 %v3378, %v3378
      %v3411 = vpack.c.b16 %v3379, %v3379
      %v3412 = vpack.c.b16 %v3380, %v3380
      %v3413 = vpack.c.b16 %v3381, %v3381
      %v3414 = vpack.c.b16 %v3382, %v3382
      %v3415 = vpack.c.b16 %v3383, %v3383
      %v3416 = vpack.c.b16 %v3384, %v3384
      %v3417 = vpack.c.b16 %v3385, %v3385
      %v3418 = vpack.c.b16 %v3386, %v3386
      %v3419 = vpack.c.b16 %v3387, %v3387
      %v3420 = vpack.c.b16 %v3388, %v3388
      %v3421 = vpack.c.b16 %v3389, %v3389
      %v3422 = vpack.c.b16 %v3390, %v3390
      %v3423 = vpack.c.b16 %v3391, %v3391
      %v3424 = vpack.c.b16 %v3392, %v3392
      %v3425 = vpack.c.b16 %v3393, %v3393
      %v3426 = vpack.c.b16 %v3394, %v3394
      %v3427 = vpack.c.b16 %v3395, %v3395
      %v3428 = vpack.c.b16 %v3396, %v3396
      %v3429 = vpack.c.b16 %v3397, %v3397
      %v3430 = vpack.c.b16 %v3398, %v3398
      %3463 = vst [vmem:[%s211] sm:$0xf] %v3399
      %3464 = vst [vmem:[%s211 + $0x4] sm:$0xf] %v3400
      %3465 = vst [vmem:[%s211 + $0x8] sm:$0xf] %v3401
      %3466 = vst [vmem:[%s211 + $0xc] sm:$0xf] %v3402
      %3467 = vst [vmem:[%s211 + $0x10] sm:$0xf] %v3403
      %3468 = vst [vmem:[%s211 + $0x14] sm:$0xf] %v3404
      %3469 = vst [vmem:[%s211 + $0x18] sm:$0xf] %v3405
      %3470 = vst [vmem:[%s211 + $0x1c] sm:$0xf] %v3406
      %3471 = vst [vmem:[%s211 + $0x20] sm:$0xf] %v3407
      %3472 = vst [vmem:[%s211 + $0x24] sm:$0xf] %v3408
      %3473 = vst [vmem:[%s211 + $0x28] sm:$0xf] %v3409
      %3474 = vst [vmem:[%s211 + $0x2c] sm:$0xf] %v3410
      %3475 = vst [vmem:[%s211 + $0x30] sm:$0xf] %v3411
      %3476 = vst [vmem:[%s211 + $0x34] sm:$0xf] %v3412
      %3477 = vst [vmem:[%s211 + $0x38] sm:$0xf] %v3413
      %3478 = vst [vmem:[%s211 + $0x3c] sm:$0xf] %v3414
      %3479 = vst [vmem:[%s211 + $0x40] sm:$0xf] %v3415
      %3480 = vst [vmem:[%s211 + $0x44] sm:$0xf] %v3416
      %3481 = vst [vmem:[%s211 + $0x48] sm:$0xf] %v3417
      %3482 = vst [vmem:[%s211 + $0x4c] sm:$0xf] %v3418
      %3483 = vst [vmem:[%s211 + $0x50] sm:$0xf] %v3419
      %3484 = vst [vmem:[%s211 + $0x54] sm:$0xf] %v3420
      %3485 = vst [vmem:[%s211 + $0x58] sm:$0xf] %v3421
      %3486 = vst [vmem:[%s211 + $0x5c] sm:$0xf] %v3422
      %3487 = vst [vmem:[%s211 + $0x60] sm:$0xf] %v3423
      %3488 = vst [vmem:[%s211 + $0x64] sm:$0xf] %v3424
      %3489 = vst [vmem:[%s211 + $0x68] sm:$0xf] %v3425
      %3490 = vst [vmem:[%s211 + $0x6c] sm:$0xf] %v3426
      %3491 = vst [vmem:[%s211 + $0x70] sm:$0xf] %v3427
      %3492 = vst [vmem:[%s211 + $0x74] sm:$0xf] %v3428
      %3493 = vst [vmem:[%s211 + $0x78] sm:$0xf] %v3429
      %3494 = vst [vmem:[%s211 + $0x7c] sm:$0xf] %v3430
      %v3495 = vpack.c.bf16 %v2967, %v2963
      %v3496 = vpack.c.bf16 %v2977, %v2973
      %v3497 = vpack.c.bf16 %v2987, %v2983
      %v3498 = vpack.c.bf16 %v2997, %v2993
      %v3499 = vpack.c.bf16 %v3007, %v3003
      %v3500 = vpack.c.bf16 %v3017, %v3013
      %v3501 = vpack.c.bf16 %v3027, %v3023
      %v3502 = vpack.c.bf16 %v3037, %v3033
      %v3503 = vpack.c.bf16 %v3047, %v3043
      %v3504 = vpack.c.bf16 %v3057, %v3053
      %v3505 = vpack.c.bf16 %v3067, %v3063
      %v3506 = vpack.c.bf16 %v3077, %v3073
      %v3507 = vpack.c.bf16 %v3087, %v3083
      %v3508 = vpack.c.bf16 %v3097, %v3093
      %v3509 = vpack.c.bf16 %v3107, %v3103
      %v3510 = vpack.c.bf16 %v3117, %v3113
      %v3527 = vunpack.c.l.b16 %v3495
      %v3528 = vunpack.c.h.b16 %v3495
      %v3529 = vunpack.c.l.b16 %v3496
      %v3530 = vunpack.c.h.b16 %v3496
      %v3531 = vunpack.c.l.b16 %v3497
      %v3532 = vunpack.c.h.b16 %v3497
      %v3533 = vunpack.c.l.b16 %v3498
      %v3534 = vunpack.c.h.b16 %v3498
      %v3535 = vunpack.c.l.b16 %v3499
      %v3536 = vunpack.c.h.b16 %v3499
      %v3537 = vunpack.c.l.b16 %v3500
      %v3538 = vunpack.c.h.b16 %v3500
      %v3539 = vunpack.c.l.b16 %v3501
      %v3540 = vunpack.c.h.b16 %v3501
      %v3541 = vunpack.c.l.b16 %v3502
      %v3542 = vunpack.c.h.b16 %v3502
      %v3543 = vunpack.c.l.b16 %v3503
      %v3544 = vunpack.c.h.b16 %v3503
      %v3545 = vunpack.c.l.b16 %v3504
      %v3546 = vunpack.c.h.b16 %v3504
      %v3547 = vunpack.c.l.b16 %v3505
      %v3548 = vunpack.c.h.b16 %v3505
      %v3549 = vunpack.c.l.b16 %v3506
      %v3550 = vunpack.c.h.b16 %v3506
      %v3551 = vunpack.c.l.b16 %v3507
      %v3552 = vunpack.c.h.b16 %v3507
      %v3553 = vunpack.c.l.b16 %v3508
      %v3554 = vunpack.c.h.b16 %v3508
      %v3555 = vunpack.c.l.b16 %v3509
      %v3556 = vunpack.c.h.b16 %v3509
      %v3557 = vunpack.c.l.b16 %v3510
      %v3558 = vunpack.c.h.b16 %v3510
      %v3559 = vpack.c.b16 %v3527, %v3527
      %v3560 = vpack.c.b16 %v3528, %v3528
      %v3561 = vpack.c.b16 %v3529, %v3529
      %v3562 = vpack.c.b16 %v3530, %v3530
      %v3563 = vpack.c.b16 %v3531, %v3531
      %v3564 = vpack.c.b16 %v3532, %v3532
      %v3565 = vpack.c.b16 %v3533, %v3533
      %v3566 = vpack.c.b16 %v3534, %v3534
      %v3567 = vpack.c.b16 %v3535, %v3535
      %v3568 = vpack.c.b16 %v3536, %v3536
      %v3569 = vpack.c.b16 %v3537, %v3537
      %v3570 = vpack.c.b16 %v3538, %v3538
      %v3571 = vpack.c.b16 %v3539, %v3539
      %v3572 = vpack.c.b16 %v3540, %v3540
      %v3573 = vpack.c.b16 %v3541, %v3541
      %v3574 = vpack.c.b16 %v3542, %v3542
      %v3575 = vpack.c.b16 %v3543, %v3543
      %v3576 = vpack.c.b16 %v3544, %v3544
      %v3577 = vpack.c.b16 %v3545, %v3545
      %v3578 = vpack.c.b16 %v3546, %v3546
      %v3579 = vpack.c.b16 %v3547, %v3547
      %v3580 = vpack.c.b16 %v3548, %v3548
      %v3581 = vpack.c.b16 %v3549, %v3549
      %v3582 = vpack.c.b16 %v3550, %v3550
      %v3583 = vpack.c.b16 %v3551, %v3551
      %v3584 = vpack.c.b16 %v3552, %v3552
      %v3585 = vpack.c.b16 %v3553, %v3553
      %v3586 = vpack.c.b16 %v3554, %v3554
      %v3587 = vpack.c.b16 %v3555, %v3555
      %v3588 = vpack.c.b16 %v3556, %v3556
      %v3589 = vpack.c.b16 %v3557, %v3557
      %v3590 = vpack.c.b16 %v3558, %v3558
      %3623 = vst [vmem:[%s216] sm:$0xf] %v3559
      %3624 = vst [vmem:[%s216 + $0x4] sm:$0xf] %v3560
      %3625 = vst [vmem:[%s216 + $0x8] sm:$0xf] %v3561
      %3626 = vst [vmem:[%s216 + $0xc] sm:$0xf] %v3562
      %3627 = vst [vmem:[%s216 + $0x10] sm:$0xf] %v3563
      %3628 = vst [vmem:[%s216 + $0x14] sm:$0xf] %v3564
      %3629 = vst [vmem:[%s216 + $0x18] sm:$0xf] %v3565
      %3630 = vst [vmem:[%s216 + $0x1c] sm:$0xf] %v3566
      %3631 = vst [vmem:[%s216 + $0x20] sm:$0xf] %v3567
      %3632 = vst [vmem:[%s216 + $0x24] sm:$0xf] %v3568
      %3633 = vst [vmem:[%s216 + $0x28] sm:$0xf] %v3569
      %3634 = vst [vmem:[%s216 + $0x2c] sm:$0xf] %v3570
      %3635 = vst [vmem:[%s216 + $0x30] sm:$0xf] %v3571
      %3636 = vst [vmem:[%s216 + $0x34] sm:$0xf] %v3572
      %3637 = vst [vmem:[%s216 + $0x38] sm:$0xf] %v3573
      %3638 = vst [vmem:[%s216 + $0x3c] sm:$0xf] %v3574
      %3639 = vst [vmem:[%s216 + $0x40] sm:$0xf] %v3575
      %3640 = vst [vmem:[%s216 + $0x44] sm:$0xf] %v3576
      %3641 = vst [vmem:[%s216 + $0x48] sm:$0xf] %v3577
      %3642 = vst [vmem:[%s216 + $0x4c] sm:$0xf] %v3578
      %3643 = vst [vmem:[%s216 + $0x50] sm:$0xf] %v3579
      %3644 = vst [vmem:[%s216 + $0x54] sm:$0xf] %v3580
      %3645 = vst [vmem:[%s216 + $0x58] sm:$0xf] %v3581
      %3646 = vst [vmem:[%s216 + $0x5c] sm:$0xf] %v3582
      %3647 = vst [vmem:[%s216 + $0x60] sm:$0xf] %v3583
      %3648 = vst [vmem:[%s216 + $0x64] sm:$0xf] %v3584
      %3649 = vst [vmem:[%s216 + $0x68] sm:$0xf] %v3585
      %3650 = vst [vmem:[%s216 + $0x6c] sm:$0xf] %v3586
      %3651 = vst [vmem:[%s216 + $0x70] sm:$0xf] %v3587
      %3652 = vst [vmem:[%s216 + $0x74] sm:$0xf] %v3588
      %3653 = vst [vmem:[%s216 + $0x78] sm:$0xf] %v3589
      %3654 = vst [vmem:[%s216 + $0x7c] sm:$0xf] %v3590
      %p3655 = scmp.lt.s32.totalorder %s16, 1
      %s3656 = scalar_select %p3655, %s16, 1
      %s3657 = smul.addr %s3656, 32
      %s3658 = smul.addr %s3657, 4
      %s3659 = scalar_lea.vmem %s2, %s3658
      %p3660 = scmp.lt.s32.totalorder %s16, 1
      %s3661 = scalar_select %p3660, %s16, 1
      %s3662 = smul.addr %s3661, 32
      %s3663 = smul.addr %s3662, 4
      %s3664 = scalar_lea.vmem %s3, %s3663
      %p3665 = scmp.lt.s32.totalorder %s16, 1
      %s3666 = scalar_select %p3665, %s16, 1
      %s3667 = smul.addr %s3666, 4
      %s3668 = scalar_lea.vmem %s4, %s3667
      // Predicated region
      $region29: #{residual_block_pallas.3} parent=27 // pred_check
        %p3669 = pneg %p81
      $region30: #{residual_block_pallas.3} parent=27 // pred_check_branch
        %3671 = sbr.rel (%p3669) target = $region32
      $region31: #{residual_block_pallas.3} parent=27 // pred_region
        _
      $region32: #{residual_block_pallas.3} parent=27 // pred_fallthru
        _
      // Predicated region
      $region33: #{residual_block_pallas.3} parent=27 // pred_check
        %p3672 = pneg %p107
      $region34: #{residual_block_pallas.3} parent=27 // pred_check_branch
        %3674 = sbr.rel (%p3672) target = $region36
      $region35: #{residual_block_pallas.3} parent=27 // pred_region
        _
      $region36: #{residual_block_pallas.3} parent=27 // pred_fallthru
        _
      // Predicated region
      $region37: #{residual_block_pallas.3} parent=27 // pred_check
        %p3675 = pneg %p133
      $region38: #{residual_block_pallas.3} parent=27 // pred_check_branch
        %3677 = sbr.rel (%p3675) target = $region40
      $region39: #{residual_block_pallas.3} parent=27 // pred_region
        _
      $region40: #{residual_block_pallas.3} parent=27 // pred_fallthru
        _
    $region28: #{residual_block_pallas.3} parent=5 // pred_fallthru
      _
    %p3678 = scmp.le.s32.totalorder 2, %s11
    // Predicated region
    $region41: #{residual_block_pallas.3} parent=5 // pred_check
      %p3679 = pneg %p3678
    $region42: #{residual_block_pallas.3} parent=5 // pred_check_branch
      %3681 = sbr.rel (%p3679) target = $region44
    $region43: #{residual_block_pallas.3} parent=5 // pred_region
      %s3682 = ssub.s32 %s11, 2
      // Predicated region
      $region45: #{residual_block_pallas.3} parent=43 // pred_check
        %p3683 = pneg %p87
      $region46: #{residual_block_pallas.3} parent=43 // pred_check_branch
        %3685 = sbr.rel (%p3683) target = $region48
      $region47: #{residual_block_pallas.3} parent=43 // pred_region
        %p3686 = scmp.lt.s32.totalorder %s17, 1
        %s3687 = scalar_select %p3686, %s17, 1
        %s3688 = smul.addr %s3687, 32
        %s3689 = smul.addr %s3688, 4
        %s3690 = scalar_lea.vmem %s2, %s3689
      $region48: #{residual_block_pallas.3} parent=43 // pred_fallthru
        _
      // Predicated region
      $region49: #{residual_block_pallas.3} parent=43 // pred_check
        %p3691 = pneg %p113
      $region50: #{residual_block_pallas.3} parent=43 // pred_check_branch
        %3693 = sbr.rel (%p3691) target = $region52
      $region51: #{residual_block_pallas.3} parent=43 // pred_region
        %p3694 = scmp.lt.s32.totalorder %s17, 1
        %s3695 = scalar_select %p3694, %s17, 1
        %s3696 = smul.addr %s3695, 32
        %s3697 = smul.addr %s3696, 4
        %s3698 = scalar_lea.vmem %s3, %s3697
      $region52: #{residual_block_pallas.3} parent=43 // pred_fallthru
        _
      // Predicated region
      $region53: #{residual_block_pallas.3} parent=43 // pred_check
        %p3699 = pneg %p139
      $region54: #{residual_block_pallas.3} parent=43 // pred_check_branch
        %3701 = sbr.rel (%p3699) target = $region56
      $region55: #{residual_block_pallas.3} parent=43 // pred_region
        %p3702 = scmp.lt.s32.totalorder %s17, 1
        %s3703 = scalar_select %p3702, %s17, 1
        %s3704 = smul.addr %s3703, 4
        %s3705 = scalar_lea.vmem %s4, %s3704
      $region56: #{residual_block_pallas.3} parent=43 // pred_fallthru
        _
    $region44: #{residual_block_pallas.3} parent=5 // pred_fallthru
      _
  $region6: #{residual_block_pallas.3} parent=0 // loop_footer
    %s15 = sadd.s32 1, %s11
  $region7: #{residual_block_pallas.3} parent=0 // loop_footer_branch
    %10 = sbr.rel target = $region3
  $region8: #{residual_block_pallas.3} parent=0 // loop_exit
    _

// kernel: residual_block_pallas.4
$region0: #{residual_block_pallas.4}
  #allocation0 [shape = 'u32[]', space=smem, size = 0x4, offset = 0x4, fixed_abs, tag = 'smem constant byte address 0x4 - core index']
  #allocation1 [shape = 'u32[144,128]{1,0:T(1,128)}', space=vmem, size = 0x12000, scoped, tag = 'internal scratch']
  #allocation2 [shape = 'f32[16,16,1152]{2,1,0:T(8,128)}', space=vmem, size = 0x120000, scoped, tag = 'scratch operand']
  %s0 = inlined_call_operand.vmem [shape: bf16[2,256,128], index: 0, kind: input, shape index: {}]
  %s1 = inlined_call_operand.vmem [shape: f32[1,128], index: 1, kind: input, shape index: {}]
  %s2 = inlined_call_operand.vmem [shape: f32[1,128], index: 2, kind: input, shape index: {}]
  %s3 = inlined_call_operand.vmem [shape: bf16[1152,128], index: 3, kind: input, shape index: {}]
  %s4 = inlined_call_operand.vmem [shape: bf16[2,256,128], index: 4, kind: output, shape index: {0}]
  %s5 = inlined_call_operand.vmem [shape: f32[2,2,128], index: 5, kind: output, shape index: {1}]
  %6 = xla_tuple %s4, %s5
  %s7 = sld [smem:[#allocation0]]
  $region57: #{residual_block_pallas.4} parent=0
    _
  %s9 = ssub.s32 1, %s7
  %s10 = scalar_select 0, %s9, %s7
  loop: start=0, step=1, limit=4
  $region2: #{residual_block_pallas.4} parent=0 // loop_pre_header
    _
  $region3: #{residual_block_pallas.4} parent=0 // loop_header
    %s12 = sphi 0, %s16
    %p13 = scmp.ge.s32.totalorder %s12, 4
    %s22 = sphi 0, %s24
    %s25 = sphi 0, %s22
    %s26 = sphi 0, %s25
    %s42 = sphi 0, %s26
    %s46 = sphi 0, %s46
    %s48 = sphi 0, %s46
    %s49 = sphi 0, %s48
    %s63 = sphi 0, %s49
    %s67 = sphi 0, %s67
    %s69 = sphi 0, %s67
    %s70 = sphi 0, %s69
    %s84 = sphi 0, %s70
    %s88 = sphi 0, %s88
    %s90 = sphi 0, %s88
    %s91 = sphi 0, %s90
    %s105 = sphi 0, %s91
    %s111 = sphi 0, %s113
    %s114 = sphi 0, %s111
    %s115 = sphi 0, %s114
    %s131 = sphi 0, %s115
    %s137 = sphi 0, %s139
    %s140 = sphi 0, %s137
    %s141 = sphi 0, %s140
    %s157 = sphi 0, %s141
  $region4: #{residual_block_pallas.4} parent=0 // loop_header_branch
    %15 = sbr.rel (%p13) target = $region8
  $region5: #{residual_block_pallas.4} parent=0 // loop_body
    %s17 = ssub.s32 %s12, 1
    %s18 = ssub.s32 %s12, 2
    %s19 = sadd.s32 %s12, 1
    %s20 = ssub.s32 %s12, %s19
    %p21 = scmp.eq.s32.totalorder %s20, 0
    %s23 = sadd.s32 %s22, 1
    %s24 = scalar_select %p21, %s22, %s23
    %p27 = pneg %p21
    %p28 = scmp.eq.s32.totalorder %s12, 1
    %p29 = por %p27, %p28
    %p30 = scmp.ne.s32.totalorder %s22, %s25
    %p31 = scmp.eq.s32.totalorder %s12, 0
    %p32 = por %p30, %p31
    %p33 = scmp.ne.s32.totalorder %s22, %s25
    %p34 = scmp.eq.s32.totalorder %s17, 1
    %p35 = por %p33, %p34
    %p36 = scmp.ne.s32.totalorder %s25, %s26
    %p37 = scmp.eq.s32.totalorder %s17, 0
    %p38 = por %p36, %p37
    %p39 = scmp.ne.s32.totalorder %s25, %s26
    %p40 = scmp.eq.s32.totalorder %s18, 1
    %p41 = por %p39, %p40
    %p43 = scmp.ne.s32.totalorder %s26, %s42
    %p44 = scmp.eq.s32.totalorder %s18, 0
    %p45 = por %p43, %p44
    %s47 = sadd.s32 %s46, 1
    %p50 = scmp.eq.s32.totalorder %s12, 1
    %p51 = scmp.ne.s32.totalorder %s46, %s48
    %p52 = scmp.eq.s32.totalorder %s12, 0
    %p53 = por %p51, %p52
    %p54 = scmp.ne.s32.totalorder %s46, %s48
    %p55 = scmp.eq.s32.totalorder %s17, 1
    %p56 = por %p54, %p55
    %p57 = scmp.ne.s32.totalorder %s48, %s49
    %p58 = scmp.eq.s32.totalorder %s17, 0
    %p59 = por %p57, %p58
    %p60 = scmp.ne.s32.totalorder %s48, %s49
    %p61 = scmp.eq.s32.totalorder %s18, 1
    %p62 = por %p60, %p61
    %p64 = scmp.ne.s32.totalorder %s49, %s63
    %p65 = scmp.eq.s32.totalorder %s18, 0
    %p66 = por %p64, %p65
    %s68 = sadd.s32 %s67, 1
    %p71 = scmp.eq.s32.totalorder %s12, 1
    %p72 = scmp.ne.s32.totalorder %s67, %s69
    %p73 = scmp.eq.s32.totalorder %s12, 0
    %p74 = por %p72, %p73
    %p75 = scmp.ne.s32.totalorder %s67, %s69
    %p76 = scmp.eq.s32.totalorder %s17, 1
    %p77 = por %p75, %p76
    %p78 = scmp.ne.s32.totalorder %s69, %s70
    %p79 = scmp.eq.s32.totalorder %s17, 0
    %p80 = por %p78, %p79
    %p81 = scmp.ne.s32.totalorder %s69, %s70
    %p82 = scmp.eq.s32.totalorder %s18, 1
    %p83 = por %p81, %p82
    %p85 = scmp.ne.s32.totalorder %s70, %s84
    %p86 = scmp.eq.s32.totalorder %s18, 0
    %p87 = por %p85, %p86
    %s89 = sadd.s32 %s88, 1
    %p92 = scmp.eq.s32.totalorder %s12, 1
    %p93 = scmp.ne.s32.totalorder %s88, %s90
    %p94 = scmp.eq.s32.totalorder %s12, 0
    %p95 = por %p93, %p94
    %p96 = scmp.ne.s32.totalorder %s88, %s90
    %p97 = scmp.eq.s32.totalorder %s17, 1
    %p98 = por %p96, %p97
    %p99 = scmp.ne.s32.totalorder %s90, %s91
    %p100 = scmp.eq.s32.totalorder %s17, 0
    %p101 = por %p99, %p100
    %p102 = scmp.ne.s32.totalorder %s90, %s91
    %p103 = scmp.eq.s32.totalorder %s18, 1
    %p104 = por %p102, %p103
    %p106 = scmp.ne.s32.totalorder %s91, %s105
    %p107 = scmp.eq.s32.totalorder %s18, 0
    %p108 = por %p106, %p107
    %s109 = ssub.s32 %s12, %s19
    %p110 = scmp.eq.s32.totalorder %s109, 0
    %s112 = sadd.s32 %s111, 1
    %s113 = scalar_select %p110, %s111, %s112
    %p116 = pneg %p110
    %p117 = scmp.eq.s32.totalorder %s12, 1
    %p118 = por %p116, %p117
    %p119 = scmp.ne.s32.totalorder %s111, %s114
    %p120 = scmp.eq.s32.totalorder %s12, 0
    %p121 = por %p119, %p120
    %p122 = scmp.ne.s32.totalorder %s111, %s114
    %p123 = scmp.eq.s32.totalorder %s17, 1
    %p124 = por %p122, %p123
    %p125 = scmp.ne.s32.totalorder %s114, %s115
    %p126 = scmp.eq.s32.totalorder %s17, 0
    %p127 = por %p125, %p126
    %p128 = scmp.ne.s32.totalorder %s114, %s115
    %p129 = scmp.eq.s32.totalorder %s18, 1
    %p130 = por %p128, %p129
    %p132 = scmp.ne.s32.totalorder %s115, %s131
    %p133 = scmp.eq.s32.totalorder %s18, 0
    %p134 = por %p132, %p133
    %s135 = ssub.s32 %s12, %s19
    %p136 = scmp.eq.s32.totalorder %s135, 0
    %s138 = sadd.s32 %s137, 1
    %s139 = scalar_select %p136, %s137, %s138
    %p142 = pneg %p136
    %p143 = scmp.eq.s32.totalorder %s12, 1
    %p144 = por %p142, %p143
    %p145 = scmp.ne.s32.totalorder %s137, %s140
    %p146 = scmp.eq.s32.totalorder %s12, 0
    %p147 = por %p145, %p146
    %p148 = scmp.ne.s32.totalorder %s137, %s140
    %p149 = scmp.eq.s32.totalorder %s17, 1
    %p150 = por %p148, %p149
    %p151 = scmp.ne.s32.totalorder %s140, %s141
    %p152 = scmp.eq.s32.totalorder %s17, 0
    %p153 = por %p151, %p152
    %p154 = scmp.ne.s32.totalorder %s140, %s141
    %p155 = scmp.eq.s32.totalorder %s18, 1
    %p156 = por %p154, %p155
    %p158 = scmp.ne.s32.totalorder %s141, %s157
    %p159 = scmp.eq.s32.totalorder %s18, 0
    %p160 = por %p158, %p159
    %p161 = scmp.le.s32.totalorder 1, %s12
    %p162 = scmp.lt.s32.totalorder %s12, 3
    %p163 = pnand %p161, %p162
    %p164 = pneg %p163
    // Predicated region
    $region9: #{residual_block_pallas.4} parent=5 // pred_check
      _
    $region10: #{residual_block_pallas.4} parent=5 // pred_check_branch
      %166 = sbr.rel (%p163) target = $region12
    $region11: #{residual_block_pallas.4} parent=5 // pred_region
      %s167 = ssub.s32 %s12, 1
      // Predicated region
      $region13: #{residual_block_pallas.4} parent=11 // pred_check
        %p168 = pneg %p59
      $region14: #{residual_block_pallas.4} parent=11 // pred_check_branch
        %170 = sbr.rel (%p168) target = $region16
      $region15: #{residual_block_pallas.4} parent=11 // pred_region
        _
      $region16: #{residual_block_pallas.4} parent=11 // pred_fallthru
        _
      // Predicated region
      $region17: #{residual_block_pallas.4} parent=11 // pred_check
        %p171 = pneg %p80
      $region18: #{residual_block_pallas.4} parent=11 // pred_check_branch
        %173 = sbr.rel (%p171) target = $region20
      $region19: #{residual_block_pallas.4} parent=11 // pred_region
        _
      $region20: #{residual_block_pallas.4} parent=11 // pred_fallthru
        _
      // Predicated region
      $region21: #{residual_block_pallas.4} parent=11 // pred_check
        %p174 = pneg %p101
      $region22: #{residual_block_pallas.4} parent=11 // pred_check_branch
        %176 = sbr.rel (%p174) target = $region24
      $region23: #{residual_block_pallas.4} parent=11 // pred_region
        _
      $region24: #{residual_block_pallas.4} parent=11 // pred_fallthru
        _
    $region12: #{residual_block_pallas.4} parent=5 // pred_fallthru
      _
    %p177 = scmp.lt.s32.totalorder %s12, 2
    // Predicated region
    $region25: #{residual_block_pallas.4} parent=5 // pred_check
      %p178 = pneg %p177
    $region26: #{residual_block_pallas.4} parent=5 // pred_check_branch
      %180 = sbr.rel (%p178) target = $region28
    $region27: #{residual_block_pallas.4} parent=5 // pred_region
      // Predicated region
      $region29: #{residual_block_pallas.4} parent=27 // pred_check
        %p181 = pneg %p32
      $region30: #{residual_block_pallas.4} parent=27 // pred_check_branch
        %183 = sbr.rel (%p181) target = $region32
      $region31: #{residual_block_pallas.4} parent=27 // pred_region
        %p184 = scmp.lt.s32.totalorder %s12, 1
        %s185 = scalar_select %p184, %s12, 1
        %s186 = smul.addr %s185, 32
        %s187 = smul.addr %s186, 4
        %s188 = scalar_lea.vmem %s0, %s187
      $region32: #{residual_block_pallas.4} parent=27 // pred_fallthru
        _
    $region28: #{residual_block_pallas.4} parent=5 // pred_fallthru
      _
    %p189 = scmp.le.s32.totalorder 1, %s12
    %p190 = scmp.lt.s32.totalorder %s12, 3
    %p191 = pnand %p189, %p190
    %p192 = pneg %p191
    // Predicated region
    $region33: #{residual_block_pallas.4} parent=5 // pred_check
      _
    $region34: #{residual_block_pallas.4} parent=5 // pred_check_branch
      %194 = sbr.rel (%p191) target = $region36
    $region35: #{residual_block_pallas.4} parent=5 // pred_region
      %s195 = ssub.s32 %s12, 1
      %p196 = scmp.lt.s32.totalorder %s17, 1
      %s197 = scalar_select %p196, %s17, 1
      %s198 = smul.addr %s197, 32
      %s199 = smul.addr %s198, 4
      %s200 = scalar_lea.vmem %s0, %s199
      %p201 = pneg %p38
      %p202 = pneg %p35
      %p203 = pneg %p59
      %p204 = pneg %p56
      %p205 = pneg %p80
      %p206 = pneg %p77
      %p207 = pneg %p101
      %p208 = pneg %p98
      %p209 = pneg %p127
      %p210 = pneg %p124
      %p211 = scmp.lt.s32.totalorder %s17, 1
      %s212 = scalar_select %p211, %s17, 1
      %s213 = smul.addr %s212, 32
      %s214 = smul.addr %s213, 4
      %s215 = scalar_lea.vmem %s4, %s214
      %p216 = pneg %p153
      %p217 = pneg %p150
      %p218 = scmp.lt.s32.totalorder %s17, 1
      %s219 = scalar_select %p218, %s17, 1
      %s220 = smul.addr %s219, 2
      %s221 = scalar_lea.vmem %s5, %s220
      %p222 = scmp.lt.s32.totalorder %s17, 1
      %s223 = scalar_select %p222, %s17, 1
      %s224 = smul.addr %s223, 32
      %s225 = smul.addr %s224, 4
      %s226 = scalar_lea.vmem %s0, %s225
      %p227 = scmp.lt.s32.totalorder %s17, 1
      %s228 = scalar_select %p227, %s17, 1
      %s229 = smul.addr %s228, 32
      %s230 = smul.addr %s229, 4
      %s231 = scalar_lea.vmem %s4, %s230
      %p232 = scmp.lt.s32.totalorder %s17, 1
      %s233 = scalar_select %p232, %s17, 1
      %s234 = smul.addr %s233, 2
      %s235 = scalar_lea.vmem %s5, %s234
      %v237 = vld [vmem:[%s226] sm:$0xf]
      %v238 = vld [vmem:[%s226 + $0x4] sm:$0xf]
      %v239 = vld [vmem:[%s226 + $0x8] sm:$0xf]
      %v240 = vld [vmem:[%s226 + $0xc] sm:$0xf]
      %v241 = vld [vmem:[%s226 + $0x10] sm:$0xf]
      %v242 = vld [vmem:[%s226 + $0x14] sm:$0xf]
      %v243 = vld [vmem:[%s226 + $0x18] sm:$0xf]
      %v244 = vld [vmem:[%s226 + $0x1c] sm:$0xf]
      %v245 = vld [vmem:[%s226 + $0x20] sm:$0xf]
      %v246 = vld [vmem:[%s226 + $0x24] sm:$0xf]
      %v247 = vld [vmem:[%s226 + $0x28] sm:$0xf]
      %v248 = vld [vmem:[%s226 + $0x2c] sm:$0xf]
      %v249 = vld [vmem:[%s226 + $0x30] sm:$0xf]
      %v250 = vld [vmem:[%s226 + $0x34] sm:$0xf]
      %v251 = vld [vmem:[%s226 + $0x38] sm:$0xf]
      %v252 = vld [vmem:[%s226 + $0x3c] sm:$0xf]
      %v253 = vld [vmem:[%s226 + $0x40] sm:$0xf]
      %v254 = vld [vmem:[%s226 + $0x44] sm:$0xf]
      %v255 = vld [vmem:[%s226 + $0x48] sm:$0xf]
      %v256 = vld [vmem:[%s226 + $0x4c] sm:$0xf]
      %v257 = vld [vmem:[%s226 + $0x50] sm:$0xf]
      %v258 = vld [vmem:[%s226 + $0x54] sm:$0xf]
      %v259 = vld [vmem:[%s226 + $0x58] sm:$0xf]
      %v260 = vld [vmem:[%s226 + $0x5c] sm:$0xf]
      %v261 = vld [vmem:[%s226 + $0x60] sm:$0xf]
      %v262 = vld [vmem:[%s226 + $0x64] sm:$0xf]
      %v263 = vld [vmem:[%s226 + $0x68] sm:$0xf]
      %v264 = vld [vmem:[%s226 + $0x6c] sm:$0xf]
      %v265 = vld [vmem:[%s226 + $0x70] sm:$0xf]
      %v266 = vld [vmem:[%s226 + $0x74] sm:$0xf]
      %v267 = vld [vmem:[%s226 + $0x78] sm:$0xf]
      %v268 = vld [vmem:[%s226 + $0x7c] sm:$0xf]
      %v269 = vunpack.c.l.bf16 %v237
      %v270 = vunpack.c.l.bf16 %v238
      %v271 = vunpack.c.l.bf16 %v239
      %v272 = vunpack.c.l.bf16 %v240
      %v273 = vunpack.c.l.bf16 %v241
      %v274 = vunpack.c.l.bf16 %v242
      %v275 = vunpack.c.l.bf16 %v243
      %v276 = vunpack.c.l.bf16 %v244
      %v277 = vunpack.c.l.bf16 %v245
      %v278 = vunpack.c.l.bf16 %v246
      %v279 = vunpack.c.l.bf16 %v247
      %v280 = vunpack.c.l.bf16 %v248
      %v281 = vunpack.c.l.bf16 %v249
      %v282 = vunpack.c.l.bf16 %v250
      %v283 = vunpack.c.l.bf16 %v251
      %v284 = vunpack.c.l.bf16 %v252
      %v285 = vunpack.c.l.bf16 %v253
      %v286 = vunpack.c.l.bf16 %v254
      %v287 = vunpack.c.l.bf16 %v255
      %v288 = vunpack.c.l.bf16 %v256
      %v289 = vunpack.c.l.bf16 %v257
      %v290 = vunpack.c.l.bf16 %v258
      %v291 = vunpack.c.l.bf16 %v259
      %v292 = vunpack.c.l.bf16 %v260
      %v293 = vunpack.c.l.bf16 %v261
      %v294 = vunpack.c.l.bf16 %v262
      %v295 = vunpack.c.l.bf16 %v263
      %v296 = vunpack.c.l.bf16 %v264
      %v297 = vunpack.c.l.bf16 %v265
      %v298 = vunpack.c.l.bf16 %v266
      %v299 = vunpack.c.l.bf16 %v267
      %v300 = vunpack.c.l.bf16 %v268
      %v301 = vld [vmem:[%s1] sm:$0x1]
      %v303 = vlaneseq
      %v304 = vshrl.u32 %v303, 7
      %v305 = vsub.s32 0, %v304
      %v306 = vrot.slane %v301, %v305
      %v308 = vmul.f32 %v269, %v306
      %v309 = vmul.f32 %v270, %v306
      %v310 = vmul.f32 %v271, %v306
      %v311 = vmul.f32 %v272, %v306
      %v312 = vmul.f32 %v273, %v306
      %v313 = vmul.f32 %v274, %v306
      %v314 = vmul.f32 %v275, %v306
      %v315 = vmul.f32 %v276, %v306
      %v316 = vmul.f32 %v277, %v306
      %v317 = vmul.f32 %v278, %v306
      %v318 = vmul.f32 %v279, %v306
      %v319 = vmul.f32 %v280, %v306
      %v320 = vmul.f32 %v281, %v306
      %v321 = vmul.f32 %v282, %v306
      %v322 = vmul.f32 %v283, %v306
      %v323 = vmul.f32 %v284, %v306
      %v324 = vmul.f32 %v285, %v306
      %v325 = vmul.f32 %v286, %v306
      %v326 = vmul.f32 %v287, %v306
      %v327 = vmul.f32 %v288, %v306
      %v328 = vmul.f32 %v289, %v306
      %v329 = vmul.f32 %v290, %v306
      %v330 = vmul.f32 %v291, %v306
      %v331 = vmul.f32 %v292, %v306
      %v332 = vmul.f32 %v293, %v306
      %v333 = vmul.f32 %v294, %v306
      %v334 = vmul.f32 %v295, %v306
      %v335 = vmul.f32 %v296, %v306
      %v336 = vmul.f32 %v297, %v306
      %v337 = vmul.f32 %v298, %v306
      %v338 = vmul.f32 %v299, %v306
      %v339 = vmul.f32 %v300, %v306
      %v340 = vld [vmem:[%s2] sm:$0x1]
      %v342 = vlaneseq
      %v343 = vshrl.u32 %v342, 7
      %v344 = vsub.s32 0, %v343
      %v345 = vrot.slane %v340, %v344
      %v347 = vadd.f32 %v308, %v345
      %v348 = vadd.f32 %v309, %v345
      %v349 = vadd.f32 %v310, %v345
      %v350 = vadd.f32 %v311, %v345
      %v351 = vadd.f32 %v312, %v345
      %v352 = vadd.f32 %v313, %v345
      %v353 = vadd.f32 %v314, %v345
      %v354 = vadd.f32 %v315, %v345
      %v355 = vadd.f32 %v316, %v345
      %v356 = vadd.f32 %v317, %v345
      %v357 = vadd.f32 %v318, %v345
      %v358 = vadd.f32 %v319, %v345
      %v359 = vadd.f32 %v320, %v345
      %v360 = vadd.f32 %v321, %v345
      %v361 = vadd.f32 %v322, %v345
      %v362 = vadd.f32 %v323, %v345
      %v363 = vadd.f32 %v324, %v345
      %v364 = vadd.f32 %v325, %v345
      %v365 = vadd.f32 %v326, %v345
      %v366 = vadd.f32 %v327, %v345
      %v367 = vadd.f32 %v328, %v345
      %v368 = vadd.f32 %v329, %v345
      %v369 = vadd.f32 %v330, %v345
      %v370 = vadd.f32 %v331, %v345
      %v371 = vadd.f32 %v332, %v345
      %v372 = vadd.f32 %v333, %v345
      %v373 = vadd.f32 %v334, %v345
      %v374 = vadd.f32 %v335, %v345
      %v375 = vadd.f32 %v336, %v345
      %v376 = vadd.f32 %v337, %v345
      %v377 = vadd.f32 %v338, %v345
      %v378 = vadd.f32 %v339, %v345
      %v379 = vmax.f32 %v347, 0.0
      %v380 = vmax.f32 %v348, 0.0
      %v381 = vmax.f32 %v349, 0.0
      %v382 = vmax.f32 %v350, 0.0
      %v383 = vmax.f32 %v351, 0.0
      %v384 = vmax.f32 %v352, 0.0
      %v385 = vmax.f32 %v353, 0.0
      %v386 = vmax.f32 %v354, 0.0
      %v387 = vmax.f32 %v355, 0.0
      %v388 = vmax.f32 %v356, 0.0
      %v389 = vmax.f32 %v357, 0.0
      %v390 = vmax.f32 %v358, 0.0
      %v391 = vmax.f32 %v359, 0.0
      %v392 = vmax.f32 %v360, 0.0
      %v393 = vmax.f32 %v361, 0.0
      %v394 = vmax.f32 %v362, 0.0
      %v395 = vmax.f32 %v363, 0.0
      %v396 = vmax.f32 %v364, 0.0
      %v397 = vmax.f32 %v365, 0.0
      %v398 = vmax.f32 %v366, 0.0
      %v399 = vmax.f32 %v367, 0.0
      %v400 = vmax.f32 %v368, 0.0
      %v401 = vmax.f32 %v369, 0.0
      %v402 = vmax.f32 %v370, 0.0
      %v403 = vmax.f32 %v371, 0.0
      %v404 = vmax.f32 %v372, 0.0
      %v405 = vmax.f32 %v373, 0.0
      %v406 = vmax.f32 %v374, 0.0
      %v407 = vmax.f32 %v375, 0.0
      %v408 = vmax.f32 %v376, 0.0
      %v409 = vmax.f32 %v377, 0.0
      %v410 = vmax.f32 %v378, 0.0
      %411 = vst [vmem:[#allocation2] sm:$0xff] 0.0
      %412 = vst [vmem:[#allocation2 + $0x8] sm:$0xff] 0.0
      %413 = vst [vmem:[#allocation2 + $0x10] sm:$0xff] 0.0
      %414 = vst [vmem:[#allocation2 + $0x18] sm:$0xff] 0.0
      %415 = vst [vmem:[#allocation2 + $0x20] sm:$0xff] 0.0
      %416 = vst [vmem:[#allocation2 + $0x28] sm:$0xff] 0.0
      %417 = vst [vmem:[#allocation2 + $0x30] sm:$0xff] 0.0
      %418 = vst [vmem:[#allocation2 + $0x38] sm:$0xff] 0.0
      %419 = vst [vmem:[#allocation2 + $0x40] sm:$0xff] 0.0
      %420 = vst [vmem:[#allocation2 + $0x48] sm:$0xff] 0.0
      %421 = vst [vmem:[#allocation2 + $0x50] sm:$0xff] 0.0
      %422 = vst [vmem:[#allocation2 + $0x58] sm:$0xff] 0.0
      %423 = vst [vmem:[#allocation2 + $0x60] sm:$0xff] 0.0
      %424 = vst [vmem:[#allocation2 + $0x68] sm:$0xff] 0.0
      %425 = vst [vmem:[#allocation2 + $0x70] sm:$0xff] 0.0
      %426 = vst [vmem:[#allocation2 + $0x78] sm:$0xff] 0.0
      %427 = vst [vmem:[#allocation2 + $0x80] sm:$0xff] 0.0
      %428 = vst [vmem:[#allocation2 + $0x88] sm:$0xff] 0.0
      %s429 = scalar_lea.vmem [#allocation2], 2160
      %430 = vst [vmem:[%s429] sm:$0xff] 0.0
      %431 = vst [vmem:[%s429 + $0x8] sm:$0xff] 0.0
      %432 = vst [vmem:[%s429 + $0x10] sm:$0xff] 0.0
      %433 = vst [vmem:[%s429 + $0x18] sm:$0xff] 0.0
      %434 = vst [vmem:[%s429 + $0x20] sm:$0xff] 0.0
      %435 = vst [vmem:[%s429 + $0x28] sm:$0xff] 0.0
      %436 = vst [vmem:[%s429 + $0x30] sm:$0xff] 0.0
      %437 = vst [vmem:[%s429 + $0x38] sm:$0xff] 0.0
      %438 = vst [vmem:[%s429 + $0x40] sm:$0xff] 0.0
      %439 = vst [vmem:[%s429 + $0x48] sm:$0xff] 0.0
      %440 = vst [vmem:[%s429 + $0x50] sm:$0xff] 0.0
      %441 = vst [vmem:[%s429 + $0x58] sm:$0xff] 0.0
      %442 = vst [vmem:[%s429 + $0x60] sm:$0xff] 0.0
      %443 = vst [vmem:[%s429 + $0x68] sm:$0xff] 0.0
      %444 = vst [vmem:[%s429 + $0x70] sm:$0xff] 0.0
      %445 = vst [vmem:[%s429 + $0x78] sm:$0xff] 0.0
      %446 = vst [vmem:[%s429 + $0x80] sm:$0xff] 0.0
      %447 = vst [vmem:[%s429 + $0x88] sm:$0xff] 0.0
      %448 = vst [vmem:[#allocation2] sm:$0x1] 0.0
      %449 = vst [vmem:[#allocation2 + $0x90] sm:$0x1] 0.0
      %450 = vst [vmem:[#allocation2 + $0x120] sm:$0x1] 0.0
      %451 = vst [vmem:[#allocation2 + $0x1b0] sm:$0x1] 0.0
      %452 = vst [vmem:[#allocation2 + $0x240] sm:$0x1] 0.0
      %453 = vst [vmem:[#allocation2 + $0x2d0] sm:$0x1] 0.0
      %454 = vst [vmem:[#allocation2 + $0x360] sm:$0x1] 0.0
      %455 = vst [vmem:[#allocation2 + $0x3f0] sm:$0x1] 0.0
      %456 = vst [vmem:[#allocation2 + $0x480] sm:$0x1] 0.0
      %457 = vst [vmem:[#allocation2 + $0x510] sm:$0x1] 0.0
      %458 = vst [vmem:[#allocation2 + $0x5a0] sm:$0x1] 0.0
      %459 = vst [vmem:[#allocation2 + $0x630] sm:$0x1] 0.0
      %460 = vst [vmem:[#allocation2 + $0x6c0] sm:$0x1] 0.0
      %461 = vst [vmem:[#allocation2 + $0x750] sm:$0x1] 0.0
      %462 = vst [vmem:[#allocation2 + $0x7e0] sm:$0x1] 0.0
      %463 = vst [vmem:[#allocation2 + $0x870] sm:$0x1] 0.0
      %464 = vst [vmem:[#allocation2 + $0x18] sm:$0x1] 0.0
      %465 = vst [vmem:[#allocation2 + $0xa8] sm:$0x1] 0.0
      %466 = vst [vmem:[#allocation2 + $0x138] sm:$0x1] 0.0
      %467 = vst [vmem:[#allocation2 + $0x1c8] sm:$0x1] 0.0
      %468 = vst [vmem:[#allocation2 + $0x258] sm:$0x1] 0.0
      %469 = vst [vmem:[#allocation2 + $0x2e8] sm:$0x1] 0.0
      %470 = vst [vmem:[#allocation2 + $0x378] sm:$0x1] 0.0
      %471 = vst [vmem:[#allocation2 + $0x408] sm:$0x1] 0.0
      %472 = vst [vmem:[#allocation2 + $0x498] sm:$0x1] 0.0
      %473 = vst [vmem:[#allocation2 + $0x528] sm:$0x1] 0.0
      %474 = vst [vmem:[#allocation2 + $0x5b8] sm:$0x1] 0.0
      %475 = vst [vmem:[#allocation2 + $0x648] sm:$0x1] 0.0
      %476 = vst [vmem:[#allocation2 + $0x6d8] sm:$0x1] 0.0
      %477 = vst [vmem:[#allocation2 + $0x768] sm:$0x1] 0.0
      %478 = vst [vmem:[#allocation2 + $0x7f8] sm:$0x1] 0.0
      %479 = vst [vmem:[#allocation2 + $0x888] sm:$0x1] 0.0
      %480 = vst [vmem:[#allocation2 + $0x30] sm:$0x1] 0.0
      %481 = vst [vmem:[#allocation2 + $0xc0] sm:$0x1] 0.0
      %482 = vst [vmem:[#allocation2 + $0x150] sm:$0x1] 0.0
      %483 = vst [vmem:[#allocation2 + $0x1e0] sm:$0x1] 0.0
      %484 = vst [vmem:[#allocation2 + $0x270] sm:$0x1] 0.0
      %485 = vst [vmem:[#allocation2 + $0x300] sm:$0x1] 0.0
      %486 = vst [vmem:[#allocation2 + $0x390] sm:$0x1] 0.0
      %487 = vst [vmem:[#allocation2 + $0x420] sm:$0x1] 0.0
      %488 = vst [vmem:[#allocation2 + $0x4b0] sm:$0x1] 0.0
      %489 = vst [vmem:[#allocation2 + $0x540] sm:$0x1] 0.0
      %490 = vst [vmem:[#allocation2 + $0x5d0] sm:$0x1] 0.0
      %491 = vst [vmem:[#allocation2 + $0x660] sm:$0x1] 0.0
      %492 = vst [vmem:[#allocation2 + $0x6f0] sm:$0x1] 0.0
      %493 = vst [vmem:[#allocation2 + $0x780] sm:$0x1] 0.0
      %494 = vst [vmem:[#allocation2 + $0x810] sm:$0x1] 0.0
      %495 = vst [vmem:[#allocation2 + $0x8a0] sm:$0x1] 0.0
      %496 = vst [vmem:[#allocation2 + $0x5f] sm:$0x1] 0.0
      %497 = vst [vmem:[#allocation2 + $0xef] sm:$0x1] 0.0
      %498 = vst [vmem:[#allocation2 + $0x17f] sm:$0x1] 0.0
      %499 = vst [vmem:[#allocation2 + $0x20f] sm:$0x1] 0.0
      %500 = vst [vmem:[#allocation2 + $0x29f] sm:$0x1] 0.0
      %501 = vst [vmem:[#allocation2 + $0x32f] sm:$0x1] 0.0
      %502 = vst [vmem:[#allocation2 + $0x3bf] sm:$0x1] 0.0
      %503 = vst [vmem:[#allocation2 + $0x44f] sm:$0x1] 0.0
      %504 = vst [vmem:[#allocation2 + $0x4df] sm:$0x1] 0.0
      %505 = vst [vmem:[#allocation2 + $0x56f] sm:$0x1] 0.0
      %506 = vst [vmem:[#allocation2 + $0x5ff] sm:$0x1] 0.0
      %507 = vst [vmem:[#allocation2 + $0x68f] sm:$0x1] 0.0
      %508 = vst [vmem:[#allocation2 + $0x71f] sm:$0x1] 0.0
      %509 = vst [vmem:[#allocation2 + $0x7af] sm:$0x1] 0.0
      %510 = vst [vmem:[#allocation2 + $0x83f] sm:$0x1] 0.0
      %511 = vst [vmem:[#allocation2 + $0x8cf] sm:$0x1] 0.0
      %512 = vst [vmem:[#allocation2 + $0x77] sm:$0x1] 0.0
      %513 = vst [vmem:[#allocation2 + $0x107] sm:$0x1] 0.0
      %514 = vst [vmem:[#allocation2 + $0x197] sm:$0x1] 0.0
      %515 = vst [vmem:[#allocation2 + $0x227] sm:$0x1] 0.0
      %516 = vst [vmem:[#allocation2 + $0x2b7] sm:$0x1] 0.0
      %517 = vst [vmem:[#allocation2 + $0x347] sm:$0x1] 0.0
      %518 = vst [vmem:[#allocation2 + $0x3d7] sm:$0x1] 0.0
      %519 = vst [vmem:[#allocation2 + $0x467] sm:$0x1] 0.0
      %520 = vst [vmem:[#allocation2 + $0x4f7] sm:$0x1] 0.0
      %521 = vst [vmem:[#allocation2 + $0x587] sm:$0x1] 0.0
      %522 = vst [vmem:[#allocation2 + $0x617] sm:$0x1] 0.0
      %523 = vst [vmem:[#allocation2 + $0x6a7] sm:$0x1] 0.0
      %524 = vst [vmem:[#allocation2 + $0x737] sm:$0x1] 0.0
      %525 = vst [vmem:[#allocation2 + $0x7c7] sm:$0x1] 0.0
      %526 = vst [vmem:[#allocation2 + $0x857] sm:$0x1] 0.0
      %527 = vst [vmem:[#allocation2 + $0x8e7] sm:$0x1] 0.0
      %528 = vst [vmem:[#allocation2 + $0x8f] sm:$0x1] 0.0
      %529 = vst [vmem:[#allocation2 + $0x11f] sm:$0x1] 0.0
      %530 = vst [vmem:[#allocation2 + $0x1af] sm:$0x1] 0.0
      %531 = vst [vmem:[#allocation2 + $0x23f] sm:$0x1] 0.0
      %532 = vst [vmem:[#allocation2 + $0x2cf] sm:$0x1] 0.0
      %533 = vst [vmem:[#allocation2 + $0x35f] sm:$0x1] 0.0
      %534 = vst [vmem:[#allocation2 + $0x3ef] sm:$0x1] 0.0
      %535 = vst [vmem:[#allocation2 + $0x47f] sm:$0x1] 0.0
      %536 = vst [vmem:[#allocation2 + $0x50f] sm:$0x1] 0.0
      %537 = vst [vmem:[#allocation2 + $0x59f] sm:$0x1] 0.0
      %538 = vst [vmem:[#allocation2 + $0x62f] sm:$0x1] 0.0
      %539 = vst [vmem:[#allocation2 + $0x6bf] sm:$0x1] 0.0
      %540 = vst [vmem:[#allocation2 + $0x74f] sm:$0x1] 0.0
      %541 = vst [vmem:[#allocation2 + $0x7df] sm:$0x1] 0.0
      %542 = vst [vmem:[#allocation2 + $0x86f] sm:$0x1] 0.0
      %543 = vst [vmem:[#allocation2 + $0x8ff] sm:$0x1] 0.0
      %vm574 = vcmask 1040384
      %v575 = vrot.slane %v379, 7
      %v576 = vrot.slane %v380, 7
      %v577 = vsel %vm574, %v575, %v576
      %v578 = vrot.slane %v381, 7
      %v579 = vrot.slane %v382, 7
      %v580 = vsel %vm574, %v578, %v579
      %v581 = vrot.slane %v383, 7
      %v582 = vrot.slane %v384, 7
      %v583 = vsel %vm574, %v581, %v582
      %v584 = vrot.slane %v385, 7
      %v585 = vrot.slane %v386, 7
      %v586 = vsel %vm574, %v584, %v585
      %v587 = vrot.slane %v387, 7
      %v588 = vrot.slane %v388, 7
      %v589 = vsel %vm574, %v587, %v588
      %v590 = vrot.slane %v389, 7
      %v591 = vrot.slane %v390, 7
      %v592 = vsel %vm574, %v590, %v591
      %v593 = vrot.slane %v391, 7
      %v594 = vrot.slane %v392, 7
      %v595 = vsel %vm574, %v593, %v594
      %v596 = vrot.slane %v393, 7
      %v597 = vrot.slane %v394, 7
      %v598 = vsel %vm574, %v596, %v597
      %v599 = vrot.slane %v395, 7
      %v600 = vrot.slane %v396, 7
      %v601 = vsel %vm574, %v599, %v600
      %v602 = vrot.slane %v397, 7
      %v603 = vrot.slane %v398, 7
      %v604 = vsel %vm574, %v602, %v603
      %v605 = vrot.slane %v399, 7
      %v606 = vrot.slane %v400, 7
      %v607 = vsel %vm574, %v605, %v606
      %v608 = vrot.slane %v401, 7
      %v609 = vrot.slane %v402, 7
      %v610 = vsel %vm574, %v608, %v609
      %v611 = vrot.slane %v403, 7
      %v612 = vrot.slane %v404, 7
      %v613 = vsel %vm574, %v611, %v612
      %v614 = vrot.slane %v405, 7
      %v615 = vrot.slane %v406, 7
      %v616 = vsel %vm574, %v614, %v615
      %v617 = vrot.slane %v407, 7
      %v618 = vrot.slane %v408, 7
      %v619 = vsel %vm574, %v617, %v618
      %s650 = scalar_lea.vmem [#allocation2], 144
      %651 = vst [vmem:[%s650] sm:$0xfe] %v575
      %652 = vst [vmem:[%s650 + $0x48] sm:$0xff] %v577
      %653 = vst [vmem:[%s650 + $0x90] sm:$0xfe] %v578
      %654 = vst [vmem:[%s650 + $0xd8] sm:$0xff] %v580
      %655 = vst [vmem:[%s650 + $0x120] sm:$0xfe] %v581
      %656 = vst [vmem:[%s650 + $0x168] sm:$0xff] %v583
      %657 = vst [vmem:[%s650 + $0x1b0] sm:$0xfe] %v584
      %658 = vst [vmem:[%s650 + $0x1f8] sm:$0xff] %v586
      %659 = vst [vmem:[%s650 + $0x240] sm:$0xfe] %v587
      %660 = vst [vmem:[%s650 + $0x288] sm:$0xff] %v589
      %661 = vst [vmem:[%s650 + $0x2d0] sm:$0xfe] %v590
      %662 = vst [vmem:[%s650 + $0x318] sm:$0xff] %v592
      %663 = vst [vmem:[%s650 + $0x360] sm:$0xfe] %v593
      %664 = vst [vmem:[%s650 + $0x3a8] sm:$0xff] %v595
      %665 = vst [vmem:[%s650 + $0x3f0] sm:$0xfe] %v596
      %666 = vst [vmem:[%s650 + $0x438] sm:$0xff] %v598
      %667 = vst [vmem:[%s650 + $0x480] sm:$0xfe] %v599
      %668 = vst [vmem:[%s650 + $0x4c8] sm:$0xff] %v601
      %669 = vst [vmem:[%s650 + $0x510] sm:$0xfe] %v602
      %670 = vst [vmem:[%s650 + $0x558] sm:$0xff] %v604
      %671 = vst [vmem:[%s650 + $0x5a0] sm:$0xfe] %v605
      %672 = vst [vmem:[%s650 + $0x5e8] sm:$0xff] %v607
      %673 = vst [vmem:[%s650 + $0x630] sm:$0xfe] %v608
      %674 = vst [vmem:[%s650 + $0x678] sm:$0xff] %v610
      %675 = vst [vmem:[%s650 + $0x6c0] sm:$0xfe] %v611
      %676 = vst [vmem:[%s650 + $0x708] sm:$0xff] %v613
      %677 = vst [vmem:[%s650 + $0x750] sm:$0xfe] %v614
      %678 = vst [vmem:[%s650 + $0x798] sm:$0xff] %v616
      %679 = vst [vmem:[%s650 + $0x7e0] sm:$0xfe] %v617
      %680 = vst [vmem:[%s650 + $0x828] sm:$0xff] %v619
      %681 = vst [vmem:[%s650 + $0x8] sm:$0xff] %v379
      %682 = vst [vmem:[%s650 + $0x50] sm:$0xff] %v380
      %683 = vst [vmem:[%s650 + $0x98] sm:$0xff] %v381
      %684 = vst [vmem:[%s650 + $0xe0] sm:$0xff] %v382
      %685 = vst [vmem:[%s650 + $0x128] sm:$0xff] %v383
      %686 = vst [vmem:[%s650 + $0x170] sm:$0xff] %v384
      %687 = vst [vmem:[%s650 + $0x1b8] sm:$0xff] %v385
      %688 = vst [vmem:[%s650 + $0x200] sm:$0xff] %v386
      %689 = vst [vmem:[%s650 + $0x248] sm:$0xff] %v387
      %690 = vst [vmem:[%s650 + $0x290] sm:$0xff] %v388
      %691 = vst [vmem:[%s650 + $0x2d8] sm:$0xff] %v389
      %692 = vst [vmem:[%s650 + $0x320] sm:$0xff] %v390
      %693 = vst [vmem:[%s650 + $0x368] sm:$0xff] %v391
      %694 = vst [vmem:[%s650 + $0x3b0] sm:$0xff] %v392
      %695 = vst [vmem:[%s650 + $0x3f8] sm:$0xff] %v393
      %696 = vst [vmem:[%s650 + $0x440] sm:$0xff] %v394
      %697 = vst [vmem:[%s650 + $0x488] sm:$0xff] %v395
      %698 = vst [vmem:[%s650 + $0x4d0] sm:$0xff] %v396
      %699 = vst [vmem:[%s650 + $0x518] sm:$0xff] %v397
      %700 = vst [vmem:[%s650 + $0x560] sm:$0xff] %v398
      %701 = vst [vmem:[%s650 + $0x5a8] sm:$0xff] %v399
      %702 = vst [vmem:[%s650 + $0x5f0] sm:$0xff] %v400
      %703 = vst [vmem:[%s650 + $0x638] sm:$0xff] %v401
      %704 = vst [vmem:[%s650 + $0x680] sm:$0xff] %v402
      %705 = vst [vmem:[%s650 + $0x6c8] sm:$0xff] %v403
      %706 = vst [vmem:[%s650 + $0x710] sm:$0xff] %v404
      %707 = vst [vmem:[%s650 + $0x758] sm:$0xff] %v405
      %708 = vst [vmem:[%s650 + $0x7a0] sm:$0xff] %v406
      %709 = vst [vmem:[%s650 + $0x7e8] sm:$0xff] %v407
      %710 = vst [vmem:[%s650 + $0x830] sm:$0xff] %v408
      %vm711 = vcmask 1046528
      %v712 = vrot.slane %v379, 1
      %v713 = vrot.slane %v380, 1
      %v714 = vsel %vm711, %v712, %v713
      %v715 = vrot.slane %v381, 1
      %v716 = vrot.slane %v382, 1
      %v717 = vsel %vm711, %v715, %v716
      %v718 = vrot.slane %v383, 1
      %v719 = vrot.slane %v384, 1
      %v720 = vsel %vm711, %v718, %v719
      %v721 = vrot.slane %v385, 1
      %v722 = vrot.slane %v386, 1
      %v723 = vsel %vm711, %v721, %v722
      %v724 = vrot.slane %v387, 1
      %v725 = vrot.slane %v388, 1
      %v726 = vsel %vm711, %v724, %v725
      %v727 = vrot.slane %v389, 1
      %v728 = vrot.slane %v390, 1
      %v729 = vsel %vm711, %v727, %v728
      %v730 = vrot.slane %v391, 1
      %v731 = vrot.slane %v392, 1
      %v732 = vsel %vm711, %v730, %v731
      %v733 = vrot.slane %v393, 1
      %v734 = vrot.slane %v394, 1
      %v735 = vsel %vm711, %v733, %v734
      %v736 = vrot.slane %v395, 1
      %v737 = vrot.slane %v396, 1
      %v738 = vsel %vm711, %v736, %v737
      %v739 = vrot.slane %v397, 1
      %v740 = vrot.slane %v398, 1
      %v741 = vsel %vm711, %v739, %v740
      %v742 = vrot.slane %v399, 1
      %v743 = vrot.slane %v400, 1
      %v744 = vsel %vm711, %v742, %v743
      %v745 = vrot.slane %v401, 1
      %v746 = vrot.slane %v402, 1
      %v747 = vsel %vm711, %v745, %v746
      %v748 = vrot.slane %v403, 1
      %v749 = vrot.slane %v404, 1
      %v750 = vsel %vm711, %v748, %v749
      %v751 = vrot.slane %v405, 1
      %v752 = vrot.slane %v406, 1
      %v753 = vsel %vm711, %v751, %v752
      %v754 = vrot.slane %v407, 1
      %v755 = vrot.slane %v408, 1
      %v756 = vsel %vm711, %v754, %v755
      %787 = vst [vmem:[%s650 + $0x10] sm:$0xff] %v714
      %788 = vst [vmem:[%s650 + $0x58] sm:$0x7f] %v713
      %789 = vst [vmem:[%s650 + $0xa0] sm:$0xff] %v717
      %790 = vst [vmem:[%s650 + $0xe8] sm:$0x7f] %v716
      %791 = vst [vmem:[%s650 + $0x130] sm:$0xff] %v720
      %792 = vst [vmem:[%s650 + $0x178] sm:$0x7f] %v719
      %793 = vst [vmem:[%s650 + $0x1c0] sm:$0xff] %v723
      %794 = vst [vmem:[%s650 + $0x208] sm:$0x7f] %v722
      %795 = vst [vmem:[%s650 + $0x250] sm:$0xff] %v726
      %796 = vst [vmem:[%s650 + $0x298] sm:$0x7f] %v725
      %797 = vst [vmem:[%s650 + $0x2e0] sm:$0xff] %v729
      %798 = vst [vmem:[%s650 + $0x328] sm:$0x7f] %v728
      %799 = vst [vmem:[%s650 + $0x370] sm:$0xff] %v732
      %800 = vst [vmem:[%s650 + $0x3b8] sm:$0x7f] %v731
      %801 = vst [vmem:[%s650 + $0x400] sm:$0xff] %v735
      %802 = vst [vmem:[%s650 + $0x448] sm:$0x7f] %v734
      %803 = vst [vmem:[%s650 + $0x490] sm:$0xff] %v738
      %804 = vst [vmem:[%s650 + $0x4d8] sm:$0x7f] %v737
      %805 = vst [vmem:[%s650 + $0x520] sm:$0xff] %v741
      %806 = vst [vmem:[%s650 + $0x568] sm:$0x7f] %v740
      %807 = vst [vmem:[%s650 + $0x5b0] sm:$0xff] %v744
      %808 = vst [vmem:[%s650 + $0x5f8] sm:$0x7f] %v743
      %809 = vst [vmem:[%s650 + $0x640] sm:$0xff] %v747
      %810 = vst [vmem:[%s650 + $0x688] sm:$0x7f] %v746
      %811 = vst [vmem:[%s650 + $0x6d0] sm:$0xff] %v750
      %812 = vst [vmem:[%s650 + $0x718] sm:$0x7f] %v749
      %813 = vst [vmem:[%s650 + $0x760] sm:$0xff] %v753
      %814 = vst [vmem:[%s650 + $0x7a8] sm:$0x7f] %v752
      %815 = vst [vmem:[%s650 + $0x7f0] sm:$0xff] %v756
      %816 = vst [vmem:[%s650 + $0x838] sm:$0x7f] %v755
      %v819 = vrot.slane %v409, 7
      %v820 = vrot.slane %v410, 7
      %v821 = vsel %vm574, %v819, %v820
      %824 = vst [vmem:[#allocation2 + $0x18] sm:$0xfe] %v575
      %825 = vst [vmem:[#allocation2 + $0x60] sm:$0xff] %v577
      %826 = vst [vmem:[#allocation2 + $0xa8] sm:$0xfe] %v578
      %827 = vst [vmem:[#allocation2 + $0xf0] sm:$0xff] %v580
      %828 = vst [vmem:[#allocation2 + $0x138] sm:$0xfe] %v581
      %829 = vst [vmem:[#allocation2 + $0x180] sm:$0xff] %v583
      %830 = vst [vmem:[#allocation2 + $0x1c8] sm:$0xfe] %v584
      %831 = vst [vmem:[#allocation2 + $0x210] sm:$0xff] %v586
      %832 = vst [vmem:[#allocation2 + $0x258] sm:$0xfe] %v587
      %833 = vst [vmem:[#allocation2 + $0x2a0] sm:$0xff] %v589
      %834 = vst [vmem:[#allocation2 + $0x2e8] sm:$0xfe] %v590
      %835 = vst [vmem:[#allocation2 + $0x330] sm:$0xff] %v592
      %836 = vst [vmem:[#allocation2 + $0x378] sm:$0xfe] %v593
      %837 = vst [vmem:[#allocation2 + $0x3c0] sm:$0xff] %v595
      %838 = vst [vmem:[#allocation2 + $0x408] sm:$0xfe] %v596
      %839 = vst [vmem:[#allocation2 + $0x450] sm:$0xff] %v598
      %840 = vst [vmem:[#allocation2 + $0x498] sm:$0xfe] %v599
      %841 = vst [vmem:[#allocation2 + $0x4e0] sm:$0xff] %v601
      %842 = vst [vmem:[#allocation2 + $0x528] sm:$0xfe] %v602
      %843 = vst [vmem:[#allocation2 + $0x570] sm:$0xff] %v604
      %844 = vst [vmem:[#allocation2 + $0x5b8] sm:$0xfe] %v605
      %845 = vst [vmem:[#allocation2 + $0x600] sm:$0xff] %v607
      %846 = vst [vmem:[#allocation2 + $0x648] sm:$0xfe] %v608
      %847 = vst [vmem:[#allocation2 + $0x690] sm:$0xff] %v610
      %848 = vst [vmem:[#allocation2 + $0x6d8] sm:$0xfe] %v611
      %849 = vst [vmem:[#allocation2 + $0x720] sm:$0xff] %v613
      %850 = vst [vmem:[#allocation2 + $0x768] sm:$0xfe] %v614
      %851 = vst [vmem:[#allocation2 + $0x7b0] sm:$0xff] %v616
      %852 = vst [vmem:[#allocation2 + $0x7f8] sm:$0xfe] %v617
      %853 = vst [vmem:[#allocation2 + $0x840] sm:$0xff] %v619
      %854 = vst [vmem:[#allocation2 + $0x888] sm:$0xfe] %v819
      %855 = vst [vmem:[#allocation2 + $0x8d0] sm:$0xff] %v821
      %856 = vst [vmem:[#allocation2 + $0x20] sm:$0xff] %v379
      %857 = vst [vmem:[#allocation2 + $0x68] sm:$0xff] %v380
      %858 = vst [vmem:[#allocation2 + $0xb0] sm:$0xff] %v381
      %859 = vst [vmem:[#allocation2 + $0xf8] sm:$0xff] %v382
      %860 = vst [vmem:[#allocation2 + $0x140] sm:$0xff] %v383
      %861 = vst [vmem:[#allocation2 + $0x188] sm:$0xff] %v384
      %862 = vst [vmem:[#allocation2 + $0x1d0] sm:$0xff] %v385
      %863 = vst [vmem:[#allocation2 + $0x218] sm:$0xff] %v386
      %864 = vst [vmem:[#allocation2 + $0x260] sm:$0xff] %v387
      %865 = vst [vmem:[#allocation2 + $0x2a8] sm:$0xff] %v388
      %866 = vst [vmem:[#allocation2 + $0x2f0] sm:$0xff] %v389
      %867 = vst [vmem:[#allocation2 + $0x338] sm:$0xff] %v390
      %868 = vst [vmem:[#allocation2 + $0x380] sm:$0xff] %v391
      %869 = vst [vmem:[#allocation2 + $0x3c8] sm:$0xff] %v392
      %870 = vst [vmem:[#allocation2 + $0x410] sm:$0xff] %v393
      %871 = vst [vmem:[#allocation2 + $0x458] sm:$0xff] %v394
      %872 = vst [vmem:[#allocation2 + $0x4a0] sm:$0xff] %v395
      %873 = vst [vmem:[#allocation2 + $0x4e8] sm:$0xff] %v396
      %874 = vst [vmem:[#allocation2 + $0x530] sm:$0xff] %v397
      %875 = vst [vmem:[#allocation2 + $0x578] sm:$0xff] %v398
      %876 = vst [vmem:[#allocation2 + $0x5c0] sm:$0xff] %v399
      %877 = vst [vmem:[#allocation2 + $0x608] sm:$0xff] %v400
      %878 = vst [vmem:[#allocation2 + $0x650] sm:$0xff] %v401
      %879 = vst [vmem:[#allocation2 + $0x698] sm:$0xff] %v402
      %880 = vst [vmem:[#allocation2 + $0x6e0] sm:$0xff] %v403
      %881 = vst [vmem:[#allocation2 + $0x728] sm:$0xff] %v404
      %882 = vst [vmem:[#allocation2 + $0x770] sm:$0xff] %v405
      %883 = vst [vmem:[#allocation2 + $0x7b8] sm:$0xff] %v406
      %884 = vst [vmem:[#allocation2 + $0x800] sm:$0xff] %v407
      %885 = vst [vmem:[#allocation2 + $0x848] sm:$0xff] %v408
      %886 = vst [vmem:[#allocation2 + $0x890] sm:$0xff] %v409
      %887 = vst [vmem:[#allocation2 + $0x8d8] sm:$0xff] %v410
      %v888 = vrot.slane %v409, 1
      %v889 = vrot.slane %v410, 1
      %v890 = vsel %vm711, %v888, %v889
      %893 = vst [vmem:[#allocation2 + $0x28] sm:$0xff] %v714
      %894 = vst [vmem:[#allocation2 + $0x70] sm:$0x7f] %v713
      %895 = vst [vmem:[#allocation2 + $0xb8] sm:$0xff] %v717
      %896 = vst [vmem:[#allocation2 + $0x100] sm:$0x7f] %v716
      %897 = vst [vmem:[#allocation2 + $0x148] sm:$0xff] %v720
      %898 = vst [vmem:[#allocation2 + $0x190] sm:$0x7f] %v719
      %899 = vst [vmem:[#allocation2 + $0x1d8] sm:$0xff] %v723
      %900 = vst [vmem:[#allocation2 + $0x220] sm:$0x7f] %v722
      %901 = vst [vmem:[#allocation2 + $0x268] sm:$0xff] %v726
      %902 = vst [vmem:[#allocation2 + $0x2b0] sm:$0x7f] %v725
      %903 = vst [vmem:[#allocation2 + $0x2f8] sm:$0xff] %v729
      %904 = vst [vmem:[#allocation2 + $0x340] sm:$0x7f] %v728
      %905 = vst [vmem:[#allocation2 + $0x388] sm:$0xff] %v732
      %906 = vst [vmem:[#allocation2 + $0x3d0] sm:$0x7f] %v731
      %907 = vst [vmem:[#allocation2 + $0x418] sm:$0xff] %v735
      %908 = vst [vmem:[#allocation2 + $0x460] sm:$0x7f] %v734
      %909 = vst [vmem:[#allocation2 + $0x4a8] sm:$0xff] %v738
      %910 = vst [vmem:[#allocation2 + $0x4f0] sm:$0x7f] %v737
      %911 = vst [vmem:[#allocation2 + $0x538] sm:$0xff] %v741
      %912 = vst [vmem:[#allocation2 + $0x580] sm:$0x7f] %v740
      %913 = vst [vmem:[#allocation2 + $0x5c8] sm:$0xff] %v744
      %914 = vst [vmem:[#allocation2 + $0x610] sm:$0x7f] %v743
      %915 = vst [vmem:[#allocation2 + $0x658] sm:$0xff] %v747
      %916 = vst [vmem:[#allocation2 + $0x6a0] sm:$0x7f] %v746
      %917 = vst [vmem:[#allocation2 + $0x6e8] sm:$0xff] %v750
      %918 = vst [vmem:[#allocation2 + $0x730] sm:$0x7f] %v749
      %919 = vst [vmem:[#allocation2 + $0x778] sm:$0xff] %v753
      %920 = vst [vmem:[#allocation2 + $0x7c0] sm:$0x7f] %v752
      %921 = vst [vmem:[#allocation2 + $0x808] sm:$0xff] %v756
      %922 = vst [vmem:[#allocation2 + $0x850] sm:$0x7f] %v755
      %923 = vst [vmem:[#allocation2 + $0x898] sm:$0xff] %v890
      %924 = vst [vmem:[#allocation2 + $0x8e0] sm:$0x7f] %v889
      %925 = vst [vmem:[#allocation2 + $0x30] sm:$0xfe] %v578
      %926 = vst [vmem:[#allocation2 + $0x78] sm:$0xff] %v580
      %927 = vst [vmem:[#allocation2 + $0xc0] sm:$0xfe] %v581
      %928 = vst [vmem:[#allocation2 + $0x108] sm:$0xff] %v583
      %929 = vst [vmem:[#allocation2 + $0x150] sm:$0xfe] %v584
      %930 = vst [vmem:[#allocation2 + $0x198] sm:$0xff] %v586
      %931 = vst [vmem:[#allocation2 + $0x1e0] sm:$0xfe] %v587
      %932 = vst [vmem:[#allocation2 + $0x228] sm:$0xff] %v589
      %933 = vst [vmem:[#allocation2 + $0x270] sm:$0xfe] %v590
      %934 = vst [vmem:[#allocation2 + $0x2b8] sm:$0xff] %v592
      %935 = vst [vmem:[#allocation2 + $0x300] sm:$0xfe] %v593
      %936 = vst [vmem:[#allocation2 + $0x348] sm:$0xff] %v595
      %937 = vst [vmem:[#allocation2 + $0x390] sm:$0xfe] %v596
      %938 = vst [vmem:[#allocation2 + $0x3d8] sm:$0xff] %v598
      %939 = vst [vmem:[#allocation2 + $0x420] sm:$0xfe] %v599
      %940 = vst [vmem:[#allocation2 + $0x468] sm:$0xff] %v601
      %941 = vst [vmem:[#allocation2 + $0x4b0] sm:$0xfe] %v602
      %942 = vst [vmem:[#allocation2 + $0x4f8] sm:$0xff] %v604
      %943 = vst [vmem:[#allocation2 + $0x540] sm:$0xfe] %v605
      %944 = vst [vmem:[#allocation2 + $0x588] sm:$0xff] %v607
      %945 = vst [vmem:[#allocation2 + $0x5d0] sm:$0xfe] %v608
      %946 = vst [vmem:[#allocation2 + $0x618] sm:$0xff] %v610
      %947 = vst [vmem:[#allocation2 + $0x660] sm:$0xfe] %v611
      %948 = vst [vmem:[#allocation2 + $0x6a8] sm:$0xff] %v613
      %949 = vst [vmem:[#allocation2 + $0x6f0] sm:$0xfe] %v614
      %950 = vst [vmem:[#allocation2 + $0x738] sm:$0xff] %v616
      %951 = vst [vmem:[#allocation2 + $0x780] sm:$0xfe] %v617
      %952 = vst [vmem:[#allocation2 + $0x7c8] sm:$0xff] %v619
      %953 = vst [vmem:[#allocation2 + $0x810] sm:$0xfe] %v819
      %954 = vst [vmem:[#allocation2 + $0x858] sm:$0xff] %v821
      %955 = vst [vmem:[#allocation2 + $0x38] sm:$0xff] %v381
      %956 = vst [vmem:[#allocation2 + $0x80] sm:$0xff] %v382
      %957 = vst [vmem:[#allocation2 + $0xc8] sm:$0xff] %v383
      %958 = vst [vmem:[#allocation2 + $0x110] sm:$0xff] %v384
      %959 = vst [vmem:[#allocation2 + $0x158] sm:$0xff] %v385
      %960 = vst [vmem:[#allocation2 + $0x1a0] sm:$0xff] %v386
      %961 = vst [vmem:[#allocation2 + $0x1e8] sm:$0xff] %v387
      %962 = vst [vmem:[#allocation2 + $0x230] sm:$0xff] %v388
      %963 = vst [vmem:[#allocation2 + $0x278] sm:$0xff] %v389
      %964 = vst [vmem:[#allocation2 + $0x2c0] sm:$0xff] %v390
      %965 = vst [vmem:[#allocation2 + $0x308] sm:$0xff] %v391
      %966 = vst [vmem:[#allocation2 + $0x350] sm:$0xff] %v392
      %967 = vst [vmem:[#allocation2 + $0x398] sm:$0xff] %v393
      %968 = vst [vmem:[#allocation2 + $0x3e0] sm:$0xff] %v394
      %969 = vst [vmem:[#allocation2 + $0x428] sm:$0xff] %v395
      %970 = vst [vmem:[#allocation2 + $0x470] sm:$0xff] %v396
      %971 = vst [vmem:[#allocation2 + $0x4b8] sm:$0xff] %v397
      %972 = vst [vmem:[#allocation2 + $0x500] sm:$0xff] %v398
      %973 = vst [vmem:[#allocation2 + $0x548] sm:$0xff] %v399
      %974 = vst [vmem:[#allocation2 + $0x590] sm:$0xff] %v400
      %975 = vst [vmem:[#allocation2 + $0x5d8] sm:$0xff] %v401
      %976 = vst [vmem:[#allocation2 + $0x620] sm:$0xff] %v402
      %977 = vst [vmem:[#allocation2 + $0x668] sm:$0xff] %v403
      %978 = vst [vmem:[#allocation2 + $0x6b0] sm:$0xff] %v404
      %979 = vst [vmem:[#allocation2 + $0x6f8] sm:$0xff] %v405
      %980 = vst [vmem:[#allocation2 + $0x740] sm:$0xff] %v406
      %981 = vst [vmem:[#allocation2 + $0x788] sm:$0xff] %v407
      %982 = vst [vmem:[#allocation2 + $0x7d0] sm:$0xff] %v408
      %983 = vst [vmem:[#allocation2 + $0x818] sm:$0xff] %v409
      %984 = vst [vmem:[#allocation2 + $0x860] sm:$0xff] %v410
      %985 = vst [vmem:[#allocation2 + $0x40] sm:$0xff] %v717
      %986 = vst [vmem:[#allocation2 + $0x88] sm:$0x7f] %v716
      %987 = vst [vmem:[#allocation2 + $0xd0] sm:$0xff] %v720
      %988 = vst [vmem:[#allocation2 + $0x118] sm:$0x7f] %v719
      %989 = vst [vmem:[#allocation2 + $0x160] sm:$0xff] %v723
      %990 = vst [vmem:[#allocation2 + $0x1a8] sm:$0x7f] %v722
      %991 = vst [vmem:[#allocation2 + $0x1f0] sm:$0xff] %v726
      %992 = vst [vmem:[#allocation2 + $0x238] sm:$0x7f] %v725
      %993 = vst [vmem:[#allocation2 + $0x280] sm:$0xff] %v729
      %994 = vst [vmem:[#allocation2 + $0x2c8] sm:$0x7f] %v728
      %995 = vst [vmem:[#allocation2 + $0x310] sm:$0xff] %v732
      %996 = vst [vmem:[#allocation2 + $0x358] sm:$0x7f] %v731
      %997 = vst [vmem:[#allocation2 + $0x3a0] sm:$0xff] %v735
      %998 = vst [vmem:[#allocation2 + $0x3e8] sm:$0x7f] %v734
      %999 = vst [vmem:[#allocation2 + $0x430] sm:$0xff] %v738
      %1000 = vst [vmem:[#allocation2 + $0x478] sm:$0x7f] %v737
      %1001 = vst [vmem:[#allocation2 + $0x4c0] sm:$0xff] %v741
      %1002 = vst [vmem:[#allocation2 + $0x508] sm:$0x7f] %v740
      %1003 = vst [vmem:[#allocation2 + $0x550] sm:$0xff] %v744
      %1004 = vst [vmem:[#allocation2 + $0x598] sm:$0x7f] %v743
      %1005 = vst [vmem:[#allocation2 + $0x5e0] sm:$0xff] %v747
      %1006 = vst [vmem:[#allocation2 + $0x628] sm:$0x7f] %v746
      %1007 = vst [vmem:[#allocation2 + $0x670] sm:$0xff] %v750
      %1008 = vst [vmem:[#allocation2 + $0x6b8] sm:$0x7f] %v749
      %1009 = vst [vmem:[#allocation2 + $0x700] sm:$0xff] %v753
      %1010 = vst [vmem:[#allocation2 + $0x748] sm:$0x7f] %v752
      %1011 = vst [vmem:[#allocation2 + $0x790] sm:$0xff] %v756
      %1012 = vst [vmem:[#allocation2 + $0x7d8] sm:$0x7f] %v755
      %1013 = vst [vmem:[#allocation2 + $0x820] sm:$0xff] %v890
      %1014 = vst [vmem:[#allocation2 + $0x868] sm:$0x7f] %v889
      %v1015 = vld [vmem:[#allocation2] sm:$0xff]
      %v1016 = vld [vmem:[#allocation2 + $0x8] sm:$0xff]
      %v1017 = vld [vmem:[#allocation2 + $0x10] sm:$0xff]
      %v1018 = vld [vmem:[#allocation2 + $0x18] sm:$0xff]
      %v1019 = vld [vmem:[#allocation2 + $0x20] sm:$0xff]
      %v1020 = vld [vmem:[#allocation2 + $0x28] sm:$0xff]
      %v1021 = vld [vmem:[#allocation2 + $0x30] sm:$0xff]
      %v1022 = vld [vmem:[#allocation2 + $0x38] sm:$0xff]
      %v1023 = vld [vmem:[#allocation2 + $0x40] sm:$0xff]
      %v1024 = vld [vmem:[#allocation2 + $0x48] sm:$0xff]
      %v1025 = vld [vmem:[#allocation2 + $0x50] sm:$0xff]
      %v1026 = vld [vmem:[#allocation2 + $0x58] sm:$0xff]
      %v1027 = vld [vmem:[#allocation2 + $0x60] sm:$0xff]
      %v1028 = vld [vmem:[#allocation2 + $0x68] sm:$0xff]
      %v1029 = vld [vmem:[#allocation2 + $0x70] sm:$0xff]
      %v1030 = vld [vmem:[#allocation2 + $0x78] sm:$0xff]
      %v1031 = vld [vmem:[#allocation2 + $0x80] sm:$0xff]
      %v1032 = vld [vmem:[#allocation2 + $0x88] sm:$0xff]
      %v1033 = vld [vmem:[#allocation2 + $0x90] sm:$0xff]
      %v1034 = vld [vmem:[#allocation2 + $0x98] sm:$0xff]
      %v1035 = vld [vmem:[#allocation2 + $0xa0] sm:$0xff]
      %v1036 = vld [vmem:[#allocation2 + $0xa8] sm:$0xff]
      %v1037 = vld [vmem:[#allocation2 + $0xb0] sm:$0xff]
      %v1038 = vld [vmem:[#allocation2 + $0xb8] sm:$0xff]
      %v1039 = vld [vmem:[#allocation2 + $0xc0] sm:$0xff]
      %v1040 = vld [vmem:[#allocation2 + $0xc8] sm:$0xff]
      %v1041 = vld [vmem:[#allocation2 + $0xd0] sm:$0xff]
      %v1042 = vld [vmem:[#allocation2 + $0xd8] sm:$0xff]
      %v1043 = vld [vmem:[#allocation2 + $0xe0] sm:$0xff]
      %v1044 = vld [vmem:[#allocation2 + $0xe8] sm:$0xff]
      %v1045 = vld [vmem:[#allocation2 + $0xf0] sm:$0xff]
      %v1046 = vld [vmem:[#allocation2 + $0xf8] sm:$0xff]
      %v1047 = vld [vmem:[#allocation2 + $0x100] sm:$0xff]
      %v1048 = vld [vmem:[#allocation2 + $0x108] sm:$0xff]
      %v1049 = vld [vmem:[#allocation2 + $0x110] sm:$0xff]
      %v1050 = vld [vmem:[#allocation2 + $0x118] sm:$0xff]
      %v1051 = vld [vmem:[#allocation2 + $0x120] sm:$0xff]
      %v1052 = vld [vmem:[#allocation2 + $0x128] sm:$0xff]
      %v1053 = vld [vmem:[#allocation2 + $0x130] sm:$0xff]
      %v1054 = vld [vmem:[#allocation2 + $0x138] sm:$0xff]
      %v1055 = vld [vmem:[#allocation2 + $0x140] sm:$0xff]
      %v1056 = vld [vmem:[#allocation2 + $0x148] sm:$0xff]
      %v1057 = vld [vmem:[#allocation2 + $0x150] sm:$0xff]
      %v1058 = vld [vmem:[#allocation2 + $0x158] sm:$0xff]
      %v1059 = vld [vmem:[#allocation2 + $0x160] sm:$0xff]
      %v1060 = vld [vmem:[#allocation2 + $0x168] sm:$0xff]
      %v1061 = vld [vmem:[#allocation2 + $0x170] sm:$0xff]
      %v1062 = vld [vmem:[#allocation2 + $0x178] sm:$0xff]
      %v1063 = vld [vmem:[#allocation2 + $0x180] sm:$0xff]
      %v1064 = vld [vmem:[#allocation2 + $0x188] sm:$0xff]
      %v1065 = vld [vmem:[#allocation2 + $0x190] sm:$0xff]
      %v1066 = vld [vmem:[#allocation2 + $0x198] sm:$0xff]
      %v1067 = vld [vmem:[#allocation2 + $0x1a0] sm:$0xff]
      %v1068 = vld [vmem:[#allocation2 + $0x1a8] sm:$0xff]
      %v1069 = vld [vmem:[#allocation2 + $0x1b0] sm:$0xff]
      %v1070 = vld [vmem:[#allocation2 + $0x1b8] sm:$0xff]
      %v1071 = vld [vmem:[#allocation2 + $0x1c0] sm:$0xff]
      %v1072 = vld [vmem:[#allocation2 + $0x1c8] sm:$0xff]
      %v1073 = vld [vmem:[#allocation2 + $0x1d0] sm:$0xff]
      %v1074 = vld [vmem:[#allocation2 + $0x1d8] sm:$0xff]
      %v1075 = vld [vmem:[#allocation2 + $0x1e0] sm:$0xff]
      %v1076 = vld [vmem:[#allocation2 + $0x1e8] sm:$0xff]
      %v1077 = vld [vmem:[#allocation2 + $0x1f0] sm:$0xff]
      %v1078 = vld [vmem:[#allocation2 + $0x1f8] sm:$0xff]
      %v1079 = vld [vmem:[#allocation2 + $0x200] sm:$0xff]
      %v1080 = vld [vmem:[#allocation2 + $0x208] sm:$0xff]
      %v1081 = vld [vmem:[#allocation2 + $0x210] sm:$0xff]
      %v1082 = vld [vmem:[#allocation2 + $0x218] sm:$0xff]
      %v1083 = vld [vmem:[#allocation2 + $0x220] sm:$0xff]
      %v1084 = vld [vmem:[#allocation2 + $0x228] sm:$0xff]
      %v1085 = vld [vmem:[#allocation2 + $0x230] sm:$0xff]
      %v1086 = vld [vmem:[#allocation2 + $0x238] sm:$0xff]
      %v1087 = vld [vmem:[#allocation2 + $0x240] sm:$0xff]
      %v1088 = vld [vmem:[#allocation2 + $0x248] sm:$0xff]
      %v1089 = vld [vmem:[#allocation2 + $0x250] sm:$0xff]
      %v1090 = vld [vmem:[#allocation2 + $0x258] sm:$0xff]
      %v1091 = vld [vmem:[#allocation2 + $0x260] sm:$0xff]
      %v1092 = vld [vmem:[#allocation2 + $0x268] sm:$0xff]
      %v1093 = vld [vmem:[#allocation2 + $0x270] sm:$0xff]
      %v1094 = vld [vmem:[#allocation2 + $0x278] sm:$0xff]
      %v1095 = vld [vmem:[#allocation2 + $0x280] sm:$0xff]
      %v1096 = vld [vmem:[#allocation2 + $0x288] sm:$0xff]
      %v1097 = vld [vmem:[#allocation2 + $0x290] sm:$0xff]
      %v1098 = vld [vmem:[#allocation2 + $0x298] sm:$0xff]
      %v1099 = vld [vmem:[#allocation2 + $0x2a0] sm:$0xff]
      %v1100 = vld [vmem:[#allocation2 + $0x2a8] sm:$0xff]
      %v1101 = vld [vmem:[#allocation2 + $0x2b0] sm:$0xff]
      %v1102 = vld [vmem:[#allocation2 + $0x2b8] sm:$0xff]
      %v1103 = vld [vmem:[#allocation2 + $0x2c0] sm:$0xff]
      %v1104 = vld [vmem:[#allocation2 + $0x2c8] sm:$0xff]
      %v1105 = vld [vmem:[#allocation2 + $0x2d0] sm:$0xff]
      %v1106 = vld [vmem:[#allocation2 + $0x2d8] sm:$0xff]
      %v1107 = vld [vmem:[#allocation2 + $0x2e0] sm:$0xff]
      %v1108 = vld [vmem:[#allocation2 + $0x2e8] sm:$0xff]
      %v1109 = vld [vmem:[#allocation2 + $0x2f0] sm:$0xff]
      %v1110 = vld [vmem:[#allocation2 + $0x2f8] sm:$0xff]
      %v1111 = vld [vmem:[#allocation2 + $0x300] sm:$0xff]
      %v1112 = vld [vmem:[#allocation2 + $0x308] sm:$0xff]
      %v1113 = vld [vmem:[#allocation2 + $0x310] sm:$0xff]
      %v1114 = vld [vmem:[#allocation2 + $0x318] sm:$0xff]
      %v1115 = vld [vmem:[#allocation2 + $0x320] sm:$0xff]
      %v1116 = vld [vmem:[#allocation2 + $0x328] sm:$0xff]
      %v1117 = vld [vmem:[#allocation2 + $0x330] sm:$0xff]
      %v1118 = vld [vmem:[#allocation2 + $0x338] sm:$0xff]
      %v1119 = vld [vmem:[#allocation2 + $0x340] sm:$0xff]
      %v1120 = vld [vmem:[#allocation2 + $0x348] sm:$0xff]
      %v1121 = vld [vmem:[#allocation2 + $0x350] sm:$0xff]
      %v1122 = vld [vmem:[#allocation2 + $0x358] sm:$0xff]
      %v1123 = vld [vmem:[#allocation2 + $0x360] sm:$0xff]
      %v1124 = vld [vmem:[#allocation2 + $0x368] sm:$0xff]
      %v1125 = vld [vmem:[#allocation2 + $0x370] sm:$0xff]
      %v1126 = vld [vmem:[#allocation2 + $0x378] sm:$0xff]
      %v1127 = vld [vmem:[#allocation2 + $0x380] sm:$0xff]
      %v1128 = vld [vmem:[#allocation2 + $0x388] sm:$0xff]
      %v1129 = vld [vmem:[#allocation2 + $0x390] sm:$0xff]
      %v1130 = vld [vmem:[#allocation2 + $0x398] sm:$0xff]
      %v1131 = vld [vmem:[#allocation2 + $0x3a0] sm:$0xff]
      %v1132 = vld [vmem:[#allocation2 + $0x3a8] sm:$0xff]
      %v1133 = vld [vmem:[#allocation2 + $0x3b0] sm:$0xff]
      %v1134 = vld [vmem:[#allocation2 + $0x3b8] sm:$0xff]
      %v1135 = vld [vmem:[#allocation2 + $0x3c0] sm:$0xff]
      %v1136 = vld [vmem:[#allocation2 + $0x3c8] sm:$0xff]
      %v1137 = vld [vmem:[#allocation2 + $0x3d0] sm:$0xff]
      %v1138 = vld [vmem:[#allocation2 + $0x3d8] sm:$0xff]
      %v1139 = vld [vmem:[#allocation2 + $0x3e0] sm:$0xff]
      %v1140 = vld [vmem:[#allocation2 + $0x3e8] sm:$0xff]
      %v1141 = vld [vmem:[#allocation2 + $0x3f0] sm:$0xff]
      %v1142 = vld [vmem:[#allocation2 + $0x3f8] sm:$0xff]
      %v1143 = vld [vmem:[#allocation2 + $0x400] sm:$0xff]
      %v1144 = vld [vmem:[#allocation2 + $0x408] sm:$0xff]
      %v1145 = vld [vmem:[#allocation2 + $0x410] sm:$0xff]
      %v1146 = vld [vmem:[#allocation2 + $0x418] sm:$0xff]
      %v1147 = vld [vmem:[#allocation2 + $0x420] sm:$0xff]
      %v1148 = vld [vmem:[#allocation2 + $0x428] sm:$0xff]
      %v1149 = vld [vmem:[#allocation2 + $0x430] sm:$0xff]
      %v1150 = vld [vmem:[#allocation2 + $0x438] sm:$0xff]
      %v1151 = vld [vmem:[#allocation2 + $0x440] sm:$0xff]
      %v1152 = vld [vmem:[#allocation2 + $0x448] sm:$0xff]
      %v1153 = vld [vmem:[#allocation2 + $0x450] sm:$0xff]
      %v1154 = vld [vmem:[#allocation2 + $0x458] sm:$0xff]
      %v1155 = vld [vmem:[#allocation2 + $0x460] sm:$0xff]
      %v1156 = vld [vmem:[#allocation2 + $0x468] sm:$0xff]
      %v1157 = vld [vmem:[#allocation2 + $0x470] sm:$0xff]
      %v1158 = vld [vmem:[#allocation2 + $0x478] sm:$0xff]
      %v1159 = vld [vmem:[#allocation2 + $0x480] sm:$0xff]
      %v1160 = vld [vmem:[#allocation2 + $0x488] sm:$0xff]
      %v1161 = vld [vmem:[#allocation2 + $0x490] sm:$0xff]
      %v1162 = vld [vmem:[#allocation2 + $0x498] sm:$0xff]
      %v1163 = vld [vmem:[#allocation2 + $0x4a0] sm:$0xff]
      %v1164 = vld [vmem:[#allocation2 + $0x4a8] sm:$0xff]
      %v1165 = vld [vmem:[#allocation2 + $0x4b0] sm:$0xff]
      %v1166 = vld [vmem:[#allocation2 + $0x4b8] sm:$0xff]
      %v1167 = vld [vmem:[#allocation2 + $0x4c0] sm:$0xff]
      %v1168 = vld [vmem:[#allocation2 + $0x4c8] sm:$0xff]
      %v1169 = vld [vmem:[#allocation2 + $0x4d0] sm:$0xff]
      %v1170 = vld [vmem:[#allocation2 + $0x4d8] sm:$0xff]
      %v1171 = vld [vmem:[#allocation2 + $0x4e0] sm:$0xff]
      %v1172 = vld [vmem:[#allocation2 + $0x4e8] sm:$0xff]
      %v1173 = vld [vmem:[#allocation2 + $0x4f0] sm:$0xff]
      %v1174 = vld [vmem:[#allocation2 + $0x4f8] sm:$0xff]
      %v1175 = vld [vmem:[#allocation2 + $0x500] sm:$0xff]
      %v1176 = vld [vmem:[#allocation2 + $0x508] sm:$0xff]
      %v1177 = vld [vmem:[#allocation2 + $0x510] sm:$0xff]
      %v1178 = vld [vmem:[#allocation2 + $0x518] sm:$0xff]
      %v1179 = vld [vmem:[#allocation2 + $0x520] sm:$0xff]
      %v1180 = vld [vmem:[#allocation2 + $0x528] sm:$0xff]
      %v1181 = vld [vmem:[#allocation2 + $0x530] sm:$0xff]
      %v1182 = vld [vmem:[#allocation2 + $0x538] sm:$0xff]
      %v1183 = vld [vmem:[#allocation2 + $0x540] sm:$0xff]
      %v1184 = vld [vmem:[#allocation2 + $0x548] sm:$0xff]
      %v1185 = vld [vmem:[#allocation2 + $0x550] sm:$0xff]
      %v1186 = vld [vmem:[#allocation2 + $0x558] sm:$0xff]
      %v1187 = vld [vmem:[#allocation2 + $0x560] sm:$0xff]
      %v1188 = vld [vmem:[#allocation2 + $0x568] sm:$0xff]
      %v1189 = vld [vmem:[#allocation2 + $0x570] sm:$0xff]
      %v1190 = vld [vmem:[#allocation2 + $0x578] sm:$0xff]
      %v1191 = vld [vmem:[#allocation2 + $0x580] sm:$0xff]
      %v1192 = vld [vmem:[#allocation2 + $0x588] sm:$0xff]
      %v1193 = vld [vmem:[#allocation2 + $0x590] sm:$0xff]
      %v1194 = vld [vmem:[#allocation2 + $0x598] sm:$0xff]
      %v1195 = vld [vmem:[#allocation2 + $0x5a0] sm:$0xff]
      %v1196 = vld [vmem:[#allocation2 + $0x5a8] sm:$0xff]
      %v1197 = vld [vmem:[#allocation2 + $0x5b0] sm:$0xff]
      %v1198 = vld [vmem:[#allocation2 + $0x5b8] sm:$0xff]
      %v1199 = vld [vmem:[#allocation2 + $0x5c0] sm:$0xff]
      %v1200 = vld [vmem:[#allocation2 + $0x5c8] sm:$0xff]
      %v1201 = vld [vmem:[#allocation2 + $0x5d0] sm:$0xff]
      %v1202 = vld [vmem:[#allocation2 + $0x5d8] sm:$0xff]
      %v1203 = vld [vmem:[#allocation2 + $0x5e0] sm:$0xff]
      %v1204 = vld [vmem:[#allocation2 + $0x5e8] sm:$0xff]
      %v1205 = vld [vmem:[#allocation2 + $0x5f0] sm:$0xff]
      %v1206 = vld [vmem:[#allocation2 + $0x5f8] sm:$0xff]
      %v1207 = vld [vmem:[#allocation2 + $0x600] sm:$0xff]
      %v1208 = vld [vmem:[#allocation2 + $0x608] sm:$0xff]
      %v1209 = vld [vmem:[#allocation2 + $0x610] sm:$0xff]
      %v1210 = vld [vmem:[#allocation2 + $0x618] sm:$0xff]
      %v1211 = vld [vmem:[#allocation2 + $0x620] sm:$0xff]
      %v1212 = vld [vmem:[#allocation2 + $0x628] sm:$0xff]
      %v1213 = vld [vmem:[#allocation2 + $0x630] sm:$0xff]
      %v1214 = vld [vmem:[#allocation2 + $0x638] sm:$0xff]
      %v1215 = vld [vmem:[#allocation2 + $0x640] sm:$0xff]
      %v1216 = vld [vmem:[#allocation2 + $0x648] sm:$0xff]
      %v1217 = vld [vmem:[#allocation2 + $0x650] sm:$0xff]
      %v1218 = vld [vmem:[#allocation2 + $0x658] sm:$0xff]
      %v1219 = vld [vmem:[#allocation2 + $0x660] sm:$0xff]
      %v1220 = vld [vmem:[#allocation2 + $0x668] sm:$0xff]
      %v1221 = vld [vmem:[#allocation2 + $0x670] sm:$0xff]
      %v1222 = vld [vmem:[#allocation2 + $0x678] sm:$0xff]
      %v1223 = vld [vmem:[#allocation2 + $0x680] sm:$0xff]
      %v1224 = vld [vmem:[#allocation2 + $0x688] sm:$0xff]
      %v1225 = vld [vmem:[#allocation2 + $0x690] sm:$0xff]
      %v1226 = vld [vmem:[#allocation2 + $0x698] sm:$0xff]
      %v1227 = vld [vmem:[#allocation2 + $0x6a0] sm:$0xff]
      %v1228 = vld [vmem:[#allocation2 + $0x6a8] sm:$0xff]
      %v1229 = vld [vmem:[#allocation2 + $0x6b0] sm:$0xff]
      %v1230 = vld [vmem:[#allocation2 + $0x6b8] sm:$0xff]
      %v1231 = vld [vmem:[#allocation2 + $0x6c0] sm:$0xff]
      %v1232 = vld [vmem:[#allocation2 + $0x6c8] sm:$0xff]
      %v1233 = vld [vmem:[#allocation2 + $0x6d0] sm:$0xff]
      %v1234 = vld [vmem:[#allocation2 + $0x6d8] sm:$0xff]
      %v1235 = vld [vmem:[#allocation2 + $0x6e0] sm:$0xff]
      %v1236 = vld [vmem:[#allocation2 + $0x6e8] sm:$0xff]
      %v1237 = vld [vmem:[#allocation2 + $0x6f0] sm:$0xff]
      %v1238 = vld [vmem:[#allocation2 + $0x6f8] sm:$0xff]
      %v1239 = vld [vmem:[#allocation2 + $0x700] sm:$0xff]
      %v1240 = vld [vmem:[#allocation2 + $0x708] sm:$0xff]
      %v1241 = vld [vmem:[#allocation2 + $0x710] sm:$0xff]
      %v1242 = vld [vmem:[#allocation2 + $0x718] sm:$0xff]
      %v1243 = vld [vmem:[#allocation2 + $0x720] sm:$0xff]
      %v1244 = vld [vmem:[#allocation2 + $0x728] sm:$0xff]
      %v1245 = vld [vmem:[#allocation2 + $0x730] sm:$0xff]
      %v1246 = vld [vmem:[#allocation2 + $0x738] sm:$0xff]
      %v1247 = vld [vmem:[#allocation2 + $0x740] sm:$0xff]
      %v1248 = vld [vmem:[#allocation2 + $0x748] sm:$0xff]
      %v1249 = vld [vmem:[#allocation2 + $0x750] sm:$0xff]
      %v1250 = vld [vmem:[#allocation2 + $0x758] sm:$0xff]
      %v1251 = vld [vmem:[#allocation2 + $0x760] sm:$0xff]
      %v1252 = vld [vmem:[#allocation2 + $0x768] sm:$0xff]
      %v1253 = vld [vmem:[#allocation2 + $0x770] sm:$0xff]
      %v1254 = vld [vmem:[#allocation2 + $0x778] sm:$0xff]
      %v1255 = vld [vmem:[#allocation2 + $0x780] sm:$0xff]
      %v1256 = vld [vmem:[#allocation2 + $0x788] sm:$0xff]
      %v1257 = vld [vmem:[#allocation2 + $0x790] sm:$0xff]
      %v1258 = vld [vmem:[#allocation2 + $0x798] sm:$0xff]
      %v1259 = vld [vmem:[#allocation2 + $0x7a0] sm:$0xff]
      %v1260 = vld [vmem:[#allocation2 + $0x7a8] sm:$0xff]
      %v1261 = vld [vmem:[#allocation2 + $0x7b0] sm:$0xff]
      %v1262 = vld [vmem:[#allocation2 + $0x7b8] sm:$0xff]
      %v1263 = vld [vmem:[#allocation2 + $0x7c0] sm:$0xff]
      %v1264 = vld [vmem:[#allocation2 + $0x7c8] sm:$0xff]
      %v1265 = vld [vmem:[#allocation2 + $0x7d0] sm:$0xff]
      %v1266 = vld [vmem:[#allocation2 + $0x7d8] sm:$0xff]
      %v1267 = vld [vmem:[#allocation2 + $0x7e0] sm:$0xff]
      %v1268 = vld [vmem:[#allocation2 + $0x7e8] sm:$0xff]
      %v1269 = vld [vmem:[#allocation2 + $0x7f0] sm:$0xff]
      %v1270 = vld [vmem:[#allocation2 + $0x7f8] sm:$0xff]
      %v1271 = vld [vmem:[#allocation2 + $0x800] sm:$0xff]
      %v1272 = vld [vmem:[#allocation2 + $0x808] sm:$0xff]
      %v1273 = vld [vmem:[#allocation2 + $0x810] sm:$0xff]
      %v1274 = vld [vmem:[#allocation2 + $0x818] sm:$0xff]
      %v1275 = vld [vmem:[#allocation2 + $0x820] sm:$0xff]
      %v1276 = vld [vmem:[#allocation2 + $0x828] sm:$0xff]
      %v1277 = vld [vmem:[#allocation2 + $0x830] sm:$0xff]
      %v1278 = vld [vmem:[#allocation2 + $0x838] sm:$0xff]
      %v1279 = vld [vmem:[#allocation2 + $0x840] sm:$0xff]
      %v1280 = vld [vmem:[#allocation2 + $0x848] sm:$0xff]
      %v1281 = vld [vmem:[#allocation2 + $0x850] sm:$0xff]
      %v1282 = vld [vmem:[#allocation2 + $0x858] sm:$0xff]
      %v1283 = vld [vmem:[#allocation2 + $0x860] sm:$0xff]
      %v1284 = vld [vmem:[#allocation2 + $0x868] sm:$0xff]
      %v1285 = vld [vmem:[#allocation2 + $0x870] sm:$0xff]
      %v1286 = vld [vmem:[#allocation2 + $0x878] sm:$0xff]
      %v1287 = vld [vmem:[#allocation2 + $0x880] sm:$0xff]
      %v1288 = vld [vmem:[#allocation2 + $0x888] sm:$0xff]
      %v1289 = vld [vmem:[#allocation2 + $0x890] sm:$0xff]
      %v1290 = vld [vmem:[#allocation2 + $0x898] sm:$0xff]
      %v1291 = vld [vmem:[#allocation2 + $0x8a0] sm:$0xff]
      %v1292 = vld [vmem:[#allocation2 + $0x8a8] sm:$0xff]
      %v1293 = vld [vmem:[#allocation2 + $0x8b0] sm:$0xff]
      %v1294 = vld [vmem:[#allocation2 + $0x8b8] sm:$0xff]
      %v1295 = vld [vmem:[#allocation2 + $0x8c0] sm:$0xff]
      %v1296 = vld [vmem:[#allocation2 + $0x8c8] sm:$0xff]
      %v1297 = vld [vmem:[#allocation2 + $0x8d0] sm:$0xff]
      %v1298 = vld [vmem:[#allocation2 + $0x8d8] sm:$0xff]
      %v1299 = vld [vmem:[#allocation2 + $0x8e0] sm:$0xff]
      %v1300 = vld [vmem:[#allocation2 + $0x8e8] sm:$0xff]
      %v1301 = vld [vmem:[#allocation2 + $0x8f0] sm:$0xff]
      %v1302 = vld [vmem:[#allocation2 + $0x8f8] sm:$0xff]
      %v1303 = vpack.c.bf16 %v1024, %v1015
      %v1304 = vpack.c.bf16 %v1025, %v1016
      %v1305 = vpack.c.bf16 %v1026, %v1017
      %v1306 = vpack.c.bf16 %v1027, %v1018
      %v1307 = vpack.c.bf16 %v1028, %v1019
      %v1308 = vpack.c.bf16 %v1029, %v1020
      %v1309 = vpack.c.bf16 %v1030, %v1021
      %v1310 = vpack.c.bf16 %v1031, %v1022
      %v1311 = vpack.c.bf16 %v1032, %v1023
      %v1312 = vpack.c.bf16 %v1042, %v1033
      %v1313 = vpack.c.bf16 %v1043, %v1034
      %v1314 = vpack.c.bf16 %v1044, %v1035
      %v1315 = vpack.c.bf16 %v1045, %v1036
      %v1316 = vpack.c.bf16 %v1046, %v1037
      %v1317 = vpack.c.bf16 %v1047, %v1038
      %v1318 = vpack.c.bf16 %v1048, %v1039
      %v1319 = vpack.c.bf16 %v1049, %v1040
      %v1320 = vpack.c.bf16 %v1050, %v1041
      %v1321 = vpack.c.bf16 %v1060, %v1051
      %v1322 = vpack.c.bf16 %v1061, %v1052
      %v1323 = vpack.c.bf16 %v1062, %v1053
      %v1324 = vpack.c.bf16 %v1063, %v1054
      %v1325 = vpack.c.bf16 %v1064, %v1055
      %v1326 = vpack.c.bf16 %v1065, %v1056
      %v1327 = vpack.c.bf16 %v1066, %v1057
      %v1328 = vpack.c.bf16 %v1067, %v1058
      %v1329 = vpack.c.bf16 %v1068, %v1059
      %v1330 = vpack.c.bf16 %v1078, %v1069
      %v1331 = vpack.c.bf16 %v1079, %v1070
      %v1332 = vpack.c.bf16 %v1080, %v1071
      %v1333 = vpack.c.bf16 %v1081, %v1072
      %v1334 = vpack.c.bf16 %v1082, %v1073
      %v1335 = vpack.c.bf16 %v1083, %v1074
      %v1336 = vpack.c.bf16 %v1084, %v1075
      %v1337 = vpack.c.bf16 %v1085, %v1076
      %v1338 = vpack.c.bf16 %v1086, %v1077
      %v1339 = vpack.c.bf16 %v1096, %v1087
      %v1340 = vpack.c.bf16 %v1097, %v1088
      %v1341 = vpack.c.bf16 %v1098, %v1089
      %v1342 = vpack.c.bf16 %v1099, %v1090
      %v1343 = vpack.c.bf16 %v1100, %v1091
      %v1344 = vpack.c.bf16 %v1101, %v1092
      %v1345 = vpack.c.bf16 %v1102, %v1093
      %v1346 = vpack.c.bf16 %v1103, %v1094
      %v1347 = vpack.c.bf16 %v1104, %v1095
      %v1348 = vpack.c.bf16 %v1114, %v1105
      %v1349 = vpack.c.bf16 %v1115, %v1106
      %v1350 = vpack.c.bf16 %v1116, %v1107
      %v1351 = vpack.c.bf16 %v1117, %v1108
      %v1352 = vpack.c.bf16 %v1118, %v1109
      %v1353 = vpack.c.bf16 %v1119, %v1110
      %v1354 = vpack.c.bf16 %v1120, %v1111
      %v1355 = vpack.c.bf16 %v1121, %v1112
      %v1356 = vpack.c.bf16 %v1122, %v1113
      %v1357 = vpack.c.bf16 %v1132, %v1123
      %v1358 = vpack.c.bf16 %v1133, %v1124
      %v1359 = vpack.c.bf16 %v1134, %v1125
      %v1360 = vpack.c.bf16 %v1135, %v1126
      %v1361 = vpack.c.bf16 %v1136, %v1127
      %v1362 = vpack.c.bf16 %v1137, %v1128
      %v1363 = vpack.c.bf16 %v1138, %v1129
      %v1364 = vpack.c.bf16 %v1139, %v1130
      %v1365 = vpack.c.bf16 %v1140, %v1131
      %v1366 = vpack.c.bf16 %v1150, %v1141
      %v1367 = vpack.c.bf16 %v1151, %v1142
      %v1368 = vpack.c.bf16 %v1152, %v1143
      %v1369 = vpack.c.bf16 %v1153, %v1144
      %v1370 = vpack.c.bf16 %v1154, %v1145
      %v1371 = vpack.c.bf16 %v1155, %v1146
      %v1372 = vpack.c.bf16 %v1156, %v1147
      %v1373 = vpack.c.bf16 %v1157, %v1148
      %v1374 = vpack.c.bf16 %v1158, %v1149
      %v1375 = vpack.c.bf16 %v1168, %v1159
      %v1376 = vpack.c.bf16 %v1169, %v1160
      %v1377 = vpack.c.bf16 %v1170, %v1161
      %v1378 = vpack.c.bf16 %v1171, %v1162
      %v1379 = vpack.c.bf16 %v1172, %v1163
      %v1380 = vpack.c.bf16 %v1173, %v1164
      %v1381 = vpack.c.bf16 %v1174, %v1165
      %v1382 = vpack.c.bf16 %v1175, %v1166
      %v1383 = vpack.c.bf16 %v1176, %v1167
      %v1384 = vpack.c.bf16 %v1186, %v1177
      %v1385 = vpack.c.bf16 %v1187, %v1178
      %v1386 = vpack.c.bf16 %v1188, %v1179
      %v1387 = vpack.c.bf16 %v1189, %v1180
      %v1388 = vpack.c.bf16 %v1190, %v1181
      %v1389 = vpack.c.bf16 %v1191, %v1182
      %v1390 = vpack.c.bf16 %v1192, %v1183
      %v1391 = vpack.c.bf16 %v1193, %v1184
      %v1392 = vpack.c.bf16 %v1194, %v1185
      %v1393 = vpack.c.bf16 %v1204, %v1195
      %v1394 = vpack.c.bf16 %v1205, %v1196
      %v1395 = vpack.c.bf16 %v1206, %v1197
      %v1396 = vpack.c.bf16 %v1207, %v1198
      %v1397 = vpack.c.bf16 %v1208, %v1199
      %v1398 = vpack.c.bf16 %v1209, %v1200
      %v1399 = vpack.c.bf16 %v1210, %v1201
      %v1400 = vpack.c.bf16 %v1211, %v1202
      %v1401 = vpack.c.bf16 %v1212, %v1203
      %v1402 = vpack.c.bf16 %v1222, %v1213
      %v1403 = vpack.c.bf16 %v1223, %v1214
      %v1404 = vpack.c.bf16 %v1224, %v1215
      %v1405 = vpack.c.bf16 %v1225, %v1216
      %v1406 = vpack.c.bf16 %v1226, %v1217
      %v1407 = vpack.c.bf16 %v1227, %v1218
      %v1408 = vpack.c.bf16 %v1228, %v1219
      %v1409 = vpack.c.bf16 %v1229, %v1220
      %v1410 = vpack.c.bf16 %v1230, %v1221
      %v1411 = vpack.c.bf16 %v1240, %v1231
      %v1412 = vpack.c.bf16 %v1241, %v1232
      %v1413 = vpack.c.bf16 %v1242, %v1233
      %v1414 = vpack.c.bf16 %v1243, %v1234
      %v1415 = vpack.c.bf16 %v1244, %v1235
      %v1416 = vpack.c.bf16 %v1245, %v1236
      %v1417 = vpack.c.bf16 %v1246, %v1237
      %v1418 = vpack.c.bf16 %v1247, %v1238
      %v1419 = vpack.c.bf16 %v1248, %v1239
      %v1420 = vpack.c.bf16 %v1258, %v1249
      %v1421 = vpack.c.bf16 %v1259, %v1250
      %v1422 = vpack.c.bf16 %v1260, %v1251
      %v1423 = vpack.c.bf16 %v1261, %v1252
      %v1424 = vpack.c.bf16 %v1262, %v1253
      %v1425 = vpack.c.bf16 %v1263, %v1254
      %v1426 = vpack.c.bf16 %v1264, %v1255
      %v1427 = vpack.c.bf16 %v1265, %v1256
      %v1428 = vpack.c.bf16 %v1266, %v1257
      %v1429 = vpack.c.bf16 %v1276, %v1267
      %v1430 = vpack.c.bf16 %v1277, %v1268
      %v1431 = vpack.c.bf16 %v1278, %v1269
      %v1432 = vpack.c.bf16 %v1279, %v1270
      %v1433 = vpack.c.bf16 %v1280, %v1271
      %v1434 = vpack.c.bf16 %v1281, %v1272
      %v1435 = vpack.c.bf16 %v1282, %v1273
      %v1436 = vpack.c.bf16 %v1283, %v1274
      %v1437 = vpack.c.bf16 %v1284, %v1275
      %v1438 = vpack.c.bf16 %v1294, %v1285
      %v1439 = vpack.c.bf16 %v1295, %v1286
      %v1440 = vpack.c.bf16 %v1296, %v1287
      %v1441 = vpack.c.bf16 %v1297, %v1288
      %v1442 = vpack.c.bf16 %v1298, %v1289
      %v1443 = vpack.c.bf16 %v1299, %v1290
      %v1444 = vpack.c.bf16 %v1300, %v1291
      %v1445 = vpack.c.bf16 %v1301, %v1292
      %v1446 = vpack.c.bf16 %v1302, %v1293
      %v1447 = vld [vmem:[%s3] sm:$0xf]
      %v1448 = vld [vmem:[%s3 + $0x4] sm:$0xf]
      %v1449 = vld [vmem:[%s3 + $0x8] sm:$0xf]
      %v1450 = vld [vmem:[%s3 + $0xc] sm:$0xf]
      %v1451 = vld [vmem:[%s3 + $0x10] sm:$0xf]
      %v1452 = vld [vmem:[%s3 + $0x14] sm:$0xf]
      %v1453 = vld [vmem:[%s3 + $0x18] sm:$0xf]
      %v1454 = vld [vmem:[%s3 + $0x1c] sm:$0xf]
      %v1455 = vld [vmem:[%s3 + $0x20] sm:$0xf]
      %v1456 = vld [vmem:[%s3 + $0x24] sm:$0xf]
      %v1457 = vld [vmem:[%s3 + $0x28] sm:$0xf]
      %v1458 = vld [vmem:[%s3 + $0x2c] sm:$0xf]
      %v1459 = vld [vmem:[%s3 + $0x30] sm:$0xf]
      %v1460 = vld [vmem:[%s3 + $0x34] sm:$0xf]
      %v1461 = vld [vmem:[%s3 + $0x38] sm:$0xf]
      %v1462 = vld [vmem:[%s3 + $0x3c] sm:$0xf]
      %v1463 = vld [vmem:[%s3 + $0x40] sm:$0xf]
      %v1464 = vld [vmem:[%s3 + $0x44] sm:$0xf]
      %v1465 = vld [vmem:[%s3 + $0x48] sm:$0xf]
      %v1466 = vld [vmem:[%s3 + $0x4c] sm:$0xf]
      %v1467 = vld [vmem:[%s3 + $0x50] sm:$0xf]
      %v1468 = vld [vmem:[%s3 + $0x54] sm:$0xf]
      %v1469 = vld [vmem:[%s3 + $0x58] sm:$0xf]
      %v1470 = vld [vmem:[%s3 + $0x5c] sm:$0xf]
      %v1471 = vld [vmem:[%s3 + $0x60] sm:$0xf]
      %v1472 = vld [vmem:[%s3 + $0x64] sm:$0xf]
      %v1473 = vld [vmem:[%s3 + $0x68] sm:$0xf]
      %v1474 = vld [vmem:[%s3 + $0x6c] sm:$0xf]
      %v1475 = vld [vmem:[%s3 + $0x70] sm:$0xf]
      %v1476 = vld [vmem:[%s3 + $0x74] sm:$0xf]
      %v1477 = vld [vmem:[%s3 + $0x78] sm:$0xf]
      %v1478 = vld [vmem:[%s3 + $0x7c] sm:$0xf]
      %v1479 = vld [vmem:[%s3 + $0x80] sm:$0xf]
      %v1480 = vld [vmem:[%s3 + $0x84] sm:$0xf]
      %v1481 = vld [vmem:[%s3 + $0x88] sm:$0xf]
      %v1482 = vld [vmem:[%s3 + $0x8c] sm:$0xf]
      %v1483 = vld [vmem:[%s3 + $0x90] sm:$0xf]
      %v1484 = vld [vmem:[%s3 + $0x94] sm:$0xf]
      %v1485 = vld [vmem:[%s3 + $0x98] sm:$0xf]
      %v1486 = vld [vmem:[%s3 + $0x9c] sm:$0xf]
      %v1487 = vld [vmem:[%s3 + $0xa0] sm:$0xf]
      %v1488 = vld [vmem:[%s3 + $0xa4] sm:$0xf]
      %v1489 = vld [vmem:[%s3 + $0xa8] sm:$0xf]
      %v1490 = vld [vmem:[%s3 + $0xac] sm:$0xf]
      %v1491 = vld [vmem:[%s3 + $0xb0] sm:$0xf]
      %v1492 = vld [vmem:[%s3 + $0xb4] sm:$0xf]
      %v1493 = vld [vmem:[%s3 + $0xb8] sm:$0xf]
      %v1494 = vld [vmem:[%s3 + $0xbc] sm:$0xf]
      %v1495 = vld [vmem:[%s3 + $0xc0] sm:$0xf]
      %v1496 = vld [vmem:[%s3 + $0xc4] sm:$0xf]
      %v1497 = vld [vmem:[%s3 + $0xc8] sm:$0xf]
      %v1498 = vld [vmem:[%s3 + $0xcc] sm:$0xf]
      %v1499 = vld [vmem:[%s3 + $0xd0] sm:$0xf]
      %v1500 = vld [vmem:[%s3 + $0xd4] sm:$0xf]
      %v1501 = vld [vmem:[%s3 + $0xd8] sm:$0xf]
      %v1502 = vld [vmem:[%s3 + $0xdc] sm:$0xf]
      %v1503 = vld [vmem:[%s3 + $0xe0] sm:$0xf]
      %v1504 = vld [vmem:[%s3 + $0xe4] sm:$0xf]
      %v1505 = vld [vmem:[%s3 + $0xe8] sm:$0xf]
      %v1506 = vld [vmem:[%s3 + $0xec] sm:$0xf]
      %v1507 = vld [vmem:[%s3 + $0xf0] sm:$0xf]
      %v1508 = vld [vmem:[%s3 + $0xf4] sm:$0xf]
      %v1509 = vld [vmem:[%s3 + $0xf8] sm:$0xf]
      %v1510 = vld [vmem:[%s3 + $0xfc] sm:$0xf]
      %v1511 = vld [vmem:[%s3 + $0x100] sm:$0xf]
      %v1512 = vld [vmem:[%s3 + $0x104] sm:$0xf]
      %v1513 = vld [vmem:[%s3 + $0x108] sm:$0xf]
      %v1514 = vld [vmem:[%s3 + $0x10c] sm:$0xf]
      %v1515 = vld [vmem:[%s3 + $0x110] sm:$0xf]
      %v1516 = vld [vmem:[%s3 + $0x114] sm:$0xf]
      %v1517 = vld [vmem:[%s3 + $0x118] sm:$0xf]
      %v1518 = vld [vmem:[%s3 + $0x11c] sm:$0xf]
      %v1519 = vld [vmem:[%s3 + $0x120] sm:$0xf]
      %v1520 = vld [vmem:[%s3 + $0x124] sm:$0xf]
      %v1521 = vld [vmem:[%s3 + $0x128] sm:$0xf]
      %v1522 = vld [vmem:[%s3 + $0x12c] sm:$0xf]
      %v1523 = vld [vmem:[%s3 + $0x130] sm:$0xf]
      %v1524 = vld [vmem:[%s3 + $0x134] sm:$0xf]
      %v1525 = vld [vmem:[%s3 + $0x138] sm:$0xf]
      %v1526 = vld [vmem:[%s3 + $0x13c] sm:$0xf]
      %v1527 = vld [vmem:[%s3 + $0x140] sm:$0xf]
      %v1528 = vld [vmem:[%s3 + $0x144] sm:$0xf]
      %v1529 = vld [vmem:[%s3 + $0x148] sm:$0xf]
      %v1530 = vld [vmem:[%s3 + $0x14c] sm:$0xf]
      %v1531 = vld [vmem:[%s3 + $0x150] sm:$0xf]
      %v1532 = vld [vmem:[%s3 + $0x154] sm:$0xf]
      %v1533 = vld [vmem:[%s3 + $0x158] sm:$0xf]
      %v1534 = vld [vmem:[%s3 + $0x15c] sm:$0xf]
      %v1535 = vld [vmem:[%s3 + $0x160] sm:$0xf]
      %v1536 = vld [vmem:[%s3 + $0x164] sm:$0xf]
      %v1537 = vld [vmem:[%s3 + $0x168] sm:$0xf]
      %v1538 = vld [vmem:[%s3 + $0x16c] sm:$0xf]
      %v1539 = vld [vmem:[%s3 + $0x170] sm:$0xf]
      %v1540 = vld [vmem:[%s3 + $0x174] sm:$0xf]
      %v1541 = vld [vmem:[%s3 + $0x178] sm:$0xf]
      %v1542 = vld [vmem:[%s3 + $0x17c] sm:$0xf]
      %v1543 = vld [vmem:[%s3 + $0x180] sm:$0xf]
      %v1544 = vld [vmem:[%s3 + $0x184] sm:$0xf]
      %v1545 = vld [vmem:[%s3 + $0x188] sm:$0xf]
      %v1546 = vld [vmem:[%s3 + $0x18c] sm:$0xf]
      %v1547 = vld [vmem:[%s3 + $0x190] sm:$0xf]
      %v1548 = vld [vmem:[%s3 + $0x194] sm:$0xf]
      %v1549 = vld [vmem:[%s3 + $0x198] sm:$0xf]
      %v1550 = vld [vmem:[%s3 + $0x19c] sm:$0xf]
      %v1551 = vld [vmem:[%s3 + $0x1a0] sm:$0xf]
      %v1552 = vld [vmem:[%s3 + $0x1a4] sm:$0xf]
      %v1553 = vld [vmem:[%s3 + $0x1a8] sm:$0xf]
      %v1554 = vld [vmem:[%s3 + $0x1ac] sm:$0xf]
      %v1555 = vld [vmem:[%s3 + $0x1b0] sm:$0xf]
      %v1556 = vld [vmem:[%s3 + $0x1b4] sm:$0xf]
      %v1557 = vld [vmem:[%s3 + $0x1b8] sm:$0xf]
      %v1558 = vld [vmem:[%s3 + $0x1bc] sm:$0xf]
      %v1559 = vld [vmem:[%s3 + $0x1c0] sm:$0xf]
      %v1560 = vld [vmem:[%s3 + $0x1c4] sm:$0xf]
      %v1561 = vld [vmem:[%s3 + $0x1c8] sm:$0xf]
      %v1562 = vld [vmem:[%s3 + $0x1cc] sm:$0xf]
      %v1563 = vld [vmem:[%s3 + $0x1d0] sm:$0xf]
      %v1564 = vld [vmem:[%s3 + $0x1d4] sm:$0xf]
      %v1565 = vld [vmem:[%s3 + $0x1d8] sm:$0xf]
      %v1566 = vld [vmem:[%s3 + $0x1dc] sm:$0xf]
      %v1567 = vld [vmem:[%s3 + $0x1e0] sm:$0xf]
      %v1568 = vld [vmem:[%s3 + $0x1e4] sm:$0xf]
      %v1569 = vld [vmem:[%s3 + $0x1e8] sm:$0xf]
      %v1570 = vld [vmem:[%s3 + $0x1ec] sm:$0xf]
      %v1571 = vld [vmem:[%s3 + $0x1f0] sm:$0xf]
      %v1572 = vld [vmem:[%s3 + $0x1f4] sm:$0xf]
      %v1573 = vld [vmem:[%s3 + $0x1f8] sm:$0xf]
      %v1574 = vld [vmem:[%s3 + $0x1fc] sm:$0xf]
      %v1575 = vld [vmem:[%s3 + $0x200] sm:$0xf]
      %v1576 = vld [vmem:[%s3 + $0x204] sm:$0xf]
      %v1577 = vld [vmem:[%s3 + $0x208] sm:$0xf]
      %v1578 = vld [vmem:[%s3 + $0x20c] sm:$0xf]
      %v1579 = vld [vmem:[%s3 + $0x210] sm:$0xf]
      %v1580 = vld [vmem:[%s3 + $0x214] sm:$0xf]
      %v1581 = vld [vmem:[%s3 + $0x218] sm:$0xf]
      %v1582 = vld [vmem:[%s3 + $0x21c] sm:$0xf]
      %v1583 = vld [vmem:[%s3 + $0x220] sm:$0xf]
      %v1584 = vld [vmem:[%s3 + $0x224] sm:$0xf]
      %v1585 = vld [vmem:[%s3 + $0x228] sm:$0xf]
      %v1586 = vld [vmem:[%s3 + $0x22c] sm:$0xf]
      %v1587 = vld [vmem:[%s3 + $0x230] sm:$0xf]
      %v1588 = vld [vmem:[%s3 + $0x234] sm:$0xf]
      %v1589 = vld [vmem:[%s3 + $0x238] sm:$0xf]
      %v1590 = vld [vmem:[%s3 + $0x23c] sm:$0xf]
      %v1735 = vunpack.c.l.b16 %v1447
      %v1736 = vunpack.c.l.b16 %v1448
      %v1737 = vunpack.c.l.b16 %v1449
      %v1738 = vunpack.c.l.b16 %v1450
      %v1739 = vunpack.c.l.b16 %v1451
      %v1740 = vunpack.c.l.b16 %v1452
      %v1741 = vunpack.c.l.b16 %v1453
      %v1742 = vunpack.c.l.b16 %v1454
      %v1743 = vunpack.c.l.b16 %v1455
      %v1744 = vunpack.c.l.b16 %v1456
      %v1745 = vunpack.c.l.b16 %v1457
      %v1746 = vunpack.c.l.b16 %v1458
      %v1747 = vunpack.c.l.b16 %v1459
      %v1748 = vunpack.c.l.b16 %v1460
      %v1749 = vunpack.c.l.b16 %v1461
      %v1750 = vunpack.c.l.b16 %v1462
      %v1751 = vunpack.c.l.b16 %v1463
      %v1752 = vunpack.c.l.b16 %v1464
      %v1753 = vunpack.c.l.b16 %v1465
      %v1754 = vunpack.c.l.b16 %v1466
      %v1755 = vunpack.c.l.b16 %v1467
      %v1756 = vunpack.c.l.b16 %v1468
      %v1757 = vunpack.c.l.b16 %v1469
      %v1758 = vunpack.c.l.b16 %v1470
      %v1759 = vunpack.c.l.b16 %v1471
      %v1760 = vunpack.c.l.b16 %v1472
      %v1761 = vunpack.c.l.b16 %v1473
      %v1762 = vunpack.c.l.b16 %v1474
      %v1763 = vunpack.c.l.b16 %v1475
      %v1764 = vunpack.c.l.b16 %v1476
      %v1765 = vunpack.c.l.b16 %v1477
      %v1766 = vunpack.c.l.b16 %v1478
      %v1767 = vunpack.c.l.b16 %v1479
      %v1768 = vunpack.c.l.b16 %v1480
      %v1769 = vunpack.c.l.b16 %v1481
      %v1770 = vunpack.c.l.b16 %v1482
      %v1771 = vunpack.c.l.b16 %v1483
      %v1772 = vunpack.c.l.b16 %v1484
      %v1773 = vunpack.c.l.b16 %v1485
      %v1774 = vunpack.c.l.b16 %v1486
      %v1775 = vunpack.c.l.b16 %v1487
      %v1776 = vunpack.c.l.b16 %v1488
      %v1777 = vunpack.c.l.b16 %v1489
      %v1778 = vunpack.c.l.b16 %v1490
      %v1779 = vunpack.c.l.b16 %v1491
      %v1780 = vunpack.c.l.b16 %v1492
      %v1781 = vunpack.c.l.b16 %v1493
      %v1782 = vunpack.c.l.b16 %v1494
      %v1783 = vunpack.c.l.b16 %v1495
      %v1784 = vunpack.c.l.b16 %v1496
      %v1785 = vunpack.c.l.b16 %v1497
      %v1786 = vunpack.c.l.b16 %v1498
      %v1787 = vunpack.c.l.b16 %v1499
      %v1788 = vunpack.c.l.b16 %v1500
      %v1789 = vunpack.c.l.b16 %v1501
      %v1790 = vunpack.c.l.b16 %v1502
      %v1791 = vunpack.c.l.b16 %v1503
      %v1792 = vunpack.c.l.b16 %v1504
      %v1793 = vunpack.c.l.b16 %v1505
      %v1794 = vunpack.c.l.b16 %v1506
      %v1795 = vunpack.c.l.b16 %v1507
      %v1796 = vunpack.c.l.b16 %v1508
      %v1797 = vunpack.c.l.b16 %v1509
      %v1798 = vunpack.c.l.b16 %v1510
      %v1799 = vunpack.c.l.b16 %v1511
      %v1800 = vunpack.c.l.b16 %v1512
      %v1801 = vunpack.c.l.b16 %v1513
      %v1802 = vunpack.c.l.b16 %v1514
      %v1803 = vunpack.c.l.b16 %v1515
      %v1804 = vunpack.c.l.b16 %v1516
      %v1805 = vunpack.c.l.b16 %v1517
      %v1806 = vunpack.c.l.b16 %v1518
      %v1807 = vunpack.c.l.b16 %v1519
      %v1808 = vunpack.c.l.b16 %v1520
      %v1809 = vunpack.c.l.b16 %v1521
      %v1810 = vunpack.c.l.b16 %v1522
      %v1811 = vunpack.c.l.b16 %v1523
      %v1812 = vunpack.c.l.b16 %v1524
      %v1813 = vunpack.c.l.b16 %v1525
      %v1814 = vunpack.c.l.b16 %v1526
      %v1815 = vunpack.c.l.b16 %v1527
      %v1816 = vunpack.c.l.b16 %v1528
      %v1817 = vunpack.c.l.b16 %v1529
      %v1818 = vunpack.c.l.b16 %v1530
      %v1819 = vunpack.c.l.b16 %v1531
      %v1820 = vunpack.c.l.b16 %v1532
      %v1821 = vunpack.c.l.b16 %v1533
      %v1822 = vunpack.c.l.b16 %v1534
      %v1823 = vunpack.c.l.b16 %v1535
      %v1824 = vunpack.c.l.b16 %v1536
      %v1825 = vunpack.c.l.b16 %v1537
      %v1826 = vunpack.c.l.b16 %v1538
      %v1827 = vunpack.c.l.b16 %v1539
      %v1828 = vunpack.c.l.b16 %v1540
      %v1829 = vunpack.c.l.b16 %v1541
      %v1830 = vunpack.c.l.b16 %v1542
      %v1831 = vunpack.c.l.b16 %v1543
      %v1832 = vunpack.c.l.b16 %v1544
      %v1833 = vunpack.c.l.b16 %v1545
      %v1834 = vunpack.c.l.b16 %v1546
      %v1835 = vunpack.c.l.b16 %v1547
      %v1836 = vunpack.c.l.b16 %v1548
      %v1837 = vunpack.c.l.b16 %v1549
      %v1838 = vunpack.c.l.b16 %v1550
      %v1839 = vunpack.c.l.b16 %v1551
      %v1840 = vunpack.c.l.b16 %v1552
      %v1841 = vunpack.c.l.b16 %v1553
      %v1842 = vunpack.c.l.b16 %v1554
      %v1843 = vunpack.c.l.b16 %v1555
      %v1844 = vunpack.c.l.b16 %v1556
      %v1845 = vunpack.c.l.b16 %v1557
      %v1846 = vunpack.c.l.b16 %v1558
      %v1847 = vunpack.c.l.b16 %v1559
      %v1848 = vunpack.c.l.b16 %v1560
      %v1849 = vunpack.c.l.b16 %v1561
      %v1850 = vunpack.c.l.b16 %v1562
      %v1851 = vunpack.c.l.b16 %v1563
      %v1852 = vunpack.c.l.b16 %v1564
      %v1853 = vunpack.c.l.b16 %v1565
      %v1854 = vunpack.c.l.b16 %v1566
      %v1855 = vunpack.c.l.b16 %v1567
      %v1856 = vunpack.c.l.b16 %v1568
      %v1857 = vunpack.c.l.b16 %v1569
      %v1858 = vunpack.c.l.b16 %v1570
      %v1859 = vunpack.c.l.b16 %v1571
      %v1860 = vunpack.c.l.b16 %v1572
      %v1861 = vunpack.c.l.b16 %v1573
      %v1862 = vunpack.c.l.b16 %v1574
      %v1863 = vunpack.c.l.b16 %v1575
      %v1864 = vunpack.c.l.b16 %v1576
      %v1865 = vunpack.c.l.b16 %v1577
      %v1866 = vunpack.c.l.b16 %v1578
      %v1867 = vunpack.c.l.b16 %v1579
      %v1868 = vunpack.c.l.b16 %v1580
      %v1869 = vunpack.c.l.b16 %v1581
      %v1870 = vunpack.c.l.b16 %v1582
      %v1871 = vunpack.c.l.b16 %v1583
      %v1872 = vunpack.c.l.b16 %v1584
      %v1873 = vunpack.c.l.b16 %v1585
      %v1874 = vunpack.c.l.b16 %v1586
      %v1875 = vunpack.c.l.b16 %v1587
      %v1876 = vunpack.c.l.b16 %v1588
      %v1877 = vunpack.c.l.b16 %v1589
      %v1878 = vunpack.c.l.b16 %v1590
      %v1879 = vpack.c.b16 %v1736, %v1735
      %v1880 = vpack.c.b16 %v1738, %v1737
      %v1881 = vpack.c.b16 %v1740, %v1739
      %v1882 = vpack.c.b16 %v1742, %v1741
      %v1883 = vpack.c.b16 %v1744, %v1743
      %v1884 = vpack.c.b16 %v1746, %v1745
      %v1885 = vpack.c.b16 %v1748, %v1747
      %v1886 = vpack.c.b16 %v1750, %v1749
      %v1887 = vpack.c.b16 %v1752, %v1751
      %v1888 = vpack.c.b16 %v1754, %v1753
      %v1889 = vpack.c.b16 %v1756, %v1755
      %v1890 = vpack.c.b16 %v1758, %v1757
      %v1891 = vpack.c.b16 %v1760, %v1759
      %v1892 = vpack.c.b16 %v1762, %v1761
      %v1893 = vpack.c.b16 %v1764, %v1763
      %v1894 = vpack.c.b16 %v1766, %v1765
      %v1895 = vpack.c.b16 %v1768, %v1767
      %v1896 = vpack.c.b16 %v1770, %v1769
      %v1897 = vpack.c.b16 %v1772, %v1771
      %v1898 = vpack.c.b16 %v1774, %v1773
      %v1899 = vpack.c.b16 %v1776, %v1775
      %v1900 = vpack.c.b16 %v1778, %v1777
      %v1901 = vpack.c.b16 %v1780, %v1779
      %v1902 = vpack.c.b16 %v1782, %v1781
      %v1903 = vpack.c.b16 %v1784, %v1783
      %v1904 = vpack.c.b16 %v1786, %v1785
      %v1905 = vpack.c.b16 %v1788, %v1787
      %v1906 = vpack.c.b16 %v1790, %v1789
      %v1907 = vpack.c.b16 %v1792, %v1791
      %v1908 = vpack.c.b16 %v1794, %v1793
      %v1909 = vpack.c.b16 %v1796, %v1795
      %v1910 = vpack.c.b16 %v1798, %v1797
      %v1911 = vpack.c.b16 %v1800, %v1799
      %v1912 = vpack.c.b16 %v1802, %v1801
      %v1913 = vpack.c.b16 %v1804, %v1803
      %v1914 = vpack.c.b16 %v1806, %v1805
      %v1915 = vpack.c.b16 %v1808, %v1807
      %v1916 = vpack.c.b16 %v1810, %v1809
      %v1917 = vpack.c.b16 %v1812, %v1811
      %v1918 = vpack.c.b16 %v1814, %v1813
      %v1919 = vpack.c.b16 %v1816, %v1815
      %v1920 = vpack.c.b16 %v1818, %v1817
      %v1921 = vpack.c.b16 %v1820, %v1819
      %v1922 = vpack.c.b16 %v1822, %v1821
      %v1923 = vpack.c.b16 %v1824, %v1823
      %v1924 = vpack.c.b16 %v1826, %v1825
      %v1925 = vpack.c.b16 %v1828, %v1827
      %v1926 = vpack.c.b16 %v1830, %v1829
      %v1927 = vpack.c.b16 %v1832, %v1831
      %v1928 = vpack.c.b16 %v1834, %v1833
      %v1929 = vpack.c.b16 %v1836, %v1835
      %v1930 = vpack.c.b16 %v1838, %v1837
      %v1931 = vpack.c.b16 %v1840, %v1839
      %v1932 = vpack.c.b16 %v1842, %v1841
      %v1933 = vpack.c.b16 %v1844, %v1843
      %v1934 = vpack.c.b16 %v1846, %v1845
      %v1935 = vpack.c.b16 %v1848, %v1847
      %v1936 = vpack.c.b16 %v1850, %v1849
      %v1937 = vpack.c.b16 %v1852, %v1851
      %v1938 = vpack.c.b16 %v1854, %v1853
      %v1939 = vpack.c.b16 %v1856, %v1855
      %v1940 = vpack.c.b16 %v1858, %v1857
      %v1941 = vpack.c.b16 %v1860, %v1859
      %v1942 = vpack.c.b16 %v1862, %v1861
      %v1943 = vpack.c.b16 %v1864, %v1863
      %v1944 = vpack.c.b16 %v1866, %v1865
      %v1945 = vpack.c.b16 %v1868, %v1867
      %v1946 = vpack.c.b16 %v1870, %v1869
      %v1947 = vpack.c.b16 %v1872, %v1871
      %v1948 = vpack.c.b16 %v1874, %v1873
      %v1949 = vpack.c.b16 %v1876, %v1875
      %v1950 = vpack.c.b16 %v1878, %v1877
      %2023 = vmatprep.subr.bf16.mxu0 0
      %2024 = vmatpush1.bf16.msra.mxu0 %v1879
      %2025 = vmatprep.subr.bf16.mxu0 0
      %2026 = vmatpush1.bf16.msra.mxu0 %v1880
      %2027 = vmatprep.subr.bf16.mxu0 0
      %2028 = vmatpush1.bf16.msra.mxu0 %v1881
      %2029 = vmatprep.subr.bf16.mxu0 0
      %2030 = vmatpush1.bf16.msra.mxu0 %v1882
      %2031 = vmatprep.subr.bf16.mxu0 0
      %2032 = vmatpush1.bf16.msra.mxu0 %v1883
      %2033 = vmatprep.subr.bf16.mxu0 0
      %2034 = vmatpush1.bf16.msra.mxu0 %v1884
      %2035 = vmatprep.subr.bf16.mxu0 0
      %2036 = vmatpush1.bf16.msra.mxu0 %v1885
      %2037 = vmatprep.subr.bf16.mxu0 0
      %2038 = vmatpush1.bf16.msra.mxu0 %v1886
      %2039 = vmatprep.subr.bf16.mxu0 0
      %2040 = vmatpush1.bf16.msra.mxu0 %v1887
      %2041 = vmatprep.subr.bf16.mxu0 0
      %2042 = vmatpush1.bf16.msra.mxu0 %v1888
      %2043 = vmatprep.subr.bf16.mxu0 0
      %2044 = vmatpush1.bf16.msra.mxu0 %v1889
      %2045 = vmatprep.subr.bf16.mxu0 0
      %2046 = vmatpush1.bf16.msra.mxu0 %v1890
      %2047 = vmatprep.subr.bf16.mxu0 0
      %2048 = vmatpush1.bf16.msra.mxu0 %v1891
      %2049 = vmatprep.subr.bf16.mxu0 0
      %2050 = vmatpush1.bf16.msra.mxu0 %v1892
      %2051 = vmatprep.subr.bf16.mxu0 0
      %2052 = vmatpush1.bf16.msra.mxu0 %v1893
      %2053 = vmatprep.subr.bf16.mxu0 0
      %2054 = vmatpush1.bf16.msra.mxu0 %v1894
      %2055 = vmatprep.mubr.bf16.mxu0 %v1304
      %2056 = vmatmul.mubr.bf16.gmra.mrb[0].mxu0 %v1303
      %v2057 = vpop.f32.mrb[0].mxu0
      %v2058 = vadd.f32 0.0, %v2057
      %v2059 = vpop.f32.mrb[0].mxu0
      %v2060 = vpop.f32.mrb[0].mxu0
      %v2061 = vadd.f32 0.0, %v2060
      %v2062 = vpop.f32.mrb[0].mxu0
      %2063 = vmatprep.mubr.bf16.mxu0 %v1313
      %2064 = vmatmul.mubr.bf16.gmra.mrb[0].mxu0 %v1312
      %v2065 = vpop.f32.mrb[0].mxu0
      %v2066 = vadd.f32 0.0, %v2065
      %v2067 = vpop.f32.mrb[0].mxu0
      %v2068 = vpop.f32.mrb[0].mxu0
      %v2069 = vadd.f32 0.0, %v2068
      %v2070 = vpop.f32.mrb[0].mxu0
      %2071 = vmatprep.mubr.bf16.mxu0 %v1322
      %2072 = vmatmul.mubr.bf16.gmra.mrb[0].mxu0 %v1321
      %v2073 = vpop.f32.mrb[0].mxu0
      %v2074 = vadd.f32 0.0, %v2073
      %v2075 = vpop.f32.mrb[0].mxu0
      %v2076 = vpop.f32.mrb[0].mxu0
      %v2077 = vadd.f32 0.0, %v2076
      %v2078 = vpop.f32.mrb[0].mxu0
      %2079 = vmatprep.mubr.bf16.mxu0 %v1331
      %2080 = vmatmul.mubr.bf16.gmra.mrb[0].mxu0 %v1330
      %v2081 = vpop.f32.mrb[0].mxu0
      %v2082 = vadd.f32 0.0, %v2081
      %v2083 = vpop.f32.mrb[0].mxu0
      %v2084 = vpop.f32.mrb[0].mxu0
      %v2085 = vadd.f32 0.0, %v2084
      %v2086 = vpop.f32.mrb[0].mxu0
      %2087 = vmatprep.mubr.bf16.mxu0 %v1340
      %2088 = vmatmul.mubr.bf16.gmra.mrb[0].mxu0 %v1339
      %v2089 = vpop.f32.mrb[0].mxu0
      %v2090 = vadd.f32 0.0, %v2089
      %v2091 = vpop.f32.mrb[0].mxu0
      %v2092 = vpop.f32.mrb[0].mxu0
      %v2093 = vadd.f32 0.0, %v2092
      %v2094 = vpop.f32.mrb[0].mxu0
      %2095 = vmatprep.mubr.bf16.mxu0 %v1349
      %2096 = vmatmul.mubr.bf16.gmra.mrb[0].mxu0 %v1348
      %v2097 = vpop.f32.mrb[0].mxu0
      %v2098 = vadd.f32 0.0, %v2097
      %v2099 = vpop.f32.mrb[0].mxu0
      %v2100 = vpop.f32.mrb[0].mxu0
      %v2101 = vadd.f32 0.0, %v2100
      %v2102 = vpop.f32.mrb[0].mxu0
      %2103 = vmatprep.mubr.bf16.mxu0 %v1358
      %2104 = vmatmul.mubr.bf16.gmra.mrb[0].mxu0 %v1357
      %v2105 = vpop.f32.mrb[0].mxu0
      %v2106 = vadd.f32 0.0, %v2105
      %v2107 = vpop.f32.mrb[0].mxu0
      %v2108 = vpop.f32.mrb[0].mxu0
      %v2109 = vadd.f32 0.0, %v2108
      %v2110 = vpop.f32.mrb[0].mxu0
      %2111 = vmatprep.mubr.bf16.mxu0 %v1367
      %2112 = vmatmul.mubr.bf16.gmra.mrb[0].mxu0 %v1366
      %v2113 = vpop.f32.mrb[0].mxu0
      %v2114 = vadd.f32 0.0, %v2113
      %v2115 = vpop.f32.mrb[0].mxu0
      %v2116 = vpop.f32.mrb[0].mxu0
      %v2117 = vadd.f32 0.0, %v2116
      %v2118 = vpop.f32.mrb[0].mxu0
      %2119 = vmatprep.mubr.bf16.mxu0 %v1376
      %2120 = vmatmul.mubr.bf16.gmra.mrb[0].mxu0 %v1375
      %v2121 = vpop.f32.mrb[0].mxu0
      %v2122 = vadd.f32 0.0, %v2121
      %v2123 = vpop.f32.mrb[0].mxu0
      %v2124 = vpop.f32.mrb[0].mxu0
      %v2125 = vadd.f32 0.0, %v2124
      %v2126 = vpop.f32.mrb[0].mxu0
      %2127 = vmatprep.mubr.bf16.mxu0 %v1385
      %2128 = vmatmul.mubr.bf16.gmra.mrb[0].mxu0 %v1384
      %v2129 = vpop.f32.mrb[0].mxu0
      %v2130 = vadd.f32 0.0, %v2129
      %v2131 = vpop.f32.mrb[0].mxu0
      %v2132 = vpop.f32.mrb[0].mxu0
      %v2133 = vadd.f32 0.0, %v2132
      %v2134 = vpop.f32.mrb[0].mxu0
      %2135 = vmatprep.mubr.bf16.mxu0 %v1394
      %2136 = vmatmul.mubr.bf16.gmra.mrb[0].mxu0 %v1393
      %v2137 = vpop.f32.mrb[0].mxu0
      %v2138 = vadd.f32 0.0, %v2137
      %v2139 = vpop.f32.mrb[0].mxu0
      %v2140 = vpop.f32.mrb[0].mxu0
      %v2141 = vadd.f32 0.0, %v2140
      %v2142 = vpop.f32.mrb[0].mxu0
      %2143 = vmatprep.mubr.bf16.mxu0 %v1403
      %2144 = vmatmul.mubr.bf16.gmra.mrb[0].mxu0 %v1402
      %v2145 = vpop.f32.mrb[0].mxu0
      %v2146 = vadd.f32 0.0, %v2145
      %v2147 = vpop.f32.mrb[0].mxu0
      %v2148 = vpop.f32.mrb[0].mxu0
      %v2149 = vadd.f32 0.0, %v2148
      %v2150 = vpop.f32.mrb[0].mxu0
      %2151 = vmatprep.mubr.bf16.mxu0 %v1412
      %2152 = vmatmul.mubr.bf16.gmra.mrb[0].mxu0 %v1411
      %v2153 = vpop.f32.mrb[0].mxu0
      %v2154 = vadd.f32 0.0, %v2153
      %v2155 = vpop.f32.mrb[0].mxu0
      %v2156 = vpop.f32.mrb[0].mxu0
      %v2157 = vadd.f32 0.0, %v2156
      %v2158 = vpop.f32.mrb[0].mxu0
      %2159 = vmatprep.mubr.bf16.mxu0 %v1421
      %2160 = vmatmul.mubr.bf16.gmra.mrb[0].mxu0 %v1420
      %v2161 = vpop.f32.mrb[0].mxu0
      %v2162 = vadd.f32 0.0, %v2161
      %v2163 = vpop.f32.mrb[0].mxu0
      %v2164 = vpop.f32.mrb[0].mxu0
      %v2165 = vadd.f32 0.0, %v2164
      %v2166 = vpop.f32.mrb[0].mxu0
      %2167 = vmatprep.mubr.bf16.mxu0 %v1430
      %2168 = vmatmul.mubr.bf16.gmra.mrb[0].mxu0 %v1429
      %v2169 = vpop.f32.mrb[0].mxu0
      %v2170 = vadd.f32 0.0, %v2169
      %v2171 = vpop.f32.mrb[0].mxu0
      %v2172 = vpop.f32.mrb[0].mxu0
      %v2173 = vadd.f32 0.0, %v2172
      %v2174 = vpop.f32.mrb[0].mxu0
      %2175 = vmatprep.mubr.bf16.mxu0 %v1439
      %2176 = vmatmul.mubr.bf16.gmra.mrb[0].mxu0 %v1438
      %v2177 = vpop.f32.mrb[0].mxu0
      %v2178 = vadd.f32 0.0, %v2177
      %v2179 = vpop.f32.mrb[0].mxu0
      %v2180 = vpop.f32.mrb[0].mxu0
      %v2181 = vadd.f32 0.0, %v2180
      %v2182 = vpop.f32.mrb[0].mxu0
      %2183 = vdwg.mxu0
      %2184 = vmatprep.subr.bf16.mxu0 0
      %2185 = vmatpush1.bf16.msra.mxu0 %v1895
      %2186 = vmatprep.subr.bf16.mxu0 0
      %2187 = vmatpush1.bf16.msra.mxu0 %v1896
      %2188 = vmatprep.subr.bf16.mxu0 0
      %2189 = vmatpush1.bf16.msra.mxu0 %v1897
      %2190 = vmatprep.subr.bf16.mxu0 0
      %2191 = vmatpush1.bf16.msra.mxu0 %v1898
      %2192 = vmatprep.subr.bf16.mxu0 0
      %2193 = vmatpush1.bf16.msra.mxu0 %v1899
      %2194 = vmatprep.subr.bf16.mxu0 0
      %2195 = vmatpush1.bf16.msra.mxu0 %v1900
      %2196 = vmatprep.subr.bf16.mxu0 0
      %2197 = vmatpush1.bf16.msra.mxu0 %v1901
      %2198 = vmatprep.subr.bf16.mxu0 0
      %2199 = vmatpush1.bf16.msra.mxu0 %v1902
      %2200 = vmatprep.subr.bf16.mxu0 0
      %2201 = vmatpush1.bf16.msra.mxu0 %v1903
      %2202 = vmatprep.subr.bf16.mxu0 0
      %2203 = vmatpush1.bf16.msra.mxu0 %v1904
      %2204 = vmatprep.subr.bf16.mxu0 0
      %2205 = vmatpush1.bf16.msra.mxu0 %v1905
      %2206 = vmatprep.subr.bf16.mxu0 0
      %2207 = vmatpush1.bf16.msra.mxu0 %v1906
      %2208 = vmatprep.subr.bf16.mxu0 0
      %2209 = vmatpush1.bf16.msra.mxu0 %v1907
      %2210 = vmatprep.subr.bf16.mxu0 0
      %2211 = vmatpush1.bf16.msra.mxu0 %v1908
      %2212 = vmatprep.subr.bf16.mxu0 0
      %2213 = vmatpush1.bf16.msra.mxu0 %v1909
      %2214 = vmatprep.subr.bf16.mxu0 0
      %2215 = vmatpush1.bf16.msra.mxu0 %v1910
      %2216 = vmatprep.mubr.bf16.mxu0 %v1306
      %2217 = vmatmul.mubr.bf16.gmra.mrb[0].mxu0 %v1305
      %v2218 = vpop.f32.mrb[0].mxu0
      %v2219 = vadd.f32 %v2058, %v2218
      %v2220 = vpop.f32.mrb[0].mxu0
      %v2221 = vpop.f32.mrb[0].mxu0
      %v2222 = vadd.f32 %v2061, %v2221
      %v2223 = vpop.f32.mrb[0].mxu0
      %2224 = vmatprep.mubr.bf16.mxu0 %v1315
      %2225 = vmatmul.mubr.bf16.gmra.mrb[0].mxu0 %v1314
      %v2226 = vpop.f32.mrb[0].mxu0
      %v2227 = vadd.f32 %v2066, %v2226
      %v2228 = vpop.f32.mrb[0].mxu0
      %v2229 = vpop.f32.mrb[0].mxu0
      %v2230 = vadd.f32 %v2069, %v2229
      %v2231 = vpop.f32.mrb[0].mxu0
      %2232 = vmatprep.mubr.bf16.mxu0 %v1324
      %2233 = vmatmul.mubr.bf16.gmra.mrb[0].mxu0 %v1323
      %v2234 = vpop.f32.mrb[0].mxu0
      %v2235 = vadd.f32 %v2074, %v2234
      %v2236 = vpop.f32.mrb[0].mxu0
      %v2237 = vpop.f32.mrb[0].mxu0
      %v2238 = vadd.f32 %v2077, %v2237
      %v2239 = vpop.f32.mrb[0].mxu0
      %2240 = vmatprep.mubr.bf16.mxu0 %v1333
      %2241 = vmatmul.mubr.bf16.gmra.mrb[0].mxu0 %v1332
      %v2242 = vpop.f32.mrb[0].mxu0
      %v2243 = vadd.f32 %v2082, %v2242
      %v2244 = vpop.f32.mrb[0].mxu0
      %v2245 = vpop.f32.mrb[0].mxu0
      %v2246 = vadd.f32 %v2085, %v2245
      %v2247 = vpop.f32.mrb[0].mxu0
      %2248 = vmatprep.mubr.bf16.mxu0 %v1342
      %2249 = vmatmul.mubr.bf16.gmra.mrb[0].mxu0 %v1341
      %v2250 = vpop.f32.mrb[0].mxu0
      %v2251 = vadd.f32 %v2090, %v2250
      %v2252 = vpop.f32.mrb[0].mxu0
      %v2253 = vpop.f32.mrb[0].mxu0
      %v2254 = vadd.f32 %v2093, %v2253
      %v2255 = vpop.f32.mrb[0].mxu0
      %2256 = vmatprep.mubr.bf16.mxu0 %v1351
      %2257 = vmatmul.mubr.bf16.gmra.mrb[0].mxu0 %v1350
      %v2258 = vpop.f32.mrb[0].mxu0
      %v2259 = vadd.f32 %v2098, %v2258
      %v2260 = vpop.f32.mrb[0].mxu0
      %v2261 = vpop.f32.mrb[0].mxu0
      %v2262 = vadd.f32 %v2101, %v2261
      %v2263 = vpop.f32.mrb[0].mxu0
      %2264 = vmatprep.mubr.bf16.mxu0 %v1360
      %2265 = vmatmul.mubr.bf16.gmra.mrb[0].mxu0 %v1359
      %v2266 = vpop.f32.mrb[0].mxu0
      %v2267 = vadd.f32 %v2106, %v2266
      %v2268 = vpop.f32.mrb[0].mxu0
      %v2269 = vpop.f32.mrb[0].mxu0
      %v2270 = vadd.f32 %v2109, %v2269
      %v2271 = vpop.f32.mrb[0].mxu0
      %2272 = vmatprep.mubr.bf16.mxu0 %v1369
      %2273 = vmatmul.mubr.bf16.gmra.mrb[0].mxu0 %v1368
      %v2274 = vpop.f32.mrb[0].mxu0
      %v2275 = vadd.f32 %v2114, %v2274
      %v2276 = vpop.f32.mrb[0].mxu0
      %v2277 = vpop.f32.mrb[0].mxu0
      %v2278 = vadd.f32 %v2117, %v2277
      %v2279 = vpop.f32.mrb[0].mxu0
      %2280 = vmatprep.mubr.bf16.mxu0 %v1378
      %2281 = vmatmul.mubr.bf16.gmra.mrb[0].mxu0 %v1377
      %v2282 = vpop.f32.mrb[0].mxu0
      %v2283 = vadd.f32 %v2122, %v2282
      %v2284 = vpop.f32.mrb[0].mxu0
      %v2285 = vpop.f32.mrb[0].mxu0
      %v2286 = vadd.f32 %v2125, %v2285
      %v2287 = vpop.f32.mrb[0].mxu0
      %2288 = vmatprep.mubr.bf16.mxu0 %v1387
      %2289 = vmatmul.mubr.bf16.gmra.mrb[0].mxu0 %v1386
      %v2290 = vpop.f32.mrb[0].mxu0
      %v2291 = vadd.f32 %v2130, %v2290
      %v2292 = vpop.f32.mrb[0].mxu0
      %v2293 = vpop.f32.mrb[0].mxu0
      %v2294 = vadd.f32 %v2133, %v2293
      %v2295 = vpop.f32.mrb[0].mxu0
      %2296 = vmatprep.mubr.bf16.mxu0 %v1396
      %2297 = vmatmul.mubr.bf16.gmra.mrb[0].mxu0 %v1395
      %v2298 = vpop.f32.mrb[0].mxu0
      %v2299 = vadd.f32 %v2138, %v2298
      %v2300 = vpop.f32.mrb[0].mxu0
      %v2301 = vpop.f32.mrb[0].mxu0
      %v2302 = vadd.f32 %v2141, %v2301
      %v2303 = vpop.f32.mrb[0].mxu0
      %2304 = vmatprep.mubr.bf16.mxu0 %v1405
      %2305 = vmatmul.mubr.bf16.gmra.mrb[0].mxu0 %v1404
      %v2306 = vpop.f32.mrb[0].mxu0
      %v2307 = vadd.f32 %v2146, %v2306
      %v2308 = vpop.f32.mrb[0].mxu0
      %v2309 = vpop.f32.mrb[0].mxu0
      %v2310 = vadd.f32 %v2149, %v2309
      %v2311 = vpop.f32.mrb[0].mxu0
      %2312 = vmatprep.mubr.bf16.mxu0 %v1414
      %2313 = vmatmul.mubr.bf16.gmra.mrb[0].mxu0 %v1413
      %v2314 = vpop.f32.mrb[0].mxu0
      %v2315 = vadd.f32 %v2154, %v2314
      %v2316 = vpop.f32.mrb[0].mxu0
      %v2317 = vpop.f32.mrb[0].mxu0
      %v2318 = vadd.f32 %v2157, %v2317
      %v2319 = vpop.f32.mrb[0].mxu0
      %2320 = vmatprep.mubr.bf16.mxu0 %v1423
      %2321 = vmatmul.mubr.bf16.gmra.mrb[0].mxu0 %v1422
      %v2322 = vpop.f32.mrb[0].mxu0
      %v2323 = vadd.f32 %v2162, %v2322
      %v2324 = vpop.f32.mrb[0].mxu0
      %v2325 = vpop.f32.mrb[0].mxu0
      %v2326 = vadd.f32 %v2165, %v2325
      %v2327 = vpop.f32.mrb[0].mxu0
      %2328 = vmatprep.mubr.bf16.mxu0 %v1432
      %2329 = vmatmul.mubr.bf16.gmra.mrb[0].mxu0 %v1431
      %v2330 = vpop.f32.mrb[0].mxu0
      %v2331 = vadd.f32 %v2170, %v2330
      %v2332 = vpop.f32.mrb[0].mxu0
      %v2333 = vpop.f32.mrb[0].mxu0
      %v2334 = vadd.f32 %v2173, %v2333
      %v2335 = vpop.f32.mrb[0].mxu0
      %2336 = vmatprep.mubr.bf16.mxu0 %v1441
      %2337 = vmatmul.mubr.bf16.gmra.mrb[0].mxu0 %v1440
      %v2338 = vpop.f32.mrb[0].mxu0
      %v2339 = vadd.f32 %v2178, %v2338
      %v2340 = vpop.f32.mrb[0].mxu0
      %v2341 = vpop.f32.mrb[0].mxu0
      %v2342 = vadd.f32 %v2181, %v2341
      %v2343 = vpop.f32.mrb[0].mxu0
      %2344 = vdwg.mxu0
      %2345 = vmatprep.subr.bf16.mxu0 0
      %2346 = vmatpush1.bf16.msra.mxu0 %v1911
      %2347 = vmatprep.subr.bf16.mxu0 0
      %2348 = vmatpush1.bf16.msra.mxu0 %v1912
      %2349 = vmatprep.subr.bf16.mxu0 0
      %2350 = vmatpush1.bf16.msra.mxu0 %v1913
      %2351 = vmatprep.subr.bf16.mxu0 0
      %2352 = vmatpush1.bf16.msra.mxu0 %v1914
      %2353 = vmatprep.subr.bf16.mxu0 0
      %2354 = vmatpush1.bf16.msra.mxu0 %v1915
      %2355 = vmatprep.subr.bf16.mxu0 0
      %2356 = vmatpush1.bf16.msra.mxu0 %v1916
      %2357 = vmatprep.subr.bf16.mxu0 0
      %2358 = vmatpush1.bf16.msra.mxu0 %v1917
      %2359 = vmatprep.subr.bf16.mxu0 0
      %2360 = vmatpush1.bf16.msra.mxu0 %v1918
      %2361 = vmatprep.subr.bf16.mxu0 0
      %2362 = vmatpush1.bf16.msra.mxu0 %v1919
      %2363 = vmatprep.subr.bf16.mxu0 0
      %2364 = vmatpush1.bf16.msra.mxu0 %v1920
      %2365 = vmatprep.subr.bf16.mxu0 0
      %2366 = vmatpush1.bf16.msra.mxu0 %v1921
      %2367 = vmatprep.subr.bf16.mxu0 0
      %2368 = vmatpush1.bf16.msra.mxu0 %v1922
      %2369 = vmatprep.subr.bf16.mxu0 0
      %2370 = vmatpush1.bf16.msra.mxu0 %v1923
      %2371 = vmatprep.subr.bf16.mxu0 0
      %2372 = vmatpush1.bf16.msra.mxu0 %v1924
      %2373 = vmatprep.subr.bf16.mxu0 0
      %2374 = vmatpush1.bf16.msra.mxu0 %v1925
      %2375 = vmatprep.subr.bf16.mxu0 0
      %2376 = vmatpush1.bf16.msra.mxu0 %v1926
      %2377 = vmatprep.mubr.bf16.mxu0 %v1308
      %2378 = vmatmul.mubr.bf16.gmra.mrb[0].mxu0 %v1307
      %v2379 = vpop.f32.mrb[0].mxu0
      %v2380 = vadd.f32 %v2219, %v2379
      %v2381 = vpop.f32.mrb[0].mxu0
      %v2382 = vpop.f32.mrb[0].mxu0
      %v2383 = vadd.f32 %v2222, %v2382
      %v2384 = vpop.f32.mrb[0].mxu0
      %2385 = vmatprep.mubr.bf16.mxu0 %v1317
      %2386 = vmatmul.mubr.bf16.gmra.mrb[0].mxu0 %v1316
      %v2387 = vpop.f32.mrb[0].mxu0
      %v2388 = vadd.f32 %v2227, %v2387
      %v2389 = vpop.f32.mrb[0].mxu0
      %v2390 = vpop.f32.mrb[0].mxu0
      %v2391 = vadd.f32 %v2230, %v2390
      %v2392 = vpop.f32.mrb[0].mxu0
      %2393 = vmatprep.mubr.bf16.mxu0 %v1326
      %2394 = vmatmul.mubr.bf16.gmra.mrb[0].mxu0 %v1325
      %v2395 = vpop.f32.mrb[0].mxu0
      %v2396 = vadd.f32 %v2235, %v2395
      %v2397 = vpop.f32.mrb[0].mxu0
      %v2398 = vpop.f32.mrb[0].mxu0
      %v2399 = vadd.f32 %v2238, %v2398
      %v2400 = vpop.f32.mrb[0].mxu0
      %2401 = vmatprep.mubr.bf16.mxu0 %v1335
      %2402 = vmatmul.mubr.bf16.gmra.mrb[0].mxu0 %v1334
      %v2403 = vpop.f32.mrb[0].mxu0
      %v2404 = vadd.f32 %v2243, %v2403
      %v2405 = vpop.f32.mrb[0].mxu0
      %v2406 = vpop.f32.mrb[0].mxu0
      %v2407 = vadd.f32 %v2246, %v2406
      %v2408 = vpop.f32.mrb[0].mxu0
      %2409 = vmatprep.mubr.bf16.mxu0 %v1344
      %2410 = vmatmul.mubr.bf16.gmra.mrb[0].mxu0 %v1343
      %v2411 = vpop.f32.mrb[0].mxu0
      %v2412 = vadd.f32 %v2251, %v2411
      %v2413 = vpop.f32.mrb[0].mxu0
      %v2414 = vpop.f32.mrb[0].mxu0
      %v2415 = vadd.f32 %v2254, %v2414
      %v2416 = vpop.f32.mrb[0].mxu0
      %2417 = vmatprep.mubr.bf16.mxu0 %v1353
      %2418 = vmatmul.mubr.bf16.gmra.mrb[0].mxu0 %v1352
      %v2419 = vpop.f32.mrb[0].mxu0
      %v2420 = vadd.f32 %v2259, %v2419
      %v2421 = vpop.f32.mrb[0].mxu0
      %v2422 = vpop.f32.mrb[0].mxu0
      %v2423 = vadd.f32 %v2262, %v2422
      %v2424 = vpop.f32.mrb[0].mxu0
      %2425 = vmatprep.mubr.bf16.mxu0 %v1362
      %2426 = vmatmul.mubr.bf16.gmra.mrb[0].mxu0 %v1361
      %v2427 = vpop.f32.mrb[0].mxu0
      %v2428 = vadd.f32 %v2267, %v2427
      %v2429 = vpop.f32.mrb[0].mxu0
      %v2430 = vpop.f32.mrb[0].mxu0
      %v2431 = vadd.f32 %v2270, %v2430
      %v2432 = vpop.f32.mrb[0].mxu0
      %2433 = vmatprep.mubr.bf16.mxu0 %v1371
      %2434 = vmatmul.mubr.bf16.gmra.mrb[0].mxu0 %v1370
      %v2435 = vpop.f32.mrb[0].mxu0
      %v2436 = vadd.f32 %v2275, %v2435
      %v2437 = vpop.f32.mrb[0].mxu0
      %v2438 = vpop.f32.mrb[0].mxu0
      %v2439 = vadd.f32 %v2278, %v2438
      %v2440 = vpop.f32.mrb[0].mxu0
      %2441 = vmatprep.mubr.bf16.mxu0 %v1380
      %2442 = vmatmul.mubr.bf16.gmra.mrb[0].mxu0 %v1379
      %v2443 = vpop.f32.mrb[0].mxu0
      %v2444 = vadd.f32 %v2283, %v2443
      %v2445 = vpop.f32.mrb[0].mxu0
      %v2446 = vpop.f32.mrb[0].mxu0
      %v2447 = vadd.f32 %v2286, %v2446
      %v2448 = vpop.f32.mrb[0].mxu0
      %2449 = vmatprep.mubr.bf16.mxu0 %v1389
      %2450 = vmatmul.mubr.bf16.gmra.mrb[0].mxu0 %v1388
      %v2451 = vpop.f32.mrb[0].mxu0
      %v2452 = vadd.f32 %v2291, %v2451
      %v2453 = vpop.f32.mrb[0].mxu0
      %v2454 = vpop.f32.mrb[0].mxu0
      %v2455 = vadd.f32 %v2294, %v2454
      %v2456 = vpop.f32.mrb[0].mxu0
      %2457 = vmatprep.mubr.bf16.mxu0 %v1398
      %2458 = vmatmul.mubr.bf16.gmra.mrb[0].mxu0 %v1397
      %v2459 = vpop.f32.mrb[0].mxu0
      %v2460 = vadd.f32 %v2299, %v2459
      %v2461 = vpop.f32.mrb[0].mxu0
      %v2462 = vpop.f32.mrb[0].mxu0
      %v2463 = vadd.f32 %v2302, %v2462
      %v2464 = vpop.f32.mrb[0].mxu0
      %2465 = vmatprep.mubr.bf16.mxu0 %v1407
      %2466 = vmatmul.mubr.bf16.gmra.mrb[0].mxu0 %v1406
      %v2467 = vpop.f32.mrb[0].mxu0
      %v2468 = vadd.f32 %v2307, %v2467
      %v2469 = vpop.f32.mrb[0].mxu0
      %v2470 = vpop.f32.mrb[0].mxu0
      %v2471 = vadd.f32 %v2310, %v2470
      %v2472 = vpop.f32.mrb[0].mxu0
      %2473 = vmatprep.mubr.bf16.mxu0 %v1416
      %2474 = vmatmul.mubr.bf16.gmra.mrb[0].mxu0 %v1415
      %v2475 = vpop.f32.mrb[0].mxu0
      %v2476 = vadd.f32 %v2315, %v2475
      %v2477 = vpop.f32.mrb[0].mxu0
      %v2478 = vpop.f32.mrb[0].mxu0
      %v2479 = vadd.f32 %v2318, %v2478
      %v2480 = vpop.f32.mrb[0].mxu0
      %2481 = vmatprep.mubr.bf16.mxu0 %v1425
      %2482 = vmatmul.mubr.bf16.gmra.mrb[0].mxu0 %v1424
      %v2483 = vpop.f32.mrb[0].mxu0
      %v2484 = vadd.f32 %v2323, %v2483
      %v2485 = vpop.f32.mrb[0].mxu0
      %v2486 = vpop.f32.mrb[0].mxu0
      %v2487 = vadd.f32 %v2326, %v2486
      %v2488 = vpop.f32.mrb[0].mxu0
      %2489 = vmatprep.mubr.bf16.mxu0 %v1434
      %2490 = vmatmul.mubr.bf16.gmra.mrb[0].mxu0 %v1433
      %v2491 = vpop.f32.mrb[0].mxu0
      %v2492 = vadd.f32 %v2331, %v2491
      %v2493 = vpop.f32.mrb[0].mxu0
      %v2494 = vpop.f32.mrb[0].mxu0
      %v2495 = vadd.f32 %v2334, %v2494
      %v2496 = vpop.f32.mrb[0].mxu0
      %2497 = vmatprep.mubr.bf16.mxu0 %v1443
      %2498 = vmatmul.mubr.bf16.gmra.mrb[0].mxu0 %v1442
      %v2499 = vpop.f32.mrb[0].mxu0
      %v2500 = vadd.f32 %v2339, %v2499
      %v2501 = vpop.f32.mrb[0].mxu0
      %v2502 = vpop.f32.mrb[0].mxu0
      %v2503 = vadd.f32 %v2342, %v2502
      %v2504 = vpop.f32.mrb[0].mxu0
      %2505 = vdwg.mxu0
      %2506 = vmatprep.subr.bf16.mxu0 0
      %2507 = vmatpush1.bf16.msra.mxu0 %v1927
      %2508 = vmatprep.subr.bf16.mxu0 0
      %2509 = vmatpush1.bf16.msra.mxu0 %v1928
      %2510 = vmatprep.subr.bf16.mxu0 0
      %2511 = vmatpush1.bf16.msra.mxu0 %v1929
      %2512 = vmatprep.subr.bf16.mxu0 0
      %2513 = vmatpush1.bf16.msra.mxu0 %v1930
      %2514 = vmatprep.subr.bf16.mxu0 0
      %2515 = vmatpush1.bf16.msra.mxu0 %v1931
      %2516 = vmatprep.subr.bf16.mxu0 0
      %2517 = vmatpush1.bf16.msra.mxu0 %v1932
      %2518 = vmatprep.subr.bf16.mxu0 0
      %2519 = vmatpush1.bf16.msra.mxu0 %v1933
      %2520 = vmatprep.subr.bf16.mxu0 0
      %2521 = vmatpush1.bf16.msra.mxu0 %v1934
      %2522 = vmatprep.subr.bf16.mxu0 0
      %2523 = vmatpush1.bf16.msra.mxu0 %v1935
      %2524 = vmatprep.subr.bf16.mxu0 0
      %2525 = vmatpush1.bf16.msra.mxu0 %v1936
      %2526 = vmatprep.subr.bf16.mxu0 0
      %2527 = vmatpush1.bf16.msra.mxu0 %v1937
      %2528 = vmatprep.subr.bf16.mxu0 0
      %2529 = vmatpush1.bf16.msra.mxu0 %v1938
      %2530 = vmatprep.subr.bf16.mxu0 0
      %2531 = vmatpush1.bf16.msra.mxu0 %v1939
      %2532 = vmatprep.subr.bf16.mxu0 0
      %2533 = vmatpush1.bf16.msra.mxu0 %v1940
      %2534 = vmatprep.subr.bf16.mxu0 0
      %2535 = vmatpush1.bf16.msra.mxu0 %v1941
      %2536 = vmatprep.subr.bf16.mxu0 0
      %2537 = vmatpush1.bf16.msra.mxu0 %v1942
      %2538 = vmatprep.mubr.bf16.mxu0 %v1310
      %2539 = vmatmul.mubr.bf16.gmra.mrb[0].mxu0 %v1309
      %v2540 = vpop.f32.mrb[0].mxu0
      %v2541 = vadd.f32 %v2380, %v2540
      %v2542 = vpop.f32.mrb[0].mxu0
      %v2543 = vpop.f32.mrb[0].mxu0
      %v2544 = vadd.f32 %v2383, %v2543
      %v2545 = vpop.f32.mrb[0].mxu0
      %2546 = vmatprep.mubr.bf16.mxu0 %v1319
      %2547 = vmatmul.mubr.bf16.gmra.mrb[0].mxu0 %v1318
      %v2548 = vpop.f32.mrb[0].mxu0
      %v2549 = vadd.f32 %v2388, %v2548
      %v2550 = vpop.f32.mrb[0].mxu0
      %v2551 = vpop.f32.mrb[0].mxu0
      %v2552 = vadd.f32 %v2391, %v2551
      %v2553 = vpop.f32.mrb[0].mxu0
      %2554 = vmatprep.mubr.bf16.mxu0 %v1328
      %2555 = vmatmul.mubr.bf16.gmra.mrb[0].mxu0 %v1327
      %v2556 = vpop.f32.mrb[0].mxu0
      %v2557 = vadd.f32 %v2396, %v2556
      %v2558 = vpop.f32.mrb[0].mxu0
      %v2559 = vpop.f32.mrb[0].mxu0
      %v2560 = vadd.f32 %v2399, %v2559
      %v2561 = vpop.f32.mrb[0].mxu0
      %2562 = vmatprep.mubr.bf16.mxu0 %v1337
      %2563 = vmatmul.mubr.bf16.gmra.mrb[0].mxu0 %v1336
      %v2564 = vpop.f32.mrb[0].mxu0
      %v2565 = vadd.f32 %v2404, %v2564
      %v2566 = vpop.f32.mrb[0].mxu0
      %v2567 = vpop.f32.mrb[0].mxu0
      %v2568 = vadd.f32 %v2407, %v2567
      %v2569 = vpop.f32.mrb[0].mxu0
      %2570 = vmatprep.mubr.bf16.mxu0 %v1346
      %2571 = vmatmul.mubr.bf16.gmra.mrb[0].mxu0 %v1345
      %v2572 = vpop.f32.mrb[0].mxu0
      %v2573 = vadd.f32 %v2412, %v2572
      %v2574 = vpop.f32.mrb[0].mxu0
      %v2575 = vpop.f32.mrb[0].mxu0
      %v2576 = vadd.f32 %v2415, %v2575
      %v2577 = vpop.f32.mrb[0].mxu0
      %2578 = vmatprep.mubr.bf16.mxu0 %v1355
      %2579 = vmatmul.mubr.bf16.gmra.mrb[0].mxu0 %v1354
      %v2580 = vpop.f32.mrb[0].mxu0
      %v2581 = vadd.f32 %v2420, %v2580
      %v2582 = vpop.f32.mrb[0].mxu0
      %v2583 = vpop.f32.mrb[0].mxu0
      %v2584 = vadd.f32 %v2423, %v2583
      %v2585 = vpop.f32.mrb[0].mxu0
      %2586 = vmatprep.mubr.bf16.mxu0 %v1364
      %2587 = vmatmul.mubr.bf16.gmra.mrb[0].mxu0 %v1363
      %v2588 = vpop.f32.mrb[0].mxu0
      %v2589 = vadd.f32 %v2428, %v2588
      %v2590 = vpop.f32.mrb[0].mxu0
      %v2591 = vpop.f32.mrb[0].mxu0
      %v2592 = vadd.f32 %v2431, %v2591
      %v2593 = vpop.f32.mrb[0].mxu0
      %2594 = vmatprep.mubr.bf16.mxu0 %v1373
      %2595 = vmatmul.mubr.bf16.gmra.mrb[0].mxu0 %v1372
      %v2596 = vpop.f32.mrb[0].mxu0
      %v2597 = vadd.f32 %v2436, %v2596
      %v2598 = vpop.f32.mrb[0].mxu0
      %v2599 = vpop.f32.mrb[0].mxu0
      %v2600 = vadd.f32 %v2439, %v2599
      %v2601 = vpop.f32.mrb[0].mxu0
      %2602 = vmatprep.mubr.bf16.mxu0 %v1382
      %2603 = vmatmul.mubr.bf16.gmra.mrb[0].mxu0 %v1381
      %v2604 = vpop.f32.mrb[0].mxu0
      %v2605 = vadd.f32 %v2444, %v2604
      %v2606 = vpop.f32.mrb[0].mxu0
      %v2607 = vpop.f32.mrb[0].mxu0
      %v2608 = vadd.f32 %v2447, %v2607
      %v2609 = vpop.f32.mrb[0].mxu0
      %2610 = vmatprep.mubr.bf16.mxu0 %v1391
      %2611 = vmatmul.mubr.bf16.gmra.mrb[0].mxu0 %v1390
      %v2612 = vpop.f32.mrb[0].mxu0
      %v2613 = vadd.f32 %v2452, %v2612
      %v2614 = vpop.f32.mrb[0].mxu0
      %v2615 = vpop.f32.mrb[0].mxu0
      %v2616 = vadd.f32 %v2455, %v2615
      %v2617 = vpop.f32.mrb[0].mxu0
      %2618 = vmatprep.mubr.bf16.mxu0 %v1400
      %2619 = vmatmul.mubr.bf16.gmra.mrb[0].mxu0 %v1399
      %v2620 = vpop.f32.mrb[0].mxu0
      %v2621 = vadd.f32 %v2460, %v2620
      %v2622 = vpop.f32.mrb[0].mxu0
      %v2623 = vpop.f32.mrb[0].mxu0
      %v2624 = vadd.f32 %v2463, %v2623
      %v2625 = vpop.f32.mrb[0].mxu0
      %2626 = vmatprep.mubr.bf16.mxu0 %v1409
      %2627 = vmatmul.mubr.bf16.gmra.mrb[0].mxu0 %v1408
      %v2628 = vpop.f32.mrb[0].mxu0
      %v2629 = vadd.f32 %v2468, %v2628
      %v2630 = vpop.f32.mrb[0].mxu0
      %v2631 = vpop.f32.mrb[0].mxu0
      %v2632 = vadd.f32 %v2471, %v2631
      %v2633 = vpop.f32.mrb[0].mxu0
      %2634 = vmatprep.mubr.bf16.mxu0 %v1418
      %2635 = vmatmul.mubr.bf16.gmra.mrb[0].mxu0 %v1417
      %v2636 = vpop.f32.mrb[0].mxu0
      %v2637 = vadd.f32 %v2476, %v2636
      %v2638 = vpop.f32.mrb[0].mxu0
      %v2639 = vpop.f32.mrb[0].mxu0
      %v2640 = vadd.f32 %v2479, %v2639
      %v2641 = vpop.f32.mrb[0].mxu0
      %2642 = vmatprep.mubr.bf16.mxu0 %v1427
      %2643 = vmatmul.mubr.bf16.gmra.mrb[0].mxu0 %v1426
      %v2644 = vpop.f32.mrb[0].mxu0
      %v2645 = vadd.f32 %v2484, %v2644
      %v2646 = vpop.f32.mrb[0].mxu0
      %v2647 = vpop.f32.mrb[0].mxu0
      %v2648 = vadd.f32 %v2487, %v2647
      %v2649 = vpop.f32.mrb[0].mxu0
      %2650 = vmatprep.mubr.bf16.mxu0 %v1436
      %2651 = vmatmul.mubr.bf16.gmra.mrb[0].mxu0 %v1435
      %v2652 = vpop.f32.mrb[0].mxu0
      %v2653 = vadd.f32 %v2492, %v2652
      %v2654 = vpop.f32.mrb[0].mxu0
      %v2655 = vpop.f32.mrb[0].mxu0
      %v2656 = vadd.f32 %v2495, %v2655
      %v2657 = vpop.f32.mrb[0].mxu0
      %2658 = vmatprep.mubr.bf16.mxu0 %v1445
      %2659 = vmatmul.mubr.bf16.gmra.mrb[0].mxu0 %v1444
      %v2660 = vpop.f32.mrb[0].mxu0
      %v2661 = vadd.f32 %v2500, %v2660
      %v2662 = vpop.f32.mrb[0].mxu0
      %v2663 = vpop.f32.mrb[0].mxu0
      %v2664 = vadd.f32 %v2503, %v2663
      %v2665 = vpop.f32.mrb[0].mxu0
      %2666 = vdwg.mxu0
      %2667 = vmatprep.subr.bf16.mxu0 0
      %2668 = vmatpush1.bf16.msra.mxu0 %v1943
      %2669 = vmatprep.subr.bf16.mxu0 0
      %2670 = vmatpush1.bf16.msra.mxu0 %v1944
      %2671 = vmatprep.subr.bf16.mxu0 0
      %2672 = vmatpush1.bf16.msra.mxu0 %v1945
      %2673 = vmatprep.subr.bf16.mxu0 0
      %2674 = vmatpush1.bf16.msra.mxu0 %v1946
      %2675 = vmatprep.subr.bf16.mxu0 0
      %2676 = vmatpush1.bf16.msra.mxu0 %v1947
      %2677 = vmatprep.subr.bf16.mxu0 0
      %2678 = vmatpush1.bf16.msra.mxu0 %v1948
      %2679 = vmatprep.subr.bf16.mxu0 0
      %2680 = vmatpush1.bf16.msra.mxu0 %v1949
      %2681 = vmatprep.subr.bf16.mxu0 0
      %2682 = vmatpush1.bf16.msra.mxu0 %v1950
      %2683 = vmatprep.subr.bf16.mxu0 0
      %2684 = vmatpush1.bf16.msra.mxu0 0
      %2685 = vmatprep.subr.bf16.mxu0 0
      %2686 = vmatpush1.bf16.msra.mxu0 0
      %2687 = vmatprep.subr.bf16.mxu0 0
      %2688 = vmatpush1.bf16.msra.mxu0 0
      %2689 = vmatprep.subr.bf16.mxu0 0
      %2690 = vmatpush1.bf16.msra.mxu0 0
      %2691 = vmatprep.subr.bf16.mxu0 0
      %2692 = vmatpush1.bf16.msra.mxu0 0
      %2693 = vmatprep.subr.bf16.mxu0 0
      %2694 = vmatpush1.bf16.msra.mxu0 0
      %2695 = vmatprep.subr.bf16.mxu0 0
      %2696 = vmatpush1.bf16.msra.mxu0 0
      %2697 = vmatprep.subr.bf16.mxu0 0
      %2698 = vmatpush1.bf16.msra.mxu0 0
      %2699 = vmatprep.mubr.bf16.mxu0 0
      %2700 = vmatmul.mubr.bf16.gmra.mrb[0].mxu0 %v1311
      %v2701 = vpop.f32.mrb[0].mxu0
      %v2702 = vadd.f32 %v2541, %v2701
      %v2703 = vpop.f32.mrb[0].mxu0
      %v2704 = vpop.f32.mrb[0].mxu0
      %v2705 = vadd.f32 %v2544, %v2704
      %v2706 = vpop.f32.mrb[0].mxu0
      %2707 = vmatprep.mubr.bf16.mxu0 0
      %2708 = vmatmul.mubr.bf16.gmra.mrb[0].mxu0 %v1320
      %v2709 = vpop.f32.mrb[0].mxu0
      %v2710 = vadd.f32 %v2549, %v2709
      %v2711 = vpop.f32.mrb[0].mxu0
      %v2712 = vpop.f32.mrb[0].mxu0
      %v2713 = vadd.f32 %v2552, %v2712
      %v2714 = vpop.f32.mrb[0].mxu0
      %2715 = vmatprep.mubr.bf16.mxu0 0
      %2716 = vmatmul.mubr.bf16.gmra.mrb[0].mxu0 %v1329
      %v2717 = vpop.f32.mrb[0].mxu0
      %v2718 = vadd.f32 %v2557, %v2717
      %v2719 = vpop.f32.mrb[0].mxu0
      %v2720 = vpop.f32.mrb[0].mxu0
      %v2721 = vadd.f32 %v2560, %v2720
      %v2722 = vpop.f32.mrb[0].mxu0
      %2723 = vmatprep.mubr.bf16.mxu0 0
      %2724 = vmatmul.mubr.bf16.gmra.mrb[0].mxu0 %v1338
      %v2725 = vpop.f32.mrb[0].mxu0
      %v2726 = vadd.f32 %v2565, %v2725
      %v2727 = vpop.f32.mrb[0].mxu0
      %v2728 = vpop.f32.mrb[0].mxu0
      %v2729 = vadd.f32 %v2568, %v2728
      %v2730 = vpop.f32.mrb[0].mxu0
      %2731 = vmatprep.mubr.bf16.mxu0 0
      %2732 = vmatmul.mubr.bf16.gmra.mrb[0].mxu0 %v1347
      %v2733 = vpop.f32.mrb[0].mxu0
      %v2734 = vadd.f32 %v2573, %v2733
      %v2735 = vpop.f32.mrb[0].mxu0
      %v2736 = vpop.f32.mrb[0].mxu0
      %v2737 = vadd.f32 %v2576, %v2736
      %v2738 = vpop.f32.mrb[0].mxu0
      %2739 = vmatprep.mubr.bf16.mxu0 0
      %2740 = vmatmul.mubr.bf16.gmra.mrb[0].mxu0 %v1356
      %v2741 = vpop.f32.mrb[0].mxu0
      %v2742 = vadd.f32 %v2581, %v2741
      %v2743 = vpop.f32.mrb[0].mxu0
      %v2744 = vpop.f32.mrb[0].mxu0
      %v2745 = vadd.f32 %v2584, %v2744
      %v2746 = vpop.f32.mrb[0].mxu0
      %2747 = vmatprep.mubr.bf16.mxu0 0
      %2748 = vmatmul.mubr.bf16.gmra.mrb[0].mxu0 %v1365
      %v2749 = vpop.f32.mrb[0].mxu0
      %v2750 = vadd.f32 %v2589, %v2749
      %v2751 = vpop.f32.mrb[0].mxu0
      %v2752 = vpop.f32.mrb[0].mxu0
      %v2753 = vadd.f32 %v2592, %v2752
      %v2754 = vpop.f32.mrb[0].mxu0
      %2755 = vmatprep.mubr.bf16.mxu0 0
      %2756 = vmatmul.mubr.bf16.gmra.mrb[0].mxu0 %v1374
      %v2757 = vpop.f32.mrb[0].mxu0
      %v2758 = vadd.f32 %v2597, %v2757
      %v2759 = vpop.f32.mrb[0].mxu0
      %v2760 = vpop.f32.mrb[0].mxu0
      %v2761 = vadd.f32 %v2600, %v2760
      %v2762 = vpop.f32.mrb[0].mxu0
      %2763 = vmatprep.mubr.bf16.mxu0 0
      %2764 = vmatmul.mubr.bf16.gmra.mrb[0].mxu0 %v1383
      %v2765 = vpop.f32.mrb[0].mxu0
      %v2766 = vadd.f32 %v2605, %v2765
      %v2767 = vpop.f32.mrb[0].mxu0
      %v2768 = vpop.f32.mrb[0].mxu0
      %v2769 = vadd.f32 %v2608, %v2768
      %v2770 = vpop.f32.mrb[0].mxu0
      %2771 = vmatprep.mubr.bf16.mxu0 0
      %2772 = vmatmul.mubr.bf16.gmra.mrb[0].mxu0 %v1392
      %v2773 = vpop.f32.mrb[0].mxu0
      %v2774 = vadd.f32 %v2613, %v2773
      %v2775 = vpop.f32.mrb[0].mxu0
      %v2776 = vpop.f32.mrb[0].mxu0
      %v2777 = vadd.f32 %v2616, %v2776
      %v2778 = vpop.f32.mrb[0].mxu0
      %2779 = vmatprep.mubr.bf16.mxu0 0
      %2780 = vmatmul.mubr.bf16.gmra.mrb[0].mxu0 %v1401
      %v2781 = vpop.f32.mrb[0].mxu0
      %v2782 = vadd.f32 %v2621, %v2781
      %v2783 = vpop.f32.mrb[0].mxu0
      %v2784 = vpop.f32.mrb[0].mxu0
      %v2785 = vadd.f32 %v2624, %v2784
      %v2786 = vpop.f32.mrb[0].mxu0
      %2787 = vmatprep.mubr.bf16.mxu0 0
      %2788 = vmatmul.mubr.bf16.gmra.mrb[0].mxu0 %v1410
      %v2789 = vpop.f32.mrb[0].mxu0
      %v2790 = vadd.f32 %v2629, %v2789
      %v2791 = vpop.f32.mrb[0].mxu0
      %v2792 = vpop.f32.mrb[0].mxu0
      %v2793 = vadd.f32 %v2632, %v2792
      %v2794 = vpop.f32.mrb[0].mxu0
      %2795 = vmatprep.mubr.bf16.mxu0 0
      %2796 = vmatmul.mubr.bf16.gmra.mrb[0].mxu0 %v1419
      %v2797 = vpop.f32.mrb[0].mxu0
      %v2798 = vadd.f32 %v2637, %v2797
      %v2799 = vpop.f32.mrb[0].mxu0
      %v2800 = vpop.f32.mrb[0].mxu0
      %v2801 = vadd.f32 %v2640, %v2800
      %v2802 = vpop.f32.mrb[0].mxu0
      %2803 = vmatprep.mubr.bf16.mxu0 0
      %2804 = vmatmul.mubr.bf16.gmra.mrb[0].mxu0 %v1428
      %v2805 = vpop.f32.mrb[0].mxu0
      %v2806 = vadd.f32 %v2645, %v2805
      %v2807 = vpop.f32.mrb[0].mxu0
      %v2808 = vpop.f32.mrb[0].mxu0
      %v2809 = vadd.f32 %v2648, %v2808
      %v2810 = vpop.f32.mrb[0].mxu0
      %2811 = vmatprep.mubr.bf16.mxu0 0
      %2812 = vmatmul.mubr.bf16.gmra.mrb[0].mxu0 %v1437
      %v2813 = vpop.f32.mrb[0].mxu0
      %v2814 = vadd.f32 %v2653, %v2813
      %v2815 = vpop.f32.mrb[0].mxu0
      %v2816 = vpop.f32.mrb[0].mxu0
      %v2817 = vadd.f32 %v2656, %v2816
      %v2818 = vpop.f32.mrb[0].mxu0
      %2819 = vmatprep.mubr.bf16.mxu0 0
      %2820 = vmatmul.mubr.bf16.gmra.mrb[0].mxu0 %v1446
      %v2821 = vpop.f32.mrb[0].mxu0
      %v2822 = vadd.f32 %v2661, %v2821
      %v2823 = vpop.f32.mrb[0].mxu0
      %v2824 = vpop.f32.mrb[0].mxu0
      %v2825 = vadd.f32 %v2664, %v2824
      %v2826 = vpop.f32.mrb[0].mxu0
      %2827 = vdwg.mxu0
      %v2828 = vadd.f32 %v2702, %v2705
      %v2829 = vadd.f32 %v2828, %v2710
      %v2830 = vadd.f32 %v2829, %v2713
      %v2831 = vadd.f32 %v2830, %v2718
      %v2832 = vadd.f32 %v2831, %v2721
      %v2833 = vadd.f32 %v2832, %v2726
      %v2834 = vadd.f32 %v2833, %v2729
      %v2835 = vadd.f32 %v2834, %v2734
      %v2836 = vadd.f32 %v2835, %v2737
      %v2837 = vadd.f32 %v2836, %v2742
      %v2838 = vadd.f32 %v2837, %v2745
      %v2839 = vadd.f32 %v2838, %v2750
      %v2840 = vadd.f32 %v2839, %v2753
      %v2841 = vadd.f32 %v2840, %v2758
      %v2842 = vadd.f32 %v2841, %v2761
      %v2843 = vadd.f32 %v2842, %v2766
      %v2844 = vadd.f32 %v2843, %v2769
      %v2845 = vadd.f32 %v2844, %v2774
      %v2846 = vadd.f32 %v2845, %v2777
      %v2847 = vadd.f32 %v2846, %v2782
      %v2848 = vadd.f32 %v2847, %v2785
      %v2849 = vadd.f32 %v2848, %v2790
      %v2850 = vadd.f32 %v2849, %v2793
      %v2851 = vadd.f32 %v2850, %v2798
      %v2852 = vadd.f32 %v2851, %v2801
      %v2853 = vadd.f32 %v2852, %v2806
      %v2854 = vadd.f32 %v2853, %v2809
      %v2855 = vadd.f32 %v2854, %v2814
      %v2856 = vadd.f32 %v2855, %v2817
      %v2857 = vadd.f32 %v2856, %v2822
      %v2858 = vadd.f32 %v2857, %v2825
      %v2859 = vrot.slane %v2858, 4
      %v2860 = vadd.f32 %v2858, %v2859
      %v2861 = vrot.slane %v2860, 2
      %v2862 = vadd.f32 %v2860, %v2861
      %v2863 = vrot.slane %v2862, 1
      %v2864 = vadd.f32 %v2862, %v2863
      %2865 = vst [vmem:[%s235] sm:$0x1] %v2864
      %v2866 = vmul.f32 %v2702, %v2702
      %v2867 = vmul.f32 %v2705, %v2705
      %v2868 = vmul.f32 %v2710, %v2710
      %v2869 = vmul.f32 %v2713, %v2713
      %v2870 = vmul.f32 %v2718, %v2718
      %v2871 = vmul.f32 %v2721, %v2721
      %v2872 = vmul.f32 %v2726, %v2726
      %v2873 = vmul.f32 %v2729, %v2729
      %v2874 = vmul.f32 %v2734, %v2734
      %v2875 = vmul.f32 %v2737, %v2737
      %v2876 = vmul.f32 %v2742, %v2742
      %v2877 = vmul.f32 %v2745, %v2745
      %v2878 = vmul.f32 %v2750, %v2750
      %v2879 = vmul.f32 %v2753, %v2753
      %v2880 = vmul.f32 %v2758, %v2758
      %v2881 = vmul.f32 %v2761, %v2761
      %v2882 = vmul.f32 %v2766, %v2766
      %v2883 = vmul.f32 %v2769, %v2769
      %v2884 = vmul.f32 %v2774, %v2774
      %v2885 = vmul.f32 %v2777, %v2777
      %v2886 = vmul.f32 %v2782, %v2782
      %v2887 = vmul.f32 %v2785, %v2785
      %v2888 = vmul.f32 %v2790, %v2790
      %v2889 = vmul.f32 %v2793, %v2793
      %v2890 = vmul.f32 %v2798, %v2798
      %v2891 = vmul.f32 %v2801, %v2801
      %v2892 = vmul.f32 %v2806, %v2806
      %v2893 = vmul.f32 %v2809, %v2809
      %v2894 = vmul.f32 %v2814, %v2814
      %v2895 = vmul.f32 %v2817, %v2817
      %v2896 = vmul.f32 %v2822, %v2822
      %v2897 = vmul.f32 %v2825, %v2825
      %v2898 = vadd.f32 %v2866, %v2867
      %v2899 = vadd.f32 %v2898, %v2868
      %v2900 = vadd.f32 %v2899, %v2869
      %v2901 = vadd.f32 %v2900, %v2870
      %v2902 = vadd.f32 %v2901, %v2871
      %v2903 = vadd.f32 %v2902, %v2872
      %v2904 = vadd.f32 %v2903, %v2873
      %v2905 = vadd.f32 %v2904, %v2874
      %v2906 = vadd.f32 %v2905, %v2875
      %v2907 = vadd.f32 %v2906, %v2876
      %v2908 = vadd.f32 %v2907, %v2877
      %v2909 = vadd.f32 %v2908, %v2878
      %v2910 = vadd.f32 %v2909, %v2879
      %v2911 = vadd.f32 %v2910, %v2880
      %v2912 = vadd.f32 %v2911, %v2881
      %v2913 = vadd.f32 %v2912, %v2882
      %v2914 = vadd.f32 %v2913, %v2883
      %v2915 = vadd.f32 %v2914, %v2884
      %v2916 = vadd.f32 %v2915, %v2885
      %v2917 = vadd.f32 %v2916, %v2886
      %v2918 = vadd.f32 %v2917, %v2887
      %v2919 = vadd.f32 %v2918, %v2888
      %v2920 = vadd.f32 %v2919, %v2889
      %v2921 = vadd.f32 %v2920, %v2890
      %v2922 = vadd.f32 %v2921, %v2891
      %v2923 = vadd.f32 %v2922, %v2892
      %v2924 = vadd.f32 %v2923, %v2893
      %v2925 = vadd.f32 %v2924, %v2894
      %v2926 = vadd.f32 %v2925, %v2895
      %v2927 = vadd.f32 %v2926, %v2896
      %v2928 = vadd.f32 %v2927, %v2897
      %v2929 = vrot.slane %v2928, 4
      %v2930 = vadd.f32 %v2928, %v2929
      %v2931 = vrot.slane %v2930, 2
      %v2932 = vadd.f32 %v2930, %v2931
      %v2933 = vrot.slane %v2932, 1
      %v2934 = vadd.f32 %v2932, %v2933
      %2935 = vst [vmem:[%s235 + $0x1] sm:$0x1] %v2934
      %v2936 = vpack.c.bf16 %v2705, %v2702
      %v2937 = vpack.c.bf16 %v2713, %v2710
      %v2938 = vpack.c.bf16 %v2721, %v2718
      %v2939 = vpack.c.bf16 %v2729, %v2726
      %v2940 = vpack.c.bf16 %v2737, %v2734
      %v2941 = vpack.c.bf16 %v2745, %v2742
      %v2942 = vpack.c.bf16 %v2753, %v2750
      %v2943 = vpack.c.bf16 %v2761, %v2758
      %v2944 = vpack.c.bf16 %v2769, %v2766
      %v2945 = vpack.c.bf16 %v2777, %v2774
      %v2946 = vpack.c.bf16 %v2785, %v2782
      %v2947 = vpack.c.bf16 %v2793, %v2790
      %v2948 = vpack.c.bf16 %v2801, %v2798
      %v2949 = vpack.c.bf16 %v2809, %v2806
      %v2950 = vpack.c.bf16 %v2817, %v2814
      %v2951 = vpack.c.bf16 %v2825, %v2822
      %v2968 = vunpack.c.l.b16 %v2936
      %v2969 = vunpack.c.h.b16 %v2936
      %v2970 = vunpack.c.l.b16 %v2937
      %v2971 = vunpack.c.h.b16 %v2937
      %v2972 = vunpack.c.l.b16 %v2938
      %v2973 = vunpack.c.h.b16 %v2938
      %v2974 = vunpack.c.l.b16 %v2939
      %v2975 = vunpack.c.h.b16 %v2939
      %v2976 = vunpack.c.l.b16 %v2940
      %v2977 = vunpack.c.h.b16 %v2940
      %v2978 = vunpack.c.l.b16 %v2941
      %v2979 = vunpack.c.h.b16 %v2941
      %v2980 = vunpack.c.l.b16 %v2942
      %v2981 = vunpack.c.h.b16 %v2942
      %v2982 = vunpack.c.l.b16 %v2943
      %v2983 = vunpack.c.h.b16 %v2943
      %v2984 = vunpack.c.l.b16 %v2944
      %v2985 = vunpack.c.h.b16 %v2944
      %v2986 = vunpack.c.l.b16 %v2945
      %v2987 = vunpack.c.h.b16 %v2945
      %v2988 = vunpack.c.l.b16 %v2946
      %v2989 = vunpack.c.h.b16 %v2946
      %v2990 = vunpack.c.l.b16 %v2947
      %v2991 = vunpack.c.h.b16 %v2947
      %v2992 = vunpack.c.l.b16 %v2948
      %v2993 = vunpack.c.h.b16 %v2948
      %v2994 = vunpack.c.l.b16 %v2949
      %v2995 = vunpack.c.h.b16 %v2949
      %v2996 = vunpack.c.l.b16 %v2950
      %v2997 = vunpack.c.h.b16 %v2950
      %v2998 = vunpack.c.l.b16 %v2951
      %v2999 = vunpack.c.h.b16 %v2951
      %v3000 = vpack.c.b16 %v2968, %v2968
      %v3001 = vpack.c.b16 %v2969, %v2969
      %v3002 = vpack.c.b16 %v2970, %v2970
      %v3003 = vpack.c.b16 %v2971, %v2971
      %v3004 = vpack.c.b16 %v2972, %v2972
      %v3005 = vpack.c.b16 %v2973, %v2973
      %v3006 = vpack.c.b16 %v2974, %v2974
      %v3007 = vpack.c.b16 %v2975, %v2975
      %v3008 = vpack.c.b16 %v2976, %v2976
      %v3009 = vpack.c.b16 %v2977, %v2977
      %v3010 = vpack.c.b16 %v2978, %v2978
      %v3011 = vpack.c.b16 %v2979, %v2979
      %v3012 = vpack.c.b16 %v2980, %v2980
      %v3013 = vpack.c.b16 %v2981, %v2981
      %v3014 = vpack.c.b16 %v2982, %v2982
      %v3015 = vpack.c.b16 %v2983, %v2983
      %v3016 = vpack.c.b16 %v2984, %v2984
      %v3017 = vpack.c.b16 %v2985, %v2985
      %v3018 = vpack.c.b16 %v2986, %v2986
      %v3019 = vpack.c.b16 %v2987, %v2987
      %v3020 = vpack.c.b16 %v2988, %v2988
      %v3021 = vpack.c.b16 %v2989, %v2989
      %v3022 = vpack.c.b16 %v2990, %v2990
      %v3023 = vpack.c.b16 %v2991, %v2991
      %v3024 = vpack.c.b16 %v2992, %v2992
      %v3025 = vpack.c.b16 %v2993, %v2993
      %v3026 = vpack.c.b16 %v2994, %v2994
      %v3027 = vpack.c.b16 %v2995, %v2995
      %v3028 = vpack.c.b16 %v2996, %v2996
      %v3029 = vpack.c.b16 %v2997, %v2997
      %v3030 = vpack.c.b16 %v2998, %v2998
      %v3031 = vpack.c.b16 %v2999, %v2999
      %3064 = vst [vmem:[%s231] sm:$0xf] %v3000
      %3065 = vst [vmem:[%s231 + $0x4] sm:$0xf] %v3001
      %3066 = vst [vmem:[%s231 + $0x8] sm:$0xf] %v3002
      %3067 = vst [vmem:[%s231 + $0xc] sm:$0xf] %v3003
      %3068 = vst [vmem:[%s231 + $0x10] sm:$0xf] %v3004
      %3069 = vst [vmem:[%s231 + $0x14] sm:$0xf] %v3005
      %3070 = vst [vmem:[%s231 + $0x18] sm:$0xf] %v3006
      %3071 = vst [vmem:[%s231 + $0x1c] sm:$0xf] %v3007
      %3072 = vst [vmem:[%s231 + $0x20] sm:$0xf] %v3008
      %3073 = vst [vmem:[%s231 + $0x24] sm:$0xf] %v3009
      %3074 = vst [vmem:[%s231 + $0x28] sm:$0xf] %v3010
      %3075 = vst [vmem:[%s231 + $0x2c] sm:$0xf] %v3011
      %3076 = vst [vmem:[%s231 + $0x30] sm:$0xf] %v3012
      %3077 = vst [vmem:[%s231 + $0x34] sm:$0xf] %v3013
      %3078 = vst [vmem:[%s231 + $0x38] sm:$0xf] %v3014
      %3079 = vst [vmem:[%s231 + $0x3c] sm:$0xf] %v3015
      %3080 = vst [vmem:[%s231 + $0x40] sm:$0xf] %v3016
      %3081 = vst [vmem:[%s231 + $0x44] sm:$0xf] %v3017
      %3082 = vst [vmem:[%s231 + $0x48] sm:$0xf] %v3018
      %3083 = vst [vmem:[%s231 + $0x4c] sm:$0xf] %v3019
      %3084 = vst [vmem:[%s231 + $0x50] sm:$0xf] %v3020
      %3085 = vst [vmem:[%s231 + $0x54] sm:$0xf] %v3021
      %3086 = vst [vmem:[%s231 + $0x58] sm:$0xf] %v3022
      %3087 = vst [vmem:[%s231 + $0x5c] sm:$0xf] %v3023
      %3088 = vst [vmem:[%s231 + $0x60] sm:$0xf] %v3024
      %3089 = vst [vmem:[%s231 + $0x64] sm:$0xf] %v3025
      %3090 = vst [vmem:[%s231 + $0x68] sm:$0xf] %v3026
      %3091 = vst [vmem:[%s231 + $0x6c] sm:$0xf] %v3027
      %3092 = vst [vmem:[%s231 + $0x70] sm:$0xf] %v3028
      %3093 = vst [vmem:[%s231 + $0x74] sm:$0xf] %v3029
      %3094 = vst [vmem:[%s231 + $0x78] sm:$0xf] %v3030
      %3095 = vst [vmem:[%s231 + $0x7c] sm:$0xf] %v3031
      %p3096 = scmp.lt.s32.totalorder %s17, 1
      %s3097 = scalar_select %p3096, %s17, 1
      %s3098 = smul.addr %s3097, 32
      %s3099 = smul.addr %s3098, 4
      %s3100 = scalar_lea.vmem %s4, %s3099
      %p3101 = scmp.lt.s32.totalorder %s17, 1
      %s3102 = scalar_select %p3101, %s17, 1
      %s3103 = smul.addr %s3102, 2
      %s3104 = scalar_lea.vmem %s5, %s3103
      // Predicated region
      $region37: #{residual_block_pallas.4} parent=35 // pred_check
        %p3105 = pneg %p124
      $region38: #{residual_block_pallas.4} parent=35 // pred_check_branch
        %3107 = sbr.rel (%p3105) target = $region40
      $region39: #{residual_block_pallas.4} parent=35 // pred_region
        _
      $region40: #{residual_block_pallas.4} parent=35 // pred_fallthru
        _
      // Predicated region
      $region41: #{residual_block_pallas.4} parent=35 // pred_check
        %p3108 = pneg %p150
      $region42: #{residual_block_pallas.4} parent=35 // pred_check_branch
        %3110 = sbr.rel (%p3108) target = $region44
      $region43: #{residual_block_pallas.4} parent=35 // pred_region
        _
      $region44: #{residual_block_pallas.4} parent=35 // pred_fallthru
        _
    $region36: #{residual_block_pallas.4} parent=5 // pred_fallthru
      _
    %p3111 = scmp.le.s32.totalorder 2, %s12
    // Predicated region
    $region45: #{residual_block_pallas.4} parent=5 // pred_check
      %p3112 = pneg %p3111
    $region46: #{residual_block_pallas.4} parent=5 // pred_check_branch
      %3114 = sbr.rel (%p3112) target = $region48
    $region47: #{residual_block_pallas.4} parent=5 // pred_region
      %s3115 = ssub.s32 %s12, 2
      // Predicated region
      $region49: #{residual_block_pallas.4} parent=47 // pred_check
        %p3116 = pneg %p130
      $region50: #{residual_block_pallas.4} parent=47 // pred_check_branch
        %3118 = sbr.rel (%p3116) target = $region52
      $region51: #{residual_block_pallas.4} parent=47 // pred_region
        %p3119 = scmp.lt.s32.totalorder %s18, 1
        %s3120 = scalar_select %p3119, %s18, 1
        %s3121 = smul.addr %s3120, 32
        %s3122 = smul.addr %s3121, 4
        %s3123 = scalar_lea.vmem %s4, %s3122
      $region52: #{residual_block_pallas.4} parent=47 // pred_fallthru
        _
      // Predicated region
      $region53: #{residual_block_pallas.4} parent=47 // pred_check
        %p3124 = pneg %p156
      $region54: #{residual_block_pallas.4} parent=47 // pred_check_branch
        %3126 = sbr.rel (%p3124) target = $region56
      $region55: #{residual_block_pallas.4} parent=47 // pred_region
        %p3127 = scmp.lt.s32.totalorder %s18, 1
        %s3128 = scalar_select %p3127, %s18, 1
        %s3129 = smul.addr %s3128, 2
        %s3130 = scalar_lea.vmem %s5, %s3129
      $region56: #{residual_block_pallas.4} parent=47 // pred_fallthru
        _
    $region48: #{residual_block_pallas.4} parent=5 // pred_fallthru
      _
  $region6: #{residual_block_pallas.4} parent=0 // loop_footer
    %s16 = sadd.s32 1, %s12
  $region7: #{residual_block_pallas.4} parent=0 // loop_footer_branch
    %11 = sbr.rel target = $region3
  $region8: #{residual_block_pallas.4} parent=0 // loop_exit
    _

</llo_original>
